<compile_context>
chip_gen: v6e
topology: v6e:2x2x1
jax: 0.10.0
libtpu: 0.0.40
codegen_flags: <defaults>
</compile_context>

<pallas_src>
import functools

import numpy as np
import jax
import jax.numpy as jnp
from jax.experimental import pallas as pl
from jax.experimental.pallas import tpu as pltpu

LRELU_SLOPE = 0.2
BN_EPS = 1e-5


# ---------------------------------------------------------------------------
# Fully fused kernel: conv1 + LeakyReLU + conv2 + BN2d + LeakyReLU + fc1
#                     + BN1d + LeakyReLU + head + Sigmoid
# Grid: one step per fc1 K-block (w3 streamed / pipelined by BlockSpec).
# ---------------------------------------------------------------------------
def _disc_fused_kernel(pat_ref, w1_ref, w2_ref, b2_ref, g2_ref, bt2_ref,
                       w3_ref, b3_ref, g3_ref, bt3_ref, w4_ref, b4_ref,
                       o_ref, h2_ref, acc_ref,
                       *, batch, n_spatial, kpair, head_is_reduction):
    q = pl.program_id(0)
    rows = batch * n_spatial                    # rows of the conv2 / BN2d stage

    def lrelu(v):
        return jnp.maximum(v, LRELU_SLOPE * v)  # 2 VPU ops (mul + max)

    # ---- Step 0: conv1 -> conv2 -> BatchNorm2d -> LeakyReLU, all in VMEM. ----
    @pl.when(q == 0)
    def _():
        w1 = w1_ref[...]                         # (16*Cin + 1, 64) bf16
        y2 = jnp.zeros((rows, 128), jnp.float32)
        # conv2 as a sum over the 16 (kh, kw) taps; the conv1 activations for
        # each tap come from the composed-im2col rows (bias + conv2 zero pad
        # folded into the homogeneous last column, so OOB taps are exactly 0).
        for p in range(16):
            patch = pat_ref[pl.ds(p * rows, rows), :]          # (rows, K1) bf16
            c1 = lrelu(jnp.dot(patch, w1,
                               preferred_element_type=jnp.float32))
            y2 = y2 + jnp.dot(c1.astype(w2_ref.dtype), w2_ref[p],
                              preferred_element_type=jnp.float32)
        y2 = y2 + b2_ref[...]
        # BatchNorm2d, training-mode batch statistics (full B*Ho*Wo extent is
        # resident in this single block; one-pass, clamped variance).
        inv_n = 1.0 / rows
        mean = jnp.sum(y2, axis=0, keepdims=True) * inv_n
        var = jnp.maximum(
            jnp.sum(y2 * y2, axis=0, keepdims=True) * inv_n - mean * mean, 0.0)
        h2 = lrelu((y2 - mean) * jax.lax.rsqrt(var + BN_EPS) * g2_ref[...]
                   + bt2_ref[...])
        h2_ref[...] = h2.astype(h2_ref.dtype)    # bf16 scratch for fc1
        acc_ref[...] = jnp.zeros_like(acc_ref)

    # ---- Every step: one K = 128*kpair slice of fc1 (w3 block streamed). ----
    base = pl.multiple_of(q * (kpair * batch), kpair * batch)
    parts = [h2_ref[pl.ds(base + t * batch, batch), :] for t in range(kpair)]
    x_fc = parts[0] if kpair == 1 else jnp.concatenate(parts, axis=-1)
    acc_ref[...] += jnp.dot(x_fc, w3_ref[0],
                            preferred_element_type=jnp.float32)

    # ---- Last step: BatchNorm1d -> LeakyReLU -> head -> Sigmoid. ----
    @pl.when(q == pl.num_programs(0) - 1)
    def _():
        y3 = acc_ref[...] + b3_ref[...]
        inv_b = 1.0 / batch
        mean = jnp.sum(y3, axis=0, keepdims=True) * inv_b
        var = jnp.maximum(
            jnp.sum(y3 * y3, axis=0, keepdims=True) * inv_b - mean * mean, 0.0)
        h3 = lrelu((y3 - mean) * jax.lax.rsqrt(var + BN_EPS) * g3_ref[...]
                   + bt3_ref[...])
        if head_is_reduction:
            # output_dim == 1: VPU multiply + lane reduction, no N=1 matmul.
            logit = jnp.sum(h3 * w4_ref[...], axis=-1, keepdims=True) + b4_ref[...]
        else:
            logit = jnp.dot(h3, w4_ref[...],
                            preferred_element_type=jnp.float32) + b4_ref[...]
        o_ref[...] = jax.nn.sigmoid(logit)


# ---------------------------------------------------------------------------
# XLA glue on the raw input only: composed im2col.  For every conv2 kernel tap
# (ki, kj) and conv2 output position (ho2, wo2), emit the conv1 patch of x at
# the conv1-output position that tap needs.  Rows ordered (tap, ho2, wo2, b).
# The last column is 1 for in-bounds taps and 0 on conv2's zero-padded border
# (conv1's bias is folded into a matching extra row of w1).
# ---------------------------------------------------------------------------
def _build_conv_patches(x_nchw):
    B, Cin, H, _ = x_nchw.shape
    h1s = H // 2                                  # conv1 output spatial size
    s = H // 4                                    # conv2 output spatial size
    x = x_nchw.transpose(0, 2, 3, 1)              # NHWC
    xp = jnp.pad(x, ((0, 0), (1, 1), (1, 1), (0, 0)))          # conv1 pad = 1
    cols = [xp[:, a:a + 2 * h1s:2, c:c + 2 * h1s:2, :]
            for a in range(4) for c in range(4)]
    p1 = jnp.stack(cols, axis=3).reshape(B, h1s, h1s, 16 * Cin)
    p1p = jnp.pad(p1, ((0, 0), (1, 1), (1, 1), (0, 0)))        # conv2 pad = 1

    taps, valid = [], []
    for ki in range(4):
        for kj in range(4):
            t = p1p[:, ki:ki + 2 * s:2, kj:kj + 2 * s:2, :]    # (B, s, s, .)
            taps.append(t.transpose(1, 2, 0, 3))               # (s, s, B, .)
            hi = 2 * np.arange(s) + ki - 1
            wi = 2 * np.arange(s) + kj - 1
            v = (((hi >= 0) & (hi < h1s)).astype(np.float32)[:, None, None]
                 * ((wi >= 0) & (wi < h1s)).astype(np.float32)[None, :, None])
            valid.append(np.broadcast_to(v, (s, s, B)))

    pat = jnp.stack(taps, axis=0).reshape(16 * s * s * B, 16 * Cin)
    homog = jnp.asarray(np.stack(valid, axis=0).reshape(16 * s * s * B, 1))
    return jnp.concatenate([pat, homog], axis=-1).astype(jnp.bfloat16)


# ---------------------------------------------------------------------------
# Parameters: PyTorch-layout init, one-time conversion to kernel layouts.
# ---------------------------------------------------------------------------
def init_params(key, input_dim=1, output_dim=1, input_size=16):
    s = input_size // 4
    ks = jax.random.split(key, 6)
    p = {}
    p["w1"] = 0.02 * jax.random.normal(ks[0], (64, input_dim, 4, 4), jnp.float32)
    p["b1"] = jnp.zeros((64,), jnp.float32)
    p["w2"] = 0.02 * jax.random.normal(ks[1], (128, 64, 4, 4), jnp.float32)
    p["b2"] = jnp.zeros((128,), jnp.float32)
    p["bn2_g"] = 1.0 + 0.02 * jax.random.normal(ks[2], (128,), jnp.float32)
    p["bn2_b"] = jnp.zeros((128,), jnp.float32)
    p["w3"] = 0.02 * jax.random.normal(ks[3], (1024, 128 * s * s), jnp.float32)
    p["b3"] = jnp.zeros((1024,), jnp.float32)
    p["bn3_g"] = 1.0 + 0.02 * jax.random.normal(ks[4], (1024,), jnp.float32)
    p["bn3_b"] = jnp.zeros((1024,), jnp.float32)
    p["w4"] = 0.02 * jax.random.normal(ks[5], (output_dim, 1024), jnp.float32)
    p["b4"] = jnp.zeros((output_dim,), jnp.float32)
    return p


def prepare_params(p, input_size=16):
    """One-time layout conversion (outside the hot path)."""
    s = input_size // 4
    n_sp = s * s
    kpair = 2 if n_sp % 2 == 0 else 1            # K=256 fc1 blocks when possible
    cin = p["w1"].shape[1]
    q = {}
    # conv1: (64, Cin, 4, 4) -> (kh*kw*Cin, 64); bias folded in as an extra
    # homogeneous row so padded conv2 taps stay exactly zero.
    w1 = p["w1"].transpose(2, 3, 1, 0).reshape(16 * cin, 64)
    q["w1"] = jnp.concatenate([w1, p["b1"].reshape(1, 64)],
                              axis=0).astype(jnp.bfloat16)
    # conv2: (128, 64, 4, 4) -> one (64, 128) block per (kh, kw) tap.
    q["w2"] = p["w2"].transpose(2, 3, 1, 0).reshape(16, 64, 128).astype(jnp.bfloat16)
    q["b2"] = p["b2"].reshape(1, 128)
    q["g2"] = p["bn2_g"].reshape(1, 128)
    q["bt2"] = p["bn2_b"].reshape(1, 128)
    # fc1: NCHW-flatten (1024, 128*s*s) -> spatial-major K blocks of 128*kpair.
    w3 = p["w3"].reshape(1024, 128, s, s).transpose(2, 3, 1, 0)  # (s,s,128,1024)
    q["w3"] = w3.reshape(n_sp // kpair, 128 * kpair, 1024).astype(jnp.bfloat16)
    q["b3"] = p["b3"].reshape(1, 1024)
    q["g3"] = p["bn3_g"].reshape(1, 1024)
    q["bt3"] = p["bn3_b"].reshape(1, 1024)
    od = p["w4"].shape[0]
    q["w4"] = p["w4"].reshape(1, 1024) if od == 1 else p["w4"].T
    q["b4"] = p["b4"].reshape(1, od)
    return q


# ---------------------------------------------------------------------------
# Forward pass (mirrors discriminator.forward, training-mode BatchNorm)
# ---------------------------------------------------------------------------
def discriminator_forward(kparams, x_nchw):
    B, _, H, _ = x_nchw.shape
    s = H // 4
    n_sp = s * s
    od = kparams["b4"].shape[1]
    kpair = kparams["w3"].shape[1] // 128
    nblk = kparams["w3"].shape[0]
    w3 = kparams["w3"]

    pat1c = _build_conv_patches(x_nchw)          # (16*n_sp*B, 16*Cin+1) bf16

    kernel = functools.partial(_disc_fused_kernel, batch=B, n_spatial=n_sp,
                               kpair=kpair, head_is_reduction=(od == 1))

    def const_spec(a):
        zero = (0,) * a.ndim
        return pl.BlockSpec(a.shape, lambda q, _z=zero: _z)

    in_specs = [
        const_spec(pat1c), const_spec(kparams["w1"]),
        const_spec(kparams["w2"]), const_spec(kparams["b2"]),
        const_spec(kparams["g2"]), const_spec(kparams["bt2"]),
        pl.BlockSpec((1, w3.shape[1], w3.shape[2]), lambda q: (q, 0, 0)),
        const_spec(kparams["b3"]), const_spec(kparams["g3"]),
        const_spec(kparams["bt3"]), const_spec(kparams["w4"]),
        const_spec(kparams["b4"]),
    ]

    out = pl.pallas_call(
        kernel,
        out_shape=jax.ShapeDtypeStruct((B, od), jnp.float32),
        grid_spec=pltpu.PrefetchScalarGridSpec(
            num_scalar_prefetch=0,
            grid=(nblk,),
            in_specs=in_specs,
            out_specs=pl.BlockSpec((B, od), lambda q: (0, 0)),
            scratch_shapes=[pltpu.VMEM((n_sp * B, 128), jnp.bfloat16),  # h2
                            pltpu.VMEM((B, 1024), jnp.float32)]),       # fc1 acc
        compiler_params=pltpu.CompilerParams(
            dimension_semantics=("arbitrary",),
            vmem_limit_bytes=32 * 1024 * 1024),
    )(pat1c, kparams["w1"], kparams["w2"], kparams["b2"], kparams["g2"],
      kparams["bt2"], w3, kparams["b3"], kparams["g3"], kparams["bt3"],
      kparams["w4"], kparams["b4"])
    return out


# ---------------------------------------------------------------------------
# Pure-JAX f32 reference (same training-mode BatchNorm semantics as PyTorch)
# ---------------------------------------------------------------------------
def _reference_forward(p, x):
    B = x.shape[0]
    dn = ("NCHW", "OIHW", "NCHW")
    y = jax.lax.conv_general_dilated(x, p["w1"], (2, 2), [(1, 1), (1, 1)],
                                     dimension_numbers=dn)
    y = y + p["b1"].reshape(1, -1, 1, 1)
    y = jnp.where(y >= 0, y, LRELU_SLOPE * y)
    y = jax.lax.conv_general_dilated(y, p["w2"], (2, 2), [(1, 1), (1, 1)],
                                     dimension_numbers=dn)
    y = y + p["b2"].reshape(1, -1, 1, 1)
    m = y.mean(axis=(0, 2, 3), keepdims=True)
    v = y.var(axis=(0, 2, 3), keepdims=True)
    y = ((y - m) / jnp.sqrt(v + BN_EPS) * p["bn2_g"].reshape(1, -1, 1, 1)
         + p["bn2_b"].reshape(1, -1, 1, 1))
    y = jnp.where(y >= 0, y, LRELU_SLOPE * y)
    y = y.reshape(B, -1)
    y = y @ p["w3"].T + p["b3"]
    m = y.mean(axis=0, keepdims=True)
    v = y.var(axis=0, keepdims=True)
    y = (y - m) / jnp.sqrt(v + BN_EPS) * p["bn3_g"] + p["bn3_b"]
    y = jnp.where(y >= 0, y, LRELU_SLOPE * y)
    y = y @ p["w4"].T + p["b4"]
    return jax.nn.sigmoid(y)


if __name__ == "__main__":
    key = jax.random.PRNGKey(0)
    k_param, k_data = jax.random.split(key)

    INPUT_DIM, OUTPUT_DIM, INPUT_SIZE, BATCH = 1, 1, 16, 8
    torch_layout_params = init_params(k_param, INPUT_DIM, OUTPUT_DIM, INPUT_SIZE)
    kparams = prepare_params(torch_layout_params, INPUT_SIZE)
    x = jax.random.normal(k_data, (BATCH, INPUT_DIM, INPUT_SIZE, INPUT_SIZE),
                          jnp.float32)

    fwd = jax.jit(discriminator_forward)
    y = jax.block_until_ready(fwd(kparams, x))

    assert y.shape == (BATCH, OUTPUT_DIM)
    assert bool(jnp.all(jnp.isfinite(y)))
    assert bool(jnp.all((y >= 0.0) & (y <= 1.0)))

    # Correctness vs. a pure-JAX f32 reference (bf16 MXU inputs -> tolerance).
    y_ref = jax.block_until_ready(
        jax.jit(_reference_forward)(torch_layout_params, x))
    max_err = float(jnp.max(jnp.abs(y - y_ref)))
    assert max_err < 3e-2, f"max abs error vs reference: {max_err}"

    print("KERNEL_OK")
</pallas_src>

<mosaic_0001>
module attributes {stable_mosaic.version = 11 : i64} {
  func.func @_disc_fused_kernel(%arg0: i32, %arg1: memref<2048x17xbf16, #tpu.memory_space<vmem>>, %arg2: memref<17x64xbf16, #tpu.memory_space<vmem>>, %arg3: memref<16x64x128xbf16, #tpu.memory_space<vmem>>, %arg4: memref<1x128xf32, #tpu.memory_space<vmem>>, %arg5: memref<1x128xf32, #tpu.memory_space<vmem>>, %arg6: memref<1x128xf32, #tpu.memory_space<vmem>>, %arg7: memref<1x256x1024xbf16, #tpu.memory_space<vmem>>, %arg8: memref<1x1024xf32, #tpu.memory_space<vmem>>, %arg9: memref<1x1024xf32, #tpu.memory_space<vmem>>, %arg10: memref<1x1024xf32, #tpu.memory_space<vmem>>, %arg11: memref<1x1024xf32, #tpu.memory_space<vmem>>, %arg12: memref<1x1xf32, #tpu.memory_space<vmem>>, %arg13: memref<8x1xf32, #tpu.memory_space<vmem>>, %arg14: memref<128x128xbf16, #tpu.memory_space<vmem>>, %arg15: memref<8x1024xf32, #tpu.memory_space<vmem>>) attributes {dimension_semantics = [#tpu.dimension_semantics<arbitrary>], iteration_bounds = array<i64: 8>, scalar_prefetch = 0 : i64, scratch_operands = 2 : i64, tpu.core_type = #tpu.core_type<tc>, window_params = [{pipeline_mode = #tpu.pipeline_mode<synchronous>, transform_indices = @transform_0, window_bounds = array<i64: 2048, 17>}, {pipeline_mode = #tpu.pipeline_mode<synchronous>, transform_indices = @transform_1, window_bounds = array<i64: 17, 64>}, {pipeline_mode = #tpu.pipeline_mode<synchronous>, transform_indices = @transform_2, window_bounds = array<i64: 16, 64, 128>}, {pipeline_mode = #tpu.pipeline_mode<synchronous>, transform_indices = @transform_3, window_bounds = array<i64: 1, 128>}, {pipeline_mode = #tpu.pipeline_mode<synchronous>, transform_indices = @transform_4, window_bounds = array<i64: 1, 128>}, {pipeline_mode = #tpu.pipeline_mode<synchronous>, transform_indices = @transform_5, window_bounds = array<i64: 1, 128>}, {transform_indices = @transform_6, window_bounds = array<i64: 1, 256, 1024>}, {pipeline_mode = #tpu.pipeline_mode<synchronous>, transform_indices = @transform_7, window_bounds = array<i64: 1, 1024>}, {pipeline_mode = #tpu.pipeline_mode<synchronous>, transform_indices = @transform_8, window_bounds = array<i64: 1, 1024>}, {pipeline_mode = #tpu.pipeline_mode<synchronous>, transform_indices = @transform_9, window_bounds = array<i64: 1, 1024>}, {pipeline_mode = #tpu.pipeline_mode<synchronous>, transform_indices = @transform_10, window_bounds = array<i64: 1, 1024>}, {pipeline_mode = #tpu.pipeline_mode<synchronous>, transform_indices = @transform_11, window_bounds = array<i64: 1, 1>}, {pipeline_mode = #tpu.pipeline_mode<synchronous>, transform_indices = @transform_12, window_bounds = array<i64: 8, 1>}]} {
    %c0_i32 = arith.constant 0 : i32
    %0 = arith.cmpi eq, %arg0, %c0_i32 : i32
    %1 = arith.extui %0 : i1 to i32
    %c0_i32_0 = arith.constant 0 : i32
    %2 = arith.cmpi ne, %1, %c0_i32_0 : i32
    scf.if %2 {
      %c0_11 = arith.constant 0 : index
      %c0_12 = arith.constant 0 : index
      %21 = vector.load %arg2[%c0_11, %c0_12] : memref<17x64xbf16, #tpu.memory_space<vmem>>, vector<17x64xbf16>
      %cst_13 = arith.constant 0.000000e+00 : f32
      %22 = vector.broadcast %cst_13 : f32 to vector<128x128xf32>
      %c0_14 = arith.constant 0 : index
      %c0_15 = arith.constant 0 : index
      %23 = vector.load %arg1[%c0_14, %c0_15] : memref<2048x17xbf16, #tpu.memory_space<vmem>>, vector<128x17xbf16>
      %cst_16 = arith.constant dense<0.000000e+00> : vector<128x64xf32>
      %24 = tpu.matmul %23, %21, %cst_16 {dimension_numbers = #tpu.dot_dimension_numbers<[1], [0], [0], [1], [0, 0, 1, 1], [], []>} : vector<128x17xbf16>, vector<17x64xbf16>, vector<128x64xf32> -> vector<128x64xf32>
      %cst_17 = arith.constant 2.000000e-01 : f32
      %25 = vector.broadcast %cst_17 : f32 to vector<128x64xf32>
      %26 = arith.mulf %25, %24 : vector<128x64xf32>
      %27 = arith.maximumf %24, %26 : vector<128x64xf32>
      %28 = arith.truncf %27 : vector<128x64xf32> to vector<128x64xbf16>
      %c0_18 = arith.constant 0 : index
      %c0_19 = arith.constant 0 : index
      %c0_20 = arith.constant 0 : index
      %29 = vector.load %arg3[%c0_18, %c0_19, %c0_20] : memref<16x64x128xbf16, #tpu.memory_space<vmem>>, vector<1x64x128xbf16>
      %30 = vector.shape_cast %29 : vector<1x64x128xbf16> to vector<64x128xbf16>
      %cst_21 = arith.constant dense<0.000000e+00> : vector<128x128xf32>
      %31 = tpu.matmul %28, %30, %cst_21 {dimension_numbers = #tpu.dot_dimension_numbers<[1], [0], [0], [1], [0, 0, 1, 1], [], []>} : vector<128x64xbf16>, vector<64x128xbf16>, vector<128x128xf32> -> vector<128x128xf32>
      %32 = arith.addf %22, %31 : vector<128x128xf32>
      %c128 = arith.constant 128 : index
      %c0_22 = arith.constant 0 : index
      %33 = vector.load %arg1[%c128, %c0_22] : memref<2048x17xbf16, #tpu.memory_space<vmem>>, vector<128x17xbf16>
      %cst_23 = arith.constant dense<0.000000e+00> : vector<128x64xf32>
      %34 = tpu.matmul %33, %21, %cst_23 {dimension_numbers = #tpu.dot_dimension_numbers<[1], [0], [0], [1], [0, 0, 1, 1], [], []>} : vector<128x17xbf16>, vector<17x64xbf16>, vector<128x64xf32> -> vector<128x64xf32>
      %cst_24 = arith.constant 2.000000e-01 : f32
      %35 = vector.broadcast %cst_24 : f32 to vector<128x64xf32>
      %36 = arith.mulf %35, %34 : vector<128x64xf32>
      %37 = arith.maximumf %34, %36 : vector<128x64xf32>
      %38 = arith.truncf %37 : vector<128x64xf32> to vector<128x64xbf16>
      %c1 = arith.constant 1 : index
      %c0_25 = arith.constant 0 : index
      %c0_26 = arith.constant 0 : index
      %39 = vector.load %arg3[%c1, %c0_25, %c0_26] : memref<16x64x128xbf16, #tpu.memory_space<vmem>>, vector<1x64x128xbf16>
      %40 = vector.shape_cast %39 : vector<1x64x128xbf16> to vector<64x128xbf16>
      %cst_27 = arith.constant dense<0.000000e+00> : vector<128x128xf32>
      %41 = tpu.matmul %38, %40, %cst_27 {dimension_numbers = #tpu.dot_dimension_numbers<[1], [0], [0], [1], [0, 0, 1, 1], [], []>} : vector<128x64xbf16>, vector<64x128xbf16>, vector<128x128xf32> -> vector<128x128xf32>
      %42 = arith.addf %32, %41 : vector<128x128xf32>
      %c256 = arith.constant 256 : index
      %c0_28 = arith.constant 0 : index
      %43 = vector.load %arg1[%c256, %c0_28] : memref<2048x17xbf16, #tpu.memory_space<vmem>>, vector<128x17xbf16>
      %cst_29 = arith.constant dense<0.000000e+00> : vector<128x64xf32>
      %44 = tpu.matmul %43, %21, %cst_29 {dimension_numbers = #tpu.dot_dimension_numbers<[1], [0], [0], [1], [0, 0, 1, 1], [], []>} : vector<128x17xbf16>, vector<17x64xbf16>, vector<128x64xf32> -> vector<128x64xf32>
      %cst_30 = arith.constant 2.000000e-01 : f32
      %45 = vector.broadcast %cst_30 : f32 to vector<128x64xf32>
      %46 = arith.mulf %45, %44 : vector<128x64xf32>
      %47 = arith.maximumf %44, %46 : vector<128x64xf32>
      %48 = arith.truncf %47 : vector<128x64xf32> to vector<128x64xbf16>
      %c2 = arith.constant 2 : index
      %c0_31 = arith.constant 0 : index
      %c0_32 = arith.constant 0 : index
      %49 = vector.load %arg3[%c2, %c0_31, %c0_32] : memref<16x64x128xbf16, #tpu.memory_space<vmem>>, vector<1x64x128xbf16>
      %50 = vector.shape_cast %49 : vector<1x64x128xbf16> to vector<64x128xbf16>
      %cst_33 = arith.constant dense<0.000000e+00> : vector<128x128xf32>
      %51 = tpu.matmul %48, %50, %cst_33 {dimension_numbers = #tpu.dot_dimension_numbers<[1], [0], [0], [1], [0, 0, 1, 1], [], []>} : vector<128x64xbf16>, vector<64x128xbf16>, vector<128x128xf32> -> vector<128x128xf32>
      %52 = arith.addf %42, %51 : vector<128x128xf32>
      %c384 = arith.constant 384 : index
      %c0_34 = arith.constant 0 : index
      %53 = vector.load %arg1[%c384, %c0_34] : memref<2048x17xbf16, #tpu.memory_space<vmem>>, vector<128x17xbf16>
      %cst_35 = arith.constant dense<0.000000e+00> : vector<128x64xf32>
      %54 = tpu.matmul %53, %21, %cst_35 {dimension_numbers = #tpu.dot_dimension_numbers<[1], [0], [0], [1], [0, 0, 1, 1], [], []>} : vector<128x17xbf16>, vector<17x64xbf16>, vector<128x64xf32> -> vector<128x64xf32>
      %cst_36 = arith.constant 2.000000e-01 : f32
      %55 = vector.broadcast %cst_36 : f32 to vector<128x64xf32>
      %56 = arith.mulf %55, %54 : vector<128x64xf32>
      %57 = arith.maximumf %54, %56 : vector<128x64xf32>
      %58 = arith.truncf %57 : vector<128x64xf32> to vector<128x64xbf16>
      %c3 = arith.constant 3 : index
      %c0_37 = arith.constant 0 : index
      %c0_38 = arith.constant 0 : index
      %59 = vector.load %arg3[%c3, %c0_37, %c0_38] : memref<16x64x128xbf16, #tpu.memory_space<vmem>>, vector<1x64x128xbf16>
      %60 = vector.shape_cast %59 : vector<1x64x128xbf16> to vector<64x128xbf16>
      %cst_39 = arith.constant dense<0.000000e+00> : vector<128x128xf32>
      %61 = tpu.matmul %58, %60, %cst_39 {dimension_numbers = #tpu.dot_dimension_numbers<[1], [0], [0], [1], [0, 0, 1, 1], [], []>} : vector<128x64xbf16>, vector<64x128xbf16>, vector<128x128xf32> -> vector<128x128xf32>
      %62 = arith.addf %52, %61 : vector<128x128xf32>
      %c512 = arith.constant 512 : index
      %c0_40 = arith.constant 0 : index
      %63 = vector.load %arg1[%c512, %c0_40] : memref<2048x17xbf16, #tpu.memory_space<vmem>>, vector<128x17xbf16>
      %cst_41 = arith.constant dense<0.000000e+00> : vector<128x64xf32>
      %64 = tpu.matmul %63, %21, %cst_41 {dimension_numbers = #tpu.dot_dimension_numbers<[1], [0], [0], [1], [0, 0, 1, 1], [], []>} : vector<128x17xbf16>, vector<17x64xbf16>, vector<128x64xf32> -> vector<128x64xf32>
      %cst_42 = arith.constant 2.000000e-01 : f32
      %65 = vector.broadcast %cst_42 : f32 to vector<128x64xf32>
      %66 = arith.mulf %65, %64 : vector<128x64xf32>
      %67 = arith.maximumf %64, %66 : vector<128x64xf32>
      %68 = arith.truncf %67 : vector<128x64xf32> to vector<128x64xbf16>
      %c4 = arith.constant 4 : index
      %c0_43 = arith.constant 0 : index
      %c0_44 = arith.constant 0 : index
      %69 = vector.load %arg3[%c4, %c0_43, %c0_44] : memref<16x64x128xbf16, #tpu.memory_space<vmem>>, vector<1x64x128xbf16>
      %70 = vector.shape_cast %69 : vector<1x64x128xbf16> to vector<64x128xbf16>
      %cst_45 = arith.constant dense<0.000000e+00> : vector<128x128xf32>
      %71 = tpu.matmul %68, %70, %cst_45 {dimension_numbers = #tpu.dot_dimension_numbers<[1], [0], [0], [1], [0, 0, 1, 1], [], []>} : vector<128x64xbf16>, vector<64x128xbf16>, vector<128x128xf32> -> vector<128x128xf32>
      %72 = arith.addf %62, %71 : vector<128x128xf32>
      %c640 = arith.constant 640 : index
      %c0_46 = arith.constant 0 : index
      %73 = vector.load %arg1[%c640, %c0_46] : memref<2048x17xbf16, #tpu.memory_space<vmem>>, vector<128x17xbf16>
      %cst_47 = arith.constant dense<0.000000e+00> : vector<128x64xf32>
      %74 = tpu.matmul %73, %21, %cst_47 {dimension_numbers = #tpu.dot_dimension_numbers<[1], [0], [0], [1], [0, 0, 1, 1], [], []>} : vector<128x17xbf16>, vector<17x64xbf16>, vector<128x64xf32> -> vector<128x64xf32>
      %cst_48 = arith.constant 2.000000e-01 : f32
      %75 = vector.broadcast %cst_48 : f32 to vector<128x64xf32>
      %76 = arith.mulf %75, %74 : vector<128x64xf32>
      %77 = arith.maximumf %74, %76 : vector<128x64xf32>
      %78 = arith.truncf %77 : vector<128x64xf32> to vector<128x64xbf16>
      %c5 = arith.constant 5 : index
      %c0_49 = arith.constant 0 : index
      %c0_50 = arith.constant 0 : index
      %79 = vector.load %arg3[%c5, %c0_49, %c0_50] : memref<16x64x128xbf16, #tpu.memory_space<vmem>>, vector<1x64x128xbf16>
      %80 = vector.shape_cast %79 : vector<1x64x128xbf16> to vector<64x128xbf16>
      %cst_51 = arith.constant dense<0.000000e+00> : vector<128x128xf32>
      %81 = tpu.matmul %78, %80, %cst_51 {dimension_numbers = #tpu.dot_dimension_numbers<[1], [0], [0], [1], [0, 0, 1, 1], [], []>} : vector<128x64xbf16>, vector<64x128xbf16>, vector<128x128xf32> -> vector<128x128xf32>
      %82 = arith.addf %72, %81 : vector<128x128xf32>
      %c768 = arith.constant 768 : index
      %c0_52 = arith.constant 0 : index
      %83 = vector.load %arg1[%c768, %c0_52] : memref<2048x17xbf16, #tpu.memory_space<vmem>>, vector<128x17xbf16>
      %cst_53 = arith.constant dense<0.000000e+00> : vector<128x64xf32>
      %84 = tpu.matmul %83, %21, %cst_53 {dimension_numbers = #tpu.dot_dimension_numbers<[1], [0], [0], [1], [0, 0, 1, 1], [], []>} : vector<128x17xbf16>, vector<17x64xbf16>, vector<128x64xf32> -> vector<128x64xf32>
      %cst_54 = arith.constant 2.000000e-01 : f32
      %85 = vector.broadcast %cst_54 : f32 to vector<128x64xf32>
      %86 = arith.mulf %85, %84 : vector<128x64xf32>
      %87 = arith.maximumf %84, %86 : vector<128x64xf32>
      %88 = arith.truncf %87 : vector<128x64xf32> to vector<128x64xbf16>
      %c6 = arith.constant 6 : index
      %c0_55 = arith.constant 0 : index
      %c0_56 = arith.constant 0 : index
      %89 = vector.load %arg3[%c6, %c0_55, %c0_56] : memref<16x64x128xbf16, #tpu.memory_space<vmem>>, vector<1x64x128xbf16>
      %90 = vector.shape_cast %89 : vector<1x64x128xbf16> to vector<64x128xbf16>
      %cst_57 = arith.constant dense<0.000000e+00> : vector<128x128xf32>
      %91 = tpu.matmul %88, %90, %cst_57 {dimension_numbers = #tpu.dot_dimension_numbers<[1], [0], [0], [1], [0, 0, 1, 1], [], []>} : vector<128x64xbf16>, vector<64x128xbf16>, vector<128x128xf32> -> vector<128x128xf32>
      %92 = arith.addf %82, %91 : vector<128x128xf32>
      %c896 = arith.constant 896 : index
      %c0_58 = arith.constant 0 : index
      %93 = vector.load %arg1[%c896, %c0_58] : memref<2048x17xbf16, #tpu.memory_space<vmem>>, vector<128x17xbf16>
      %cst_59 = arith.constant dense<0.000000e+00> : vector<128x64xf32>
      %94 = tpu.matmul %93, %21, %cst_59 {dimension_numbers = #tpu.dot_dimension_numbers<[1], [0], [0], [1], [0, 0, 1, 1], [], []>} : vector<128x17xbf16>, vector<17x64xbf16>, vector<128x64xf32> -> vector<128x64xf32>
      %cst_60 = arith.constant 2.000000e-01 : f32
      %95 = vector.broadcast %cst_60 : f32 to vector<128x64xf32>
      %96 = arith.mulf %95, %94 : vector<128x64xf32>
      %97 = arith.maximumf %94, %96 : vector<128x64xf32>
      %98 = arith.truncf %97 : vector<128x64xf32> to vector<128x64xbf16>
      %c7 = arith.constant 7 : index
      %c0_61 = arith.constant 0 : index
      %c0_62 = arith.constant 0 : index
      %99 = vector.load %arg3[%c7, %c0_61, %c0_62] : memref<16x64x128xbf16, #tpu.memory_space<vmem>>, vector<1x64x128xbf16>
      %100 = vector.shape_cast %99 : vector<1x64x128xbf16> to vector<64x128xbf16>
      %cst_63 = arith.constant dense<0.000000e+00> : vector<128x128xf32>
      %101 = tpu.matmul %98, %100, %cst_63 {dimension_numbers = #tpu.dot_dimension_numbers<[1], [0], [0], [1], [0, 0, 1, 1], [], []>} : vector<128x64xbf16>, vector<64x128xbf16>, vector<128x128xf32> -> vector<128x128xf32>
      %102 = arith.addf %92, %101 : vector<128x128xf32>
      %c1024 = arith.constant 1024 : index
      %c0_64 = arith.constant 0 : index
      %103 = vector.load %arg1[%c1024, %c0_64] : memref<2048x17xbf16, #tpu.memory_space<vmem>>, vector<128x17xbf16>
      %cst_65 = arith.constant dense<0.000000e+00> : vector<128x64xf32>
      %104 = tpu.matmul %103, %21, %cst_65 {dimension_numbers = #tpu.dot_dimension_numbers<[1], [0], [0], [1], [0, 0, 1, 1], [], []>} : vector<128x17xbf16>, vector<17x64xbf16>, vector<128x64xf32> -> vector<128x64xf32>
      %cst_66 = arith.constant 2.000000e-01 : f32
      %105 = vector.broadcast %cst_66 : f32 to vector<128x64xf32>
      %106 = arith.mulf %105, %104 : vector<128x64xf32>
      %107 = arith.maximumf %104, %106 : vector<128x64xf32>
      %108 = arith.truncf %107 : vector<128x64xf32> to vector<128x64xbf16>
      %c8 = arith.constant 8 : index
      %c0_67 = arith.constant 0 : index
      %c0_68 = arith.constant 0 : index
      %109 = vector.load %arg3[%c8, %c0_67, %c0_68] : memref<16x64x128xbf16, #tpu.memory_space<vmem>>, vector<1x64x128xbf16>
      %110 = vector.shape_cast %109 : vector<1x64x128xbf16> to vector<64x128xbf16>
      %cst_69 = arith.constant dense<0.000000e+00> : vector<128x128xf32>
      %111 = tpu.matmul %108, %110, %cst_69 {dimension_numbers = #tpu.dot_dimension_numbers<[1], [0], [0], [1], [0, 0, 1, 1], [], []>} : vector<128x64xbf16>, vector<64x128xbf16>, vector<128x128xf32> -> vector<128x128xf32>
      %112 = arith.addf %102, %111 : vector<128x128xf32>
      %c1152 = arith.constant 1152 : index
      %c0_70 = arith.constant 0 : index
      %113 = vector.load %arg1[%c1152, %c0_70] : memref<2048x17xbf16, #tpu.memory_space<vmem>>, vector<128x17xbf16>
      %cst_71 = arith.constant dense<0.000000e+00> : vector<128x64xf32>
      %114 = tpu.matmul %113, %21, %cst_71 {dimension_numbers = #tpu.dot_dimension_numbers<[1], [0], [0], [1], [0, 0, 1, 1], [], []>} : vector<128x17xbf16>, vector<17x64xbf16>, vector<128x64xf32> -> vector<128x64xf32>
      %cst_72 = arith.constant 2.000000e-01 : f32
      %115 = vector.broadcast %cst_72 : f32 to vector<128x64xf32>
      %116 = arith.mulf %115, %114 : vector<128x64xf32>
      %117 = arith.maximumf %114, %116 : vector<128x64xf32>
      %118 = arith.truncf %117 : vector<128x64xf32> to vector<128x64xbf16>
      %c9 = arith.constant 9 : index
      %c0_73 = arith.constant 0 : index
      %c0_74 = arith.constant 0 : index
      %119 = vector.load %arg3[%c9, %c0_73, %c0_74] : memref<16x64x128xbf16, #tpu.memory_space<vmem>>, vector<1x64x128xbf16>
      %120 = vector.shape_cast %119 : vector<1x64x128xbf16> to vector<64x128xbf16>
      %cst_75 = arith.constant dense<0.000000e+00> : vector<128x128xf32>
      %121 = tpu.matmul %118, %120, %cst_75 {dimension_numbers = #tpu.dot_dimension_numbers<[1], [0], [0], [1], [0, 0, 1, 1], [], []>} : vector<128x64xbf16>, vector<64x128xbf16>, vector<128x128xf32> -> vector<128x128xf32>
      %122 = arith.addf %112, %121 : vector<128x128xf32>
      %c1280 = arith.constant 1280 : index
      %c0_76 = arith.constant 0 : index
      %123 = vector.load %arg1[%c1280, %c0_76] : memref<2048x17xbf16, #tpu.memory_space<vmem>>, vector<128x17xbf16>
      %cst_77 = arith.constant dense<0.000000e+00> : vector<128x64xf32>
      %124 = tpu.matmul %123, %21, %cst_77 {dimension_numbers = #tpu.dot_dimension_numbers<[1], [0], [0], [1], [0, 0, 1, 1], [], []>} : vector<128x17xbf16>, vector<17x64xbf16>, vector<128x64xf32> -> vector<128x64xf32>
      %cst_78 = arith.constant 2.000000e-01 : f32
      %125 = vector.broadcast %cst_78 : f32 to vector<128x64xf32>
      %126 = arith.mulf %125, %124 : vector<128x64xf32>
      %127 = arith.maximumf %124, %126 : vector<128x64xf32>
      %128 = arith.truncf %127 : vector<128x64xf32> to vector<128x64xbf16>
      %c10 = arith.constant 10 : index
      %c0_79 = arith.constant 0 : index
      %c0_80 = arith.constant 0 : index
      %129 = vector.load %arg3[%c10, %c0_79, %c0_80] : memref<16x64x128xbf16, #tpu.memory_space<vmem>>, vector<1x64x128xbf16>
      %130 = vector.shape_cast %129 : vector<1x64x128xbf16> to vector<64x128xbf16>
      %cst_81 = arith.constant dense<0.000000e+00> : vector<128x128xf32>
      %131 = tpu.matmul %128, %130, %cst_81 {dimension_numbers = #tpu.dot_dimension_numbers<[1], [0], [0], [1], [0, 0, 1, 1], [], []>} : vector<128x64xbf16>, vector<64x128xbf16>, vector<128x128xf32> -> vector<128x128xf32>
      %132 = arith.addf %122, %131 : vector<128x128xf32>
      %c1408 = arith.constant 1408 : index
      %c0_82 = arith.constant 0 : index
      %133 = vector.load %arg1[%c1408, %c0_82] : memref<2048x17xbf16, #tpu.memory_space<vmem>>, vector<128x17xbf16>
      %cst_83 = arith.constant dense<0.000000e+00> : vector<128x64xf32>
      %134 = tpu.matmul %133, %21, %cst_83 {dimension_numbers = #tpu.dot_dimension_numbers<[1], [0], [0], [1], [0, 0, 1, 1], [], []>} : vector<128x17xbf16>, vector<17x64xbf16>, vector<128x64xf32> -> vector<128x64xf32>
      %cst_84 = arith.constant 2.000000e-01 : f32
      %135 = vector.broadcast %cst_84 : f32 to vector<128x64xf32>
      %136 = arith.mulf %135, %134 : vector<128x64xf32>
      %137 = arith.maximumf %134, %136 : vector<128x64xf32>
      %138 = arith.truncf %137 : vector<128x64xf32> to vector<128x64xbf16>
      %c11 = arith.constant 11 : index
      %c0_85 = arith.constant 0 : index
      %c0_86 = arith.constant 0 : index
      %139 = vector.load %arg3[%c11, %c0_85, %c0_86] : memref<16x64x128xbf16, #tpu.memory_space<vmem>>, vector<1x64x128xbf16>
      %140 = vector.shape_cast %139 : vector<1x64x128xbf16> to vector<64x128xbf16>
      %cst_87 = arith.constant dense<0.000000e+00> : vector<128x128xf32>
      %141 = tpu.matmul %138, %140, %cst_87 {dimension_numbers = #tpu.dot_dimension_numbers<[1], [0], [0], [1], [0, 0, 1, 1], [], []>} : vector<128x64xbf16>, vector<64x128xbf16>, vector<128x128xf32> -> vector<128x128xf32>
      %142 = arith.addf %132, %141 : vector<128x128xf32>
      %c1536 = arith.constant 1536 : index
      %c0_88 = arith.constant 0 : index
      %143 = vector.load %arg1[%c1536, %c0_88] : memref<2048x17xbf16, #tpu.memory_space<vmem>>, vector<128x17xbf16>
      %cst_89 = arith.constant dense<0.000000e+00> : vector<128x64xf32>
      %144 = tpu.matmul %143, %21, %cst_89 {dimension_numbers = #tpu.dot_dimension_numbers<[1], [0], [0], [1], [0, 0, 1, 1], [], []>} : vector<128x17xbf16>, vector<17x64xbf16>, vector<128x64xf32> -> vector<128x64xf32>
      %cst_90 = arith.constant 2.000000e-01 : f32
      %145 = vector.broadcast %cst_90 : f32 to vector<128x64xf32>
      %146 = arith.mulf %145, %144 : vector<128x64xf32>
      %147 = arith.maximumf %144, %146 : vector<128x64xf32>
      %148 = arith.truncf %147 : vector<128x64xf32> to vector<128x64xbf16>
      %c12 = arith.constant 12 : index
      %c0_91 = arith.constant 0 : index
      %c0_92 = arith.constant 0 : index
      %149 = vector.load %arg3[%c12, %c0_91, %c0_92] : memref<16x64x128xbf16, #tpu.memory_space<vmem>>, vector<1x64x128xbf16>
      %150 = vector.shape_cast %149 : vector<1x64x128xbf16> to vector<64x128xbf16>
      %cst_93 = arith.constant dense<0.000000e+00> : vector<128x128xf32>
      %151 = tpu.matmul %148, %150, %cst_93 {dimension_numbers = #tpu.dot_dimension_numbers<[1], [0], [0], [1], [0, 0, 1, 1], [], []>} : vector<128x64xbf16>, vector<64x128xbf16>, vector<128x128xf32> -> vector<128x128xf32>
      %152 = arith.addf %142, %151 : vector<128x128xf32>
      %c1664 = arith.constant 1664 : index
      %c0_94 = arith.constant 0 : index
      %153 = vector.load %arg1[%c1664, %c0_94] : memref<2048x17xbf16, #tpu.memory_space<vmem>>, vector<128x17xbf16>
      %cst_95 = arith.constant dense<0.000000e+00> : vector<128x64xf32>
      %154 = tpu.matmul %153, %21, %cst_95 {dimension_numbers = #tpu.dot_dimension_numbers<[1], [0], [0], [1], [0, 0, 1, 1], [], []>} : vector<128x17xbf16>, vector<17x64xbf16>, vector<128x64xf32> -> vector<128x64xf32>
      %cst_96 = arith.constant 2.000000e-01 : f32
      %155 = vector.broadcast %cst_96 : f32 to vector<128x64xf32>
      %156 = arith.mulf %155, %154 : vector<128x64xf32>
      %157 = arith.maximumf %154, %156 : vector<128x64xf32>
      %158 = arith.truncf %157 : vector<128x64xf32> to vector<128x64xbf16>
      %c13 = arith.constant 13 : index
      %c0_97 = arith.constant 0 : index
      %c0_98 = arith.constant 0 : index
      %159 = vector.load %arg3[%c13, %c0_97, %c0_98] : memref<16x64x128xbf16, #tpu.memory_space<vmem>>, vector<1x64x128xbf16>
      %160 = vector.shape_cast %159 : vector<1x64x128xbf16> to vector<64x128xbf16>
      %cst_99 = arith.constant dense<0.000000e+00> : vector<128x128xf32>
      %161 = tpu.matmul %158, %160, %cst_99 {dimension_numbers = #tpu.dot_dimension_numbers<[1], [0], [0], [1], [0, 0, 1, 1], [], []>} : vector<128x64xbf16>, vector<64x128xbf16>, vector<128x128xf32> -> vector<128x128xf32>
      %162 = arith.addf %152, %161 : vector<128x128xf32>
      %c1792 = arith.constant 1792 : index
      %c0_100 = arith.constant 0 : index
      %163 = vector.load %arg1[%c1792, %c0_100] : memref<2048x17xbf16, #tpu.memory_space<vmem>>, vector<128x17xbf16>
      %cst_101 = arith.constant dense<0.000000e+00> : vector<128x64xf32>
      %164 = tpu.matmul %163, %21, %cst_101 {dimension_numbers = #tpu.dot_dimension_numbers<[1], [0], [0], [1], [0, 0, 1, 1], [], []>} : vector<128x17xbf16>, vector<17x64xbf16>, vector<128x64xf32> -> vector<128x64xf32>
      %cst_102 = arith.constant 2.000000e-01 : f32
      %165 = vector.broadcast %cst_102 : f32 to vector<128x64xf32>
      %166 = arith.mulf %165, %164 : vector<128x64xf32>
      %167 = arith.maximumf %164, %166 : vector<128x64xf32>
      %168 = arith.truncf %167 : vector<128x64xf32> to vector<128x64xbf16>
      %c14 = arith.constant 14 : index
      %c0_103 = arith.constant 0 : index
      %c0_104 = arith.constant 0 : index
      %169 = vector.load %arg3[%c14, %c0_103, %c0_104] : memref<16x64x128xbf16, #tpu.memory_space<vmem>>, vector<1x64x128xbf16>
      %170 = vector.shape_cast %169 : vector<1x64x128xbf16> to vector<64x128xbf16>
      %cst_105 = arith.constant dense<0.000000e+00> : vector<128x128xf32>
      %171 = tpu.matmul %168, %170, %cst_105 {dimension_numbers = #tpu.dot_dimension_numbers<[1], [0], [0], [1], [0, 0, 1, 1], [], []>} : vector<128x64xbf16>, vector<64x128xbf16>, vector<128x128xf32> -> vector<128x128xf32>
      %172 = arith.addf %162, %171 : vector<128x128xf32>
      %c1920 = arith.constant 1920 : index
      %c0_106 = arith.constant 0 : index
      %173 = vector.load %arg1[%c1920, %c0_106] : memref<2048x17xbf16, #tpu.memory_space<vmem>>, vector<128x17xbf16>
      %cst_107 = arith.constant dense<0.000000e+00> : vector<128x64xf32>
      %174 = tpu.matmul %173, %21, %cst_107 {dimension_numbers = #tpu.dot_dimension_numbers<[1], [0], [0], [1], [0, 0, 1, 1], [], []>} : vector<128x17xbf16>, vector<17x64xbf16>, vector<128x64xf32> -> vector<128x64xf32>
      %cst_108 = arith.constant 2.000000e-01 : f32
      %175 = vector.broadcast %cst_108 : f32 to vector<128x64xf32>
      %176 = arith.mulf %175, %174 : vector<128x64xf32>
      %177 = arith.maximumf %174, %176 : vector<128x64xf32>
      %178 = arith.truncf %177 : vector<128x64xf32> to vector<128x64xbf16>
      %c15 = arith.constant 15 : index
      %c0_109 = arith.constant 0 : index
      %c0_110 = arith.constant 0 : index
      %179 = vector.load %arg3[%c15, %c0_109, %c0_110] : memref<16x64x128xbf16, #tpu.memory_space<vmem>>, vector<1x64x128xbf16>
      %180 = vector.shape_cast %179 : vector<1x64x128xbf16> to vector<64x128xbf16>
      %cst_111 = arith.constant dense<0.000000e+00> : vector<128x128xf32>
      %181 = tpu.matmul %178, %180, %cst_111 {dimension_numbers = #tpu.dot_dimension_numbers<[1], [0], [0], [1], [0, 0, 1, 1], [], []>} : vector<128x64xbf16>, vector<64x128xbf16>, vector<128x128xf32> -> vector<128x128xf32>
      %182 = arith.addf %172, %181 : vector<128x128xf32>
      %c0_112 = arith.constant 0 : index
      %c0_113 = arith.constant 0 : index
      %183 = vector.load %arg4[%c0_112, %c0_113] : memref<1x128xf32, #tpu.memory_space<vmem>>, vector<1x128xf32>
      %184 = vector.broadcast %183 : vector<1x128xf32> to vector<128x128xf32>
      %185 = arith.addf %182, %184 : vector<128x128xf32>
      %cst_114 = arith.constant dense<0.000000e+00> : vector<128xf32>
      %186 = vector.multi_reduction <add>, %185, %cst_114 [0] : vector<128x128xf32> to vector<128xf32>
      %187 = vector.shape_cast %186 : vector<128xf32> to vector<1x128xf32>
      %cst_115 = arith.constant 7.812500e-03 : f32
      %188 = vector.broadcast %cst_115 : f32 to vector<1x128xf32>
      %189 = arith.mulf %187, %188 : vector<1x128xf32>
      %190 = arith.mulf %185, %185 : vector<128x128xf32>
      %cst_116 = arith.constant dense<0.000000e+00> : vector<128xf32>
      %191 = vector.multi_reduction <add>, %190, %cst_116 [0] : vector<128x128xf32> to vector<128xf32>
      %192 = vector.shape_cast %191 : vector<128xf32> to vector<1x128xf32>
      %cst_117 = arith.constant 7.812500e-03 : f32
      %193 = vector.broadcast %cst_117 : f32 to vector<1x128xf32>
      %194 = arith.mulf %192, %193 : vector<1x128xf32>
      %195 = arith.mulf %189, %189 : vector<1x128xf32>
      %196 = arith.subf %194, %195 : vector<1x128xf32>
      %cst_118 = arith.constant 0.000000e+00 : f32
      %197 = vector.broadcast %cst_118 : f32 to vector<1x128xf32>
      %198 = arith.maximumf %196, %197 : vector<1x128xf32>
      %199 = vector.broadcast %189 : vector<1x128xf32> to vector<128x128xf32>
      %200 = arith.subf %185, %199 : vector<128x128xf32>
      %cst_119 = arith.constant 9.99999974E-6 : f32
      %201 = vector.broadcast %cst_119 : f32 to vector<1x128xf32>
      %202 = arith.addf %198, %201 : vector<1x128xf32>
      %203 = math.rsqrt %202 : vector<1x128xf32>
      %204 = vector.broadcast %203 : vector<1x128xf32> to vector<128x128xf32>
      %205 = arith.mulf %200, %204 : vector<128x128xf32>
      %c0_120 = arith.constant 0 : index
      %c0_121 = arith.constant 0 : index
      %206 = vector.load %arg5[%c0_120, %c0_121] : memref<1x128xf32, #tpu.memory_space<vmem>>, vector<1x128xf32>
      %207 = vector.broadcast %206 : vector<1x128xf32> to vector<128x128xf32>
      %208 = arith.mulf %205, %207 : vector<128x128xf32>
      %c0_122 = arith.constant 0 : index
      %c0_123 = arith.constant 0 : index
      %209 = vector.load %arg6[%c0_122, %c0_123] : memref<1x128xf32, #tpu.memory_space<vmem>>, vector<1x128xf32>
      %210 = vector.broadcast %209 : vector<1x128xf32> to vector<128x128xf32>
      %211 = arith.addf %208, %210 : vector<128x128xf32>
      %cst_124 = arith.constant 2.000000e-01 : f32
      %212 = vector.broadcast %cst_124 : f32 to vector<128x128xf32>
      %213 = arith.mulf %212, %211 : vector<128x128xf32>
      %214 = arith.maximumf %211, %213 : vector<128x128xf32>
      %215 = arith.truncf %214 : vector<128x128xf32> to vector<128x128xbf16>
      %c0_125 = arith.constant 0 : index
      %c0_126 = arith.constant 0 : index
      %216 = vector.load %arg14[%c0_125, %c0_126] : memref<128x128xbf16, #tpu.memory_space<vmem>>, vector<128x128xbf16>
      tpu.vector_store %arg14[%c0_125, %c0_126], %215 {strides = array<i32>} : memref<128x128xbf16, #tpu.memory_space<vmem>>, vector<128x128xbf16>,
      %cst_127 = arith.constant 0.000000e+00 : f32
      %217 = vector.broadcast %cst_127 : f32 to vector<8x1024xf32>
      %c0_128 = arith.constant 0 : index
      %c0_129 = arith.constant 0 : index
      %218 = vector.load %arg15[%c0_128, %c0_129] : memref<8x1024xf32, #tpu.memory_space<vmem>>, vector<8x1024xf32>
      tpu.vector_store %arg15[%c0_128, %c0_129], %217 {strides = array<i32>} : memref<8x1024xf32, #tpu.memory_space<vmem>>, vector<8x1024xf32>,
    } else {
    }
    %c16_i32 = arith.constant 16 : i32
    %3 = arith.muli %arg0, %c16_i32 : i32
    %4 = tpu.assume_multiple %3, 16 : i32
    %c0_i32_1 = arith.constant 0 : i32
    %5 = arith.addi %4, %c0_i32_1 : i32
    %6 = arith.index_cast %5 : i32 to index
    %c0 = arith.constant 0 : index
    %7 = vector.load %arg14[%6, %c0] : memref<128x128xbf16, #tpu.memory_space<vmem>>, vector<8x128xbf16>
    %c8_i32 = arith.constant 8 : i32
    %8 = arith.addi %4, %c8_i32 : i32
    %9 = arith.index_cast %8 : i32 to index
    %c0_2 = arith.constant 0 : index
    %10 = vector.load %arg14[%9, %c0_2] : memref<128x128xbf16, #tpu.memory_space<vmem>>, vector<8x128xbf16>
    %11 = tpu.concatenate %7, %10 in 1 : vector<8x128xbf16>, vector<8x128xbf16> -> vector<8x256xbf16>
    %c0_3 = arith.constant 0 : index
    %c0_4 = arith.constant 0 : index
    %12 = vector.load %arg15[%c0_3, %c0_4] : memref<8x1024xf32, #tpu.memory_space<vmem>>, vector<8x1024xf32>
    %c0_5 = arith.constant 0 : index
    %c0_6 = arith.constant 0 : index
    %c0_7 = arith.constant 0 : index
    %13 = vector.load %arg7[%c0_5, %c0_6, %c0_7] : memref<1x256x1024xbf16, #tpu.memory_space<vmem>>, vector<1x256x1024xbf16>
    %14 = vector.shape_cast %13 : vector<1x256x1024xbf16> to vector<256x1024xbf16>
    %cst = arith.constant dense<0.000000e+00> : vector<8x1024xf32>
    %15 = tpu.matmul %11, %14, %cst {dimension_numbers = #tpu.dot_dimension_numbers<[1], [0], [0], [1], [0, 0, 1, 1], [], []>} : vector<8x256xbf16>, vector<256x1024xbf16>, vector<8x1024xf32> -> vector<8x1024xf32>
    %16 = arith.addf %12, %15 : vector<8x1024xf32>
    %c0_8 = arith.constant 0 : index
    %c0_9 = arith.constant 0 : index
    %17 = vector.load %arg15[%c0_8, %c0_9] : memref<8x1024xf32, #tpu.memory_space<vmem>>, vector<8x1024xf32>
    tpu.vector_store %arg15[%c0_8, %c0_9], %16 {strides = array<i32>} : memref<8x1024xf32, #tpu.memory_space<vmem>>, vector<8x1024xf32>,
    %c7_i32 = arith.constant 7 : i32
    %18 = arith.cmpi eq, %arg0, %c7_i32 : i32
    %19 = arith.extui %18 : i1 to i32
    %c0_i32_10 = arith.constant 0 : i32
    %20 = arith.cmpi ne, %19, %c0_i32_10 : i32
    scf.if %20 {
      %c0_11 = arith.constant 0 : index
      %c0_12 = arith.constant 0 : index
      %21 = vector.load %arg15[%c0_11, %c0_12] : memref<8x1024xf32, #tpu.memory_space<vmem>>, vector<8x1024xf32>
      %c0_13 = arith.constant 0 : index
      %c0_14 = arith.constant 0 : index
      %22 = vector.load %arg8[%c0_13, %c0_14] : memref<1x1024xf32, #tpu.memory_space<vmem>>, vector<1x1024xf32>
      %23 = vector.broadcast %22 : vector<1x1024xf32> to vector<8x1024xf32>
      %24 = arith.addf %21, %23 : vector<8x1024xf32>
      %cst_15 = arith.constant dense<0.000000e+00> : vector<1024xf32>
      %25 = vector.multi_reduction <add>, %24, %cst_15 [0] : vector<8x1024xf32> to vector<1024xf32>
      %26 = vector.shape_cast %25 : vector<1024xf32> to vector<1x1024xf32>
      %cst_16 = arith.constant 1.250000e-01 : f32
      %27 = vector.broadcast %cst_16 : f32 to vector<1x1024xf32>
      %28 = arith.mulf %26, %27 : vector<1x1024xf32>
      %29 = arith.mulf %24, %24 : vector<8x1024xf32>
      %cst_17 = arith.constant dense<0.000000e+00> : vector<1024xf32>
      %30 = vector.multi_reduction <add>, %29, %cst_17 [0] : vector<8x1024xf32> to vector<1024xf32>
      %31 = vector.shape_cast %30 : vector<1024xf32> to vector<1x1024xf32>
      %cst_18 = arith.constant 1.250000e-01 : f32
      %32 = vector.broadcast %cst_18 : f32 to vector<1x1024xf32>
      %33 = arith.mulf %31, %32 : vector<1x1024xf32>
      %34 = arith.mulf %28, %28 : vector<1x1024xf32>
      %35 = arith.subf %33, %34 : vector<1x1024xf32>
      %cst_19 = arith.constant 0.000000e+00 : f32
      %36 = vector.broadcast %cst_19 : f32 to vector<1x1024xf32>
      %37 = arith.maximumf %35, %36 : vector<1x1024xf32>
      %38 = vector.broadcast %28 : vector<1x1024xf32> to vector<8x1024xf32>
      %39 = arith.subf %24, %38 : vector<8x1024xf32>
      %cst_20 = arith.constant 9.99999974E-6 : f32
      %40 = vector.broadcast %cst_20 : f32 to vector<1x1024xf32>
      %41 = arith.addf %37, %40 : vector<1x1024xf32>
      %42 = math.rsqrt %41 : vector<1x1024xf32>
      %43 = vector.broadcast %42 : vector<1x1024xf32> to vector<8x1024xf32>
      %44 = arith.mulf %39, %43 : vector<8x1024xf32>
      %c0_21 = arith.constant 0 : index
      %c0_22 = arith.constant 0 : index
      %45 = vector.load %arg9[%c0_21, %c0_22] : memref<1x1024xf32, #tpu.memory_space<vmem>>, vector<1x1024xf32>
      %46 = vector.broadcast %45 : vector<1x1024xf32> to vector<8x1024xf32>
      %47 = arith.mulf %44, %46 : vector<8x1024xf32>
      %c0_23 = arith.constant 0 : index
      %c0_24 = arith.constant 0 : index
      %48 = vector.load %arg10[%c0_23, %c0_24] : memref<1x1024xf32, #tpu.memory_space<vmem>>, vector<1x1024xf32>
      %49 = vector.broadcast %48 : vector<1x1024xf32> to vector<8x1024xf32>
      %50 = arith.addf %47, %49 : vector<8x1024xf32>
      %cst_25 = arith.constant 2.000000e-01 : f32
      %51 = vector.broadcast %cst_25 : f32 to vector<8x1024xf32>
      %52 = arith.mulf %51, %50 : vector<8x1024xf32>
      %53 = arith.maximumf %50, %52 : vector<8x1024xf32>
      %c0_26 = arith.constant 0 : index
      %c0_27 = arith.constant 0 : index
      %54 = vector.load %arg11[%c0_26, %c0_27] : memref<1x1024xf32, #tpu.memory_space<vmem>>, vector<1x1024xf32>
      %55 = vector.broadcast %54 : vector<1x1024xf32> to vector<8x1024xf32>
      %56 = arith.mulf %53, %55 : vector<8x1024xf32>
      %cst_28 = arith.constant dense<0.000000e+00> : vector<8xf32>
      %57 = vector.multi_reduction <add>, %56, %cst_28 [1] : vector<8x1024xf32> to vector<8xf32>
      %58 = vector.shape_cast %57 : vector<8xf32> to vector<8x1xf32>
      %c0_29 = arith.constant 0 : index
      %c0_30 = arith.constant 0 : index
      %59 = vector.load %arg12[%c0_29, %c0_30] : memref<1x1xf32, #tpu.memory_space<vmem>>, vector<1x1xf32>
      %60 = vector.broadcast %59 : vector<1x1xf32> to vector<8x1xf32>
      %61 = arith.addf %58, %60 : vector<8x1xf32>
      %62 = arith.negf %61 : vector<8x1xf32>
      %63 = math.exp %62 : vector<8x1xf32>
      %cst_31 = arith.constant 1.000000e+00 : f32
      %64 = vector.broadcast %cst_31 : f32 to vector<8x1xf32>
      %65 = arith.addf %64, %63 : vector<8x1xf32>
      %66 = arith.divf %64, %65 : vector<8x1xf32>
      %c0_32 = arith.constant 0 : index
      %c0_33 = arith.constant 0 : index
      %67 = vector.load %arg13[%c0_32, %c0_33] : memref<8x1xf32, #tpu.memory_space<vmem>>, vector<8x1xf32>
      tpu.vector_store %arg13[%c0_32, %c0_33], %66 {strides = array<i32>} : memref<8x1xf32, #tpu.memory_space<vmem>>, vector<8x1xf32>,
    } else {
    }
    return
  }
  func.func @transform_0(%arg0: i32) -> (i32, i32) {
    %c0_i32 = arith.constant 0 : i32
    %c0_i32_0 = arith.constant 0 : i32
    %c0_i32_1 = arith.constant 0 : i32
    return %c0_i32, %c0_i32_0 : i32, i32
  }
  func.func @transform_1(%arg0: i32) -> (i32, i32) {
    %c0_i32 = arith.constant 0 : i32
    %c0_i32_0 = arith.constant 0 : i32
    %c0_i32_1 = arith.constant 0 : i32
    return %c0_i32, %c0_i32_0 : i32, i32
  }
  func.func @transform_2(%arg0: i32) -> (i32, i32, i32) {
    %c0_i32 = arith.constant 0 : i32
    %c0_i32_0 = arith.constant 0 : i32
    %c0_i32_1 = arith.constant 0 : i32
    %c0_i32_2 = arith.constant 0 : i32
    return %c0_i32, %c0_i32_0, %c0_i32_1 : i32, i32, i32
  }
  func.func @transform_3(%arg0: i32) -> (i32, i32) {
    %c0_i32 = arith.constant 0 : i32
    %c0_i32_0 = arith.constant 0 : i32
    %c0_i32_1 = arith.constant 0 : i32
    return %c0_i32, %c0_i32_0 : i32, i32
  }
  func.func @transform_4(%arg0: i32) -> (i32, i32) {
    %c0_i32 = arith.constant 0 : i32
    %c0_i32_0 = arith.constant 0 : i32
    %c0_i32_1 = arith.constant 0 : i32
    return %c0_i32, %c0_i32_0 : i32, i32
  }
  func.func @transform_5(%arg0: i32) -> (i32, i32) {
    %c0_i32 = arith.constant 0 : i32
    %c0_i32_0 = arith.constant 0 : i32
    %c0_i32_1 = arith.constant 0 : i32
    return %c0_i32, %c0_i32_0 : i32, i32
  }
  func.func @transform_6(%arg0: i32) -> (i32, i32, i32) {
    %c0_i32 = arith.constant 0 : i32
    %c0_i32_0 = arith.constant 0 : i32
    %c0_i32_1 = arith.constant 0 : i32
    return %arg0, %c0_i32, %c0_i32_0 : i32, i32, i32
  }
  func.func @transform_7(%arg0: i32) -> (i32, i32) {
    %c0_i32 = arith.constant 0 : i32
    %c0_i32_0 = arith.constant 0 : i32
    %c0_i32_1 = arith.constant 0 : i32
    return %c0_i32, %c0_i32_0 : i32, i32
  }
  func.func @transform_8(%arg0: i32) -> (i32, i32) {
    %c0_i32 = arith.constant 0 : i32
    %c0_i32_0 = arith.constant 0 : i32
    %c0_i32_1 = arith.constant 0 : i32
    return %c0_i32, %c0_i32_0 : i32, i32
  }
  func.func @transform_9(%arg0: i32) -> (i32, i32) {
    %c0_i32 = arith.constant 0 : i32
    %c0_i32_0 = arith.constant 0 : i32
    %c0_i32_1 = arith.constant 0 : i32
    return %c0_i32, %c0_i32_0 : i32, i32
  }
  func.func @transform_10(%arg0: i32) -> (i32, i32) {
    %c0_i32 = arith.constant 0 : i32
    %c0_i32_0 = arith.constant 0 : i32
    %c0_i32_1 = arith.constant 0 : i32
    return %c0_i32, %c0_i32_0 : i32, i32
  }
  func.func @transform_11(%arg0: i32) -> (i32, i32) {
    %c0_i32 = arith.constant 0 : i32
    %c0_i32_0 = arith.constant 0 : i32
    %c0_i32_1 = arith.constant 0 : i32
    return %c0_i32, %c0_i32_0 : i32, i32
  }
  func.func @transform_12(%arg0: i32) -> (i32, i32) {
    %c0_i32 = arith.constant 0 : i32
    %c0_i32_0 = arith.constant 0 : i32
    %c0_i32_1 = arith.constant 0 : i32
    return %c0_i32, %c0_i32_0 : i32, i32
  }
}

</mosaic_0001>

<llo_original>
// kernel: discriminator_forward.1
$region0: #{discriminator_forward.1}
  #allocation0 [shape = 'u32[]', space=smem, size = 0x4, offset = 0x4, fixed_abs, tag = 'smem constant byte address 0x4 - core index']
  #allocation1 [shape = 'u32[144,128]{1,0:T(1,128)}', space=vmem, size = 0x12000, scoped, tag = 'internal scratch']
  #allocation2 [shape = 'bf16[128,128]{1,0:T(8,128)(2,1)}', space=vmem, size = 0x8000, scoped, tag = 'scratch operand']
  #allocation3 [shape = 'f32[8,1024]{1,0:T(8,128)}', space=vmem, size = 0x8000, scoped, tag = 'scratch operand']
  #allocation4 [shape = 'f32[1,1]{1,0:T(1,128)S(1)}', space=vmem, size = 0x200, scoped, tag = 'scoped memory for discriminator_forward.1']
  %s0 = inlined_call_operand.vmem [shape: bf16[2048,17], index: 0, kind: input, shape index: {}]
  %s1 = inlined_call_operand.vmem [shape: bf16[17,64], index: 1, kind: input, shape index: {}]
  %s2 = inlined_call_operand.vmem [shape: bf16[16,64,128], index: 2, kind: input, shape index: {}]
  %s3 = inlined_call_operand.vmem [shape: f32[1,128], index: 3, kind: input, shape index: {}]
  %s4 = inlined_call_operand.vmem [shape: f32[1,128], index: 4, kind: input, shape index: {}]
  %s5 = inlined_call_operand.vmem [shape: f32[1,128], index: 5, kind: input, shape index: {}]
  %s6 = inlined_call_operand.vmem [shape: bf16[8,256,1024], index: 6, kind: input, shape index: {}]
  %s7 = inlined_call_operand.vmem [shape: f32[1,1024], index: 7, kind: input, shape index: {}]
  %s8 = inlined_call_operand.vmem [shape: f32[1,1024], index: 8, kind: input, shape index: {}]
  %s9 = inlined_call_operand.vmem [shape: f32[1,1024], index: 9, kind: input, shape index: {}]
  %s10 = inlined_call_operand.vmem [shape: f32[1,1024], index: 10, kind: input, shape index: {}]
  %s11 = inlined_call_operand.<no memory space> [shape: f32[1,1], index: 11, kind: input, shape index: {}]
  %s12 = inlined_call_operand.vmem [shape: f32[8,1], index: 12, kind: output, shape index: {}]
  %s13 = sld [smem:[#allocation0]]
  $region89: #{discriminator_forward.1} parent=0
    _
  %s15 = ssub.s32 1, %s13
  %s16 = scalar_select 0, %s15, %s13
  %v17 = vstv %s11
  %18 = vst [vmem:[#allocation4] sm:$0x1] %v17
  loop: start=0, step=1, limit=10
  $region2: #{discriminator_forward.1} parent=0 // loop_pre_header
    _
  $region3: #{discriminator_forward.1} parent=0 // loop_header
    %s20 = sphi 0, %s24
    %p21 = scmp.ge.s32.totalorder %s20, 10
    %s28 = sphi 0, %s28
    %s30 = sphi 0, %s28
    %s31 = sphi 0, %s30
    %s45 = sphi 0, %s31
    %s49 = sphi 0, %s49
    %s51 = sphi 0, %s49
    %s52 = sphi 0, %s51
    %s66 = sphi 0, %s52
    %s70 = sphi 0, %s70
    %s72 = sphi 0, %s70
    %s73 = sphi 0, %s72
    %s87 = sphi 0, %s73
    %s91 = sphi 0, %s91
    %s93 = sphi 0, %s91
    %s94 = sphi 0, %s93
    %s108 = sphi 0, %s94
    %s112 = sphi 0, %s112
    %s114 = sphi 0, %s112
    %s115 = sphi 0, %s114
    %s129 = sphi 0, %s115
    %s133 = sphi 0, %s133
    %s135 = sphi 0, %s133
    %s136 = sphi 0, %s135
    %s150 = sphi 0, %s136
    %s156 = sphi 0, %s158
    %s159 = sphi 0, %s156
    %s160 = sphi 0, %s159
    %s176 = sphi 0, %s160
    %s180 = sphi 0, %s180
    %s182 = sphi 0, %s180
    %s183 = sphi 0, %s182
    %s197 = sphi 0, %s183
    %s201 = sphi 0, %s201
    %s203 = sphi 0, %s201
    %s204 = sphi 0, %s203
    %s218 = sphi 0, %s204
    %s222 = sphi 0, %s222
    %s224 = sphi 0, %s222
    %s225 = sphi 0, %s224
    %s239 = sphi 0, %s225
    %s243 = sphi 0, %s243
    %s245 = sphi 0, %s243
    %s246 = sphi 0, %s245
    %s260 = sphi 0, %s246
    %s264 = sphi 0, %s264
    %s266 = sphi 0, %s264
    %s267 = sphi 0, %s266
    %s281 = sphi 0, %s267
    %s285 = sphi 0, %s285
    %s287 = sphi 0, %s285
    %s288 = sphi 0, %s287
    %s302 = sphi 0, %s288
  $region4: #{discriminator_forward.1} parent=0 // loop_header_branch
    %23 = sbr.rel (%p21) target = $region8
  $region5: #{discriminator_forward.1} parent=0 // loop_body
    %s25 = ssub.s32 %s20, 1
    %s26 = ssub.s32 %s20, 2
    %s27 = sadd.s32 %s20, 1
    %s29 = sadd.s32 %s28, 1
    %p32 = scmp.eq.s32.totalorder %s20, 7
    %p33 = scmp.ne.s32.totalorder %s28, %s30
    %p34 = scmp.eq.s32.totalorder %s20, 0
    %p35 = por %p33, %p34
    %p36 = scmp.ne.s32.totalorder %s28, %s30
    %p37 = scmp.eq.s32.totalorder %s25, 7
    %p38 = por %p36, %p37
    %p39 = scmp.ne.s32.totalorder %s30, %s31
    %p40 = scmp.eq.s32.totalorder %s25, 0
    %p41 = por %p39, %p40
    %p42 = scmp.ne.s32.totalorder %s30, %s31
    %p43 = scmp.eq.s32.totalorder %s26, 7
    %p44 = por %p42, %p43
    %p46 = scmp.ne.s32.totalorder %s31, %s45
    %p47 = scmp.eq.s32.totalorder %s26, 0
    %p48 = por %p46, %p47
    %s50 = sadd.s32 %s49, 1
    %p53 = scmp.eq.s32.totalorder %s20, 7
    %p54 = scmp.ne.s32.totalorder %s49, %s51
    %p55 = scmp.eq.s32.totalorder %s20, 0
    %p56 = por %p54, %p55
    %p57 = scmp.ne.s32.totalorder %s49, %s51
    %p58 = scmp.eq.s32.totalorder %s25, 7
    %p59 = por %p57, %p58
    %p60 = scmp.ne.s32.totalorder %s51, %s52
    %p61 = scmp.eq.s32.totalorder %s25, 0
    %p62 = por %p60, %p61
    %p63 = scmp.ne.s32.totalorder %s51, %s52
    %p64 = scmp.eq.s32.totalorder %s26, 7
    %p65 = por %p63, %p64
    %p67 = scmp.ne.s32.totalorder %s52, %s66
    %p68 = scmp.eq.s32.totalorder %s26, 0
    %p69 = por %p67, %p68
    %s71 = sadd.s32 %s70, 1
    %p74 = scmp.eq.s32.totalorder %s20, 7
    %p75 = scmp.ne.s32.totalorder %s70, %s72
    %p76 = scmp.eq.s32.totalorder %s20, 0
    %p77 = por %p75, %p76
    %p78 = scmp.ne.s32.totalorder %s70, %s72
    %p79 = scmp.eq.s32.totalorder %s25, 7
    %p80 = por %p78, %p79
    %p81 = scmp.ne.s32.totalorder %s72, %s73
    %p82 = scmp.eq.s32.totalorder %s25, 0
    %p83 = por %p81, %p82
    %p84 = scmp.ne.s32.totalorder %s72, %s73
    %p85 = scmp.eq.s32.totalorder %s26, 7
    %p86 = por %p84, %p85
    %p88 = scmp.ne.s32.totalorder %s73, %s87
    %p89 = scmp.eq.s32.totalorder %s26, 0
    %p90 = por %p88, %p89
    %s92 = sadd.s32 %s91, 1
    %p95 = scmp.eq.s32.totalorder %s20, 7
    %p96 = scmp.ne.s32.totalorder %s91, %s93
    %p97 = scmp.eq.s32.totalorder %s20, 0
    %p98 = por %p96, %p97
    %p99 = scmp.ne.s32.totalorder %s91, %s93
    %p100 = scmp.eq.s32.totalorder %s25, 7
    %p101 = por %p99, %p100
    %p102 = scmp.ne.s32.totalorder %s93, %s94
    %p103 = scmp.eq.s32.totalorder %s25, 0
    %p104 = por %p102, %p103
    %p105 = scmp.ne.s32.totalorder %s93, %s94
    %p106 = scmp.eq.s32.totalorder %s26, 7
    %p107 = por %p105, %p106
    %p109 = scmp.ne.s32.totalorder %s94, %s108
    %p110 = scmp.eq.s32.totalorder %s26, 0
    %p111 = por %p109, %p110
    %s113 = sadd.s32 %s112, 1
    %p116 = scmp.eq.s32.totalorder %s20, 7
    %p117 = scmp.ne.s32.totalorder %s112, %s114
    %p118 = scmp.eq.s32.totalorder %s20, 0
    %p119 = por %p117, %p118
    %p120 = scmp.ne.s32.totalorder %s112, %s114
    %p121 = scmp.eq.s32.totalorder %s25, 7
    %p122 = por %p120, %p121
    %p123 = scmp.ne.s32.totalorder %s114, %s115
    %p124 = scmp.eq.s32.totalorder %s25, 0
    %p125 = por %p123, %p124
    %p126 = scmp.ne.s32.totalorder %s114, %s115
    %p127 = scmp.eq.s32.totalorder %s26, 7
    %p128 = por %p126, %p127
    %p130 = scmp.ne.s32.totalorder %s115, %s129
    %p131 = scmp.eq.s32.totalorder %s26, 0
    %p132 = por %p130, %p131
    %s134 = sadd.s32 %s133, 1
    %p137 = scmp.eq.s32.totalorder %s20, 7
    %p138 = scmp.ne.s32.totalorder %s133, %s135
    %p139 = scmp.eq.s32.totalorder %s20, 0
    %p140 = por %p138, %p139
    %p141 = scmp.ne.s32.totalorder %s133, %s135
    %p142 = scmp.eq.s32.totalorder %s25, 7
    %p143 = por %p141, %p142
    %p144 = scmp.ne.s32.totalorder %s135, %s136
    %p145 = scmp.eq.s32.totalorder %s25, 0
    %p146 = por %p144, %p145
    %p147 = scmp.ne.s32.totalorder %s135, %s136
    %p148 = scmp.eq.s32.totalorder %s26, 7
    %p149 = por %p147, %p148
    %p151 = scmp.ne.s32.totalorder %s136, %s150
    %p152 = scmp.eq.s32.totalorder %s26, 0
    %p153 = por %p151, %p152
    %s154 = ssub.s32 %s20, %s27
    %p155 = scmp.eq.s32.totalorder %s154, 0
    %s157 = sadd.s32 %s156, 1
    %s158 = scalar_select %p155, %s156, %s157
    %p161 = pneg %p155
    %p162 = scmp.eq.s32.totalorder %s20, 7
    %p163 = por %p161, %p162
    %p164 = scmp.ne.s32.totalorder %s156, %s159
    %p165 = scmp.eq.s32.totalorder %s20, 0
    %p166 = por %p164, %p165
    %p167 = scmp.ne.s32.totalorder %s156, %s159
    %p168 = scmp.eq.s32.totalorder %s25, 7
    %p169 = por %p167, %p168
    %p170 = scmp.ne.s32.totalorder %s159, %s160
    %p171 = scmp.eq.s32.totalorder %s25, 0
    %p172 = por %p170, %p171
    %p173 = scmp.ne.s32.totalorder %s159, %s160
    %p174 = scmp.eq.s32.totalorder %s26, 7
    %p175 = por %p173, %p174
    %p177 = scmp.ne.s32.totalorder %s160, %s176
    %p178 = scmp.eq.s32.totalorder %s26, 0
    %p179 = por %p177, %p178
    %s181 = sadd.s32 %s180, 1
    %p184 = scmp.eq.s32.totalorder %s20, 7
    %p185 = scmp.ne.s32.totalorder %s180, %s182
    %p186 = scmp.eq.s32.totalorder %s20, 0
    %p187 = por %p185, %p186
    %p188 = scmp.ne.s32.totalorder %s180, %s182
    %p189 = scmp.eq.s32.totalorder %s25, 7
    %p190 = por %p188, %p189
    %p191 = scmp.ne.s32.totalorder %s182, %s183
    %p192 = scmp.eq.s32.totalorder %s25, 0
    %p193 = por %p191, %p192
    %p194 = scmp.ne.s32.totalorder %s182, %s183
    %p195 = scmp.eq.s32.totalorder %s26, 7
    %p196 = por %p194, %p195
    %p198 = scmp.ne.s32.totalorder %s183, %s197
    %p199 = scmp.eq.s32.totalorder %s26, 0
    %p200 = por %p198, %p199
    %s202 = sadd.s32 %s201, 1
    %p205 = scmp.eq.s32.totalorder %s20, 7
    %p206 = scmp.ne.s32.totalorder %s201, %s203
    %p207 = scmp.eq.s32.totalorder %s20, 0
    %p208 = por %p206, %p207
    %p209 = scmp.ne.s32.totalorder %s201, %s203
    %p210 = scmp.eq.s32.totalorder %s25, 7
    %p211 = por %p209, %p210
    %p212 = scmp.ne.s32.totalorder %s203, %s204
    %p213 = scmp.eq.s32.totalorder %s25, 0
    %p214 = por %p212, %p213
    %p215 = scmp.ne.s32.totalorder %s203, %s204
    %p216 = scmp.eq.s32.totalorder %s26, 7
    %p217 = por %p215, %p216
    %p219 = scmp.ne.s32.totalorder %s204, %s218
    %p220 = scmp.eq.s32.totalorder %s26, 0
    %p221 = por %p219, %p220
    %s223 = sadd.s32 %s222, 1
    %p226 = scmp.eq.s32.totalorder %s20, 7
    %p227 = scmp.ne.s32.totalorder %s222, %s224
    %p228 = scmp.eq.s32.totalorder %s20, 0
    %p229 = por %p227, %p228
    %p230 = scmp.ne.s32.totalorder %s222, %s224
    %p231 = scmp.eq.s32.totalorder %s25, 7
    %p232 = por %p230, %p231
    %p233 = scmp.ne.s32.totalorder %s224, %s225
    %p234 = scmp.eq.s32.totalorder %s25, 0
    %p235 = por %p233, %p234
    %p236 = scmp.ne.s32.totalorder %s224, %s225
    %p237 = scmp.eq.s32.totalorder %s26, 7
    %p238 = por %p236, %p237
    %p240 = scmp.ne.s32.totalorder %s225, %s239
    %p241 = scmp.eq.s32.totalorder %s26, 0
    %p242 = por %p240, %p241
    %s244 = sadd.s32 %s243, 1
    %p247 = scmp.eq.s32.totalorder %s20, 7
    %p248 = scmp.ne.s32.totalorder %s243, %s245
    %p249 = scmp.eq.s32.totalorder %s20, 0
    %p250 = por %p248, %p249
    %p251 = scmp.ne.s32.totalorder %s243, %s245
    %p252 = scmp.eq.s32.totalorder %s25, 7
    %p253 = por %p251, %p252
    %p254 = scmp.ne.s32.totalorder %s245, %s246
    %p255 = scmp.eq.s32.totalorder %s25, 0
    %p256 = por %p254, %p255
    %p257 = scmp.ne.s32.totalorder %s245, %s246
    %p258 = scmp.eq.s32.totalorder %s26, 7
    %p259 = por %p257, %p258
    %p261 = scmp.ne.s32.totalorder %s246, %s260
    %p262 = scmp.eq.s32.totalorder %s26, 0
    %p263 = por %p261, %p262
    %s265 = sadd.s32 %s264, 1
    %p268 = scmp.eq.s32.totalorder %s20, 7
    %p269 = scmp.ne.s32.totalorder %s264, %s266
    %p270 = scmp.eq.s32.totalorder %s20, 0
    %p271 = por %p269, %p270
    %p272 = scmp.ne.s32.totalorder %s264, %s266
    %p273 = scmp.eq.s32.totalorder %s25, 7
    %p274 = por %p272, %p273
    %p275 = scmp.ne.s32.totalorder %s266, %s267
    %p276 = scmp.eq.s32.totalorder %s25, 0
    %p277 = por %p275, %p276
    %p278 = scmp.ne.s32.totalorder %s266, %s267
    %p279 = scmp.eq.s32.totalorder %s26, 7
    %p280 = por %p278, %p279
    %p282 = scmp.ne.s32.totalorder %s267, %s281
    %p283 = scmp.eq.s32.totalorder %s26, 0
    %p284 = por %p282, %p283
    %s286 = sadd.s32 %s285, 1
    %p289 = scmp.eq.s32.totalorder %s20, 7
    %p290 = scmp.ne.s32.totalorder %s285, %s287
    %p291 = scmp.eq.s32.totalorder %s20, 0
    %p292 = por %p290, %p291
    %p293 = scmp.ne.s32.totalorder %s285, %s287
    %p294 = scmp.eq.s32.totalorder %s25, 7
    %p295 = por %p293, %p294
    %p296 = scmp.ne.s32.totalorder %s287, %s288
    %p297 = scmp.eq.s32.totalorder %s25, 0
    %p298 = por %p296, %p297
    %p299 = scmp.ne.s32.totalorder %s287, %s288
    %p300 = scmp.eq.s32.totalorder %s26, 7
    %p301 = por %p299, %p300
    %p303 = scmp.ne.s32.totalorder %s288, %s302
    %p304 = scmp.eq.s32.totalorder %s26, 0
    %p305 = por %p303, %p304
    %p306 = scmp.le.s32.totalorder 1, %s20
    %p307 = scmp.lt.s32.totalorder %s20, 9
    %p308 = pnand %p306, %p307
    %p309 = pneg %p308
    // Predicated region
    $region9: #{discriminator_forward.1} parent=5 // pred_check
      _
    $region10: #{discriminator_forward.1} parent=5 // pred_check_branch
      %311 = sbr.rel (%p308) target = $region12
    $region11: #{discriminator_forward.1} parent=5 // pred_region
      %s312 = ssub.s32 %s20, 1
      // Predicated region
      $region13: #{discriminator_forward.1} parent=11 // pred_check
        %p313 = pneg %p41
      $region14: #{discriminator_forward.1} parent=11 // pred_check_branch
        %315 = sbr.rel (%p313) target = $region16
      $region15: #{discriminator_forward.1} parent=11 // pred_region
        _
      $region16: #{discriminator_forward.1} parent=11 // pred_fallthru
        _
      // Predicated region
      $region17: #{discriminator_forward.1} parent=11 // pred_check
        %p316 = pneg %p62
      $region18: #{discriminator_forward.1} parent=11 // pred_check_branch
        %318 = sbr.rel (%p316) target = $region20
      $region19: #{discriminator_forward.1} parent=11 // pred_region
        _
      $region20: #{discriminator_forward.1} parent=11 // pred_fallthru
        _
      // Predicated region
      $region21: #{discriminator_forward.1} parent=11 // pred_check
        %p319 = pneg %p83
      $region22: #{discriminator_forward.1} parent=11 // pred_check_branch
        %321 = sbr.rel (%p319) target = $region24
      $region23: #{discriminator_forward.1} parent=11 // pred_region
        _
      $region24: #{discriminator_forward.1} parent=11 // pred_fallthru
        _
      // Predicated region
      $region25: #{discriminator_forward.1} parent=11 // pred_check
        %p322 = pneg %p104
      $region26: #{discriminator_forward.1} parent=11 // pred_check_branch
        %324 = sbr.rel (%p322) target = $region28
      $region27: #{discriminator_forward.1} parent=11 // pred_region
        _
      $region28: #{discriminator_forward.1} parent=11 // pred_fallthru
        _
      // Predicated region
      $region29: #{discriminator_forward.1} parent=11 // pred_check
        %p325 = pneg %p125
      $region30: #{discriminator_forward.1} parent=11 // pred_check_branch
        %327 = sbr.rel (%p325) target = $region32
      $region31: #{discriminator_forward.1} parent=11 // pred_region
        _
      $region32: #{discriminator_forward.1} parent=11 // pred_fallthru
        _
      // Predicated region
      $region33: #{discriminator_forward.1} parent=11 // pred_check
        %p328 = pneg %p146
      $region34: #{discriminator_forward.1} parent=11 // pred_check_branch
        %330 = sbr.rel (%p328) target = $region36
      $region35: #{discriminator_forward.1} parent=11 // pred_region
        _
      $region36: #{discriminator_forward.1} parent=11 // pred_fallthru
        _
      // Predicated region
      $region37: #{discriminator_forward.1} parent=11 // pred_check
        %p331 = pneg %p193
      $region38: #{discriminator_forward.1} parent=11 // pred_check_branch
        %333 = sbr.rel (%p331) target = $region40
      $region39: #{discriminator_forward.1} parent=11 // pred_region
        _
      $region40: #{discriminator_forward.1} parent=11 // pred_fallthru
        _
      // Predicated region
      $region41: #{discriminator_forward.1} parent=11 // pred_check
        %p334 = pneg %p214
      $region42: #{discriminator_forward.1} parent=11 // pred_check_branch
        %336 = sbr.rel (%p334) target = $region44
      $region43: #{discriminator_forward.1} parent=11 // pred_region
        _
      $region44: #{discriminator_forward.1} parent=11 // pred_fallthru
        _
      // Predicated region
      $region45: #{discriminator_forward.1} parent=11 // pred_check
        %p337 = pneg %p235
      $region46: #{discriminator_forward.1} parent=11 // pred_check_branch
        %339 = sbr.rel (%p337) target = $region48
      $region47: #{discriminator_forward.1} parent=11 // pred_region
        _
      $region48: #{discriminator_forward.1} parent=11 // pred_fallthru
        _
      // Predicated region
      $region49: #{discriminator_forward.1} parent=11 // pred_check
        %p340 = pneg %p256
      $region50: #{discriminator_forward.1} parent=11 // pred_check_branch
        %342 = sbr.rel (%p340) target = $region52
      $region51: #{discriminator_forward.1} parent=11 // pred_region
        _
      $region52: #{discriminator_forward.1} parent=11 // pred_fallthru
        _
      // Predicated region
      $region53: #{discriminator_forward.1} parent=11 // pred_check
        %p343 = pneg %p277
      $region54: #{discriminator_forward.1} parent=11 // pred_check_branch
        %345 = sbr.rel (%p343) target = $region56
      $region55: #{discriminator_forward.1} parent=11 // pred_region
        _
      $region56: #{discriminator_forward.1} parent=11 // pred_fallthru
        _
    $region12: #{discriminator_forward.1} parent=5 // pred_fallthru
      _
    %p346 = scmp.lt.s32.totalorder %s20, 8
    // Predicated region
    $region57: #{discriminator_forward.1} parent=5 // pred_check
      %p347 = pneg %p346
    $region58: #{discriminator_forward.1} parent=5 // pred_check_branch
      %349 = sbr.rel (%p347) target = $region60
    $region59: #{discriminator_forward.1} parent=5 // pred_region
      // Predicated region
      $region61: #{discriminator_forward.1} parent=59 // pred_check
        %p350 = pneg %p166
      $region62: #{discriminator_forward.1} parent=59 // pred_check_branch
        %352 = sbr.rel (%p350) target = $region64
      $region63: #{discriminator_forward.1} parent=59 // pred_region
        %p353 = scmp.lt.s32.totalorder %s20, 7
        %s354 = scalar_select %p353, %s20, 7
        %s355 = smul.addr %s354, 256
        %s356 = smul.addr %s355, 4
        %s357 = scalar_lea.vmem %s6, %s356
      $region64: #{discriminator_forward.1} parent=59 // pred_fallthru
        _
    $region60: #{discriminator_forward.1} parent=5 // pred_fallthru
      _
    %p358 = scmp.le.s32.totalorder 1, %s20
    %p359 = scmp.lt.s32.totalorder %s20, 9
    %p360 = pnand %p358, %p359
    %p361 = pneg %p360
    // Predicated region
    $region65: #{discriminator_forward.1} parent=5 // pred_check
      _
    $region66: #{discriminator_forward.1} parent=5 // pred_check_branch
      %363 = sbr.rel (%p360) target = $region68
    $region67: #{discriminator_forward.1} parent=5 // pred_region
      %s364 = ssub.s32 %s20, 1
      %p365 = pneg %p41
      %p366 = pneg %p38
      %p367 = pneg %p62
      %p368 = pneg %p59
      %p369 = pneg %p83
      %p370 = pneg %p80
      %p371 = pneg %p104
      %p372 = pneg %p101
      %p373 = pneg %p125
      %p374 = pneg %p122
      %p375 = pneg %p146
      %p376 = pneg %p143
      %p377 = scmp.lt.s32.totalorder %s25, 7
      %s378 = scalar_select %p377, %s25, 7
      %s379 = smul.addr %s378, 256
      %s380 = smul.addr %s379, 4
      %s381 = scalar_lea.vmem %s6, %s380
      %p382 = pneg %p172
      %p383 = pneg %p169
      %p384 = pneg %p193
      %p385 = pneg %p190
      %p386 = pneg %p214
      %p387 = pneg %p211
      %p388 = pneg %p235
      %p389 = pneg %p232
      %p390 = pneg %p256
      %p391 = pneg %p253
      %p392 = pneg %p277
      %p393 = pneg %p274
      %p394 = pneg %p298
      %p395 = pneg %p295
      %p396 = scmp.lt.s32.totalorder %s25, 7
      %s397 = scalar_select %p396, %s25, 7
      %s398 = smul.addr %s397, 256
      %s399 = smul.addr %s398, 4
      %s400 = scalar_lea.vmem %s6, %s399
      %p402 = scmp.eq.s32.totalorder %s25, 0
      // Predicated region
      $region69: #{discriminator_forward.1} parent=67 // pred_check
        %p403 = pneg %p402
      $region70: #{discriminator_forward.1} parent=67 // pred_check_branch
        %405 = sbr.rel (%p403) target = $region72
      $region71: #{discriminator_forward.1} parent=67 // pred_region
        %v406 = vld [vmem:[%s1] sm:$0xf]
        %v407 = vld [vmem:[%s1 + $0x4] sm:$0xf]
        %v408 = vld [vmem:[%s1 + $0x8] sm:$0x1]
        %v409 = vld [vmem:[%s0] sm:$0xf]
        %v410 = vld [vmem:[%s0 + $0x4] sm:$0xf]
        %v411 = vld [vmem:[%s0 + $0x8] sm:$0xf]
        %v412 = vld [vmem:[%s0 + $0xc] sm:$0xf]
        %v413 = vld [vmem:[%s0 + $0x10] sm:$0xf]
        %v414 = vld [vmem:[%s0 + $0x14] sm:$0xf]
        %v415 = vld [vmem:[%s0 + $0x18] sm:$0xf]
        %v416 = vld [vmem:[%s0 + $0x1c] sm:$0xf]
        %v417 = vld [vmem:[%s0 + $0x20] sm:$0xf]
        %v418 = vld [vmem:[%s0 + $0x24] sm:$0xf]
        %v419 = vld [vmem:[%s0 + $0x28] sm:$0xf]
        %v420 = vld [vmem:[%s0 + $0x2c] sm:$0xf]
        %v421 = vld [vmem:[%s0 + $0x30] sm:$0xf]
        %v422 = vld [vmem:[%s0 + $0x34] sm:$0xf]
        %v423 = vld [vmem:[%s0 + $0x38] sm:$0xf]
        %v424 = vld [vmem:[%s0 + $0x3c] sm:$0xf]
        %v441 = vunpack.c.l.b16 %v409
        %v442 = vunpack.c.l.b16 %v410
        %v443 = vunpack.c.l.b16 %v411
        %v444 = vunpack.c.l.b16 %v412
        %v445 = vunpack.c.l.b16 %v413
        %v446 = vunpack.c.l.b16 %v414
        %v447 = vunpack.c.l.b16 %v415
        %v448 = vunpack.c.l.b16 %v416
        %v449 = vunpack.c.l.b16 %v417
        %v450 = vunpack.c.l.b16 %v418
        %v451 = vunpack.c.l.b16 %v419
        %v452 = vunpack.c.l.b16 %v420
        %v453 = vunpack.c.l.b16 %v421
        %v454 = vunpack.c.l.b16 %v422
        %v455 = vunpack.c.l.b16 %v423
        %v456 = vunpack.c.l.b16 %v424
        %v457 = vpack.c.b16 %v442, %v441
        %v458 = vpack.c.b16 %v444, %v443
        %v459 = vpack.c.b16 %v446, %v445
        %v460 = vpack.c.b16 %v448, %v447
        %v461 = vpack.c.b16 %v450, %v449
        %v462 = vpack.c.b16 %v452, %v451
        %v463 = vpack.c.b16 %v454, %v453
        %v464 = vpack.c.b16 %v456, %v455
        %v468 = vunpack.c.l.b16 %v406
        %v469 = vunpack.c.l.b16 %v407
        %v470 = vunpack.c.l.b16 %v408
        %v471 = vpack.c.b16 %v469, %v468
        %v472 = vpack.c.b16 %v470, %v470
        %vm474 = vcmask 138240
        %v476 = vsel %vm474, %v457, 0
        %v479 = vsel %vm474, %v458, 0
        %v482 = vsel %vm474, %v459, 0
        %v485 = vsel %vm474, %v460, 0
        %v488 = vsel %vm474, %v461, 0
        %v491 = vsel %vm474, %v462, 0
        %v494 = vsel %vm474, %v463, 0
        %v497 = vsel %vm474, %v464, 0
        %vm499 = vcmask 1040384
        %v500 = vsel 0, 4294967295, 65535
        %v501 = vsel %vm499, %v500, 0
        %v503 = vand.u32 %v472, %v501
        %505 = vmatprep.subr.bf16.mxu0 0
        %506 = vmatpush1.bf16.msra.mxu0 0
        %507 = vmatprep.subr.bf16.mxu0 0
        %508 = vmatpush1.bf16.msra.mxu0 0
        %509 = vmatprep.subr.bf16.mxu0 0
        %510 = vmatpush1.bf16.msra.mxu0 0
        %511 = vmatprep.subr.bf16.mxu0 0
        %512 = vmatpush1.bf16.msra.mxu0 0
        %513 = vmatprep.subr.bf16.mxu0 0
        %514 = vmatpush1.bf16.msra.mxu0 0
        %515 = vmatprep.subr.bf16.mxu0 0
        %516 = vmatpush1.bf16.msra.mxu0 0
        %517 = vmatprep.subr.bf16.mxu0 0
        %518 = vmatpush1.bf16.msra.mxu0 %v503
        %519 = vmatprep.subr.bf16.mxu0 0
        %520 = vmatpush1.bf16.msra.mxu0 %v471
        %521 = vmatprep.subr.bf16.mxu0 0
        %522 = vmatpush2.bf16.msra.mxu0 0
        %523 = vmatprep.subr.bf16.mxu0 0
        %524 = vmatpush2.bf16.msra.mxu0 0
        %525 = vmatprep.subr.bf16.mxu0 0
        %526 = vmatpush2.bf16.msra.mxu0 0
        %527 = vmatprep.subr.bf16.mxu0 0
        %528 = vmatpush2.bf16.msra.mxu0 0
        %529 = vmatprep.subr.bf16.mxu0 0
        %530 = vmatpush2.bf16.msra.mxu0 0
        %531 = vmatprep.subr.bf16.mxu0 0
        %532 = vmatpush2.bf16.msra.mxu0 0
        %533 = vmatprep.subr.bf16.mxu0 0
        %534 = vmatpush2.bf16.msra.mxu0 0
        %535 = vmatprep.subr.bf16.mxu0 0
        %536 = vmatpush2.bf16.msra.mxu0 0
        %537 = vmatprep.mubr.bf16.mxu0 0
        %538 = vmatmul.mubr.bf16.gmra.mxu0 %v476
        %v539 = vpop.f32.mrf.mxu0
        %v540 = vadd.f32 0.0, %v539
        %v541 = vpop.f32.mrf.mxu0
        %v542 = vpop.f32.mrf.mxu0
        %v543 = vadd.f32 0.0, %v542
        %v544 = vpop.f32.mrf.mxu0
        %545 = vmatprep.mubr.bf16.mxu0 0
        %546 = vmatmul.mubr.bf16.gmra.mxu0 %v479
        %v547 = vpop.f32.mrf.mxu0
        %v548 = vadd.f32 0.0, %v547
        %v549 = vpop.f32.mrf.mxu0
        %v550 = vpop.f32.mrf.mxu0
        %v551 = vadd.f32 0.0, %v550
        %v552 = vpop.f32.mrf.mxu0
        %553 = vmatprep.mubr.bf16.mxu0 0
        %554 = vmatmul.mubr.bf16.gmra.mxu0 %v482
        %v555 = vpop.f32.mrf.mxu0
        %v556 = vadd.f32 0.0, %v555
        %v557 = vpop.f32.mrf.mxu0
        %v558 = vpop.f32.mrf.mxu0
        %v559 = vadd.f32 0.0, %v558
        %v560 = vpop.f32.mrf.mxu0
        %561 = vmatprep.mubr.bf16.mxu0 0
        %562 = vmatmul.mubr.bf16.gmra.mxu0 %v485
        %v563 = vpop.f32.mrf.mxu0
        %v564 = vadd.f32 0.0, %v563
        %v565 = vpop.f32.mrf.mxu0
        %v566 = vpop.f32.mrf.mxu0
        %v567 = vadd.f32 0.0, %v566
        %v568 = vpop.f32.mrf.mxu0
        %569 = vmatprep.mubr.bf16.mxu0 0
        %570 = vmatmul.mubr.bf16.gmra.mxu0 %v488
        %v571 = vpop.f32.mrf.mxu0
        %v572 = vadd.f32 0.0, %v571
        %v573 = vpop.f32.mrf.mxu0
        %v574 = vpop.f32.mrf.mxu0
        %v575 = vadd.f32 0.0, %v574
        %v576 = vpop.f32.mrf.mxu0
        %577 = vmatprep.mubr.bf16.mxu0 0
        %578 = vmatmul.mubr.bf16.gmra.mxu0 %v491
        %v579 = vpop.f32.mrf.mxu0
        %v580 = vadd.f32 0.0, %v579
        %v581 = vpop.f32.mrf.mxu0
        %v582 = vpop.f32.mrf.mxu0
        %v583 = vadd.f32 0.0, %v582
        %v584 = vpop.f32.mrf.mxu0
        %585 = vmatprep.mubr.bf16.mxu0 0
        %586 = vmatmul.mubr.bf16.gmra.mxu0 %v494
        %v587 = vpop.f32.mrf.mxu0
        %v588 = vadd.f32 0.0, %v587
        %v589 = vpop.f32.mrf.mxu0
        %v590 = vpop.f32.mrf.mxu0
        %v591 = vadd.f32 0.0, %v590
        %v592 = vpop.f32.mrf.mxu0
        %593 = vmatprep.mubr.bf16.mxu0 0
        %594 = vmatmul.mubr.bf16.gmra.mxu0 %v497
        %v595 = vpop.f32.mrf.mxu0
        %v596 = vadd.f32 0.0, %v595
        %v597 = vpop.f32.mrf.mxu0
        %v598 = vpop.f32.mrf.mxu0
        %v599 = vadd.f32 0.0, %v598
        %v600 = vpop.f32.mrf.mxu0
        %601 = vdwg.mxu0
        %v602 = vmul.f32 %v540, 0.2
        %v603 = vmul.f32 %v543, 0.2
        %v604 = vmul.f32 %v548, 0.2
        %v605 = vmul.f32 %v551, 0.2
        %v606 = vmul.f32 %v556, 0.2
        %v607 = vmul.f32 %v559, 0.2
        %v608 = vmul.f32 %v564, 0.2
        %v609 = vmul.f32 %v567, 0.2
        %v610 = vmul.f32 %v572, 0.2
        %v611 = vmul.f32 %v575, 0.2
        %v612 = vmul.f32 %v580, 0.2
        %v613 = vmul.f32 %v583, 0.2
        %v614 = vmul.f32 %v588, 0.2
        %v615 = vmul.f32 %v591, 0.2
        %v616 = vmul.f32 %v596, 0.2
        %v617 = vmul.f32 %v599, 0.2
        %v618 = vmax.f32 %v540, %v602
        %v619 = vmax.f32 %v543, %v603
        %v620 = vmax.f32 %v548, %v604
        %v621 = vmax.f32 %v551, %v605
        %v622 = vmax.f32 %v556, %v606
        %v623 = vmax.f32 %v559, %v607
        %v624 = vmax.f32 %v564, %v608
        %v625 = vmax.f32 %v567, %v609
        %v626 = vmax.f32 %v572, %v610
        %v627 = vmax.f32 %v575, %v611
        %v628 = vmax.f32 %v580, %v612
        %v629 = vmax.f32 %v583, %v613
        %v630 = vmax.f32 %v588, %v614
        %v631 = vmax.f32 %v591, %v615
        %v632 = vmax.f32 %v596, %v616
        %v633 = vmax.f32 %v599, %v617
        %v634 = vpack.c.bf16 %v619, %v618
        %v635 = vpack.c.bf16 %v621, %v620
        %v636 = vpack.c.bf16 %v623, %v622
        %v637 = vpack.c.bf16 %v625, %v624
        %v638 = vpack.c.bf16 %v627, %v626
        %v639 = vpack.c.bf16 %v629, %v628
        %v640 = vpack.c.bf16 %v631, %v630
        %v641 = vpack.c.bf16 %v633, %v632
        %v642 = vld [vmem:[%s2] sm:$0xf]
        %v643 = vld [vmem:[%s2 + $0x4] sm:$0xf]
        %v644 = vld [vmem:[%s2 + $0x8] sm:$0xf]
        %v645 = vld [vmem:[%s2 + $0xc] sm:$0xf]
        %v646 = vld [vmem:[%s2 + $0x10] sm:$0xf]
        %v647 = vld [vmem:[%s2 + $0x14] sm:$0xf]
        %v648 = vld [vmem:[%s2 + $0x18] sm:$0xf]
        %v649 = vld [vmem:[%s2 + $0x1c] sm:$0xf]
        %v650 = vld [vmem:[%s0 + $0x40] sm:$0xf]
        %v651 = vld [vmem:[%s0 + $0x44] sm:$0xf]
        %v652 = vld [vmem:[%s0 + $0x48] sm:$0xf]
        %v653 = vld [vmem:[%s0 + $0x4c] sm:$0xf]
        %v654 = vld [vmem:[%s0 + $0x50] sm:$0xf]
        %v655 = vld [vmem:[%s0 + $0x54] sm:$0xf]
        %v656 = vld [vmem:[%s0 + $0x58] sm:$0xf]
        %v657 = vld [vmem:[%s0 + $0x5c] sm:$0xf]
        %v658 = vld [vmem:[%s0 + $0x60] sm:$0xf]
        %v659 = vld [vmem:[%s0 + $0x64] sm:$0xf]
        %v660 = vld [vmem:[%s0 + $0x68] sm:$0xf]
        %v661 = vld [vmem:[%s0 + $0x6c] sm:$0xf]
        %v662 = vld [vmem:[%s0 + $0x70] sm:$0xf]
        %v663 = vld [vmem:[%s0 + $0x74] sm:$0xf]
        %v664 = vld [vmem:[%s0 + $0x78] sm:$0xf]
        %v665 = vld [vmem:[%s0 + $0x7c] sm:$0xf]
        %v682 = vunpack.c.l.b16 %v650
        %v683 = vunpack.c.l.b16 %v651
        %v684 = vunpack.c.l.b16 %v652
        %v685 = vunpack.c.l.b16 %v653
        %v686 = vunpack.c.l.b16 %v654
        %v687 = vunpack.c.l.b16 %v655
        %v688 = vunpack.c.l.b16 %v656
        %v689 = vunpack.c.l.b16 %v657
        %v690 = vunpack.c.l.b16 %v658
        %v691 = vunpack.c.l.b16 %v659
        %v692 = vunpack.c.l.b16 %v660
        %v693 = vunpack.c.l.b16 %v661
        %v694 = vunpack.c.l.b16 %v662
        %v695 = vunpack.c.l.b16 %v663
        %v696 = vunpack.c.l.b16 %v664
        %v697 = vunpack.c.l.b16 %v665
        %v698 = vpack.c.b16 %v683, %v682
        %v699 = vpack.c.b16 %v685, %v684
        %v700 = vpack.c.b16 %v687, %v686
        %v701 = vpack.c.b16 %v689, %v688
        %v702 = vpack.c.b16 %v691, %v690
        %v703 = vpack.c.b16 %v693, %v692
        %v704 = vpack.c.b16 %v695, %v694
        %v705 = vpack.c.b16 %v697, %v696
        %v707 = vsel %vm474, %v698, 0
        %v710 = vsel %vm474, %v699, 0
        %v713 = vsel %vm474, %v700, 0
        %v716 = vsel %vm474, %v701, 0
        %v719 = vsel %vm474, %v702, 0
        %v722 = vsel %vm474, %v703, 0
        %v725 = vsel %vm474, %v704, 0
        %v728 = vsel %vm474, %v705, 0
        %730 = vmatprep.subr.bf16.mxu0 0
        %731 = vmatpush1.bf16.msra.mxu0 0
        %732 = vmatprep.subr.bf16.mxu0 0
        %733 = vmatpush1.bf16.msra.mxu0 0
        %734 = vmatprep.subr.bf16.mxu0 0
        %735 = vmatpush1.bf16.msra.mxu0 0
        %736 = vmatprep.subr.bf16.mxu0 0
        %737 = vmatpush1.bf16.msra.mxu0 0
        %738 = vmatprep.subr.bf16.mxu0 0
        %739 = vmatpush1.bf16.msra.mxu0 0
        %740 = vmatprep.subr.bf16.mxu0 0
        %741 = vmatpush1.bf16.msra.mxu0 0
        %742 = vmatprep.subr.bf16.mxu0 0
        %743 = vmatpush1.bf16.msra.mxu0 %v503
        %744 = vmatprep.subr.bf16.mxu0 0
        %745 = vmatpush1.bf16.msra.mxu0 %v471
        %746 = vmatprep.subr.bf16.mxu0 0
        %747 = vmatpush2.bf16.msra.mxu0 0
        %748 = vmatprep.subr.bf16.mxu0 0
        %749 = vmatpush2.bf16.msra.mxu0 0
        %750 = vmatprep.subr.bf16.mxu0 0
        %751 = vmatpush2.bf16.msra.mxu0 0
        %752 = vmatprep.subr.bf16.mxu0 0
        %753 = vmatpush2.bf16.msra.mxu0 0
        %754 = vmatprep.subr.bf16.mxu0 0
        %755 = vmatpush2.bf16.msra.mxu0 0
        %756 = vmatprep.subr.bf16.mxu0 0
        %757 = vmatpush2.bf16.msra.mxu0 0
        %758 = vmatprep.subr.bf16.mxu0 0
        %759 = vmatpush2.bf16.msra.mxu0 0
        %760 = vmatprep.subr.bf16.mxu0 0
        %761 = vmatpush2.bf16.msra.mxu0 0
        %762 = vmatprep.mubr.bf16.mxu0 0
        %763 = vmatmul.mubr.bf16.gmra.mxu0 %v707
        %v764 = vpop.f32.mrf.mxu0
        %v765 = vadd.f32 0.0, %v764
        %v766 = vpop.f32.mrf.mxu0
        %v767 = vpop.f32.mrf.mxu0
        %v768 = vadd.f32 0.0, %v767
        %v769 = vpop.f32.mrf.mxu0
        %770 = vmatprep.mubr.bf16.mxu0 0
        %771 = vmatmul.mubr.bf16.gmra.mxu0 %v710
        %v772 = vpop.f32.mrf.mxu0
        %v773 = vadd.f32 0.0, %v772
        %v774 = vpop.f32.mrf.mxu0
        %v775 = vpop.f32.mrf.mxu0
        %v776 = vadd.f32 0.0, %v775
        %v777 = vpop.f32.mrf.mxu0
        %778 = vmatprep.mubr.bf16.mxu0 0
        %779 = vmatmul.mubr.bf16.gmra.mxu0 %v713
        %v780 = vpop.f32.mrf.mxu0
        %v781 = vadd.f32 0.0, %v780
        %v782 = vpop.f32.mrf.mxu0
        %v783 = vpop.f32.mrf.mxu0
        %v784 = vadd.f32 0.0, %v783
        %v785 = vpop.f32.mrf.mxu0
        %786 = vmatprep.mubr.bf16.mxu0 0
        %787 = vmatmul.mubr.bf16.gmra.mxu0 %v716
        %v788 = vpop.f32.mrf.mxu0
        %v789 = vadd.f32 0.0, %v788
        %v790 = vpop.f32.mrf.mxu0
        %v791 = vpop.f32.mrf.mxu0
        %v792 = vadd.f32 0.0, %v791
        %v793 = vpop.f32.mrf.mxu0
        %794 = vmatprep.mubr.bf16.mxu0 0
        %795 = vmatmul.mubr.bf16.gmra.mxu0 %v719
        %v796 = vpop.f32.mrf.mxu0
        %v797 = vadd.f32 0.0, %v796
        %v798 = vpop.f32.mrf.mxu0
        %v799 = vpop.f32.mrf.mxu0
        %v800 = vadd.f32 0.0, %v799
        %v801 = vpop.f32.mrf.mxu0
        %802 = vmatprep.mubr.bf16.mxu0 0
        %803 = vmatmul.mubr.bf16.gmra.mxu0 %v722
        %v804 = vpop.f32.mrf.mxu0
        %v805 = vadd.f32 0.0, %v804
        %v806 = vpop.f32.mrf.mxu0
        %v807 = vpop.f32.mrf.mxu0
        %v808 = vadd.f32 0.0, %v807
        %v809 = vpop.f32.mrf.mxu0
        %810 = vmatprep.mubr.bf16.mxu0 0
        %811 = vmatmul.mubr.bf16.gmra.mxu0 %v725
        %v812 = vpop.f32.mrf.mxu0
        %v813 = vadd.f32 0.0, %v812
        %v814 = vpop.f32.mrf.mxu0
        %v815 = vpop.f32.mrf.mxu0
        %v816 = vadd.f32 0.0, %v815
        %v817 = vpop.f32.mrf.mxu0
        %818 = vmatprep.mubr.bf16.mxu0 0
        %819 = vmatmul.mubr.bf16.gmra.mxu0 %v728
        %v820 = vpop.f32.mrf.mxu0
        %v821 = vadd.f32 0.0, %v820
        %v822 = vpop.f32.mrf.mxu0
        %v823 = vpop.f32.mrf.mxu0
        %v824 = vadd.f32 0.0, %v823
        %v825 = vpop.f32.mrf.mxu0
        %826 = vdwg.mxu0
        %v827 = vmul.f32 %v765, 0.2
        %v828 = vmul.f32 %v768, 0.2
        %v829 = vmul.f32 %v773, 0.2
        %v830 = vmul.f32 %v776, 0.2
        %v831 = vmul.f32 %v781, 0.2
        %v832 = vmul.f32 %v784, 0.2
        %v833 = vmul.f32 %v789, 0.2
        %v834 = vmul.f32 %v792, 0.2
        %v835 = vmul.f32 %v797, 0.2
        %v836 = vmul.f32 %v800, 0.2
        %v837 = vmul.f32 %v805, 0.2
        %v838 = vmul.f32 %v808, 0.2
        %v839 = vmul.f32 %v813, 0.2
        %v840 = vmul.f32 %v816, 0.2
        %v841 = vmul.f32 %v821, 0.2
        %v842 = vmul.f32 %v824, 0.2
        %v843 = vmax.f32 %v765, %v827
        %v844 = vmax.f32 %v768, %v828
        %v845 = vmax.f32 %v773, %v829
        %v846 = vmax.f32 %v776, %v830
        %v847 = vmax.f32 %v781, %v831
        %v848 = vmax.f32 %v784, %v832
        %v849 = vmax.f32 %v789, %v833
        %v850 = vmax.f32 %v792, %v834
        %v851 = vmax.f32 %v797, %v835
        %v852 = vmax.f32 %v800, %v836
        %v853 = vmax.f32 %v805, %v837
        %v854 = vmax.f32 %v808, %v838
        %v855 = vmax.f32 %v813, %v839
        %v856 = vmax.f32 %v816, %v840
        %v857 = vmax.f32 %v821, %v841
        %v858 = vmax.f32 %v824, %v842
        %v859 = vpack.c.bf16 %v844, %v843
        %v860 = vpack.c.bf16 %v846, %v845
        %v861 = vpack.c.bf16 %v848, %v847
        %v862 = vpack.c.bf16 %v850, %v849
        %v863 = vpack.c.bf16 %v852, %v851
        %v864 = vpack.c.bf16 %v854, %v853
        %v865 = vpack.c.bf16 %v856, %v855
        %v866 = vpack.c.bf16 %v858, %v857
        %s867 = scalar_lea.vmem %s2, 32
        %v868 = vld [vmem:[%s867] sm:$0xf]
        %v869 = vld [vmem:[%s867 + $0x4] sm:$0xf]
        %v870 = vld [vmem:[%s867 + $0x8] sm:$0xf]
        %v871 = vld [vmem:[%s867 + $0xc] sm:$0xf]
        %v872 = vld [vmem:[%s867 + $0x10] sm:$0xf]
        %v873 = vld [vmem:[%s867 + $0x14] sm:$0xf]
        %v874 = vld [vmem:[%s867 + $0x18] sm:$0xf]
        %v875 = vld [vmem:[%s867 + $0x1c] sm:$0xf]
        %v884 = vunpack.c.l.b16 %v868
        %v885 = vunpack.c.l.b16 %v869
        %v886 = vunpack.c.l.b16 %v870
        %v887 = vunpack.c.l.b16 %v871
        %v888 = vunpack.c.l.b16 %v872
        %v889 = vunpack.c.l.b16 %v873
        %v890 = vunpack.c.l.b16 %v874
        %v891 = vunpack.c.l.b16 %v875
        %v892 = vpack.c.b16 %v885, %v884
        %v893 = vpack.c.b16 %v887, %v886
        %v894 = vpack.c.b16 %v889, %v888
        %v895 = vpack.c.b16 %v891, %v890
        %vm900 = vcmask 523264
        %v902 = vsel %vm900, %v859, 0
        %v905 = vsel %vm900, %v860, 0
        %v908 = vsel %vm900, %v861, 0
        %v911 = vsel %vm900, %v862, 0
        %v914 = vsel %vm900, %v863, 0
        %v917 = vsel %vm900, %v864, 0
        %v920 = vsel %vm900, %v865, 0
        %v923 = vsel %vm900, %v866, 0
        %925 = vmatprep.subr.bf16.mxu0 0
        %926 = vmatpush1.bf16.msra.mxu0 0
        %927 = vmatprep.subr.bf16.mxu0 0
        %928 = vmatpush1.bf16.msra.mxu0 0
        %929 = vmatprep.subr.bf16.mxu0 0
        %930 = vmatpush1.bf16.msra.mxu0 0
        %931 = vmatprep.subr.bf16.mxu0 0
        %932 = vmatpush1.bf16.msra.mxu0 0
        %933 = vmatprep.subr.bf16.mxu0 0
        %934 = vmatpush1.bf16.msra.mxu0 %v895
        %935 = vmatprep.subr.bf16.mxu0 0
        %936 = vmatpush1.bf16.msra.mxu0 %v894
        %937 = vmatprep.subr.bf16.mxu0 0
        %938 = vmatpush1.bf16.msra.mxu0 %v893
        %939 = vmatprep.subr.bf16.mxu0 0
        %940 = vmatpush1.bf16.msra.mxu0 %v892
        %941 = vmatprep.subr.bf16.mxu0 0
        %942 = vmatpush2.bf16.msra.mxu0 0
        %943 = vmatprep.subr.bf16.mxu0 0
        %944 = vmatpush2.bf16.msra.mxu0 0
        %945 = vmatprep.subr.bf16.mxu0 0
        %946 = vmatpush2.bf16.msra.mxu0 0
        %947 = vmatprep.subr.bf16.mxu0 0
        %948 = vmatpush2.bf16.msra.mxu0 0
        %949 = vmatprep.subr.bf16.mxu0 0
        %950 = vmatpush2.bf16.msra.mxu0 0
        %951 = vmatprep.subr.bf16.mxu0 0
        %952 = vmatpush2.bf16.msra.mxu0 0
        %953 = vmatprep.subr.bf16.mxu0 0
        %954 = vmatpush2.bf16.msra.mxu0 0
        %955 = vmatprep.subr.bf16.mxu0 0
        %956 = vmatpush2.bf16.msra.mxu0 0
        %957 = vmatprep.mubr.bf16.mxu0 0
        %958 = vmatmul.mubr.bf16.gmra.mxu0 %v902
        %v959 = vpop.f32.mrf.mxu0
        %v960 = vadd.f32 0.0, %v959
        %v961 = vpop.f32.mrf.mxu0
        %v962 = vpop.f32.mrf.mxu0
        %v963 = vadd.f32 0.0, %v962
        %v964 = vpop.f32.mrf.mxu0
        %965 = vmatprep.mubr.bf16.mxu0 0
        %966 = vmatmul.mubr.bf16.gmra.mxu0 %v905
        %v967 = vpop.f32.mrf.mxu0
        %v968 = vadd.f32 0.0, %v967
        %v969 = vpop.f32.mrf.mxu0
        %v970 = vpop.f32.mrf.mxu0
        %v971 = vadd.f32 0.0, %v970
        %v972 = vpop.f32.mrf.mxu0
        %973 = vmatprep.mubr.bf16.mxu0 0
        %974 = vmatmul.mubr.bf16.gmra.mxu0 %v908
        %v975 = vpop.f32.mrf.mxu0
        %v976 = vadd.f32 0.0, %v975
        %v977 = vpop.f32.mrf.mxu0
        %v978 = vpop.f32.mrf.mxu0
        %v979 = vadd.f32 0.0, %v978
        %v980 = vpop.f32.mrf.mxu0
        %981 = vmatprep.mubr.bf16.mxu0 0
        %982 = vmatmul.mubr.bf16.gmra.mxu0 %v911
        %v983 = vpop.f32.mrf.mxu0
        %v984 = vadd.f32 0.0, %v983
        %v985 = vpop.f32.mrf.mxu0
        %v986 = vpop.f32.mrf.mxu0
        %v987 = vadd.f32 0.0, %v986
        %v988 = vpop.f32.mrf.mxu0
        %989 = vmatprep.mubr.bf16.mxu0 0
        %990 = vmatmul.mubr.bf16.gmra.mxu0 %v914
        %v991 = vpop.f32.mrf.mxu0
        %v992 = vadd.f32 0.0, %v991
        %v993 = vpop.f32.mrf.mxu0
        %v994 = vpop.f32.mrf.mxu0
        %v995 = vadd.f32 0.0, %v994
        %v996 = vpop.f32.mrf.mxu0
        %997 = vmatprep.mubr.bf16.mxu0 0
        %998 = vmatmul.mubr.bf16.gmra.mxu0 %v917
        %v999 = vpop.f32.mrf.mxu0
        %v1000 = vadd.f32 0.0, %v999
        %v1001 = vpop.f32.mrf.mxu0
        %v1002 = vpop.f32.mrf.mxu0
        %v1003 = vadd.f32 0.0, %v1002
        %v1004 = vpop.f32.mrf.mxu0
        %1005 = vmatprep.mubr.bf16.mxu0 0
        %1006 = vmatmul.mubr.bf16.gmra.mxu0 %v920
        %v1007 = vpop.f32.mrf.mxu0
        %v1008 = vadd.f32 0.0, %v1007
        %v1009 = vpop.f32.mrf.mxu0
        %v1010 = vpop.f32.mrf.mxu0
        %v1011 = vadd.f32 0.0, %v1010
        %v1012 = vpop.f32.mrf.mxu0
        %1013 = vmatprep.mubr.bf16.mxu0 0
        %1014 = vmatmul.mubr.bf16.gmra.mxu0 %v923
        %v1015 = vpop.f32.mrf.mxu0
        %v1016 = vadd.f32 0.0, %v1015
        %v1017 = vpop.f32.mrf.mxu0
        %v1018 = vpop.f32.mrf.mxu0
        %v1019 = vadd.f32 0.0, %v1018
        %v1020 = vpop.f32.mrf.mxu0
        %1021 = vdwg.mxu0
        %v1030 = vunpack.c.l.b16 %v642
        %v1031 = vunpack.c.l.b16 %v643
        %v1032 = vunpack.c.l.b16 %v644
        %v1033 = vunpack.c.l.b16 %v645
        %v1034 = vunpack.c.l.b16 %v646
        %v1035 = vunpack.c.l.b16 %v647
        %v1036 = vunpack.c.l.b16 %v648
        %v1037 = vunpack.c.l.b16 %v649
        %v1038 = vpack.c.b16 %v1031, %v1030
        %v1039 = vpack.c.b16 %v1033, %v1032
        %v1040 = vpack.c.b16 %v1035, %v1034
        %v1041 = vpack.c.b16 %v1037, %v1036
        %v1047 = vsel %vm900, %v634, 0
        %v1050 = vsel %vm900, %v635, 0
        %v1053 = vsel %vm900, %v636, 0
        %v1056 = vsel %vm900, %v637, 0
        %v1059 = vsel %vm900, %v638, 0
        %v1062 = vsel %vm900, %v639, 0
        %v1065 = vsel %vm900, %v640, 0
        %v1068 = vsel %vm900, %v641, 0
        %1070 = vmatprep.subr.bf16.mxu0 0
        %1071 = vmatpush1.bf16.msra.mxu0 0
        %1072 = vmatprep.subr.bf16.mxu0 0
        %1073 = vmatpush1.bf16.msra.mxu0 0
        %1074 = vmatprep.subr.bf16.mxu0 0
        %1075 = vmatpush1.bf16.msra.mxu0 0
        %1076 = vmatprep.subr.bf16.mxu0 0
        %1077 = vmatpush1.bf16.msra.mxu0 0
        %1078 = vmatprep.subr.bf16.mxu0 0
        %1079 = vmatpush1.bf16.msra.mxu0 %v1041
        %1080 = vmatprep.subr.bf16.mxu0 0
        %1081 = vmatpush1.bf16.msra.mxu0 %v1040
        %1082 = vmatprep.subr.bf16.mxu0 0
        %1083 = vmatpush1.bf16.msra.mxu0 %v1039
        %1084 = vmatprep.subr.bf16.mxu0 0
        %1085 = vmatpush1.bf16.msra.mxu0 %v1038
        %1086 = vmatprep.subr.bf16.mxu0 0
        %1087 = vmatpush2.bf16.msra.mxu0 0
        %1088 = vmatprep.subr.bf16.mxu0 0
        %1089 = vmatpush2.bf16.msra.mxu0 0
        %1090 = vmatprep.subr.bf16.mxu0 0
        %1091 = vmatpush2.bf16.msra.mxu0 0
        %1092 = vmatprep.subr.bf16.mxu0 0
        %1093 = vmatpush2.bf16.msra.mxu0 0
        %1094 = vmatprep.subr.bf16.mxu0 0
        %1095 = vmatpush2.bf16.msra.mxu0 0
        %1096 = vmatprep.subr.bf16.mxu0 0
        %1097 = vmatpush2.bf16.msra.mxu0 0
        %1098 = vmatprep.subr.bf16.mxu0 0
        %1099 = vmatpush2.bf16.msra.mxu0 0
        %1100 = vmatprep.subr.bf16.mxu0 0
        %1101 = vmatpush2.bf16.msra.mxu0 0
        %1102 = vmatprep.mubr.bf16.mxu0 0
        %1103 = vmatmul.mubr.bf16.gmra.mxu0 %v1047
        %v1104 = vpop.f32.mrf.mxu0
        %v1105 = vadd.f32 %v960, %v1104
        %v1106 = vpop.f32.mrf.mxu0
        %v1107 = vpop.f32.mrf.mxu0
        %v1108 = vadd.f32 %v963, %v1107
        %v1109 = vpop.f32.mrf.mxu0
        %1110 = vmatprep.mubr.bf16.mxu0 0
        %1111 = vmatmul.mubr.bf16.gmra.mxu0 %v1050
        %v1112 = vpop.f32.mrf.mxu0
        %v1113 = vadd.f32 %v968, %v1112
        %v1114 = vpop.f32.mrf.mxu0
        %v1115 = vpop.f32.mrf.mxu0
        %v1116 = vadd.f32 %v971, %v1115
        %v1117 = vpop.f32.mrf.mxu0
        %1118 = vmatprep.mubr.bf16.mxu0 0
        %1119 = vmatmul.mubr.bf16.gmra.mxu0 %v1053
        %v1120 = vpop.f32.mrf.mxu0
        %v1121 = vadd.f32 %v976, %v1120
        %v1122 = vpop.f32.mrf.mxu0
        %v1123 = vpop.f32.mrf.mxu0
        %v1124 = vadd.f32 %v979, %v1123
        %v1125 = vpop.f32.mrf.mxu0
        %1126 = vmatprep.mubr.bf16.mxu0 0
        %1127 = vmatmul.mubr.bf16.gmra.mxu0 %v1056
        %v1128 = vpop.f32.mrf.mxu0
        %v1129 = vadd.f32 %v984, %v1128
        %v1130 = vpop.f32.mrf.mxu0
        %v1131 = vpop.f32.mrf.mxu0
        %v1132 = vadd.f32 %v987, %v1131
        %v1133 = vpop.f32.mrf.mxu0
        %1134 = vmatprep.mubr.bf16.mxu0 0
        %1135 = vmatmul.mubr.bf16.gmra.mxu0 %v1059
        %v1136 = vpop.f32.mrf.mxu0
        %v1137 = vadd.f32 %v992, %v1136
        %v1138 = vpop.f32.mrf.mxu0
        %v1139 = vpop.f32.mrf.mxu0
        %v1140 = vadd.f32 %v995, %v1139
        %v1141 = vpop.f32.mrf.mxu0
        %1142 = vmatprep.mubr.bf16.mxu0 0
        %1143 = vmatmul.mubr.bf16.gmra.mxu0 %v1062
        %v1144 = vpop.f32.mrf.mxu0
        %v1145 = vadd.f32 %v1000, %v1144
        %v1146 = vpop.f32.mrf.mxu0
        %v1147 = vpop.f32.mrf.mxu0
        %v1148 = vadd.f32 %v1003, %v1147
        %v1149 = vpop.f32.mrf.mxu0
        %1150 = vmatprep.mubr.bf16.mxu0 0
        %1151 = vmatmul.mubr.bf16.gmra.mxu0 %v1065
        %v1152 = vpop.f32.mrf.mxu0
        %v1153 = vadd.f32 %v1008, %v1152
        %v1154 = vpop.f32.mrf.mxu0
        %v1155 = vpop.f32.mrf.mxu0
        %v1156 = vadd.f32 %v1011, %v1155
        %v1157 = vpop.f32.mrf.mxu0
        %1158 = vmatprep.mubr.bf16.mxu0 0
        %1159 = vmatmul.mubr.bf16.gmra.mxu0 %v1068
        %v1160 = vpop.f32.mrf.mxu0
        %v1161 = vadd.f32 %v1016, %v1160
        %v1162 = vpop.f32.mrf.mxu0
        %v1163 = vpop.f32.mrf.mxu0
        %v1164 = vadd.f32 %v1019, %v1163
        %v1165 = vpop.f32.mrf.mxu0
        %1166 = vdwg.mxu0
        %v1167 = vld [vmem:[%s0 + $0x80] sm:$0xf]
        %v1168 = vld [vmem:[%s0 + $0x84] sm:$0xf]
        %v1169 = vld [vmem:[%s0 + $0x88] sm:$0xf]
        %v1170 = vld [vmem:[%s0 + $0x8c] sm:$0xf]
        %v1171 = vld [vmem:[%s0 + $0x90] sm:$0xf]
        %v1172 = vld [vmem:[%s0 + $0x94] sm:$0xf]
        %v1173 = vld [vmem:[%s0 + $0x98] sm:$0xf]
        %v1174 = vld [vmem:[%s0 + $0x9c] sm:$0xf]
        %v1175 = vld [vmem:[%s0 + $0xa0] sm:$0xf]
        %v1176 = vld [vmem:[%s0 + $0xa4] sm:$0xf]
        %v1177 = vld [vmem:[%s0 + $0xa8] sm:$0xf]
        %v1178 = vld [vmem:[%s0 + $0xac] sm:$0xf]
        %v1179 = vld [vmem:[%s0 + $0xb0] sm:$0xf]
        %v1180 = vld [vmem:[%s0 + $0xb4] sm:$0xf]
        %v1181 = vld [vmem:[%s0 + $0xb8] sm:$0xf]
        %v1182 = vld [vmem:[%s0 + $0xbc] sm:$0xf]
        %v1199 = vunpack.c.l.b16 %v1167
        %v1200 = vunpack.c.l.b16 %v1168
        %v1201 = vunpack.c.l.b16 %v1169
        %v1202 = vunpack.c.l.b16 %v1170
        %v1203 = vunpack.c.l.b16 %v1171
        %v1204 = vunpack.c.l.b16 %v1172
        %v1205 = vunpack.c.l.b16 %v1173
        %v1206 = vunpack.c.l.b16 %v1174
        %v1207 = vunpack.c.l.b16 %v1175
        %v1208 = vunpack.c.l.b16 %v1176
        %v1209 = vunpack.c.l.b16 %v1177
        %v1210 = vunpack.c.l.b16 %v1178
        %v1211 = vunpack.c.l.b16 %v1179
        %v1212 = vunpack.c.l.b16 %v1180
        %v1213 = vunpack.c.l.b16 %v1181
        %v1214 = vunpack.c.l.b16 %v1182
        %v1215 = vpack.c.b16 %v1200, %v1199
        %v1216 = vpack.c.b16 %v1202, %v1201
        %v1217 = vpack.c.b16 %v1204, %v1203
        %v1218 = vpack.c.b16 %v1206, %v1205
        %v1219 = vpack.c.b16 %v1208, %v1207
        %v1220 = vpack.c.b16 %v1210, %v1209
        %v1221 = vpack.c.b16 %v1212, %v1211
        %v1222 = vpack.c.b16 %v1214, %v1213
        %v1224 = vsel %vm474, %v1215, 0
        %v1227 = vsel %vm474, %v1216, 0
        %v1230 = vsel %vm474, %v1217, 0
        %v1233 = vsel %vm474, %v1218, 0
        %v1236 = vsel %vm474, %v1219, 0
        %v1239 = vsel %vm474, %v1220, 0
        %v1242 = vsel %vm474, %v1221, 0
        %v1245 = vsel %vm474, %v1222, 0
        %1247 = vmatprep.subr.bf16.mxu0 0
        %1248 = vmatpush1.bf16.msra.mxu0 0
        %1249 = vmatprep.subr.bf16.mxu0 0
        %1250 = vmatpush1.bf16.msra.mxu0 0
        %1251 = vmatprep.subr.bf16.mxu0 0
        %1252 = vmatpush1.bf16.msra.mxu0 0
        %1253 = vmatprep.subr.bf16.mxu0 0
        %1254 = vmatpush1.bf16.msra.mxu0 0
        %1255 = vmatprep.subr.bf16.mxu0 0
        %1256 = vmatpush1.bf16.msra.mxu0 0
        %1257 = vmatprep.subr.bf16.mxu0 0
        %1258 = vmatpush1.bf16.msra.mxu0 0
        %1259 = vmatprep.subr.bf16.mxu0 0
        %1260 = vmatpush1.bf16.msra.mxu0 %v503
        %1261 = vmatprep.subr.bf16.mxu0 0
        %1262 = vmatpush1.bf16.msra.mxu0 %v471
        %1263 = vmatprep.subr.bf16.mxu0 0
        %1264 = vmatpush2.bf16.msra.mxu0 0
        %1265 = vmatprep.subr.bf16.mxu0 0
        %1266 = vmatpush2.bf16.msra.mxu0 0
        %1267 = vmatprep.subr.bf16.mxu0 0
        %1268 = vmatpush2.bf16.msra.mxu0 0
        %1269 = vmatprep.subr.bf16.mxu0 0
        %1270 = vmatpush2.bf16.msra.mxu0 0
        %1271 = vmatprep.subr.bf16.mxu0 0
        %1272 = vmatpush2.bf16.msra.mxu0 0
        %1273 = vmatprep.subr.bf16.mxu0 0
        %1274 = vmatpush2.bf16.msra.mxu0 0
        %1275 = vmatprep.subr.bf16.mxu0 0
        %1276 = vmatpush2.bf16.msra.mxu0 0
        %1277 = vmatprep.subr.bf16.mxu0 0
        %1278 = vmatpush2.bf16.msra.mxu0 0
        %1279 = vmatprep.mubr.bf16.mxu0 0
        %1280 = vmatmul.mubr.bf16.gmra.mxu0 %v1224
        %v1281 = vpop.f32.mrf.mxu0
        %v1282 = vadd.f32 0.0, %v1281
        %v1283 = vpop.f32.mrf.mxu0
        %v1284 = vpop.f32.mrf.mxu0
        %v1285 = vadd.f32 0.0, %v1284
        %v1286 = vpop.f32.mrf.mxu0
        %1287 = vmatprep.mubr.bf16.mxu0 0
        %1288 = vmatmul.mubr.bf16.gmra.mxu0 %v1227
        %v1289 = vpop.f32.mrf.mxu0
        %v1290 = vadd.f32 0.0, %v1289
        %v1291 = vpop.f32.mrf.mxu0
        %v1292 = vpop.f32.mrf.mxu0
        %v1293 = vadd.f32 0.0, %v1292
        %v1294 = vpop.f32.mrf.mxu0
        %1295 = vmatprep.mubr.bf16.mxu0 0
        %1296 = vmatmul.mubr.bf16.gmra.mxu0 %v1230
        %v1297 = vpop.f32.mrf.mxu0
        %v1298 = vadd.f32 0.0, %v1297
        %v1299 = vpop.f32.mrf.mxu0
        %v1300 = vpop.f32.mrf.mxu0
        %v1301 = vadd.f32 0.0, %v1300
        %v1302 = vpop.f32.mrf.mxu0
        %1303 = vmatprep.mubr.bf16.mxu0 0
        %1304 = vmatmul.mubr.bf16.gmra.mxu0 %v1233
        %v1305 = vpop.f32.mrf.mxu0
        %v1306 = vadd.f32 0.0, %v1305
        %v1307 = vpop.f32.mrf.mxu0
        %v1308 = vpop.f32.mrf.mxu0
        %v1309 = vadd.f32 0.0, %v1308
        %v1310 = vpop.f32.mrf.mxu0
        %1311 = vmatprep.mubr.bf16.mxu0 0
        %1312 = vmatmul.mubr.bf16.gmra.mxu0 %v1236
        %v1313 = vpop.f32.mrf.mxu0
        %v1314 = vadd.f32 0.0, %v1313
        %v1315 = vpop.f32.mrf.mxu0
        %v1316 = vpop.f32.mrf.mxu0
        %v1317 = vadd.f32 0.0, %v1316
        %v1318 = vpop.f32.mrf.mxu0
        %1319 = vmatprep.mubr.bf16.mxu0 0
        %1320 = vmatmul.mubr.bf16.gmra.mxu0 %v1239
        %v1321 = vpop.f32.mrf.mxu0
        %v1322 = vadd.f32 0.0, %v1321
        %v1323 = vpop.f32.mrf.mxu0
        %v1324 = vpop.f32.mrf.mxu0
        %v1325 = vadd.f32 0.0, %v1324
        %v1326 = vpop.f32.mrf.mxu0
        %1327 = vmatprep.mubr.bf16.mxu0 0
        %1328 = vmatmul.mubr.bf16.gmra.mxu0 %v1242
        %v1329 = vpop.f32.mrf.mxu0
        %v1330 = vadd.f32 0.0, %v1329
        %v1331 = vpop.f32.mrf.mxu0
        %v1332 = vpop.f32.mrf.mxu0
        %v1333 = vadd.f32 0.0, %v1332
        %v1334 = vpop.f32.mrf.mxu0
        %1335 = vmatprep.mubr.bf16.mxu0 0
        %1336 = vmatmul.mubr.bf16.gmra.mxu0 %v1245
        %v1337 = vpop.f32.mrf.mxu0
        %v1338 = vadd.f32 0.0, %v1337
        %v1339 = vpop.f32.mrf.mxu0
        %v1340 = vpop.f32.mrf.mxu0
        %v1341 = vadd.f32 0.0, %v1340
        %v1342 = vpop.f32.mrf.mxu0
        %1343 = vdwg.mxu0
        %v1344 = vmul.f32 %v1282, 0.2
        %v1345 = vmul.f32 %v1285, 0.2
        %v1346 = vmul.f32 %v1290, 0.2
        %v1347 = vmul.f32 %v1293, 0.2
        %v1348 = vmul.f32 %v1298, 0.2
        %v1349 = vmul.f32 %v1301, 0.2
        %v1350 = vmul.f32 %v1306, 0.2
        %v1351 = vmul.f32 %v1309, 0.2
        %v1352 = vmul.f32 %v1314, 0.2
        %v1353 = vmul.f32 %v1317, 0.2
        %v1354 = vmul.f32 %v1322, 0.2
        %v1355 = vmul.f32 %v1325, 0.2
        %v1356 = vmul.f32 %v1330, 0.2
        %v1357 = vmul.f32 %v1333, 0.2
        %v1358 = vmul.f32 %v1338, 0.2
        %v1359 = vmul.f32 %v1341, 0.2
        %v1360 = vmax.f32 %v1282, %v1344
        %v1361 = vmax.f32 %v1285, %v1345
        %v1362 = vmax.f32 %v1290, %v1346
        %v1363 = vmax.f32 %v1293, %v1347
        %v1364 = vmax.f32 %v1298, %v1348
        %v1365 = vmax.f32 %v1301, %v1349
        %v1366 = vmax.f32 %v1306, %v1350
        %v1367 = vmax.f32 %v1309, %v1351
        %v1368 = vmax.f32 %v1314, %v1352
        %v1369 = vmax.f32 %v1317, %v1353
        %v1370 = vmax.f32 %v1322, %v1354
        %v1371 = vmax.f32 %v1325, %v1355
        %v1372 = vmax.f32 %v1330, %v1356
        %v1373 = vmax.f32 %v1333, %v1357
        %v1374 = vmax.f32 %v1338, %v1358
        %v1375 = vmax.f32 %v1341, %v1359
        %v1376 = vpack.c.bf16 %v1361, %v1360
        %v1377 = vpack.c.bf16 %v1363, %v1362
        %v1378 = vpack.c.bf16 %v1365, %v1364
        %v1379 = vpack.c.bf16 %v1367, %v1366
        %v1380 = vpack.c.bf16 %v1369, %v1368
        %v1381 = vpack.c.bf16 %v1371, %v1370
        %v1382 = vpack.c.bf16 %v1373, %v1372
        %v1383 = vpack.c.bf16 %v1375, %v1374
        %s1384 = scalar_lea.vmem %s2, 64
        %v1385 = vld [vmem:[%s1384] sm:$0xf]
        %v1386 = vld [vmem:[%s1384 + $0x4] sm:$0xf]
        %v1387 = vld [vmem:[%s1384 + $0x8] sm:$0xf]
        %v1388 = vld [vmem:[%s1384 + $0xc] sm:$0xf]
        %v1389 = vld [vmem:[%s1384 + $0x10] sm:$0xf]
        %v1390 = vld [vmem:[%s1384 + $0x14] sm:$0xf]
        %v1391 = vld [vmem:[%s1384 + $0x18] sm:$0xf]
        %v1392 = vld [vmem:[%s1384 + $0x1c] sm:$0xf]
        %v1401 = vunpack.c.l.b16 %v1385
        %v1402 = vunpack.c.l.b16 %v1386
        %v1403 = vunpack.c.l.b16 %v1387
        %v1404 = vunpack.c.l.b16 %v1388
        %v1405 = vunpack.c.l.b16 %v1389
        %v1406 = vunpack.c.l.b16 %v1390
        %v1407 = vunpack.c.l.b16 %v1391
        %v1408 = vunpack.c.l.b16 %v1392
        %v1409 = vpack.c.b16 %v1402, %v1401
        %v1410 = vpack.c.b16 %v1404, %v1403
        %v1411 = vpack.c.b16 %v1406, %v1405
        %v1412 = vpack.c.b16 %v1408, %v1407
        %v1418 = vsel %vm900, %v1376, 0
        %v1421 = vsel %vm900, %v1377, 0
        %v1424 = vsel %vm900, %v1378, 0
        %v1427 = vsel %vm900, %v1379, 0
        %v1430 = vsel %vm900, %v1380, 0
        %v1433 = vsel %vm900, %v1381, 0
        %v1436 = vsel %vm900, %v1382, 0
        %v1439 = vsel %vm900, %v1383, 0
        %1441 = vmatprep.subr.bf16.mxu0 0
        %1442 = vmatpush1.bf16.msra.mxu0 0
        %1443 = vmatprep.subr.bf16.mxu0 0
        %1444 = vmatpush1.bf16.msra.mxu0 0
        %1445 = vmatprep.subr.bf16.mxu0 0
        %1446 = vmatpush1.bf16.msra.mxu0 0
        %1447 = vmatprep.subr.bf16.mxu0 0
        %1448 = vmatpush1.bf16.msra.mxu0 0
        %1449 = vmatprep.subr.bf16.mxu0 0
        %1450 = vmatpush1.bf16.msra.mxu0 %v1412
        %1451 = vmatprep.subr.bf16.mxu0 0
        %1452 = vmatpush1.bf16.msra.mxu0 %v1411
        %1453 = vmatprep.subr.bf16.mxu0 0
        %1454 = vmatpush1.bf16.msra.mxu0 %v1410
        %1455 = vmatprep.subr.bf16.mxu0 0
        %1456 = vmatpush1.bf16.msra.mxu0 %v1409
        %1457 = vmatprep.subr.bf16.mxu0 0
        %1458 = vmatpush2.bf16.msra.mxu0 0
        %1459 = vmatprep.subr.bf16.mxu0 0
        %1460 = vmatpush2.bf16.msra.mxu0 0
        %1461 = vmatprep.subr.bf16.mxu0 0
        %1462 = vmatpush2.bf16.msra.mxu0 0
        %1463 = vmatprep.subr.bf16.mxu0 0
        %1464 = vmatpush2.bf16.msra.mxu0 0
        %1465 = vmatprep.subr.bf16.mxu0 0
        %1466 = vmatpush2.bf16.msra.mxu0 0
        %1467 = vmatprep.subr.bf16.mxu0 0
        %1468 = vmatpush2.bf16.msra.mxu0 0
        %1469 = vmatprep.subr.bf16.mxu0 0
        %1470 = vmatpush2.bf16.msra.mxu0 0
        %1471 = vmatprep.subr.bf16.mxu0 0
        %1472 = vmatpush2.bf16.msra.mxu0 0
        %1473 = vmatprep.mubr.bf16.mxu0 0
        %1474 = vmatmul.mubr.bf16.gmra.mxu0 %v1418
        %v1475 = vpop.f32.mrf.mxu0
        %v1476 = vadd.f32 0.0, %v1475
        %v1477 = vpop.f32.mrf.mxu0
        %v1478 = vpop.f32.mrf.mxu0
        %v1479 = vadd.f32 0.0, %v1478
        %v1480 = vpop.f32.mrf.mxu0
        %1481 = vmatprep.mubr.bf16.mxu0 0
        %1482 = vmatmul.mubr.bf16.gmra.mxu0 %v1421
        %v1483 = vpop.f32.mrf.mxu0
        %v1484 = vadd.f32 0.0, %v1483
        %v1485 = vpop.f32.mrf.mxu0
        %v1486 = vpop.f32.mrf.mxu0
        %v1487 = vadd.f32 0.0, %v1486
        %v1488 = vpop.f32.mrf.mxu0
        %1489 = vmatprep.mubr.bf16.mxu0 0
        %1490 = vmatmul.mubr.bf16.gmra.mxu0 %v1424
        %v1491 = vpop.f32.mrf.mxu0
        %v1492 = vadd.f32 0.0, %v1491
        %v1493 = vpop.f32.mrf.mxu0
        %v1494 = vpop.f32.mrf.mxu0
        %v1495 = vadd.f32 0.0, %v1494
        %v1496 = vpop.f32.mrf.mxu0
        %1497 = vmatprep.mubr.bf16.mxu0 0
        %1498 = vmatmul.mubr.bf16.gmra.mxu0 %v1427
        %v1499 = vpop.f32.mrf.mxu0
        %v1500 = vadd.f32 0.0, %v1499
        %v1501 = vpop.f32.mrf.mxu0
        %v1502 = vpop.f32.mrf.mxu0
        %v1503 = vadd.f32 0.0, %v1502
        %v1504 = vpop.f32.mrf.mxu0
        %1505 = vmatprep.mubr.bf16.mxu0 0
        %1506 = vmatmul.mubr.bf16.gmra.mxu0 %v1430
        %v1507 = vpop.f32.mrf.mxu0
        %v1508 = vadd.f32 0.0, %v1507
        %v1509 = vpop.f32.mrf.mxu0
        %v1510 = vpop.f32.mrf.mxu0
        %v1511 = vadd.f32 0.0, %v1510
        %v1512 = vpop.f32.mrf.mxu0
        %1513 = vmatprep.mubr.bf16.mxu0 0
        %1514 = vmatmul.mubr.bf16.gmra.mxu0 %v1433
        %v1515 = vpop.f32.mrf.mxu0
        %v1516 = vadd.f32 0.0, %v1515
        %v1517 = vpop.f32.mrf.mxu0
        %v1518 = vpop.f32.mrf.mxu0
        %v1519 = vadd.f32 0.0, %v1518
        %v1520 = vpop.f32.mrf.mxu0
        %1521 = vmatprep.mubr.bf16.mxu0 0
        %1522 = vmatmul.mubr.bf16.gmra.mxu0 %v1436
        %v1523 = vpop.f32.mrf.mxu0
        %v1524 = vadd.f32 0.0, %v1523
        %v1525 = vpop.f32.mrf.mxu0
        %v1526 = vpop.f32.mrf.mxu0
        %v1527 = vadd.f32 0.0, %v1526
        %v1528 = vpop.f32.mrf.mxu0
        %1529 = vmatprep.mubr.bf16.mxu0 0
        %1530 = vmatmul.mubr.bf16.gmra.mxu0 %v1439
        %v1531 = vpop.f32.mrf.mxu0
        %v1532 = vadd.f32 0.0, %v1531
        %v1533 = vpop.f32.mrf.mxu0
        %v1534 = vpop.f32.mrf.mxu0
        %v1535 = vadd.f32 0.0, %v1534
        %v1536 = vpop.f32.mrf.mxu0
        %1537 = vdwg.mxu0
        %v1538 = vadd.f32 %v1105, %v1476
        %v1539 = vadd.f32 %v1108, %v1479
        %v1540 = vadd.f32 %v1113, %v1484
        %v1541 = vadd.f32 %v1116, %v1487
        %v1542 = vadd.f32 %v1121, %v1492
        %v1543 = vadd.f32 %v1124, %v1495
        %v1544 = vadd.f32 %v1129, %v1500
        %v1545 = vadd.f32 %v1132, %v1503
        %v1546 = vadd.f32 %v1137, %v1508
        %v1547 = vadd.f32 %v1140, %v1511
        %v1548 = vadd.f32 %v1145, %v1516
        %v1549 = vadd.f32 %v1148, %v1519
        %v1550 = vadd.f32 %v1153, %v1524
        %v1551 = vadd.f32 %v1156, %v1527
        %v1552 = vadd.f32 %v1161, %v1532
        %v1553 = vadd.f32 %v1164, %v1535
        %v1554 = vld [vmem:[%s0 + $0xc0] sm:$0xf]
        %v1555 = vld [vmem:[%s0 + $0xc4] sm:$0xf]
        %v1556 = vld [vmem:[%s0 + $0xc8] sm:$0xf]
        %v1557 = vld [vmem:[%s0 + $0xcc] sm:$0xf]
        %v1558 = vld [vmem:[%s0 + $0xd0] sm:$0xf]
        %v1559 = vld [vmem:[%s0 + $0xd4] sm:$0xf]
        %v1560 = vld [vmem:[%s0 + $0xd8] sm:$0xf]
        %v1561 = vld [vmem:[%s0 + $0xdc] sm:$0xf]
        %v1562 = vld [vmem:[%s0 + $0xe0] sm:$0xf]
        %v1563 = vld [vmem:[%s0 + $0xe4] sm:$0xf]
        %v1564 = vld [vmem:[%s0 + $0xe8] sm:$0xf]
        %v1565 = vld [vmem:[%s0 + $0xec] sm:$0xf]
        %v1566 = vld [vmem:[%s0 + $0xf0] sm:$0xf]
        %v1567 = vld [vmem:[%s0 + $0xf4] sm:$0xf]
        %v1568 = vld [vmem:[%s0 + $0xf8] sm:$0xf]
        %v1569 = vld [vmem:[%s0 + $0xfc] sm:$0xf]
        %v1586 = vunpack.c.l.b16 %v1554
        %v1587 = vunpack.c.l.b16 %v1555
        %v1588 = vunpack.c.l.b16 %v1556
        %v1589 = vunpack.c.l.b16 %v1557
        %v1590 = vunpack.c.l.b16 %v1558
        %v1591 = vunpack.c.l.b16 %v1559
        %v1592 = vunpack.c.l.b16 %v1560
        %v1593 = vunpack.c.l.b16 %v1561
        %v1594 = vunpack.c.l.b16 %v1562
        %v1595 = vunpack.c.l.b16 %v1563
        %v1596 = vunpack.c.l.b16 %v1564
        %v1597 = vunpack.c.l.b16 %v1565
        %v1598 = vunpack.c.l.b16 %v1566
        %v1599 = vunpack.c.l.b16 %v1567
        %v1600 = vunpack.c.l.b16 %v1568
        %v1601 = vunpack.c.l.b16 %v1569
        %v1602 = vpack.c.b16 %v1587, %v1586
        %v1603 = vpack.c.b16 %v1589, %v1588
        %v1604 = vpack.c.b16 %v1591, %v1590
        %v1605 = vpack.c.b16 %v1593, %v1592
        %v1606 = vpack.c.b16 %v1595, %v1594
        %v1607 = vpack.c.b16 %v1597, %v1596
        %v1608 = vpack.c.b16 %v1599, %v1598
        %v1609 = vpack.c.b16 %v1601, %v1600
        %v1611 = vsel %vm474, %v1602, 0
        %v1614 = vsel %vm474, %v1603, 0
        %v1617 = vsel %vm474, %v1604, 0
        %v1620 = vsel %vm474, %v1605, 0
        %v1623 = vsel %vm474, %v1606, 0
        %v1626 = vsel %vm474, %v1607, 0
        %v1629 = vsel %vm474, %v1608, 0
        %v1632 = vsel %vm474, %v1609, 0
        %1634 = vmatprep.subr.bf16.mxu0 0
        %1635 = vmatpush1.bf16.msra.mxu0 0
        %1636 = vmatprep.subr.bf16.mxu0 0
        %1637 = vmatpush1.bf16.msra.mxu0 0
        %1638 = vmatprep.subr.bf16.mxu0 0
        %1639 = vmatpush1.bf16.msra.mxu0 0
        %1640 = vmatprep.subr.bf16.mxu0 0
        %1641 = vmatpush1.bf16.msra.mxu0 0
        %1642 = vmatprep.subr.bf16.mxu0 0
        %1643 = vmatpush1.bf16.msra.mxu0 0
        %1644 = vmatprep.subr.bf16.mxu0 0
        %1645 = vmatpush1.bf16.msra.mxu0 0
        %1646 = vmatprep.subr.bf16.mxu0 0
        %1647 = vmatpush1.bf16.msra.mxu0 %v503
        %1648 = vmatprep.subr.bf16.mxu0 0
        %1649 = vmatpush1.bf16.msra.mxu0 %v471
        %1650 = vmatprep.subr.bf16.mxu0 0
        %1651 = vmatpush2.bf16.msra.mxu0 0
        %1652 = vmatprep.subr.bf16.mxu0 0
        %1653 = vmatpush2.bf16.msra.mxu0 0
        %1654 = vmatprep.subr.bf16.mxu0 0
        %1655 = vmatpush2.bf16.msra.mxu0 0
        %1656 = vmatprep.subr.bf16.mxu0 0
        %1657 = vmatpush2.bf16.msra.mxu0 0
        %1658 = vmatprep.subr.bf16.mxu0 0
        %1659 = vmatpush2.bf16.msra.mxu0 0
        %1660 = vmatprep.subr.bf16.mxu0 0
        %1661 = vmatpush2.bf16.msra.mxu0 0
        %1662 = vmatprep.subr.bf16.mxu0 0
        %1663 = vmatpush2.bf16.msra.mxu0 0
        %1664 = vmatprep.subr.bf16.mxu0 0
        %1665 = vmatpush2.bf16.msra.mxu0 0
        %1666 = vmatprep.mubr.bf16.mxu0 0
        %1667 = vmatmul.mubr.bf16.gmra.mxu0 %v1611
        %v1668 = vpop.f32.mrf.mxu0
        %v1669 = vadd.f32 0.0, %v1668
        %v1670 = vpop.f32.mrf.mxu0
        %v1671 = vpop.f32.mrf.mxu0
        %v1672 = vadd.f32 0.0, %v1671
        %v1673 = vpop.f32.mrf.mxu0
        %1674 = vmatprep.mubr.bf16.mxu0 0
        %1675 = vmatmul.mubr.bf16.gmra.mxu0 %v1614
        %v1676 = vpop.f32.mrf.mxu0
        %v1677 = vadd.f32 0.0, %v1676
        %v1678 = vpop.f32.mrf.mxu0
        %v1679 = vpop.f32.mrf.mxu0
        %v1680 = vadd.f32 0.0, %v1679
        %v1681 = vpop.f32.mrf.mxu0
        %1682 = vmatprep.mubr.bf16.mxu0 0
        %1683 = vmatmul.mubr.bf16.gmra.mxu0 %v1617
        %v1684 = vpop.f32.mrf.mxu0
        %v1685 = vadd.f32 0.0, %v1684
        %v1686 = vpop.f32.mrf.mxu0
        %v1687 = vpop.f32.mrf.mxu0
        %v1688 = vadd.f32 0.0, %v1687
        %v1689 = vpop.f32.mrf.mxu0
        %1690 = vmatprep.mubr.bf16.mxu0 0
        %1691 = vmatmul.mubr.bf16.gmra.mxu0 %v1620
        %v1692 = vpop.f32.mrf.mxu0
        %v1693 = vadd.f32 0.0, %v1692
        %v1694 = vpop.f32.mrf.mxu0
        %v1695 = vpop.f32.mrf.mxu0
        %v1696 = vadd.f32 0.0, %v1695
        %v1697 = vpop.f32.mrf.mxu0
        %1698 = vmatprep.mubr.bf16.mxu0 0
        %1699 = vmatmul.mubr.bf16.gmra.mxu0 %v1623
        %v1700 = vpop.f32.mrf.mxu0
        %v1701 = vadd.f32 0.0, %v1700
        %v1702 = vpop.f32.mrf.mxu0
        %v1703 = vpop.f32.mrf.mxu0
        %v1704 = vadd.f32 0.0, %v1703
        %v1705 = vpop.f32.mrf.mxu0
        %1706 = vmatprep.mubr.bf16.mxu0 0
        %1707 = vmatmul.mubr.bf16.gmra.mxu0 %v1626
        %v1708 = vpop.f32.mrf.mxu0
        %v1709 = vadd.f32 0.0, %v1708
        %v1710 = vpop.f32.mrf.mxu0
        %v1711 = vpop.f32.mrf.mxu0
        %v1712 = vadd.f32 0.0, %v1711
        %v1713 = vpop.f32.mrf.mxu0
        %1714 = vmatprep.mubr.bf16.mxu0 0
        %1715 = vmatmul.mubr.bf16.gmra.mxu0 %v1629
        %v1716 = vpop.f32.mrf.mxu0
        %v1717 = vadd.f32 0.0, %v1716
        %v1718 = vpop.f32.mrf.mxu0
        %v1719 = vpop.f32.mrf.mxu0
        %v1720 = vadd.f32 0.0, %v1719
        %v1721 = vpop.f32.mrf.mxu0
        %1722 = vmatprep.mubr.bf16.mxu0 0
        %1723 = vmatmul.mubr.bf16.gmra.mxu0 %v1632
        %v1724 = vpop.f32.mrf.mxu0
        %v1725 = vadd.f32 0.0, %v1724
        %v1726 = vpop.f32.mrf.mxu0
        %v1727 = vpop.f32.mrf.mxu0
        %v1728 = vadd.f32 0.0, %v1727
        %v1729 = vpop.f32.mrf.mxu0
        %1730 = vdwg.mxu0
        %v1731 = vmul.f32 %v1669, 0.2
        %v1732 = vmul.f32 %v1672, 0.2
        %v1733 = vmul.f32 %v1677, 0.2
        %v1734 = vmul.f32 %v1680, 0.2
        %v1735 = vmul.f32 %v1685, 0.2
        %v1736 = vmul.f32 %v1688, 0.2
        %v1737 = vmul.f32 %v1693, 0.2
        %v1738 = vmul.f32 %v1696, 0.2
        %v1739 = vmul.f32 %v1701, 0.2
        %v1740 = vmul.f32 %v1704, 0.2
        %v1741 = vmul.f32 %v1709, 0.2
        %v1742 = vmul.f32 %v1712, 0.2
        %v1743 = vmul.f32 %v1717, 0.2
        %v1744 = vmul.f32 %v1720, 0.2
        %v1745 = vmul.f32 %v1725, 0.2
        %v1746 = vmul.f32 %v1728, 0.2
        %v1747 = vmax.f32 %v1669, %v1731
        %v1748 = vmax.f32 %v1672, %v1732
        %v1749 = vmax.f32 %v1677, %v1733
        %v1750 = vmax.f32 %v1680, %v1734
        %v1751 = vmax.f32 %v1685, %v1735
        %v1752 = vmax.f32 %v1688, %v1736
        %v1753 = vmax.f32 %v1693, %v1737
        %v1754 = vmax.f32 %v1696, %v1738
        %v1755 = vmax.f32 %v1701, %v1739
        %v1756 = vmax.f32 %v1704, %v1740
        %v1757 = vmax.f32 %v1709, %v1741
        %v1758 = vmax.f32 %v1712, %v1742
        %v1759 = vmax.f32 %v1717, %v1743
        %v1760 = vmax.f32 %v1720, %v1744
        %v1761 = vmax.f32 %v1725, %v1745
        %v1762 = vmax.f32 %v1728, %v1746
        %v1763 = vpack.c.bf16 %v1748, %v1747
        %v1764 = vpack.c.bf16 %v1750, %v1749
        %v1765 = vpack.c.bf16 %v1752, %v1751
        %v1766 = vpack.c.bf16 %v1754, %v1753
        %v1767 = vpack.c.bf16 %v1756, %v1755
        %v1768 = vpack.c.bf16 %v1758, %v1757
        %v1769 = vpack.c.bf16 %v1760, %v1759
        %v1770 = vpack.c.bf16 %v1762, %v1761
        %s1771 = scalar_lea.vmem %s2, 96
        %v1772 = vld [vmem:[%s1771] sm:$0xf]
        %v1773 = vld [vmem:[%s1771 + $0x4] sm:$0xf]
        %v1774 = vld [vmem:[%s1771 + $0x8] sm:$0xf]
        %v1775 = vld [vmem:[%s1771 + $0xc] sm:$0xf]
        %v1776 = vld [vmem:[%s1771 + $0x10] sm:$0xf]
        %v1777 = vld [vmem:[%s1771 + $0x14] sm:$0xf]
        %v1778 = vld [vmem:[%s1771 + $0x18] sm:$0xf]
        %v1779 = vld [vmem:[%s1771 + $0x1c] sm:$0xf]
        %v1788 = vunpack.c.l.b16 %v1772
        %v1789 = vunpack.c.l.b16 %v1773
        %v1790 = vunpack.c.l.b16 %v1774
        %v1791 = vunpack.c.l.b16 %v1775
        %v1792 = vunpack.c.l.b16 %v1776
        %v1793 = vunpack.c.l.b16 %v1777
        %v1794 = vunpack.c.l.b16 %v1778
        %v1795 = vunpack.c.l.b16 %v1779
        %v1796 = vpack.c.b16 %v1789, %v1788
        %v1797 = vpack.c.b16 %v1791, %v1790
        %v1798 = vpack.c.b16 %v1793, %v1792
        %v1799 = vpack.c.b16 %v1795, %v1794
        %v1805 = vsel %vm900, %v1763, 0
        %v1808 = vsel %vm900, %v1764, 0
        %v1811 = vsel %vm900, %v1765, 0
        %v1814 = vsel %vm900, %v1766, 0
        %v1817 = vsel %vm900, %v1767, 0
        %v1820 = vsel %vm900, %v1768, 0
        %v1823 = vsel %vm900, %v1769, 0
        %v1826 = vsel %vm900, %v1770, 0
        %1828 = vmatprep.subr.bf16.mxu0 0
        %1829 = vmatpush1.bf16.msra.mxu0 0
        %1830 = vmatprep.subr.bf16.mxu0 0
        %1831 = vmatpush1.bf16.msra.mxu0 0
        %1832 = vmatprep.subr.bf16.mxu0 0
        %1833 = vmatpush1.bf16.msra.mxu0 0
        %1834 = vmatprep.subr.bf16.mxu0 0
        %1835 = vmatpush1.bf16.msra.mxu0 0
        %1836 = vmatprep.subr.bf16.mxu0 0
        %1837 = vmatpush1.bf16.msra.mxu0 %v1799
        %1838 = vmatprep.subr.bf16.mxu0 0
        %1839 = vmatpush1.bf16.msra.mxu0 %v1798
        %1840 = vmatprep.subr.bf16.mxu0 0
        %1841 = vmatpush1.bf16.msra.mxu0 %v1797
        %1842 = vmatprep.subr.bf16.mxu0 0
        %1843 = vmatpush1.bf16.msra.mxu0 %v1796
        %1844 = vmatprep.subr.bf16.mxu0 0
        %1845 = vmatpush2.bf16.msra.mxu0 0
        %1846 = vmatprep.subr.bf16.mxu0 0
        %1847 = vmatpush2.bf16.msra.mxu0 0
        %1848 = vmatprep.subr.bf16.mxu0 0
        %1849 = vmatpush2.bf16.msra.mxu0 0
        %1850 = vmatprep.subr.bf16.mxu0 0
        %1851 = vmatpush2.bf16.msra.mxu0 0
        %1852 = vmatprep.subr.bf16.mxu0 0
        %1853 = vmatpush2.bf16.msra.mxu0 0
        %1854 = vmatprep.subr.bf16.mxu0 0
        %1855 = vmatpush2.bf16.msra.mxu0 0
        %1856 = vmatprep.subr.bf16.mxu0 0
        %1857 = vmatpush2.bf16.msra.mxu0 0
        %1858 = vmatprep.subr.bf16.mxu0 0
        %1859 = vmatpush2.bf16.msra.mxu0 0
        %1860 = vmatprep.mubr.bf16.mxu0 0
        %1861 = vmatmul.mubr.bf16.gmra.mxu0 %v1805
        %v1862 = vpop.f32.mrf.mxu0
        %v1863 = vadd.f32 0.0, %v1862
        %v1864 = vpop.f32.mrf.mxu0
        %v1865 = vpop.f32.mrf.mxu0
        %v1866 = vadd.f32 0.0, %v1865
        %v1867 = vpop.f32.mrf.mxu0
        %1868 = vmatprep.mubr.bf16.mxu0 0
        %1869 = vmatmul.mubr.bf16.gmra.mxu0 %v1808
        %v1870 = vpop.f32.mrf.mxu0
        %v1871 = vadd.f32 0.0, %v1870
        %v1872 = vpop.f32.mrf.mxu0
        %v1873 = vpop.f32.mrf.mxu0
        %v1874 = vadd.f32 0.0, %v1873
        %v1875 = vpop.f32.mrf.mxu0
        %1876 = vmatprep.mubr.bf16.mxu0 0
        %1877 = vmatmul.mubr.bf16.gmra.mxu0 %v1811
        %v1878 = vpop.f32.mrf.mxu0
        %v1879 = vadd.f32 0.0, %v1878
        %v1880 = vpop.f32.mrf.mxu0
        %v1881 = vpop.f32.mrf.mxu0
        %v1882 = vadd.f32 0.0, %v1881
        %v1883 = vpop.f32.mrf.mxu0
        %1884 = vmatprep.mubr.bf16.mxu0 0
        %1885 = vmatmul.mubr.bf16.gmra.mxu0 %v1814
        %v1886 = vpop.f32.mrf.mxu0
        %v1887 = vadd.f32 0.0, %v1886
        %v1888 = vpop.f32.mrf.mxu0
        %v1889 = vpop.f32.mrf.mxu0
        %v1890 = vadd.f32 0.0, %v1889
        %v1891 = vpop.f32.mrf.mxu0
        %1892 = vmatprep.mubr.bf16.mxu0 0
        %1893 = vmatmul.mubr.bf16.gmra.mxu0 %v1817
        %v1894 = vpop.f32.mrf.mxu0
        %v1895 = vadd.f32 0.0, %v1894
        %v1896 = vpop.f32.mrf.mxu0
        %v1897 = vpop.f32.mrf.mxu0
        %v1898 = vadd.f32 0.0, %v1897
        %v1899 = vpop.f32.mrf.mxu0
        %1900 = vmatprep.mubr.bf16.mxu0 0
        %1901 = vmatmul.mubr.bf16.gmra.mxu0 %v1820
        %v1902 = vpop.f32.mrf.mxu0
        %v1903 = vadd.f32 0.0, %v1902
        %v1904 = vpop.f32.mrf.mxu0
        %v1905 = vpop.f32.mrf.mxu0
        %v1906 = vadd.f32 0.0, %v1905
        %v1907 = vpop.f32.mrf.mxu0
        %1908 = vmatprep.mubr.bf16.mxu0 0
        %1909 = vmatmul.mubr.bf16.gmra.mxu0 %v1823
        %v1910 = vpop.f32.mrf.mxu0
        %v1911 = vadd.f32 0.0, %v1910
        %v1912 = vpop.f32.mrf.mxu0
        %v1913 = vpop.f32.mrf.mxu0
        %v1914 = vadd.f32 0.0, %v1913
        %v1915 = vpop.f32.mrf.mxu0
        %1916 = vmatprep.mubr.bf16.mxu0 0
        %1917 = vmatmul.mubr.bf16.gmra.mxu0 %v1826
        %v1918 = vpop.f32.mrf.mxu0
        %v1919 = vadd.f32 0.0, %v1918
        %v1920 = vpop.f32.mrf.mxu0
        %v1921 = vpop.f32.mrf.mxu0
        %v1922 = vadd.f32 0.0, %v1921
        %v1923 = vpop.f32.mrf.mxu0
        %1924 = vdwg.mxu0
        %v1925 = vadd.f32 %v1538, %v1863
        %v1926 = vadd.f32 %v1539, %v1866
        %v1927 = vadd.f32 %v1540, %v1871
        %v1928 = vadd.f32 %v1541, %v1874
        %v1929 = vadd.f32 %v1542, %v1879
        %v1930 = vadd.f32 %v1543, %v1882
        %v1931 = vadd.f32 %v1544, %v1887
        %v1932 = vadd.f32 %v1545, %v1890
        %v1933 = vadd.f32 %v1546, %v1895
        %v1934 = vadd.f32 %v1547, %v1898
        %v1935 = vadd.f32 %v1548, %v1903
        %v1936 = vadd.f32 %v1549, %v1906
        %v1937 = vadd.f32 %v1550, %v1911
        %v1938 = vadd.f32 %v1551, %v1914
        %v1939 = vadd.f32 %v1552, %v1919
        %v1940 = vadd.f32 %v1553, %v1922
        %v1941 = vld [vmem:[%s0 + $0x100] sm:$0xf]
        %v1942 = vld [vmem:[%s0 + $0x104] sm:$0xf]
        %v1943 = vld [vmem:[%s0 + $0x108] sm:$0xf]
        %v1944 = vld [vmem:[%s0 + $0x10c] sm:$0xf]
        %v1945 = vld [vmem:[%s0 + $0x110] sm:$0xf]
        %v1946 = vld [vmem:[%s0 + $0x114] sm:$0xf]
        %v1947 = vld [vmem:[%s0 + $0x118] sm:$0xf]
        %v1948 = vld [vmem:[%s0 + $0x11c] sm:$0xf]
        %v1949 = vld [vmem:[%s0 + $0x120] sm:$0xf]
        %v1950 = vld [vmem:[%s0 + $0x124] sm:$0xf]
        %v1951 = vld [vmem:[%s0 + $0x128] sm:$0xf]
        %v1952 = vld [vmem:[%s0 + $0x12c] sm:$0xf]
        %v1953 = vld [vmem:[%s0 + $0x130] sm:$0xf]
        %v1954 = vld [vmem:[%s0 + $0x134] sm:$0xf]
        %v1955 = vld [vmem:[%s0 + $0x138] sm:$0xf]
        %v1956 = vld [vmem:[%s0 + $0x13c] sm:$0xf]
        %v1973 = vunpack.c.l.b16 %v1941
        %v1974 = vunpack.c.l.b16 %v1942
        %v1975 = vunpack.c.l.b16 %v1943
        %v1976 = vunpack.c.l.b16 %v1944
        %v1977 = vunpack.c.l.b16 %v1945
        %v1978 = vunpack.c.l.b16 %v1946
        %v1979 = vunpack.c.l.b16 %v1947
        %v1980 = vunpack.c.l.b16 %v1948
        %v1981 = vunpack.c.l.b16 %v1949
        %v1982 = vunpack.c.l.b16 %v1950
        %v1983 = vunpack.c.l.b16 %v1951
        %v1984 = vunpack.c.l.b16 %v1952
        %v1985 = vunpack.c.l.b16 %v1953
        %v1986 = vunpack.c.l.b16 %v1954
        %v1987 = vunpack.c.l.b16 %v1955
        %v1988 = vunpack.c.l.b16 %v1956
        %v1989 = vpack.c.b16 %v1974, %v1973
        %v1990 = vpack.c.b16 %v1976, %v1975
        %v1991 = vpack.c.b16 %v1978, %v1977
        %v1992 = vpack.c.b16 %v1980, %v1979
        %v1993 = vpack.c.b16 %v1982, %v1981
        %v1994 = vpack.c.b16 %v1984, %v1983
        %v1995 = vpack.c.b16 %v1986, %v1985
        %v1996 = vpack.c.b16 %v1988, %v1987
        %v1998 = vsel %vm474, %v1989, 0
        %v2001 = vsel %vm474, %v1990, 0
        %v2004 = vsel %vm474, %v1991, 0
        %v2007 = vsel %vm474, %v1992, 0
        %v2010 = vsel %vm474, %v1993, 0
        %v2013 = vsel %vm474, %v1994, 0
        %v2016 = vsel %vm474, %v1995, 0
        %v2019 = vsel %vm474, %v1996, 0
        %2021 = vmatprep.subr.bf16.mxu0 0
        %2022 = vmatpush1.bf16.msra.mxu0 0
        %2023 = vmatprep.subr.bf16.mxu0 0
        %2024 = vmatpush1.bf16.msra.mxu0 0
        %2025 = vmatprep.subr.bf16.mxu0 0
        %2026 = vmatpush1.bf16.msra.mxu0 0
        %2027 = vmatprep.subr.bf16.mxu0 0
        %2028 = vmatpush1.bf16.msra.mxu0 0
        %2029 = vmatprep.subr.bf16.mxu0 0
        %2030 = vmatpush1.bf16.msra.mxu0 0
        %2031 = vmatprep.subr.bf16.mxu0 0
        %2032 = vmatpush1.bf16.msra.mxu0 0
        %2033 = vmatprep.subr.bf16.mxu0 0
        %2034 = vmatpush1.bf16.msra.mxu0 %v503
        %2035 = vmatprep.subr.bf16.mxu0 0
        %2036 = vmatpush1.bf16.msra.mxu0 %v471
        %2037 = vmatprep.subr.bf16.mxu0 0
        %2038 = vmatpush2.bf16.msra.mxu0 0
        %2039 = vmatprep.subr.bf16.mxu0 0
        %2040 = vmatpush2.bf16.msra.mxu0 0
        %2041 = vmatprep.subr.bf16.mxu0 0
        %2042 = vmatpush2.bf16.msra.mxu0 0
        %2043 = vmatprep.subr.bf16.mxu0 0
        %2044 = vmatpush2.bf16.msra.mxu0 0
        %2045 = vmatprep.subr.bf16.mxu0 0
        %2046 = vmatpush2.bf16.msra.mxu0 0
        %2047 = vmatprep.subr.bf16.mxu0 0
        %2048 = vmatpush2.bf16.msra.mxu0 0
        %2049 = vmatprep.subr.bf16.mxu0 0
        %2050 = vmatpush2.bf16.msra.mxu0 0
        %2051 = vmatprep.subr.bf16.mxu0 0
        %2052 = vmatpush2.bf16.msra.mxu0 0
        %2053 = vmatprep.mubr.bf16.mxu0 0
        %2054 = vmatmul.mubr.bf16.gmra.mxu0 %v1998
        %v2055 = vpop.f32.mrf.mxu0
        %v2056 = vadd.f32 0.0, %v2055
        %v2057 = vpop.f32.mrf.mxu0
        %v2058 = vpop.f32.mrf.mxu0
        %v2059 = vadd.f32 0.0, %v2058
        %v2060 = vpop.f32.mrf.mxu0
        %2061 = vmatprep.mubr.bf16.mxu0 0
        %2062 = vmatmul.mubr.bf16.gmra.mxu0 %v2001
        %v2063 = vpop.f32.mrf.mxu0
        %v2064 = vadd.f32 0.0, %v2063
        %v2065 = vpop.f32.mrf.mxu0
        %v2066 = vpop.f32.mrf.mxu0
        %v2067 = vadd.f32 0.0, %v2066
        %v2068 = vpop.f32.mrf.mxu0
        %2069 = vmatprep.mubr.bf16.mxu0 0
        %2070 = vmatmul.mubr.bf16.gmra.mxu0 %v2004
        %v2071 = vpop.f32.mrf.mxu0
        %v2072 = vadd.f32 0.0, %v2071
        %v2073 = vpop.f32.mrf.mxu0
        %v2074 = vpop.f32.mrf.mxu0
        %v2075 = vadd.f32 0.0, %v2074
        %v2076 = vpop.f32.mrf.mxu0
        %2077 = vmatprep.mubr.bf16.mxu0 0
        %2078 = vmatmul.mubr.bf16.gmra.mxu0 %v2007
        %v2079 = vpop.f32.mrf.mxu0
        %v2080 = vadd.f32 0.0, %v2079
        %v2081 = vpop.f32.mrf.mxu0
        %v2082 = vpop.f32.mrf.mxu0
        %v2083 = vadd.f32 0.0, %v2082
        %v2084 = vpop.f32.mrf.mxu0
        %2085 = vmatprep.mubr.bf16.mxu0 0
        %2086 = vmatmul.mubr.bf16.gmra.mxu0 %v2010
        %v2087 = vpop.f32.mrf.mxu0
        %v2088 = vadd.f32 0.0, %v2087
        %v2089 = vpop.f32.mrf.mxu0
        %v2090 = vpop.f32.mrf.mxu0
        %v2091 = vadd.f32 0.0, %v2090
        %v2092 = vpop.f32.mrf.mxu0
        %2093 = vmatprep.mubr.bf16.mxu0 0
        %2094 = vmatmul.mubr.bf16.gmra.mxu0 %v2013
        %v2095 = vpop.f32.mrf.mxu0
        %v2096 = vadd.f32 0.0, %v2095
        %v2097 = vpop.f32.mrf.mxu0
        %v2098 = vpop.f32.mrf.mxu0
        %v2099 = vadd.f32 0.0, %v2098
        %v2100 = vpop.f32.mrf.mxu0
        %2101 = vmatprep.mubr.bf16.mxu0 0
        %2102 = vmatmul.mubr.bf16.gmra.mxu0 %v2016
        %v2103 = vpop.f32.mrf.mxu0
        %v2104 = vadd.f32 0.0, %v2103
        %v2105 = vpop.f32.mrf.mxu0
        %v2106 = vpop.f32.mrf.mxu0
        %v2107 = vadd.f32 0.0, %v2106
        %v2108 = vpop.f32.mrf.mxu0
        %2109 = vmatprep.mubr.bf16.mxu0 0
        %2110 = vmatmul.mubr.bf16.gmra.mxu0 %v2019
        %v2111 = vpop.f32.mrf.mxu0
        %v2112 = vadd.f32 0.0, %v2111
        %v2113 = vpop.f32.mrf.mxu0
        %v2114 = vpop.f32.mrf.mxu0
        %v2115 = vadd.f32 0.0, %v2114
        %v2116 = vpop.f32.mrf.mxu0
        %2117 = vdwg.mxu0
        %v2118 = vmul.f32 %v2056, 0.2
        %v2119 = vmul.f32 %v2059, 0.2
        %v2120 = vmul.f32 %v2064, 0.2
        %v2121 = vmul.f32 %v2067, 0.2
        %v2122 = vmul.f32 %v2072, 0.2
        %v2123 = vmul.f32 %v2075, 0.2
        %v2124 = vmul.f32 %v2080, 0.2
        %v2125 = vmul.f32 %v2083, 0.2
        %v2126 = vmul.f32 %v2088, 0.2
        %v2127 = vmul.f32 %v2091, 0.2
        %v2128 = vmul.f32 %v2096, 0.2
        %v2129 = vmul.f32 %v2099, 0.2
        %v2130 = vmul.f32 %v2104, 0.2
        %v2131 = vmul.f32 %v2107, 0.2
        %v2132 = vmul.f32 %v2112, 0.2
        %v2133 = vmul.f32 %v2115, 0.2
        %v2134 = vmax.f32 %v2056, %v2118
        %v2135 = vmax.f32 %v2059, %v2119
        %v2136 = vmax.f32 %v2064, %v2120
        %v2137 = vmax.f32 %v2067, %v2121
        %v2138 = vmax.f32 %v2072, %v2122
        %v2139 = vmax.f32 %v2075, %v2123
        %v2140 = vmax.f32 %v2080, %v2124
        %v2141 = vmax.f32 %v2083, %v2125
        %v2142 = vmax.f32 %v2088, %v2126
        %v2143 = vmax.f32 %v2091, %v2127
        %v2144 = vmax.f32 %v2096, %v2128
        %v2145 = vmax.f32 %v2099, %v2129
        %v2146 = vmax.f32 %v2104, %v2130
        %v2147 = vmax.f32 %v2107, %v2131
        %v2148 = vmax.f32 %v2112, %v2132
        %v2149 = vmax.f32 %v2115, %v2133
        %v2150 = vpack.c.bf16 %v2135, %v2134
        %v2151 = vpack.c.bf16 %v2137, %v2136
        %v2152 = vpack.c.bf16 %v2139, %v2138
        %v2153 = vpack.c.bf16 %v2141, %v2140
        %v2154 = vpack.c.bf16 %v2143, %v2142
        %v2155 = vpack.c.bf16 %v2145, %v2144
        %v2156 = vpack.c.bf16 %v2147, %v2146
        %v2157 = vpack.c.bf16 %v2149, %v2148
        %s2158 = scalar_lea.vmem %s2, 128
        %v2159 = vld [vmem:[%s2158] sm:$0xf]
        %v2160 = vld [vmem:[%s2158 + $0x4] sm:$0xf]
        %v2161 = vld [vmem:[%s2158 + $0x8] sm:$0xf]
        %v2162 = vld [vmem:[%s2158 + $0xc] sm:$0xf]
        %v2163 = vld [vmem:[%s2158 + $0x10] sm:$0xf]
        %v2164 = vld [vmem:[%s2158 + $0x14] sm:$0xf]
        %v2165 = vld [vmem:[%s2158 + $0x18] sm:$0xf]
        %v2166 = vld [vmem:[%s2158 + $0x1c] sm:$0xf]
        %v2175 = vunpack.c.l.b16 %v2159
        %v2176 = vunpack.c.l.b16 %v2160
        %v2177 = vunpack.c.l.b16 %v2161
        %v2178 = vunpack.c.l.b16 %v2162
        %v2179 = vunpack.c.l.b16 %v2163
        %v2180 = vunpack.c.l.b16 %v2164
        %v2181 = vunpack.c.l.b16 %v2165
        %v2182 = vunpack.c.l.b16 %v2166
        %v2183 = vpack.c.b16 %v2176, %v2175
        %v2184 = vpack.c.b16 %v2178, %v2177
        %v2185 = vpack.c.b16 %v2180, %v2179
        %v2186 = vpack.c.b16 %v2182, %v2181
        %v2192 = vsel %vm900, %v2150, 0
        %v2195 = vsel %vm900, %v2151, 0
        %v2198 = vsel %vm900, %v2152, 0
        %v2201 = vsel %vm900, %v2153, 0
        %v2204 = vsel %vm900, %v2154, 0
        %v2207 = vsel %vm900, %v2155, 0
        %v2210 = vsel %vm900, %v2156, 0
        %v2213 = vsel %vm900, %v2157, 0
        %2215 = vmatprep.subr.bf16.mxu0 0
        %2216 = vmatpush1.bf16.msra.mxu0 0
        %2217 = vmatprep.subr.bf16.mxu0 0
        %2218 = vmatpush1.bf16.msra.mxu0 0
        %2219 = vmatprep.subr.bf16.mxu0 0
        %2220 = vmatpush1.bf16.msra.mxu0 0
        %2221 = vmatprep.subr.bf16.mxu0 0
        %2222 = vmatpush1.bf16.msra.mxu0 0
        %2223 = vmatprep.subr.bf16.mxu0 0
        %2224 = vmatpush1.bf16.msra.mxu0 %v2186
        %2225 = vmatprep.subr.bf16.mxu0 0
        %2226 = vmatpush1.bf16.msra.mxu0 %v2185
        %2227 = vmatprep.subr.bf16.mxu0 0
        %2228 = vmatpush1.bf16.msra.mxu0 %v2184
        %2229 = vmatprep.subr.bf16.mxu0 0
        %2230 = vmatpush1.bf16.msra.mxu0 %v2183
        %2231 = vmatprep.subr.bf16.mxu0 0
        %2232 = vmatpush2.bf16.msra.mxu0 0
        %2233 = vmatprep.subr.bf16.mxu0 0
        %2234 = vmatpush2.bf16.msra.mxu0 0
        %2235 = vmatprep.subr.bf16.mxu0 0
        %2236 = vmatpush2.bf16.msra.mxu0 0
        %2237 = vmatprep.subr.bf16.mxu0 0
        %2238 = vmatpush2.bf16.msra.mxu0 0
        %2239 = vmatprep.subr.bf16.mxu0 0
        %2240 = vmatpush2.bf16.msra.mxu0 0
        %2241 = vmatprep.subr.bf16.mxu0 0
        %2242 = vmatpush2.bf16.msra.mxu0 0
        %2243 = vmatprep.subr.bf16.mxu0 0
        %2244 = vmatpush2.bf16.msra.mxu0 0
        %2245 = vmatprep.subr.bf16.mxu0 0
        %2246 = vmatpush2.bf16.msra.mxu0 0
        %2247 = vmatprep.mubr.bf16.mxu0 0
        %2248 = vmatmul.mubr.bf16.gmra.mxu0 %v2192
        %v2249 = vpop.f32.mrf.mxu0
        %v2250 = vadd.f32 0.0, %v2249
        %v2251 = vpop.f32.mrf.mxu0
        %v2252 = vpop.f32.mrf.mxu0
        %v2253 = vadd.f32 0.0, %v2252
        %v2254 = vpop.f32.mrf.mxu0
        %2255 = vmatprep.mubr.bf16.mxu0 0
        %2256 = vmatmul.mubr.bf16.gmra.mxu0 %v2195
        %v2257 = vpop.f32.mrf.mxu0
        %v2258 = vadd.f32 0.0, %v2257
        %v2259 = vpop.f32.mrf.mxu0
        %v2260 = vpop.f32.mrf.mxu0
        %v2261 = vadd.f32 0.0, %v2260
        %v2262 = vpop.f32.mrf.mxu0
        %2263 = vmatprep.mubr.bf16.mxu0 0
        %2264 = vmatmul.mubr.bf16.gmra.mxu0 %v2198
        %v2265 = vpop.f32.mrf.mxu0
        %v2266 = vadd.f32 0.0, %v2265
        %v2267 = vpop.f32.mrf.mxu0
        %v2268 = vpop.f32.mrf.mxu0
        %v2269 = vadd.f32 0.0, %v2268
        %v2270 = vpop.f32.mrf.mxu0
        %2271 = vmatprep.mubr.bf16.mxu0 0
        %2272 = vmatmul.mubr.bf16.gmra.mxu0 %v2201
        %v2273 = vpop.f32.mrf.mxu0
        %v2274 = vadd.f32 0.0, %v2273
        %v2275 = vpop.f32.mrf.mxu0
        %v2276 = vpop.f32.mrf.mxu0
        %v2277 = vadd.f32 0.0, %v2276
        %v2278 = vpop.f32.mrf.mxu0
        %2279 = vmatprep.mubr.bf16.mxu0 0
        %2280 = vmatmul.mubr.bf16.gmra.mxu0 %v2204
        %v2281 = vpop.f32.mrf.mxu0
        %v2282 = vadd.f32 0.0, %v2281
        %v2283 = vpop.f32.mrf.mxu0
        %v2284 = vpop.f32.mrf.mxu0
        %v2285 = vadd.f32 0.0, %v2284
        %v2286 = vpop.f32.mrf.mxu0
        %2287 = vmatprep.mubr.bf16.mxu0 0
        %2288 = vmatmul.mubr.bf16.gmra.mxu0 %v2207
        %v2289 = vpop.f32.mrf.mxu0
        %v2290 = vadd.f32 0.0, %v2289
        %v2291 = vpop.f32.mrf.mxu0
        %v2292 = vpop.f32.mrf.mxu0
        %v2293 = vadd.f32 0.0, %v2292
        %v2294 = vpop.f32.mrf.mxu0
        %2295 = vmatprep.mubr.bf16.mxu0 0
        %2296 = vmatmul.mubr.bf16.gmra.mxu0 %v2210
        %v2297 = vpop.f32.mrf.mxu0
        %v2298 = vadd.f32 0.0, %v2297
        %v2299 = vpop.f32.mrf.mxu0
        %v2300 = vpop.f32.mrf.mxu0
        %v2301 = vadd.f32 0.0, %v2300
        %v2302 = vpop.f32.mrf.mxu0
        %2303 = vmatprep.mubr.bf16.mxu0 0
        %2304 = vmatmul.mubr.bf16.gmra.mxu0 %v2213
        %v2305 = vpop.f32.mrf.mxu0
        %v2306 = vadd.f32 0.0, %v2305
        %v2307 = vpop.f32.mrf.mxu0
        %v2308 = vpop.f32.mrf.mxu0
        %v2309 = vadd.f32 0.0, %v2308
        %v2310 = vpop.f32.mrf.mxu0
        %2311 = vdwg.mxu0
        %v2312 = vadd.f32 %v1925, %v2250
        %v2313 = vadd.f32 %v1926, %v2253
        %v2314 = vadd.f32 %v1927, %v2258
        %v2315 = vadd.f32 %v1928, %v2261
        %v2316 = vadd.f32 %v1929, %v2266
        %v2317 = vadd.f32 %v1930, %v2269
        %v2318 = vadd.f32 %v1931, %v2274
        %v2319 = vadd.f32 %v1932, %v2277
        %v2320 = vadd.f32 %v1933, %v2282
        %v2321 = vadd.f32 %v1934, %v2285
        %v2322 = vadd.f32 %v1935, %v2290
        %v2323 = vadd.f32 %v1936, %v2293
        %v2324 = vadd.f32 %v1937, %v2298
        %v2325 = vadd.f32 %v1938, %v2301
        %v2326 = vadd.f32 %v1939, %v2306
        %v2327 = vadd.f32 %v1940, %v2309
        %v2328 = vld [vmem:[%s0 + $0x140] sm:$0xf]
        %v2329 = vld [vmem:[%s0 + $0x144] sm:$0xf]
        %v2330 = vld [vmem:[%s0 + $0x148] sm:$0xf]
        %v2331 = vld [vmem:[%s0 + $0x14c] sm:$0xf]
        %v2332 = vld [vmem:[%s0 + $0x150] sm:$0xf]
        %v2333 = vld [vmem:[%s0 + $0x154] sm:$0xf]
        %v2334 = vld [vmem:[%s0 + $0x158] sm:$0xf]
        %v2335 = vld [vmem:[%s0 + $0x15c] sm:$0xf]
        %v2336 = vld [vmem:[%s0 + $0x160] sm:$0xf]
        %v2337 = vld [vmem:[%s0 + $0x164] sm:$0xf]
        %v2338 = vld [vmem:[%s0 + $0x168] sm:$0xf]
        %v2339 = vld [vmem:[%s0 + $0x16c] sm:$0xf]
        %v2340 = vld [vmem:[%s0 + $0x170] sm:$0xf]
        %v2341 = vld [vmem:[%s0 + $0x174] sm:$0xf]
        %v2342 = vld [vmem:[%s0 + $0x178] sm:$0xf]
        %v2343 = vld [vmem:[%s0 + $0x17c] sm:$0xf]
        %v2360 = vunpack.c.l.b16 %v2328
        %v2361 = vunpack.c.l.b16 %v2329
        %v2362 = vunpack.c.l.b16 %v2330
        %v2363 = vunpack.c.l.b16 %v2331
        %v2364 = vunpack.c.l.b16 %v2332
        %v2365 = vunpack.c.l.b16 %v2333
        %v2366 = vunpack.c.l.b16 %v2334
        %v2367 = vunpack.c.l.b16 %v2335
        %v2368 = vunpack.c.l.b16 %v2336
        %v2369 = vunpack.c.l.b16 %v2337
        %v2370 = vunpack.c.l.b16 %v2338
        %v2371 = vunpack.c.l.b16 %v2339
        %v2372 = vunpack.c.l.b16 %v2340
        %v2373 = vunpack.c.l.b16 %v2341
        %v2374 = vunpack.c.l.b16 %v2342
        %v2375 = vunpack.c.l.b16 %v2343
        %v2376 = vpack.c.b16 %v2361, %v2360
        %v2377 = vpack.c.b16 %v2363, %v2362
        %v2378 = vpack.c.b16 %v2365, %v2364
        %v2379 = vpack.c.b16 %v2367, %v2366
        %v2380 = vpack.c.b16 %v2369, %v2368
        %v2381 = vpack.c.b16 %v2371, %v2370
        %v2382 = vpack.c.b16 %v2373, %v2372
        %v2383 = vpack.c.b16 %v2375, %v2374
        %v2385 = vsel %vm474, %v2376, 0
        %v2388 = vsel %vm474, %v2377, 0
        %v2391 = vsel %vm474, %v2378, 0
        %v2394 = vsel %vm474, %v2379, 0
        %v2397 = vsel %vm474, %v2380, 0
        %v2400 = vsel %vm474, %v2381, 0
        %v2403 = vsel %vm474, %v2382, 0
        %v2406 = vsel %vm474, %v2383, 0
        %2408 = vmatprep.subr.bf16.mxu0 0
        %2409 = vmatpush1.bf16.msra.mxu0 0
        %2410 = vmatprep.subr.bf16.mxu0 0
        %2411 = vmatpush1.bf16.msra.mxu0 0
        %2412 = vmatprep.subr.bf16.mxu0 0
        %2413 = vmatpush1.bf16.msra.mxu0 0
        %2414 = vmatprep.subr.bf16.mxu0 0
        %2415 = vmatpush1.bf16.msra.mxu0 0
        %2416 = vmatprep.subr.bf16.mxu0 0
        %2417 = vmatpush1.bf16.msra.mxu0 0
        %2418 = vmatprep.subr.bf16.mxu0 0
        %2419 = vmatpush1.bf16.msra.mxu0 0
        %2420 = vmatprep.subr.bf16.mxu0 0
        %2421 = vmatpush1.bf16.msra.mxu0 %v503
        %2422 = vmatprep.subr.bf16.mxu0 0
        %2423 = vmatpush1.bf16.msra.mxu0 %v471
        %2424 = vmatprep.subr.bf16.mxu0 0
        %2425 = vmatpush2.bf16.msra.mxu0 0
        %2426 = vmatprep.subr.bf16.mxu0 0
        %2427 = vmatpush2.bf16.msra.mxu0 0
        %2428 = vmatprep.subr.bf16.mxu0 0
        %2429 = vmatpush2.bf16.msra.mxu0 0
        %2430 = vmatprep.subr.bf16.mxu0 0
        %2431 = vmatpush2.bf16.msra.mxu0 0
        %2432 = vmatprep.subr.bf16.mxu0 0
        %2433 = vmatpush2.bf16.msra.mxu0 0
        %2434 = vmatprep.subr.bf16.mxu0 0
        %2435 = vmatpush2.bf16.msra.mxu0 0
        %2436 = vmatprep.subr.bf16.mxu0 0
        %2437 = vmatpush2.bf16.msra.mxu0 0
        %2438 = vmatprep.subr.bf16.mxu0 0
        %2439 = vmatpush2.bf16.msra.mxu0 0
        %2440 = vmatprep.mubr.bf16.mxu0 0
        %2441 = vmatmul.mubr.bf16.gmra.mxu0 %v2385
        %v2442 = vpop.f32.mrf.mxu0
        %v2443 = vadd.f32 0.0, %v2442
        %v2444 = vpop.f32.mrf.mxu0
        %v2445 = vpop.f32.mrf.mxu0
        %v2446 = vadd.f32 0.0, %v2445
        %v2447 = vpop.f32.mrf.mxu0
        %2448 = vmatprep.mubr.bf16.mxu0 0
        %2449 = vmatmul.mubr.bf16.gmra.mxu0 %v2388
        %v2450 = vpop.f32.mrf.mxu0
        %v2451 = vadd.f32 0.0, %v2450
        %v2452 = vpop.f32.mrf.mxu0
        %v2453 = vpop.f32.mrf.mxu0
        %v2454 = vadd.f32 0.0, %v2453
        %v2455 = vpop.f32.mrf.mxu0
        %2456 = vmatprep.mubr.bf16.mxu0 0
        %2457 = vmatmul.mubr.bf16.gmra.mxu0 %v2391
        %v2458 = vpop.f32.mrf.mxu0
        %v2459 = vadd.f32 0.0, %v2458
        %v2460 = vpop.f32.mrf.mxu0
        %v2461 = vpop.f32.mrf.mxu0
        %v2462 = vadd.f32 0.0, %v2461
        %v2463 = vpop.f32.mrf.mxu0
        %2464 = vmatprep.mubr.bf16.mxu0 0
        %2465 = vmatmul.mubr.bf16.gmra.mxu0 %v2394
        %v2466 = vpop.f32.mrf.mxu0
        %v2467 = vadd.f32 0.0, %v2466
        %v2468 = vpop.f32.mrf.mxu0
        %v2469 = vpop.f32.mrf.mxu0
        %v2470 = vadd.f32 0.0, %v2469
        %v2471 = vpop.f32.mrf.mxu0
        %2472 = vmatprep.mubr.bf16.mxu0 0
        %2473 = vmatmul.mubr.bf16.gmra.mxu0 %v2397
        %v2474 = vpop.f32.mrf.mxu0
        %v2475 = vadd.f32 0.0, %v2474
        %v2476 = vpop.f32.mrf.mxu0
        %v2477 = vpop.f32.mrf.mxu0
        %v2478 = vadd.f32 0.0, %v2477
        %v2479 = vpop.f32.mrf.mxu0
        %2480 = vmatprep.mubr.bf16.mxu0 0
        %2481 = vmatmul.mubr.bf16.gmra.mxu0 %v2400
        %v2482 = vpop.f32.mrf.mxu0
        %v2483 = vadd.f32 0.0, %v2482
        %v2484 = vpop.f32.mrf.mxu0
        %v2485 = vpop.f32.mrf.mxu0
        %v2486 = vadd.f32 0.0, %v2485
        %v2487 = vpop.f32.mrf.mxu0
        %2488 = vmatprep.mubr.bf16.mxu0 0
        %2489 = vmatmul.mubr.bf16.gmra.mxu0 %v2403
        %v2490 = vpop.f32.mrf.mxu0
        %v2491 = vadd.f32 0.0, %v2490
        %v2492 = vpop.f32.mrf.mxu0
        %v2493 = vpop.f32.mrf.mxu0
        %v2494 = vadd.f32 0.0, %v2493
        %v2495 = vpop.f32.mrf.mxu0
        %2496 = vmatprep.mubr.bf16.mxu0 0
        %2497 = vmatmul.mubr.bf16.gmra.mxu0 %v2406
        %v2498 = vpop.f32.mrf.mxu0
        %v2499 = vadd.f32 0.0, %v2498
        %v2500 = vpop.f32.mrf.mxu0
        %v2501 = vpop.f32.mrf.mxu0
        %v2502 = vadd.f32 0.0, %v2501
        %v2503 = vpop.f32.mrf.mxu0
        %2504 = vdwg.mxu0
        %v2505 = vmul.f32 %v2443, 0.2
        %v2506 = vmul.f32 %v2446, 0.2
        %v2507 = vmul.f32 %v2451, 0.2
        %v2508 = vmul.f32 %v2454, 0.2
        %v2509 = vmul.f32 %v2459, 0.2
        %v2510 = vmul.f32 %v2462, 0.2
        %v2511 = vmul.f32 %v2467, 0.2
        %v2512 = vmul.f32 %v2470, 0.2
        %v2513 = vmul.f32 %v2475, 0.2
        %v2514 = vmul.f32 %v2478, 0.2
        %v2515 = vmul.f32 %v2483, 0.2
        %v2516 = vmul.f32 %v2486, 0.2
        %v2517 = vmul.f32 %v2491, 0.2
        %v2518 = vmul.f32 %v2494, 0.2
        %v2519 = vmul.f32 %v2499, 0.2
        %v2520 = vmul.f32 %v2502, 0.2
        %v2521 = vmax.f32 %v2443, %v2505
        %v2522 = vmax.f32 %v2446, %v2506
        %v2523 = vmax.f32 %v2451, %v2507
        %v2524 = vmax.f32 %v2454, %v2508
        %v2525 = vmax.f32 %v2459, %v2509
        %v2526 = vmax.f32 %v2462, %v2510
        %v2527 = vmax.f32 %v2467, %v2511
        %v2528 = vmax.f32 %v2470, %v2512
        %v2529 = vmax.f32 %v2475, %v2513
        %v2530 = vmax.f32 %v2478, %v2514
        %v2531 = vmax.f32 %v2483, %v2515
        %v2532 = vmax.f32 %v2486, %v2516
        %v2533 = vmax.f32 %v2491, %v2517
        %v2534 = vmax.f32 %v2494, %v2518
        %v2535 = vmax.f32 %v2499, %v2519
        %v2536 = vmax.f32 %v2502, %v2520
        %v2537 = vpack.c.bf16 %v2522, %v2521
        %v2538 = vpack.c.bf16 %v2524, %v2523
        %v2539 = vpack.c.bf16 %v2526, %v2525
        %v2540 = vpack.c.bf16 %v2528, %v2527
        %v2541 = vpack.c.bf16 %v2530, %v2529
        %v2542 = vpack.c.bf16 %v2532, %v2531
        %v2543 = vpack.c.bf16 %v2534, %v2533
        %v2544 = vpack.c.bf16 %v2536, %v2535
        %s2545 = scalar_lea.vmem %s2, 160
        %v2546 = vld [vmem:[%s2545] sm:$0xf]
        %v2547 = vld [vmem:[%s2545 + $0x4] sm:$0xf]
        %v2548 = vld [vmem:[%s2545 + $0x8] sm:$0xf]
        %v2549 = vld [vmem:[%s2545 + $0xc] sm:$0xf]
        %v2550 = vld [vmem:[%s2545 + $0x10] sm:$0xf]
        %v2551 = vld [vmem:[%s2545 + $0x14] sm:$0xf]
        %v2552 = vld [vmem:[%s2545 + $0x18] sm:$0xf]
        %v2553 = vld [vmem:[%s2545 + $0x1c] sm:$0xf]
        %v2562 = vunpack.c.l.b16 %v2546
        %v2563 = vunpack.c.l.b16 %v2547
        %v2564 = vunpack.c.l.b16 %v2548
        %v2565 = vunpack.c.l.b16 %v2549
        %v2566 = vunpack.c.l.b16 %v2550
        %v2567 = vunpack.c.l.b16 %v2551
        %v2568 = vunpack.c.l.b16 %v2552
        %v2569 = vunpack.c.l.b16 %v2553
        %v2570 = vpack.c.b16 %v2563, %v2562
        %v2571 = vpack.c.b16 %v2565, %v2564
        %v2572 = vpack.c.b16 %v2567, %v2566
        %v2573 = vpack.c.b16 %v2569, %v2568
        %v2579 = vsel %vm900, %v2537, 0
        %v2582 = vsel %vm900, %v2538, 0
        %v2585 = vsel %vm900, %v2539, 0
        %v2588 = vsel %vm900, %v2540, 0
        %v2591 = vsel %vm900, %v2541, 0
        %v2594 = vsel %vm900, %v2542, 0
        %v2597 = vsel %vm900, %v2543, 0
        %v2600 = vsel %vm900, %v2544, 0
        %2602 = vmatprep.subr.bf16.mxu0 0
        %2603 = vmatpush1.bf16.msra.mxu0 0
        %2604 = vmatprep.subr.bf16.mxu0 0
        %2605 = vmatpush1.bf16.msra.mxu0 0
        %2606 = vmatprep.subr.bf16.mxu0 0
        %2607 = vmatpush1.bf16.msra.mxu0 0
        %2608 = vmatprep.subr.bf16.mxu0 0
        %2609 = vmatpush1.bf16.msra.mxu0 0
        %2610 = vmatprep.subr.bf16.mxu0 0
        %2611 = vmatpush1.bf16.msra.mxu0 %v2573
        %2612 = vmatprep.subr.bf16.mxu0 0
        %2613 = vmatpush1.bf16.msra.mxu0 %v2572
        %2614 = vmatprep.subr.bf16.mxu0 0
        %2615 = vmatpush1.bf16.msra.mxu0 %v2571
        %2616 = vmatprep.subr.bf16.mxu0 0
        %2617 = vmatpush1.bf16.msra.mxu0 %v2570
        %2618 = vmatprep.subr.bf16.mxu0 0
        %2619 = vmatpush2.bf16.msra.mxu0 0
        %2620 = vmatprep.subr.bf16.mxu0 0
        %2621 = vmatpush2.bf16.msra.mxu0 0
        %2622 = vmatprep.subr.bf16.mxu0 0
        %2623 = vmatpush2.bf16.msra.mxu0 0
        %2624 = vmatprep.subr.bf16.mxu0 0
        %2625 = vmatpush2.bf16.msra.mxu0 0
        %2626 = vmatprep.subr.bf16.mxu0 0
        %2627 = vmatpush2.bf16.msra.mxu0 0
        %2628 = vmatprep.subr.bf16.mxu0 0
        %2629 = vmatpush2.bf16.msra.mxu0 0
        %2630 = vmatprep.subr.bf16.mxu0 0
        %2631 = vmatpush2.bf16.msra.mxu0 0
        %2632 = vmatprep.subr.bf16.mxu0 0
        %2633 = vmatpush2.bf16.msra.mxu0 0
        %2634 = vmatprep.mubr.bf16.mxu0 0
        %2635 = vmatmul.mubr.bf16.gmra.mxu0 %v2579
        %v2636 = vpop.f32.mrf.mxu0
        %v2637 = vadd.f32 0.0, %v2636
        %v2638 = vpop.f32.mrf.mxu0
        %v2639 = vpop.f32.mrf.mxu0
        %v2640 = vadd.f32 0.0, %v2639
        %v2641 = vpop.f32.mrf.mxu0
        %2642 = vmatprep.mubr.bf16.mxu0 0
        %2643 = vmatmul.mubr.bf16.gmra.mxu0 %v2582
        %v2644 = vpop.f32.mrf.mxu0
        %v2645 = vadd.f32 0.0, %v2644
        %v2646 = vpop.f32.mrf.mxu0
        %v2647 = vpop.f32.mrf.mxu0
        %v2648 = vadd.f32 0.0, %v2647
        %v2649 = vpop.f32.mrf.mxu0
        %2650 = vmatprep.mubr.bf16.mxu0 0
        %2651 = vmatmul.mubr.bf16.gmra.mxu0 %v2585
        %v2652 = vpop.f32.mrf.mxu0
        %v2653 = vadd.f32 0.0, %v2652
        %v2654 = vpop.f32.mrf.mxu0
        %v2655 = vpop.f32.mrf.mxu0
        %v2656 = vadd.f32 0.0, %v2655
        %v2657 = vpop.f32.mrf.mxu0
        %2658 = vmatprep.mubr.bf16.mxu0 0
        %2659 = vmatmul.mubr.bf16.gmra.mxu0 %v2588
        %v2660 = vpop.f32.mrf.mxu0
        %v2661 = vadd.f32 0.0, %v2660
        %v2662 = vpop.f32.mrf.mxu0
        %v2663 = vpop.f32.mrf.mxu0
        %v2664 = vadd.f32 0.0, %v2663
        %v2665 = vpop.f32.mrf.mxu0
        %2666 = vmatprep.mubr.bf16.mxu0 0
        %2667 = vmatmul.mubr.bf16.gmra.mxu0 %v2591
        %v2668 = vpop.f32.mrf.mxu0
        %v2669 = vadd.f32 0.0, %v2668
        %v2670 = vpop.f32.mrf.mxu0
        %v2671 = vpop.f32.mrf.mxu0
        %v2672 = vadd.f32 0.0, %v2671
        %v2673 = vpop.f32.mrf.mxu0
        %2674 = vmatprep.mubr.bf16.mxu0 0
        %2675 = vmatmul.mubr.bf16.gmra.mxu0 %v2594
        %v2676 = vpop.f32.mrf.mxu0
        %v2677 = vadd.f32 0.0, %v2676
        %v2678 = vpop.f32.mrf.mxu0
        %v2679 = vpop.f32.mrf.mxu0
        %v2680 = vadd.f32 0.0, %v2679
        %v2681 = vpop.f32.mrf.mxu0
        %2682 = vmatprep.mubr.bf16.mxu0 0
        %2683 = vmatmul.mubr.bf16.gmra.mxu0 %v2597
        %v2684 = vpop.f32.mrf.mxu0
        %v2685 = vadd.f32 0.0, %v2684
        %v2686 = vpop.f32.mrf.mxu0
        %v2687 = vpop.f32.mrf.mxu0
        %v2688 = vadd.f32 0.0, %v2687
        %v2689 = vpop.f32.mrf.mxu0
        %2690 = vmatprep.mubr.bf16.mxu0 0
        %2691 = vmatmul.mubr.bf16.gmra.mxu0 %v2600
        %v2692 = vpop.f32.mrf.mxu0
        %v2693 = vadd.f32 0.0, %v2692
        %v2694 = vpop.f32.mrf.mxu0
        %v2695 = vpop.f32.mrf.mxu0
        %v2696 = vadd.f32 0.0, %v2695
        %v2697 = vpop.f32.mrf.mxu0
        %2698 = vdwg.mxu0
        %v2699 = vadd.f32 %v2312, %v2637
        %v2700 = vadd.f32 %v2313, %v2640
        %v2701 = vadd.f32 %v2314, %v2645
        %v2702 = vadd.f32 %v2315, %v2648
        %v2703 = vadd.f32 %v2316, %v2653
        %v2704 = vadd.f32 %v2317, %v2656
        %v2705 = vadd.f32 %v2318, %v2661
        %v2706 = vadd.f32 %v2319, %v2664
        %v2707 = vadd.f32 %v2320, %v2669
        %v2708 = vadd.f32 %v2321, %v2672
        %v2709 = vadd.f32 %v2322, %v2677
        %v2710 = vadd.f32 %v2323, %v2680
        %v2711 = vadd.f32 %v2324, %v2685
        %v2712 = vadd.f32 %v2325, %v2688
        %v2713 = vadd.f32 %v2326, %v2693
        %v2714 = vadd.f32 %v2327, %v2696
        %v2715 = vld [vmem:[%s0 + $0x180] sm:$0xf]
        %v2716 = vld [vmem:[%s0 + $0x184] sm:$0xf]
        %v2717 = vld [vmem:[%s0 + $0x188] sm:$0xf]
        %v2718 = vld [vmem:[%s0 + $0x18c] sm:$0xf]
        %v2719 = vld [vmem:[%s0 + $0x190] sm:$0xf]
        %v2720 = vld [vmem:[%s0 + $0x194] sm:$0xf]
        %v2721 = vld [vmem:[%s0 + $0x198] sm:$0xf]
        %v2722 = vld [vmem:[%s0 + $0x19c] sm:$0xf]
        %v2723 = vld [vmem:[%s0 + $0x1a0] sm:$0xf]
        %v2724 = vld [vmem:[%s0 + $0x1a4] sm:$0xf]
        %v2725 = vld [vmem:[%s0 + $0x1a8] sm:$0xf]
        %v2726 = vld [vmem:[%s0 + $0x1ac] sm:$0xf]
        %v2727 = vld [vmem:[%s0 + $0x1b0] sm:$0xf]
        %v2728 = vld [vmem:[%s0 + $0x1b4] sm:$0xf]
        %v2729 = vld [vmem:[%s0 + $0x1b8] sm:$0xf]
        %v2730 = vld [vmem:[%s0 + $0x1bc] sm:$0xf]
        %v2747 = vunpack.c.l.b16 %v2715
        %v2748 = vunpack.c.l.b16 %v2716
        %v2749 = vunpack.c.l.b16 %v2717
        %v2750 = vunpack.c.l.b16 %v2718
        %v2751 = vunpack.c.l.b16 %v2719
        %v2752 = vunpack.c.l.b16 %v2720
        %v2753 = vunpack.c.l.b16 %v2721
        %v2754 = vunpack.c.l.b16 %v2722
        %v2755 = vunpack.c.l.b16 %v2723
        %v2756 = vunpack.c.l.b16 %v2724
        %v2757 = vunpack.c.l.b16 %v2725
        %v2758 = vunpack.c.l.b16 %v2726
        %v2759 = vunpack.c.l.b16 %v2727
        %v2760 = vunpack.c.l.b16 %v2728
        %v2761 = vunpack.c.l.b16 %v2729
        %v2762 = vunpack.c.l.b16 %v2730
        %v2763 = vpack.c.b16 %v2748, %v2747
        %v2764 = vpack.c.b16 %v2750, %v2749
        %v2765 = vpack.c.b16 %v2752, %v2751
        %v2766 = vpack.c.b16 %v2754, %v2753
        %v2767 = vpack.c.b16 %v2756, %v2755
        %v2768 = vpack.c.b16 %v2758, %v2757
        %v2769 = vpack.c.b16 %v2760, %v2759
        %v2770 = vpack.c.b16 %v2762, %v2761
        %v2772 = vsel %vm474, %v2763, 0
        %v2775 = vsel %vm474, %v2764, 0
        %v2778 = vsel %vm474, %v2765, 0
        %v2781 = vsel %vm474, %v2766, 0
        %v2784 = vsel %vm474, %v2767, 0
        %v2787 = vsel %vm474, %v2768, 0
        %v2790 = vsel %vm474, %v2769, 0
        %v2793 = vsel %vm474, %v2770, 0
        %2795 = vmatprep.subr.bf16.mxu0 0
        %2796 = vmatpush1.bf16.msra.mxu0 0
        %2797 = vmatprep.subr.bf16.mxu0 0
        %2798 = vmatpush1.bf16.msra.mxu0 0
        %2799 = vmatprep.subr.bf16.mxu0 0
        %2800 = vmatpush1.bf16.msra.mxu0 0
        %2801 = vmatprep.subr.bf16.mxu0 0
        %2802 = vmatpush1.bf16.msra.mxu0 0
        %2803 = vmatprep.subr.bf16.mxu0 0
        %2804 = vmatpush1.bf16.msra.mxu0 0
        %2805 = vmatprep.subr.bf16.mxu0 0
        %2806 = vmatpush1.bf16.msra.mxu0 0
        %2807 = vmatprep.subr.bf16.mxu0 0
        %2808 = vmatpush1.bf16.msra.mxu0 %v503
        %2809 = vmatprep.subr.bf16.mxu0 0
        %2810 = vmatpush1.bf16.msra.mxu0 %v471
        %2811 = vmatprep.subr.bf16.mxu0 0
        %2812 = vmatpush2.bf16.msra.mxu0 0
        %2813 = vmatprep.subr.bf16.mxu0 0
        %2814 = vmatpush2.bf16.msra.mxu0 0
        %2815 = vmatprep.subr.bf16.mxu0 0
        %2816 = vmatpush2.bf16.msra.mxu0 0
        %2817 = vmatprep.subr.bf16.mxu0 0
        %2818 = vmatpush2.bf16.msra.mxu0 0
        %2819 = vmatprep.subr.bf16.mxu0 0
        %2820 = vmatpush2.bf16.msra.mxu0 0
        %2821 = vmatprep.subr.bf16.mxu0 0
        %2822 = vmatpush2.bf16.msra.mxu0 0
        %2823 = vmatprep.subr.bf16.mxu0 0
        %2824 = vmatpush2.bf16.msra.mxu0 0
        %2825 = vmatprep.subr.bf16.mxu0 0
        %2826 = vmatpush2.bf16.msra.mxu0 0
        %2827 = vmatprep.mubr.bf16.mxu0 0
        %2828 = vmatmul.mubr.bf16.gmra.mxu0 %v2772
        %v2829 = vpop.f32.mrf.mxu0
        %v2830 = vadd.f32 0.0, %v2829
        %v2831 = vpop.f32.mrf.mxu0
        %v2832 = vpop.f32.mrf.mxu0
        %v2833 = vadd.f32 0.0, %v2832
        %v2834 = vpop.f32.mrf.mxu0
        %2835 = vmatprep.mubr.bf16.mxu0 0
        %2836 = vmatmul.mubr.bf16.gmra.mxu0 %v2775
        %v2837 = vpop.f32.mrf.mxu0
        %v2838 = vadd.f32 0.0, %v2837
        %v2839 = vpop.f32.mrf.mxu0
        %v2840 = vpop.f32.mrf.mxu0
        %v2841 = vadd.f32 0.0, %v2840
        %v2842 = vpop.f32.mrf.mxu0
        %2843 = vmatprep.mubr.bf16.mxu0 0
        %2844 = vmatmul.mubr.bf16.gmra.mxu0 %v2778
        %v2845 = vpop.f32.mrf.mxu0
        %v2846 = vadd.f32 0.0, %v2845
        %v2847 = vpop.f32.mrf.mxu0
        %v2848 = vpop.f32.mrf.mxu0
        %v2849 = vadd.f32 0.0, %v2848
        %v2850 = vpop.f32.mrf.mxu0
        %2851 = vmatprep.mubr.bf16.mxu0 0
        %2852 = vmatmul.mubr.bf16.gmra.mxu0 %v2781
        %v2853 = vpop.f32.mrf.mxu0
        %v2854 = vadd.f32 0.0, %v2853
        %v2855 = vpop.f32.mrf.mxu0
        %v2856 = vpop.f32.mrf.mxu0
        %v2857 = vadd.f32 0.0, %v2856
        %v2858 = vpop.f32.mrf.mxu0
        %2859 = vmatprep.mubr.bf16.mxu0 0
        %2860 = vmatmul.mubr.bf16.gmra.mxu0 %v2784
        %v2861 = vpop.f32.mrf.mxu0
        %v2862 = vadd.f32 0.0, %v2861
        %v2863 = vpop.f32.mrf.mxu0
        %v2864 = vpop.f32.mrf.mxu0
        %v2865 = vadd.f32 0.0, %v2864
        %v2866 = vpop.f32.mrf.mxu0
        %2867 = vmatprep.mubr.bf16.mxu0 0
        %2868 = vmatmul.mubr.bf16.gmra.mxu0 %v2787
        %v2869 = vpop.f32.mrf.mxu0
        %v2870 = vadd.f32 0.0, %v2869
        %v2871 = vpop.f32.mrf.mxu0
        %v2872 = vpop.f32.mrf.mxu0
        %v2873 = vadd.f32 0.0, %v2872
        %v2874 = vpop.f32.mrf.mxu0
        %2875 = vmatprep.mubr.bf16.mxu0 0
        %2876 = vmatmul.mubr.bf16.gmra.mxu0 %v2790
        %v2877 = vpop.f32.mrf.mxu0
        %v2878 = vadd.f32 0.0, %v2877
        %v2879 = vpop.f32.mrf.mxu0
        %v2880 = vpop.f32.mrf.mxu0
        %v2881 = vadd.f32 0.0, %v2880
        %v2882 = vpop.f32.mrf.mxu0
        %2883 = vmatprep.mubr.bf16.mxu0 0
        %2884 = vmatmul.mubr.bf16.gmra.mxu0 %v2793
        %v2885 = vpop.f32.mrf.mxu0
        %v2886 = vadd.f32 0.0, %v2885
        %v2887 = vpop.f32.mrf.mxu0
        %v2888 = vpop.f32.mrf.mxu0
        %v2889 = vadd.f32 0.0, %v2888
        %v2890 = vpop.f32.mrf.mxu0
        %2891 = vdwg.mxu0
        %v2892 = vmul.f32 %v2830, 0.2
        %v2893 = vmul.f32 %v2833, 0.2
        %v2894 = vmul.f32 %v2838, 0.2
        %v2895 = vmul.f32 %v2841, 0.2
        %v2896 = vmul.f32 %v2846, 0.2
        %v2897 = vmul.f32 %v2849, 0.2
        %v2898 = vmul.f32 %v2854, 0.2
        %v2899 = vmul.f32 %v2857, 0.2
        %v2900 = vmul.f32 %v2862, 0.2
        %v2901 = vmul.f32 %v2865, 0.2
        %v2902 = vmul.f32 %v2870, 0.2
        %v2903 = vmul.f32 %v2873, 0.2
        %v2904 = vmul.f32 %v2878, 0.2
        %v2905 = vmul.f32 %v2881, 0.2
        %v2906 = vmul.f32 %v2886, 0.2
        %v2907 = vmul.f32 %v2889, 0.2
        %v2908 = vmax.f32 %v2830, %v2892
        %v2909 = vmax.f32 %v2833, %v2893
        %v2910 = vmax.f32 %v2838, %v2894
        %v2911 = vmax.f32 %v2841, %v2895
        %v2912 = vmax.f32 %v2846, %v2896
        %v2913 = vmax.f32 %v2849, %v2897
        %v2914 = vmax.f32 %v2854, %v2898
        %v2915 = vmax.f32 %v2857, %v2899
        %v2916 = vmax.f32 %v2862, %v2900
        %v2917 = vmax.f32 %v2865, %v2901
        %v2918 = vmax.f32 %v2870, %v2902
        %v2919 = vmax.f32 %v2873, %v2903
        %v2920 = vmax.f32 %v2878, %v2904
        %v2921 = vmax.f32 %v2881, %v2905
        %v2922 = vmax.f32 %v2886, %v2906
        %v2923 = vmax.f32 %v2889, %v2907
        %v2924 = vpack.c.bf16 %v2909, %v2908
        %v2925 = vpack.c.bf16 %v2911, %v2910
        %v2926 = vpack.c.bf16 %v2913, %v2912
        %v2927 = vpack.c.bf16 %v2915, %v2914
        %v2928 = vpack.c.bf16 %v2917, %v2916
        %v2929 = vpack.c.bf16 %v2919, %v2918
        %v2930 = vpack.c.bf16 %v2921, %v2920
        %v2931 = vpack.c.bf16 %v2923, %v2922
        %s2932 = scalar_lea.vmem %s2, 192
        %v2933 = vld [vmem:[%s2932] sm:$0xf]
        %v2934 = vld [vmem:[%s2932 + $0x4] sm:$0xf]
        %v2935 = vld [vmem:[%s2932 + $0x8] sm:$0xf]
        %v2936 = vld [vmem:[%s2932 + $0xc] sm:$0xf]
        %v2937 = vld [vmem:[%s2932 + $0x10] sm:$0xf]
        %v2938 = vld [vmem:[%s2932 + $0x14] sm:$0xf]
        %v2939 = vld [vmem:[%s2932 + $0x18] sm:$0xf]
        %v2940 = vld [vmem:[%s2932 + $0x1c] sm:$0xf]
        %v2949 = vunpack.c.l.b16 %v2933
        %v2950 = vunpack.c.l.b16 %v2934
        %v2951 = vunpack.c.l.b16 %v2935
        %v2952 = vunpack.c.l.b16 %v2936
        %v2953 = vunpack.c.l.b16 %v2937
        %v2954 = vunpack.c.l.b16 %v2938
        %v2955 = vunpack.c.l.b16 %v2939
        %v2956 = vunpack.c.l.b16 %v2940
        %v2957 = vpack.c.b16 %v2950, %v2949
        %v2958 = vpack.c.b16 %v2952, %v2951
        %v2959 = vpack.c.b16 %v2954, %v2953
        %v2960 = vpack.c.b16 %v2956, %v2955
        %v2966 = vsel %vm900, %v2924, 0
        %v2969 = vsel %vm900, %v2925, 0
        %v2972 = vsel %vm900, %v2926, 0
        %v2975 = vsel %vm900, %v2927, 0
        %v2978 = vsel %vm900, %v2928, 0
        %v2981 = vsel %vm900, %v2929, 0
        %v2984 = vsel %vm900, %v2930, 0
        %v2987 = vsel %vm900, %v2931, 0
        %2989 = vmatprep.subr.bf16.mxu0 0
        %2990 = vmatpush1.bf16.msra.mxu0 0
        %2991 = vmatprep.subr.bf16.mxu0 0
        %2992 = vmatpush1.bf16.msra.mxu0 0
        %2993 = vmatprep.subr.bf16.mxu0 0
        %2994 = vmatpush1.bf16.msra.mxu0 0
        %2995 = vmatprep.subr.bf16.mxu0 0
        %2996 = vmatpush1.bf16.msra.mxu0 0
        %2997 = vmatprep.subr.bf16.mxu0 0
        %2998 = vmatpush1.bf16.msra.mxu0 %v2960
        %2999 = vmatprep.subr.bf16.mxu0 0
        %3000 = vmatpush1.bf16.msra.mxu0 %v2959
        %3001 = vmatprep.subr.bf16.mxu0 0
        %3002 = vmatpush1.bf16.msra.mxu0 %v2958
        %3003 = vmatprep.subr.bf16.mxu0 0
        %3004 = vmatpush1.bf16.msra.mxu0 %v2957
        %3005 = vmatprep.subr.bf16.mxu0 0
        %3006 = vmatpush2.bf16.msra.mxu0 0
        %3007 = vmatprep.subr.bf16.mxu0 0
        %3008 = vmatpush2.bf16.msra.mxu0 0
        %3009 = vmatprep.subr.bf16.mxu0 0
        %3010 = vmatpush2.bf16.msra.mxu0 0
        %3011 = vmatprep.subr.bf16.mxu0 0
        %3012 = vmatpush2.bf16.msra.mxu0 0
        %3013 = vmatprep.subr.bf16.mxu0 0
        %3014 = vmatpush2.bf16.msra.mxu0 0
        %3015 = vmatprep.subr.bf16.mxu0 0
        %3016 = vmatpush2.bf16.msra.mxu0 0
        %3017 = vmatprep.subr.bf16.mxu0 0
        %3018 = vmatpush2.bf16.msra.mxu0 0
        %3019 = vmatprep.subr.bf16.mxu0 0
        %3020 = vmatpush2.bf16.msra.mxu0 0
        %3021 = vmatprep.mubr.bf16.mxu0 0
        %3022 = vmatmul.mubr.bf16.gmra.mxu0 %v2966
        %v3023 = vpop.f32.mrf.mxu0
        %v3024 = vadd.f32 0.0, %v3023
        %v3025 = vpop.f32.mrf.mxu0
        %v3026 = vpop.f32.mrf.mxu0
        %v3027 = vadd.f32 0.0, %v3026
        %v3028 = vpop.f32.mrf.mxu0
        %3029 = vmatprep.mubr.bf16.mxu0 0
        %3030 = vmatmul.mubr.bf16.gmra.mxu0 %v2969
        %v3031 = vpop.f32.mrf.mxu0
        %v3032 = vadd.f32 0.0, %v3031
        %v3033 = vpop.f32.mrf.mxu0
        %v3034 = vpop.f32.mrf.mxu0
        %v3035 = vadd.f32 0.0, %v3034
        %v3036 = vpop.f32.mrf.mxu0
        %3037 = vmatprep.mubr.bf16.mxu0 0
        %3038 = vmatmul.mubr.bf16.gmra.mxu0 %v2972
        %v3039 = vpop.f32.mrf.mxu0
        %v3040 = vadd.f32 0.0, %v3039
        %v3041 = vpop.f32.mrf.mxu0
        %v3042 = vpop.f32.mrf.mxu0
        %v3043 = vadd.f32 0.0, %v3042
        %v3044 = vpop.f32.mrf.mxu0
        %3045 = vmatprep.mubr.bf16.mxu0 0
        %3046 = vmatmul.mubr.bf16.gmra.mxu0 %v2975
        %v3047 = vpop.f32.mrf.mxu0
        %v3048 = vadd.f32 0.0, %v3047
        %v3049 = vpop.f32.mrf.mxu0
        %v3050 = vpop.f32.mrf.mxu0
        %v3051 = vadd.f32 0.0, %v3050
        %v3052 = vpop.f32.mrf.mxu0
        %3053 = vmatprep.mubr.bf16.mxu0 0
        %3054 = vmatmul.mubr.bf16.gmra.mxu0 %v2978
        %v3055 = vpop.f32.mrf.mxu0
        %v3056 = vadd.f32 0.0, %v3055
        %v3057 = vpop.f32.mrf.mxu0
        %v3058 = vpop.f32.mrf.mxu0
        %v3059 = vadd.f32 0.0, %v3058
        %v3060 = vpop.f32.mrf.mxu0
        %3061 = vmatprep.mubr.bf16.mxu0 0
        %3062 = vmatmul.mubr.bf16.gmra.mxu0 %v2981
        %v3063 = vpop.f32.mrf.mxu0
        %v3064 = vadd.f32 0.0, %v3063
        %v3065 = vpop.f32.mrf.mxu0
        %v3066 = vpop.f32.mrf.mxu0
        %v3067 = vadd.f32 0.0, %v3066
        %v3068 = vpop.f32.mrf.mxu0
        %3069 = vmatprep.mubr.bf16.mxu0 0
        %3070 = vmatmul.mubr.bf16.gmra.mxu0 %v2984
        %v3071 = vpop.f32.mrf.mxu0
        %v3072 = vadd.f32 0.0, %v3071
        %v3073 = vpop.f32.mrf.mxu0
        %v3074 = vpop.f32.mrf.mxu0
        %v3075 = vadd.f32 0.0, %v3074
        %v3076 = vpop.f32.mrf.mxu0
        %3077 = vmatprep.mubr.bf16.mxu0 0
        %3078 = vmatmul.mubr.bf16.gmra.mxu0 %v2987
        %v3079 = vpop.f32.mrf.mxu0
        %v3080 = vadd.f32 0.0, %v3079
        %v3081 = vpop.f32.mrf.mxu0
        %v3082 = vpop.f32.mrf.mxu0
        %v3083 = vadd.f32 0.0, %v3082
        %v3084 = vpop.f32.mrf.mxu0
        %3085 = vdwg.mxu0
        %v3086 = vadd.f32 %v2699, %v3024
        %v3087 = vadd.f32 %v2700, %v3027
        %v3088 = vadd.f32 %v2701, %v3032
        %v3089 = vadd.f32 %v2702, %v3035
        %v3090 = vadd.f32 %v2703, %v3040
        %v3091 = vadd.f32 %v2704, %v3043
        %v3092 = vadd.f32 %v2705, %v3048
        %v3093 = vadd.f32 %v2706, %v3051
        %v3094 = vadd.f32 %v2707, %v3056
        %v3095 = vadd.f32 %v2708, %v3059
        %v3096 = vadd.f32 %v2709, %v3064
        %v3097 = vadd.f32 %v2710, %v3067
        %v3098 = vadd.f32 %v2711, %v3072
        %v3099 = vadd.f32 %v2712, %v3075
        %v3100 = vadd.f32 %v2713, %v3080
        %v3101 = vadd.f32 %v2714, %v3083
        %v3102 = vld [vmem:[%s0 + $0x1c0] sm:$0xf]
        %v3103 = vld [vmem:[%s0 + $0x1c4] sm:$0xf]
        %v3104 = vld [vmem:[%s0 + $0x1c8] sm:$0xf]
        %v3105 = vld [vmem:[%s0 + $0x1cc] sm:$0xf]
        %v3106 = vld [vmem:[%s0 + $0x1d0] sm:$0xf]
        %v3107 = vld [vmem:[%s0 + $0x1d4] sm:$0xf]
        %v3108 = vld [vmem:[%s0 + $0x1d8] sm:$0xf]
        %v3109 = vld [vmem:[%s0 + $0x1dc] sm:$0xf]
        %v3110 = vld [vmem:[%s0 + $0x1e0] sm:$0xf]
        %v3111 = vld [vmem:[%s0 + $0x1e4] sm:$0xf]
        %v3112 = vld [vmem:[%s0 + $0x1e8] sm:$0xf]
        %v3113 = vld [vmem:[%s0 + $0x1ec] sm:$0xf]
        %v3114 = vld [vmem:[%s0 + $0x1f0] sm:$0xf]
        %v3115 = vld [vmem:[%s0 + $0x1f4] sm:$0xf]
        %v3116 = vld [vmem:[%s0 + $0x1f8] sm:$0xf]
        %v3117 = vld [vmem:[%s0 + $0x1fc] sm:$0xf]
        %v3134 = vunpack.c.l.b16 %v3102
        %v3135 = vunpack.c.l.b16 %v3103
        %v3136 = vunpack.c.l.b16 %v3104
        %v3137 = vunpack.c.l.b16 %v3105
        %v3138 = vunpack.c.l.b16 %v3106
        %v3139 = vunpack.c.l.b16 %v3107
        %v3140 = vunpack.c.l.b16 %v3108
        %v3141 = vunpack.c.l.b16 %v3109
        %v3142 = vunpack.c.l.b16 %v3110
        %v3143 = vunpack.c.l.b16 %v3111
        %v3144 = vunpack.c.l.b16 %v3112
        %v3145 = vunpack.c.l.b16 %v3113
        %v3146 = vunpack.c.l.b16 %v3114
        %v3147 = vunpack.c.l.b16 %v3115
        %v3148 = vunpack.c.l.b16 %v3116
        %v3149 = vunpack.c.l.b16 %v3117
        %v3150 = vpack.c.b16 %v3135, %v3134
        %v3151 = vpack.c.b16 %v3137, %v3136
        %v3152 = vpack.c.b16 %v3139, %v3138
        %v3153 = vpack.c.b16 %v3141, %v3140
        %v3154 = vpack.c.b16 %v3143, %v3142
        %v3155 = vpack.c.b16 %v3145, %v3144
        %v3156 = vpack.c.b16 %v3147, %v3146
        %v3157 = vpack.c.b16 %v3149, %v3148
        %v3159 = vsel %vm474, %v3150, 0
        %v3162 = vsel %vm474, %v3151, 0
        %v3165 = vsel %vm474, %v3152, 0
        %v3168 = vsel %vm474, %v3153, 0
        %v3171 = vsel %vm474, %v3154, 0
        %v3174 = vsel %vm474, %v3155, 0
        %v3177 = vsel %vm474, %v3156, 0
        %v3180 = vsel %vm474, %v3157, 0
        %3182 = vmatprep.subr.bf16.mxu0 0
        %3183 = vmatpush1.bf16.msra.mxu0 0
        %3184 = vmatprep.subr.bf16.mxu0 0
        %3185 = vmatpush1.bf16.msra.mxu0 0
        %3186 = vmatprep.subr.bf16.mxu0 0
        %3187 = vmatpush1.bf16.msra.mxu0 0
        %3188 = vmatprep.subr.bf16.mxu0 0
        %3189 = vmatpush1.bf16.msra.mxu0 0
        %3190 = vmatprep.subr.bf16.mxu0 0
        %3191 = vmatpush1.bf16.msra.mxu0 0
        %3192 = vmatprep.subr.bf16.mxu0 0
        %3193 = vmatpush1.bf16.msra.mxu0 0
        %3194 = vmatprep.subr.bf16.mxu0 0
        %3195 = vmatpush1.bf16.msra.mxu0 %v503
        %3196 = vmatprep.subr.bf16.mxu0 0
        %3197 = vmatpush1.bf16.msra.mxu0 %v471
        %3198 = vmatprep.subr.bf16.mxu0 0
        %3199 = vmatpush2.bf16.msra.mxu0 0
        %3200 = vmatprep.subr.bf16.mxu0 0
        %3201 = vmatpush2.bf16.msra.mxu0 0
        %3202 = vmatprep.subr.bf16.mxu0 0
        %3203 = vmatpush2.bf16.msra.mxu0 0
        %3204 = vmatprep.subr.bf16.mxu0 0
        %3205 = vmatpush2.bf16.msra.mxu0 0
        %3206 = vmatprep.subr.bf16.mxu0 0
        %3207 = vmatpush2.bf16.msra.mxu0 0
        %3208 = vmatprep.subr.bf16.mxu0 0
        %3209 = vmatpush2.bf16.msra.mxu0 0
        %3210 = vmatprep.subr.bf16.mxu0 0
        %3211 = vmatpush2.bf16.msra.mxu0 0
        %3212 = vmatprep.subr.bf16.mxu0 0
        %3213 = vmatpush2.bf16.msra.mxu0 0
        %3214 = vmatprep.mubr.bf16.mxu0 0
        %3215 = vmatmul.mubr.bf16.gmra.mxu0 %v3159
        %v3216 = vpop.f32.mrf.mxu0
        %v3217 = vadd.f32 0.0, %v3216
        %v3218 = vpop.f32.mrf.mxu0
        %v3219 = vpop.f32.mrf.mxu0
        %v3220 = vadd.f32 0.0, %v3219
        %v3221 = vpop.f32.mrf.mxu0
        %3222 = vmatprep.mubr.bf16.mxu0 0
        %3223 = vmatmul.mubr.bf16.gmra.mxu0 %v3162
        %v3224 = vpop.f32.mrf.mxu0
        %v3225 = vadd.f32 0.0, %v3224
        %v3226 = vpop.f32.mrf.mxu0
        %v3227 = vpop.f32.mrf.mxu0
        %v3228 = vadd.f32 0.0, %v3227
        %v3229 = vpop.f32.mrf.mxu0
        %3230 = vmatprep.mubr.bf16.mxu0 0
        %3231 = vmatmul.mubr.bf16.gmra.mxu0 %v3165
        %v3232 = vpop.f32.mrf.mxu0
        %v3233 = vadd.f32 0.0, %v3232
        %v3234 = vpop.f32.mrf.mxu0
        %v3235 = vpop.f32.mrf.mxu0
        %v3236 = vadd.f32 0.0, %v3235
        %v3237 = vpop.f32.mrf.mxu0
        %3238 = vmatprep.mubr.bf16.mxu0 0
        %3239 = vmatmul.mubr.bf16.gmra.mxu0 %v3168
        %v3240 = vpop.f32.mrf.mxu0
        %v3241 = vadd.f32 0.0, %v3240
        %v3242 = vpop.f32.mrf.mxu0
        %v3243 = vpop.f32.mrf.mxu0
        %v3244 = vadd.f32 0.0, %v3243
        %v3245 = vpop.f32.mrf.mxu0
        %3246 = vmatprep.mubr.bf16.mxu0 0
        %3247 = vmatmul.mubr.bf16.gmra.mxu0 %v3171
        %v3248 = vpop.f32.mrf.mxu0
        %v3249 = vadd.f32 0.0, %v3248
        %v3250 = vpop.f32.mrf.mxu0
        %v3251 = vpop.f32.mrf.mxu0
        %v3252 = vadd.f32 0.0, %v3251
        %v3253 = vpop.f32.mrf.mxu0
        %3254 = vmatprep.mubr.bf16.mxu0 0
        %3255 = vmatmul.mubr.bf16.gmra.mxu0 %v3174
        %v3256 = vpop.f32.mrf.mxu0
        %v3257 = vadd.f32 0.0, %v3256
        %v3258 = vpop.f32.mrf.mxu0
        %v3259 = vpop.f32.mrf.mxu0
        %v3260 = vadd.f32 0.0, %v3259
        %v3261 = vpop.f32.mrf.mxu0
        %3262 = vmatprep.mubr.bf16.mxu0 0
        %3263 = vmatmul.mubr.bf16.gmra.mxu0 %v3177
        %v3264 = vpop.f32.mrf.mxu0
        %v3265 = vadd.f32 0.0, %v3264
        %v3266 = vpop.f32.mrf.mxu0
        %v3267 = vpop.f32.mrf.mxu0
        %v3268 = vadd.f32 0.0, %v3267
        %v3269 = vpop.f32.mrf.mxu0
        %3270 = vmatprep.mubr.bf16.mxu0 0
        %3271 = vmatmul.mubr.bf16.gmra.mxu0 %v3180
        %v3272 = vpop.f32.mrf.mxu0
        %v3273 = vadd.f32 0.0, %v3272
        %v3274 = vpop.f32.mrf.mxu0
        %v3275 = vpop.f32.mrf.mxu0
        %v3276 = vadd.f32 0.0, %v3275
        %v3277 = vpop.f32.mrf.mxu0
        %3278 = vdwg.mxu0
        %v3279 = vmul.f32 %v3217, 0.2
        %v3280 = vmul.f32 %v3220, 0.2
        %v3281 = vmul.f32 %v3225, 0.2
        %v3282 = vmul.f32 %v3228, 0.2
        %v3283 = vmul.f32 %v3233, 0.2
        %v3284 = vmul.f32 %v3236, 0.2
        %v3285 = vmul.f32 %v3241, 0.2
        %v3286 = vmul.f32 %v3244, 0.2
        %v3287 = vmul.f32 %v3249, 0.2
        %v3288 = vmul.f32 %v3252, 0.2
        %v3289 = vmul.f32 %v3257, 0.2
        %v3290 = vmul.f32 %v3260, 0.2
        %v3291 = vmul.f32 %v3265, 0.2
        %v3292 = vmul.f32 %v3268, 0.2
        %v3293 = vmul.f32 %v3273, 0.2
        %v3294 = vmul.f32 %v3276, 0.2
        %v3295 = vmax.f32 %v3217, %v3279
        %v3296 = vmax.f32 %v3220, %v3280
        %v3297 = vmax.f32 %v3225, %v3281
        %v3298 = vmax.f32 %v3228, %v3282
        %v3299 = vmax.f32 %v3233, %v3283
        %v3300 = vmax.f32 %v3236, %v3284
        %v3301 = vmax.f32 %v3241, %v3285
        %v3302 = vmax.f32 %v3244, %v3286
        %v3303 = vmax.f32 %v3249, %v3287
        %v3304 = vmax.f32 %v3252, %v3288
        %v3305 = vmax.f32 %v3257, %v3289
        %v3306 = vmax.f32 %v3260, %v3290
        %v3307 = vmax.f32 %v3265, %v3291
        %v3308 = vmax.f32 %v3268, %v3292
        %v3309 = vmax.f32 %v3273, %v3293
        %v3310 = vmax.f32 %v3276, %v3294
        %v3311 = vpack.c.bf16 %v3296, %v3295
        %v3312 = vpack.c.bf16 %v3298, %v3297
        %v3313 = vpack.c.bf16 %v3300, %v3299
        %v3314 = vpack.c.bf16 %v3302, %v3301
        %v3315 = vpack.c.bf16 %v3304, %v3303
        %v3316 = vpack.c.bf16 %v3306, %v3305
        %v3317 = vpack.c.bf16 %v3308, %v3307
        %v3318 = vpack.c.bf16 %v3310, %v3309
        %s3319 = scalar_lea.vmem %s2, 224
        %v3320 = vld [vmem:[%s3319] sm:$0xf]
        %v3321 = vld [vmem:[%s3319 + $0x4] sm:$0xf]
        %v3322 = vld [vmem:[%s3319 + $0x8] sm:$0xf]
        %v3323 = vld [vmem:[%s3319 + $0xc] sm:$0xf]
        %v3324 = vld [vmem:[%s3319 + $0x10] sm:$0xf]
        %v3325 = vld [vmem:[%s3319 + $0x14] sm:$0xf]
        %v3326 = vld [vmem:[%s3319 + $0x18] sm:$0xf]
        %v3327 = vld [vmem:[%s3319 + $0x1c] sm:$0xf]
        %v3336 = vunpack.c.l.b16 %v3320
        %v3337 = vunpack.c.l.b16 %v3321
        %v3338 = vunpack.c.l.b16 %v3322
        %v3339 = vunpack.c.l.b16 %v3323
        %v3340 = vunpack.c.l.b16 %v3324
        %v3341 = vunpack.c.l.b16 %v3325
        %v3342 = vunpack.c.l.b16 %v3326
        %v3343 = vunpack.c.l.b16 %v3327
        %v3344 = vpack.c.b16 %v3337, %v3336
        %v3345 = vpack.c.b16 %v3339, %v3338
        %v3346 = vpack.c.b16 %v3341, %v3340
        %v3347 = vpack.c.b16 %v3343, %v3342
        %v3353 = vsel %vm900, %v3311, 0
        %v3356 = vsel %vm900, %v3312, 0
        %v3359 = vsel %vm900, %v3313, 0
        %v3362 = vsel %vm900, %v3314, 0
        %v3365 = vsel %vm900, %v3315, 0
        %v3368 = vsel %vm900, %v3316, 0
        %v3371 = vsel %vm900, %v3317, 0
        %v3374 = vsel %vm900, %v3318, 0
        %3376 = vmatprep.subr.bf16.mxu0 0
        %3377 = vmatpush1.bf16.msra.mxu0 0
        %3378 = vmatprep.subr.bf16.mxu0 0
        %3379 = vmatpush1.bf16.msra.mxu0 0
        %3380 = vmatprep.subr.bf16.mxu0 0
        %3381 = vmatpush1.bf16.msra.mxu0 0
        %3382 = vmatprep.subr.bf16.mxu0 0
        %3383 = vmatpush1.bf16.msra.mxu0 0
        %3384 = vmatprep.subr.bf16.mxu0 0
        %3385 = vmatpush1.bf16.msra.mxu0 %v3347
        %3386 = vmatprep.subr.bf16.mxu0 0
        %3387 = vmatpush1.bf16.msra.mxu0 %v3346
        %3388 = vmatprep.subr.bf16.mxu0 0
        %3389 = vmatpush1.bf16.msra.mxu0 %v3345
        %3390 = vmatprep.subr.bf16.mxu0 0
        %3391 = vmatpush1.bf16.msra.mxu0 %v3344
        %3392 = vmatprep.subr.bf16.mxu0 0
        %3393 = vmatpush2.bf16.msra.mxu0 0
        %3394 = vmatprep.subr.bf16.mxu0 0
        %3395 = vmatpush2.bf16.msra.mxu0 0
        %3396 = vmatprep.subr.bf16.mxu0 0
        %3397 = vmatpush2.bf16.msra.mxu0 0
        %3398 = vmatprep.subr.bf16.mxu0 0
        %3399 = vmatpush2.bf16.msra.mxu0 0
        %3400 = vmatprep.subr.bf16.mxu0 0
        %3401 = vmatpush2.bf16.msra.mxu0 0
        %3402 = vmatprep.subr.bf16.mxu0 0
        %3403 = vmatpush2.bf16.msra.mxu0 0
        %3404 = vmatprep.subr.bf16.mxu0 0
        %3405 = vmatpush2.bf16.msra.mxu0 0
        %3406 = vmatprep.subr.bf16.mxu0 0
        %3407 = vmatpush2.bf16.msra.mxu0 0
        %3408 = vmatprep.mubr.bf16.mxu0 0
        %3409 = vmatmul.mubr.bf16.gmra.mxu0 %v3353
        %v3410 = vpop.f32.mrf.mxu0
        %v3411 = vadd.f32 0.0, %v3410
        %v3412 = vpop.f32.mrf.mxu0
        %v3413 = vpop.f32.mrf.mxu0
        %v3414 = vadd.f32 0.0, %v3413
        %v3415 = vpop.f32.mrf.mxu0
        %3416 = vmatprep.mubr.bf16.mxu0 0
        %3417 = vmatmul.mubr.bf16.gmra.mxu0 %v3356
        %v3418 = vpop.f32.mrf.mxu0
        %v3419 = vadd.f32 0.0, %v3418
        %v3420 = vpop.f32.mrf.mxu0
        %v3421 = vpop.f32.mrf.mxu0
        %v3422 = vadd.f32 0.0, %v3421
        %v3423 = vpop.f32.mrf.mxu0
        %3424 = vmatprep.mubr.bf16.mxu0 0
        %3425 = vmatmul.mubr.bf16.gmra.mxu0 %v3359
        %v3426 = vpop.f32.mrf.mxu0
        %v3427 = vadd.f32 0.0, %v3426
        %v3428 = vpop.f32.mrf.mxu0
        %v3429 = vpop.f32.mrf.mxu0
        %v3430 = vadd.f32 0.0, %v3429
        %v3431 = vpop.f32.mrf.mxu0
        %3432 = vmatprep.mubr.bf16.mxu0 0
        %3433 = vmatmul.mubr.bf16.gmra.mxu0 %v3362
        %v3434 = vpop.f32.mrf.mxu0
        %v3435 = vadd.f32 0.0, %v3434
        %v3436 = vpop.f32.mrf.mxu0
        %v3437 = vpop.f32.mrf.mxu0
        %v3438 = vadd.f32 0.0, %v3437
        %v3439 = vpop.f32.mrf.mxu0
        %3440 = vmatprep.mubr.bf16.mxu0 0
        %3441 = vmatmul.mubr.bf16.gmra.mxu0 %v3365
        %v3442 = vpop.f32.mrf.mxu0
        %v3443 = vadd.f32 0.0, %v3442
        %v3444 = vpop.f32.mrf.mxu0
        %v3445 = vpop.f32.mrf.mxu0
        %v3446 = vadd.f32 0.0, %v3445
        %v3447 = vpop.f32.mrf.mxu0
        %3448 = vmatprep.mubr.bf16.mxu0 0
        %3449 = vmatmul.mubr.bf16.gmra.mxu0 %v3368
        %v3450 = vpop.f32.mrf.mxu0
        %v3451 = vadd.f32 0.0, %v3450
        %v3452 = vpop.f32.mrf.mxu0
        %v3453 = vpop.f32.mrf.mxu0
        %v3454 = vadd.f32 0.0, %v3453
        %v3455 = vpop.f32.mrf.mxu0
        %3456 = vmatprep.mubr.bf16.mxu0 0
        %3457 = vmatmul.mubr.bf16.gmra.mxu0 %v3371
        %v3458 = vpop.f32.mrf.mxu0
        %v3459 = vadd.f32 0.0, %v3458
        %v3460 = vpop.f32.mrf.mxu0
        %v3461 = vpop.f32.mrf.mxu0
        %v3462 = vadd.f32 0.0, %v3461
        %v3463 = vpop.f32.mrf.mxu0
        %3464 = vmatprep.mubr.bf16.mxu0 0
        %3465 = vmatmul.mubr.bf16.gmra.mxu0 %v3374
        %v3466 = vpop.f32.mrf.mxu0
        %v3467 = vadd.f32 0.0, %v3466
        %v3468 = vpop.f32.mrf.mxu0
        %v3469 = vpop.f32.mrf.mxu0
        %v3470 = vadd.f32 0.0, %v3469
        %v3471 = vpop.f32.mrf.mxu0
        %3472 = vdwg.mxu0
        %v3473 = vadd.f32 %v3086, %v3411
        %v3474 = vadd.f32 %v3087, %v3414
        %v3475 = vadd.f32 %v3088, %v3419
        %v3476 = vadd.f32 %v3089, %v3422
        %v3477 = vadd.f32 %v3090, %v3427
        %v3478 = vadd.f32 %v3091, %v3430
        %v3479 = vadd.f32 %v3092, %v3435
        %v3480 = vadd.f32 %v3093, %v3438
        %v3481 = vadd.f32 %v3094, %v3443
        %v3482 = vadd.f32 %v3095, %v3446
        %v3483 = vadd.f32 %v3096, %v3451
        %v3484 = vadd.f32 %v3097, %v3454
        %v3485 = vadd.f32 %v3098, %v3459
        %v3486 = vadd.f32 %v3099, %v3462
        %v3487 = vadd.f32 %v3100, %v3467
        %v3488 = vadd.f32 %v3101, %v3470
        %v3489 = vld [vmem:[%s0 + $0x200] sm:$0xf]
        %v3490 = vld [vmem:[%s0 + $0x204] sm:$0xf]
        %v3491 = vld [vmem:[%s0 + $0x208] sm:$0xf]
        %v3492 = vld [vmem:[%s0 + $0x20c] sm:$0xf]
        %v3493 = vld [vmem:[%s0 + $0x210] sm:$0xf]
        %v3494 = vld [vmem:[%s0 + $0x214] sm:$0xf]
        %v3495 = vld [vmem:[%s0 + $0x218] sm:$0xf]
        %v3496 = vld [vmem:[%s0 + $0x21c] sm:$0xf]
        %v3497 = vld [vmem:[%s0 + $0x220] sm:$0xf]
        %v3498 = vld [vmem:[%s0 + $0x224] sm:$0xf]
        %v3499 = vld [vmem:[%s0 + $0x228] sm:$0xf]
        %v3500 = vld [vmem:[%s0 + $0x22c] sm:$0xf]
        %v3501 = vld [vmem:[%s0 + $0x230] sm:$0xf]
        %v3502 = vld [vmem:[%s0 + $0x234] sm:$0xf]
        %v3503 = vld [vmem:[%s0 + $0x238] sm:$0xf]
        %v3504 = vld [vmem:[%s0 + $0x23c] sm:$0xf]
        %v3521 = vunpack.c.l.b16 %v3489
        %v3522 = vunpack.c.l.b16 %v3490
        %v3523 = vunpack.c.l.b16 %v3491
        %v3524 = vunpack.c.l.b16 %v3492
        %v3525 = vunpack.c.l.b16 %v3493
        %v3526 = vunpack.c.l.b16 %v3494
        %v3527 = vunpack.c.l.b16 %v3495
        %v3528 = vunpack.c.l.b16 %v3496
        %v3529 = vunpack.c.l.b16 %v3497
        %v3530 = vunpack.c.l.b16 %v3498
        %v3531 = vunpack.c.l.b16 %v3499
        %v3532 = vunpack.c.l.b16 %v3500
        %v3533 = vunpack.c.l.b16 %v3501
        %v3534 = vunpack.c.l.b16 %v3502
        %v3535 = vunpack.c.l.b16 %v3503
        %v3536 = vunpack.c.l.b16 %v3504
        %v3537 = vpack.c.b16 %v3522, %v3521
        %v3538 = vpack.c.b16 %v3524, %v3523
        %v3539 = vpack.c.b16 %v3526, %v3525
        %v3540 = vpack.c.b16 %v3528, %v3527
        %v3541 = vpack.c.b16 %v3530, %v3529
        %v3542 = vpack.c.b16 %v3532, %v3531
        %v3543 = vpack.c.b16 %v3534, %v3533
        %v3544 = vpack.c.b16 %v3536, %v3535
        %v3546 = vsel %vm474, %v3537, 0
        %v3549 = vsel %vm474, %v3538, 0
        %v3552 = vsel %vm474, %v3539, 0
        %v3555 = vsel %vm474, %v3540, 0
        %v3558 = vsel %vm474, %v3541, 0
        %v3561 = vsel %vm474, %v3542, 0
        %v3564 = vsel %vm474, %v3543, 0
        %v3567 = vsel %vm474, %v3544, 0
        %3569 = vmatprep.subr.bf16.mxu0 0
        %3570 = vmatpush1.bf16.msra.mxu0 0
        %3571 = vmatprep.subr.bf16.mxu0 0
        %3572 = vmatpush1.bf16.msra.mxu0 0
        %3573 = vmatprep.subr.bf16.mxu0 0
        %3574 = vmatpush1.bf16.msra.mxu0 0
        %3575 = vmatprep.subr.bf16.mxu0 0
        %3576 = vmatpush1.bf16.msra.mxu0 0
        %3577 = vmatprep.subr.bf16.mxu0 0
        %3578 = vmatpush1.bf16.msra.mxu0 0
        %3579 = vmatprep.subr.bf16.mxu0 0
        %3580 = vmatpush1.bf16.msra.mxu0 0
        %3581 = vmatprep.subr.bf16.mxu0 0
        %3582 = vmatpush1.bf16.msra.mxu0 %v503
        %3583 = vmatprep.subr.bf16.mxu0 0
        %3584 = vmatpush1.bf16.msra.mxu0 %v471
        %3585 = vmatprep.subr.bf16.mxu0 0
        %3586 = vmatpush2.bf16.msra.mxu0 0
        %3587 = vmatprep.subr.bf16.mxu0 0
        %3588 = vmatpush2.bf16.msra.mxu0 0
        %3589 = vmatprep.subr.bf16.mxu0 0
        %3590 = vmatpush2.bf16.msra.mxu0 0
        %3591 = vmatprep.subr.bf16.mxu0 0
        %3592 = vmatpush2.bf16.msra.mxu0 0
        %3593 = vmatprep.subr.bf16.mxu0 0
        %3594 = vmatpush2.bf16.msra.mxu0 0
        %3595 = vmatprep.subr.bf16.mxu0 0
        %3596 = vmatpush2.bf16.msra.mxu0 0
        %3597 = vmatprep.subr.bf16.mxu0 0
        %3598 = vmatpush2.bf16.msra.mxu0 0
        %3599 = vmatprep.subr.bf16.mxu0 0
        %3600 = vmatpush2.bf16.msra.mxu0 0
        %3601 = vmatprep.mubr.bf16.mxu0 0
        %3602 = vmatmul.mubr.bf16.gmra.mxu0 %v3546
        %v3603 = vpop.f32.mrf.mxu0
        %v3604 = vadd.f32 0.0, %v3603
        %v3605 = vpop.f32.mrf.mxu0
        %v3606 = vpop.f32.mrf.mxu0
        %v3607 = vadd.f32 0.0, %v3606
        %v3608 = vpop.f32.mrf.mxu0
        %3609 = vmatprep.mubr.bf16.mxu0 0
        %3610 = vmatmul.mubr.bf16.gmra.mxu0 %v3549
        %v3611 = vpop.f32.mrf.mxu0
        %v3612 = vadd.f32 0.0, %v3611
        %v3613 = vpop.f32.mrf.mxu0
        %v3614 = vpop.f32.mrf.mxu0
        %v3615 = vadd.f32 0.0, %v3614
        %v3616 = vpop.f32.mrf.mxu0
        %3617 = vmatprep.mubr.bf16.mxu0 0
        %3618 = vmatmul.mubr.bf16.gmra.mxu0 %v3552
        %v3619 = vpop.f32.mrf.mxu0
        %v3620 = vadd.f32 0.0, %v3619
        %v3621 = vpop.f32.mrf.mxu0
        %v3622 = vpop.f32.mrf.mxu0
        %v3623 = vadd.f32 0.0, %v3622
        %v3624 = vpop.f32.mrf.mxu0
        %3625 = vmatprep.mubr.bf16.mxu0 0
        %3626 = vmatmul.mubr.bf16.gmra.mxu0 %v3555
        %v3627 = vpop.f32.mrf.mxu0
        %v3628 = vadd.f32 0.0, %v3627
        %v3629 = vpop.f32.mrf.mxu0
        %v3630 = vpop.f32.mrf.mxu0
        %v3631 = vadd.f32 0.0, %v3630
        %v3632 = vpop.f32.mrf.mxu0
        %3633 = vmatprep.mubr.bf16.mxu0 0
        %3634 = vmatmul.mubr.bf16.gmra.mxu0 %v3558
        %v3635 = vpop.f32.mrf.mxu0
        %v3636 = vadd.f32 0.0, %v3635
        %v3637 = vpop.f32.mrf.mxu0
        %v3638 = vpop.f32.mrf.mxu0
        %v3639 = vadd.f32 0.0, %v3638
        %v3640 = vpop.f32.mrf.mxu0
        %3641 = vmatprep.mubr.bf16.mxu0 0
        %3642 = vmatmul.mubr.bf16.gmra.mxu0 %v3561
        %v3643 = vpop.f32.mrf.mxu0
        %v3644 = vadd.f32 0.0, %v3643
        %v3645 = vpop.f32.mrf.mxu0
        %v3646 = vpop.f32.mrf.mxu0
        %v3647 = vadd.f32 0.0, %v3646
        %v3648 = vpop.f32.mrf.mxu0
        %3649 = vmatprep.mubr.bf16.mxu0 0
        %3650 = vmatmul.mubr.bf16.gmra.mxu0 %v3564
        %v3651 = vpop.f32.mrf.mxu0
        %v3652 = vadd.f32 0.0, %v3651
        %v3653 = vpop.f32.mrf.mxu0
        %v3654 = vpop.f32.mrf.mxu0
        %v3655 = vadd.f32 0.0, %v3654
        %v3656 = vpop.f32.mrf.mxu0
        %3657 = vmatprep.mubr.bf16.mxu0 0
        %3658 = vmatmul.mubr.bf16.gmra.mxu0 %v3567
        %v3659 = vpop.f32.mrf.mxu0
        %v3660 = vadd.f32 0.0, %v3659
        %v3661 = vpop.f32.mrf.mxu0
        %v3662 = vpop.f32.mrf.mxu0
        %v3663 = vadd.f32 0.0, %v3662
        %v3664 = vpop.f32.mrf.mxu0
        %3665 = vdwg.mxu0
        %v3666 = vmul.f32 %v3604, 0.2
        %v3667 = vmul.f32 %v3607, 0.2
        %v3668 = vmul.f32 %v3612, 0.2
        %v3669 = vmul.f32 %v3615, 0.2
        %v3670 = vmul.f32 %v3620, 0.2
        %v3671 = vmul.f32 %v3623, 0.2
        %v3672 = vmul.f32 %v3628, 0.2
        %v3673 = vmul.f32 %v3631, 0.2
        %v3674 = vmul.f32 %v3636, 0.2
        %v3675 = vmul.f32 %v3639, 0.2
        %v3676 = vmul.f32 %v3644, 0.2
        %v3677 = vmul.f32 %v3647, 0.2
        %v3678 = vmul.f32 %v3652, 0.2
        %v3679 = vmul.f32 %v3655, 0.2
        %v3680 = vmul.f32 %v3660, 0.2
        %v3681 = vmul.f32 %v3663, 0.2
        %v3682 = vmax.f32 %v3604, %v3666
        %v3683 = vmax.f32 %v3607, %v3667
        %v3684 = vmax.f32 %v3612, %v3668
        %v3685 = vmax.f32 %v3615, %v3669
        %v3686 = vmax.f32 %v3620, %v3670
        %v3687 = vmax.f32 %v3623, %v3671
        %v3688 = vmax.f32 %v3628, %v3672
        %v3689 = vmax.f32 %v3631, %v3673
        %v3690 = vmax.f32 %v3636, %v3674
        %v3691 = vmax.f32 %v3639, %v3675
        %v3692 = vmax.f32 %v3644, %v3676
        %v3693 = vmax.f32 %v3647, %v3677
        %v3694 = vmax.f32 %v3652, %v3678
        %v3695 = vmax.f32 %v3655, %v3679
        %v3696 = vmax.f32 %v3660, %v3680
        %v3697 = vmax.f32 %v3663, %v3681
        %v3698 = vpack.c.bf16 %v3683, %v3682
        %v3699 = vpack.c.bf16 %v3685, %v3684
        %v3700 = vpack.c.bf16 %v3687, %v3686
        %v3701 = vpack.c.bf16 %v3689, %v3688
        %v3702 = vpack.c.bf16 %v3691, %v3690
        %v3703 = vpack.c.bf16 %v3693, %v3692
        %v3704 = vpack.c.bf16 %v3695, %v3694
        %v3705 = vpack.c.bf16 %v3697, %v3696
        %s3706 = scalar_lea.vmem %s2, 256
        %v3707 = vld [vmem:[%s3706] sm:$0xf]
        %v3708 = vld [vmem:[%s3706 + $0x4] sm:$0xf]
        %v3709 = vld [vmem:[%s3706 + $0x8] sm:$0xf]
        %v3710 = vld [vmem:[%s3706 + $0xc] sm:$0xf]
        %v3711 = vld [vmem:[%s3706 + $0x10] sm:$0xf]
        %v3712 = vld [vmem:[%s3706 + $0x14] sm:$0xf]
        %v3713 = vld [vmem:[%s3706 + $0x18] sm:$0xf]
        %v3714 = vld [vmem:[%s3706 + $0x1c] sm:$0xf]
        %v3723 = vunpack.c.l.b16 %v3707
        %v3724 = vunpack.c.l.b16 %v3708
        %v3725 = vunpack.c.l.b16 %v3709
        %v3726 = vunpack.c.l.b16 %v3710
        %v3727 = vunpack.c.l.b16 %v3711
        %v3728 = vunpack.c.l.b16 %v3712
        %v3729 = vunpack.c.l.b16 %v3713
        %v3730 = vunpack.c.l.b16 %v3714
        %v3731 = vpack.c.b16 %v3724, %v3723
        %v3732 = vpack.c.b16 %v3726, %v3725
        %v3733 = vpack.c.b16 %v3728, %v3727
        %v3734 = vpack.c.b16 %v3730, %v3729
        %v3740 = vsel %vm900, %v3698, 0
        %v3743 = vsel %vm900, %v3699, 0
        %v3746 = vsel %vm900, %v3700, 0
        %v3749 = vsel %vm900, %v3701, 0
        %v3752 = vsel %vm900, %v3702, 0
        %v3755 = vsel %vm900, %v3703, 0
        %v3758 = vsel %vm900, %v3704, 0
        %v3761 = vsel %vm900, %v3705, 0
        %3763 = vmatprep.subr.bf16.mxu0 0
        %3764 = vmatpush1.bf16.msra.mxu0 0
        %3765 = vmatprep.subr.bf16.mxu0 0
        %3766 = vmatpush1.bf16.msra.mxu0 0
        %3767 = vmatprep.subr.bf16.mxu0 0
        %3768 = vmatpush1.bf16.msra.mxu0 0
        %3769 = vmatprep.subr.bf16.mxu0 0
        %3770 = vmatpush1.bf16.msra.mxu0 0
        %3771 = vmatprep.subr.bf16.mxu0 0
        %3772 = vmatpush1.bf16.msra.mxu0 %v3734
        %3773 = vmatprep.subr.bf16.mxu0 0
        %3774 = vmatpush1.bf16.msra.mxu0 %v3733
        %3775 = vmatprep.subr.bf16.mxu0 0
        %3776 = vmatpush1.bf16.msra.mxu0 %v3732
        %3777 = vmatprep.subr.bf16.mxu0 0
        %3778 = vmatpush1.bf16.msra.mxu0 %v3731
        %3779 = vmatprep.subr.bf16.mxu0 0
        %3780 = vmatpush2.bf16.msra.mxu0 0
        %3781 = vmatprep.subr.bf16.mxu0 0
        %3782 = vmatpush2.bf16.msra.mxu0 0
        %3783 = vmatprep.subr.bf16.mxu0 0
        %3784 = vmatpush2.bf16.msra.mxu0 0
        %3785 = vmatprep.subr.bf16.mxu0 0
        %3786 = vmatpush2.bf16.msra.mxu0 0
        %3787 = vmatprep.subr.bf16.mxu0 0
        %3788 = vmatpush2.bf16.msra.mxu0 0
        %3789 = vmatprep.subr.bf16.mxu0 0
        %3790 = vmatpush2.bf16.msra.mxu0 0
        %3791 = vmatprep.subr.bf16.mxu0 0
        %3792 = vmatpush2.bf16.msra.mxu0 0
        %3793 = vmatprep.subr.bf16.mxu0 0
        %3794 = vmatpush2.bf16.msra.mxu0 0
        %3795 = vmatprep.mubr.bf16.mxu0 0
        %3796 = vmatmul.mubr.bf16.gmra.mxu0 %v3740
        %v3797 = vpop.f32.mrf.mxu0
        %v3798 = vadd.f32 0.0, %v3797
        %v3799 = vpop.f32.mrf.mxu0
        %v3800 = vpop.f32.mrf.mxu0
        %v3801 = vadd.f32 0.0, %v3800
        %v3802 = vpop.f32.mrf.mxu0
        %3803 = vmatprep.mubr.bf16.mxu0 0
        %3804 = vmatmul.mubr.bf16.gmra.mxu0 %v3743
        %v3805 = vpop.f32.mrf.mxu0
        %v3806 = vadd.f32 0.0, %v3805
        %v3807 = vpop.f32.mrf.mxu0
        %v3808 = vpop.f32.mrf.mxu0
        %v3809 = vadd.f32 0.0, %v3808
        %v3810 = vpop.f32.mrf.mxu0
        %3811 = vmatprep.mubr.bf16.mxu0 0
        %3812 = vmatmul.mubr.bf16.gmra.mxu0 %v3746
        %v3813 = vpop.f32.mrf.mxu0
        %v3814 = vadd.f32 0.0, %v3813
        %v3815 = vpop.f32.mrf.mxu0
        %v3816 = vpop.f32.mrf.mxu0
        %v3817 = vadd.f32 0.0, %v3816
        %v3818 = vpop.f32.mrf.mxu0
        %3819 = vmatprep.mubr.bf16.mxu0 0
        %3820 = vmatmul.mubr.bf16.gmra.mxu0 %v3749
        %v3821 = vpop.f32.mrf.mxu0
        %v3822 = vadd.f32 0.0, %v3821
        %v3823 = vpop.f32.mrf.mxu0
        %v3824 = vpop.f32.mrf.mxu0
        %v3825 = vadd.f32 0.0, %v3824
        %v3826 = vpop.f32.mrf.mxu0
        %3827 = vmatprep.mubr.bf16.mxu0 0
        %3828 = vmatmul.mubr.bf16.gmra.mxu0 %v3752
        %v3829 = vpop.f32.mrf.mxu0
        %v3830 = vadd.f32 0.0, %v3829
        %v3831 = vpop.f32.mrf.mxu0
        %v3832 = vpop.f32.mrf.mxu0
        %v3833 = vadd.f32 0.0, %v3832
        %v3834 = vpop.f32.mrf.mxu0
        %3835 = vmatprep.mubr.bf16.mxu0 0
        %3836 = vmatmul.mubr.bf16.gmra.mxu0 %v3755
        %v3837 = vpop.f32.mrf.mxu0
        %v3838 = vadd.f32 0.0, %v3837
        %v3839 = vpop.f32.mrf.mxu0
        %v3840 = vpop.f32.mrf.mxu0
        %v3841 = vadd.f32 0.0, %v3840
        %v3842 = vpop.f32.mrf.mxu0
        %3843 = vmatprep.mubr.bf16.mxu0 0
        %3844 = vmatmul.mubr.bf16.gmra.mxu0 %v3758
        %v3845 = vpop.f32.mrf.mxu0
        %v3846 = vadd.f32 0.0, %v3845
        %v3847 = vpop.f32.mrf.mxu0
        %v3848 = vpop.f32.mrf.mxu0
        %v3849 = vadd.f32 0.0, %v3848
        %v3850 = vpop.f32.mrf.mxu0
        %3851 = vmatprep.mubr.bf16.mxu0 0
        %3852 = vmatmul.mubr.bf16.gmra.mxu0 %v3761
        %v3853 = vpop.f32.mrf.mxu0
        %v3854 = vadd.f32 0.0, %v3853
        %v3855 = vpop.f32.mrf.mxu0
        %v3856 = vpop.f32.mrf.mxu0
        %v3857 = vadd.f32 0.0, %v3856
        %v3858 = vpop.f32.mrf.mxu0
        %3859 = vdwg.mxu0
        %v3860 = vadd.f32 %v3473, %v3798
        %v3861 = vadd.f32 %v3474, %v3801
        %v3862 = vadd.f32 %v3475, %v3806
        %v3863 = vadd.f32 %v3476, %v3809
        %v3864 = vadd.f32 %v3477, %v3814
        %v3865 = vadd.f32 %v3478, %v3817
        %v3866 = vadd.f32 %v3479, %v3822
        %v3867 = vadd.f32 %v3480, %v3825
        %v3868 = vadd.f32 %v3481, %v3830
        %v3869 = vadd.f32 %v3482, %v3833
        %v3870 = vadd.f32 %v3483, %v3838
        %v3871 = vadd.f32 %v3484, %v3841
        %v3872 = vadd.f32 %v3485, %v3846
        %v3873 = vadd.f32 %v3486, %v3849
        %v3874 = vadd.f32 %v3487, %v3854
        %v3875 = vadd.f32 %v3488, %v3857
        %v3876 = vld [vmem:[%s0 + $0x240] sm:$0xf]
        %v3877 = vld [vmem:[%s0 + $0x244] sm:$0xf]
        %v3878 = vld [vmem:[%s0 + $0x248] sm:$0xf]
        %v3879 = vld [vmem:[%s0 + $0x24c] sm:$0xf]
        %v3880 = vld [vmem:[%s0 + $0x250] sm:$0xf]
        %v3881 = vld [vmem:[%s0 + $0x254] sm:$0xf]
        %v3882 = vld [vmem:[%s0 + $0x258] sm:$0xf]
        %v3883 = vld [vmem:[%s0 + $0x25c] sm:$0xf]
        %v3884 = vld [vmem:[%s0 + $0x260] sm:$0xf]
        %v3885 = vld [vmem:[%s0 + $0x264] sm:$0xf]
        %v3886 = vld [vmem:[%s0 + $0x268] sm:$0xf]
        %v3887 = vld [vmem:[%s0 + $0x26c] sm:$0xf]
        %v3888 = vld [vmem:[%s0 + $0x270] sm:$0xf]
        %v3889 = vld [vmem:[%s0 + $0x274] sm:$0xf]
        %v3890 = vld [vmem:[%s0 + $0x278] sm:$0xf]
        %v3891 = vld [vmem:[%s0 + $0x27c] sm:$0xf]
        %v3908 = vunpack.c.l.b16 %v3876
        %v3909 = vunpack.c.l.b16 %v3877
        %v3910 = vunpack.c.l.b16 %v3878
        %v3911 = vunpack.c.l.b16 %v3879
        %v3912 = vunpack.c.l.b16 %v3880
        %v3913 = vunpack.c.l.b16 %v3881
        %v3914 = vunpack.c.l.b16 %v3882
        %v3915 = vunpack.c.l.b16 %v3883
        %v3916 = vunpack.c.l.b16 %v3884
        %v3917 = vunpack.c.l.b16 %v3885
        %v3918 = vunpack.c.l.b16 %v3886
        %v3919 = vunpack.c.l.b16 %v3887
        %v3920 = vunpack.c.l.b16 %v3888
        %v3921 = vunpack.c.l.b16 %v3889
        %v3922 = vunpack.c.l.b16 %v3890
        %v3923 = vunpack.c.l.b16 %v3891
        %v3924 = vpack.c.b16 %v3909, %v3908
        %v3925 = vpack.c.b16 %v3911, %v3910
        %v3926 = vpack.c.b16 %v3913, %v3912
        %v3927 = vpack.c.b16 %v3915, %v3914
        %v3928 = vpack.c.b16 %v3917, %v3916
        %v3929 = vpack.c.b16 %v3919, %v3918
        %v3930 = vpack.c.b16 %v3921, %v3920
        %v3931 = vpack.c.b16 %v3923, %v3922
        %v3933 = vsel %vm474, %v3924, 0
        %v3936 = vsel %vm474, %v3925, 0
        %v3939 = vsel %vm474, %v3926, 0
        %v3942 = vsel %vm474, %v3927, 0
        %v3945 = vsel %vm474, %v3928, 0
        %v3948 = vsel %vm474, %v3929, 0
        %v3951 = vsel %vm474, %v3930, 0
        %v3954 = vsel %vm474, %v3931, 0
        %3956 = vmatprep.subr.bf16.mxu0 0
        %3957 = vmatpush1.bf16.msra.mxu0 0
        %3958 = vmatprep.subr.bf16.mxu0 0
        %3959 = vmatpush1.bf16.msra.mxu0 0
        %3960 = vmatprep.subr.bf16.mxu0 0
        %3961 = vmatpush1.bf16.msra.mxu0 0
        %3962 = vmatprep.subr.bf16.mxu0 0
        %3963 = vmatpush1.bf16.msra.mxu0 0
        %3964 = vmatprep.subr.bf16.mxu0 0
        %3965 = vmatpush1.bf16.msra.mxu0 0
        %3966 = vmatprep.subr.bf16.mxu0 0
        %3967 = vmatpush1.bf16.msra.mxu0 0
        %3968 = vmatprep.subr.bf16.mxu0 0
        %3969 = vmatpush1.bf16.msra.mxu0 %v503
        %3970 = vmatprep.subr.bf16.mxu0 0
        %3971 = vmatpush1.bf16.msra.mxu0 %v471
        %3972 = vmatprep.subr.bf16.mxu0 0
        %3973 = vmatpush2.bf16.msra.mxu0 0
        %3974 = vmatprep.subr.bf16.mxu0 0
        %3975 = vmatpush2.bf16.msra.mxu0 0
        %3976 = vmatprep.subr.bf16.mxu0 0
        %3977 = vmatpush2.bf16.msra.mxu0 0
        %3978 = vmatprep.subr.bf16.mxu0 0
        %3979 = vmatpush2.bf16.msra.mxu0 0
        %3980 = vmatprep.subr.bf16.mxu0 0
        %3981 = vmatpush2.bf16.msra.mxu0 0
        %3982 = vmatprep.subr.bf16.mxu0 0
        %3983 = vmatpush2.bf16.msra.mxu0 0
        %3984 = vmatprep.subr.bf16.mxu0 0
        %3985 = vmatpush2.bf16.msra.mxu0 0
        %3986 = vmatprep.subr.bf16.mxu0 0
        %3987 = vmatpush2.bf16.msra.mxu0 0
        %3988 = vmatprep.mubr.bf16.mxu0 0
        %3989 = vmatmul.mubr.bf16.gmra.mxu0 %v3933
        %v3990 = vpop.f32.mrf.mxu0
        %v3991 = vadd.f32 0.0, %v3990
        %v3992 = vpop.f32.mrf.mxu0
        %v3993 = vpop.f32.mrf.mxu0
        %v3994 = vadd.f32 0.0, %v3993
        %v3995 = vpop.f32.mrf.mxu0
        %3996 = vmatprep.mubr.bf16.mxu0 0
        %3997 = vmatmul.mubr.bf16.gmra.mxu0 %v3936
        %v3998 = vpop.f32.mrf.mxu0
        %v3999 = vadd.f32 0.0, %v3998
        %v4000 = vpop.f32.mrf.mxu0
        %v4001 = vpop.f32.mrf.mxu0
        %v4002 = vadd.f32 0.0, %v4001
        %v4003 = vpop.f32.mrf.mxu0
        %4004 = vmatprep.mubr.bf16.mxu0 0
        %4005 = vmatmul.mubr.bf16.gmra.mxu0 %v3939
        %v4006 = vpop.f32.mrf.mxu0
        %v4007 = vadd.f32 0.0, %v4006
        %v4008 = vpop.f32.mrf.mxu0
        %v4009 = vpop.f32.mrf.mxu0
        %v4010 = vadd.f32 0.0, %v4009
        %v4011 = vpop.f32.mrf.mxu0
        %4012 = vmatprep.mubr.bf16.mxu0 0
        %4013 = vmatmul.mubr.bf16.gmra.mxu0 %v3942
        %v4014 = vpop.f32.mrf.mxu0
        %v4015 = vadd.f32 0.0, %v4014
        %v4016 = vpop.f32.mrf.mxu0
        %v4017 = vpop.f32.mrf.mxu0
        %v4018 = vadd.f32 0.0, %v4017
        %v4019 = vpop.f32.mrf.mxu0
        %4020 = vmatprep.mubr.bf16.mxu0 0
        %4021 = vmatmul.mubr.bf16.gmra.mxu0 %v3945
        %v4022 = vpop.f32.mrf.mxu0
        %v4023 = vadd.f32 0.0, %v4022
        %v4024 = vpop.f32.mrf.mxu0
        %v4025 = vpop.f32.mrf.mxu0
        %v4026 = vadd.f32 0.0, %v4025
        %v4027 = vpop.f32.mrf.mxu0
        %4028 = vmatprep.mubr.bf16.mxu0 0
        %4029 = vmatmul.mubr.bf16.gmra.mxu0 %v3948
        %v4030 = vpop.f32.mrf.mxu0
        %v4031 = vadd.f32 0.0, %v4030
        %v4032 = vpop.f32.mrf.mxu0
        %v4033 = vpop.f32.mrf.mxu0
        %v4034 = vadd.f32 0.0, %v4033
        %v4035 = vpop.f32.mrf.mxu0
        %4036 = vmatprep.mubr.bf16.mxu0 0
        %4037 = vmatmul.mubr.bf16.gmra.mxu0 %v3951
        %v4038 = vpop.f32.mrf.mxu0
        %v4039 = vadd.f32 0.0, %v4038
        %v4040 = vpop.f32.mrf.mxu0
        %v4041 = vpop.f32.mrf.mxu0
        %v4042 = vadd.f32 0.0, %v4041
        %v4043 = vpop.f32.mrf.mxu0
        %4044 = vmatprep.mubr.bf16.mxu0 0
        %4045 = vmatmul.mubr.bf16.gmra.mxu0 %v3954
        %v4046 = vpop.f32.mrf.mxu0
        %v4047 = vadd.f32 0.0, %v4046
        %v4048 = vpop.f32.mrf.mxu0
        %v4049 = vpop.f32.mrf.mxu0
        %v4050 = vadd.f32 0.0, %v4049
        %v4051 = vpop.f32.mrf.mxu0
        %4052 = vdwg.mxu0
        %v4053 = vmul.f32 %v3991, 0.2
        %v4054 = vmul.f32 %v3994, 0.2
        %v4055 = vmul.f32 %v3999, 0.2
        %v4056 = vmul.f32 %v4002, 0.2
        %v4057 = vmul.f32 %v4007, 0.2
        %v4058 = vmul.f32 %v4010, 0.2
        %v4059 = vmul.f32 %v4015, 0.2
        %v4060 = vmul.f32 %v4018, 0.2
        %v4061 = vmul.f32 %v4023, 0.2
        %v4062 = vmul.f32 %v4026, 0.2
        %v4063 = vmul.f32 %v4031, 0.2
        %v4064 = vmul.f32 %v4034, 0.2
        %v4065 = vmul.f32 %v4039, 0.2
        %v4066 = vmul.f32 %v4042, 0.2
        %v4067 = vmul.f32 %v4047, 0.2
        %v4068 = vmul.f32 %v4050, 0.2
        %v4069 = vmax.f32 %v3991, %v4053
        %v4070 = vmax.f32 %v3994, %v4054
        %v4071 = vmax.f32 %v3999, %v4055
        %v4072 = vmax.f32 %v4002, %v4056
        %v4073 = vmax.f32 %v4007, %v4057
        %v4074 = vmax.f32 %v4010, %v4058
        %v4075 = vmax.f32 %v4015, %v4059
        %v4076 = vmax.f32 %v4018, %v4060
        %v4077 = vmax.f32 %v4023, %v4061
        %v4078 = vmax.f32 %v4026, %v4062
        %v4079 = vmax.f32 %v4031, %v4063
        %v4080 = vmax.f32 %v4034, %v4064
        %v4081 = vmax.f32 %v4039, %v4065
        %v4082 = vmax.f32 %v4042, %v4066
        %v4083 = vmax.f32 %v4047, %v4067
        %v4084 = vmax.f32 %v4050, %v4068
        %v4085 = vpack.c.bf16 %v4070, %v4069
        %v4086 = vpack.c.bf16 %v4072, %v4071
        %v4087 = vpack.c.bf16 %v4074, %v4073
        %v4088 = vpack.c.bf16 %v4076, %v4075
        %v4089 = vpack.c.bf16 %v4078, %v4077
        %v4090 = vpack.c.bf16 %v4080, %v4079
        %v4091 = vpack.c.bf16 %v4082, %v4081
        %v4092 = vpack.c.bf16 %v4084, %v4083
        %s4093 = scalar_lea.vmem %s2, 288
        %v4094 = vld [vmem:[%s4093] sm:$0xf]
        %v4095 = vld [vmem:[%s4093 + $0x4] sm:$0xf]
        %v4096 = vld [vmem:[%s4093 + $0x8] sm:$0xf]
        %v4097 = vld [vmem:[%s4093 + $0xc] sm:$0xf]
        %v4098 = vld [vmem:[%s4093 + $0x10] sm:$0xf]
        %v4099 = vld [vmem:[%s4093 + $0x14] sm:$0xf]
        %v4100 = vld [vmem:[%s4093 + $0x18] sm:$0xf]
        %v4101 = vld [vmem:[%s4093 + $0x1c] sm:$0xf]
        %v4110 = vunpack.c.l.b16 %v4094
        %v4111 = vunpack.c.l.b16 %v4095
        %v4112 = vunpack.c.l.b16 %v4096
        %v4113 = vunpack.c.l.b16 %v4097
        %v4114 = vunpack.c.l.b16 %v4098
        %v4115 = vunpack.c.l.b16 %v4099
        %v4116 = vunpack.c.l.b16 %v4100
        %v4117 = vunpack.c.l.b16 %v4101
        %v4118 = vpack.c.b16 %v4111, %v4110
        %v4119 = vpack.c.b16 %v4113, %v4112
        %v4120 = vpack.c.b16 %v4115, %v4114
        %v4121 = vpack.c.b16 %v4117, %v4116
        %v4127 = vsel %vm900, %v4085, 0
        %v4130 = vsel %vm900, %v4086, 0
        %v4133 = vsel %vm900, %v4087, 0
        %v4136 = vsel %vm900, %v4088, 0
        %v4139 = vsel %vm900, %v4089, 0
        %v4142 = vsel %vm900, %v4090, 0
        %v4145 = vsel %vm900, %v4091, 0
        %v4148 = vsel %vm900, %v4092, 0
        %4150 = vmatprep.subr.bf16.mxu0 0
        %4151 = vmatpush1.bf16.msra.mxu0 0
        %4152 = vmatprep.subr.bf16.mxu0 0
        %4153 = vmatpush1.bf16.msra.mxu0 0
        %4154 = vmatprep.subr.bf16.mxu0 0
        %4155 = vmatpush1.bf16.msra.mxu0 0
        %4156 = vmatprep.subr.bf16.mxu0 0
        %4157 = vmatpush1.bf16.msra.mxu0 0
        %4158 = vmatprep.subr.bf16.mxu0 0
        %4159 = vmatpush1.bf16.msra.mxu0 %v4121
        %4160 = vmatprep.subr.bf16.mxu0 0
        %4161 = vmatpush1.bf16.msra.mxu0 %v4120
        %4162 = vmatprep.subr.bf16.mxu0 0
        %4163 = vmatpush1.bf16.msra.mxu0 %v4119
        %4164 = vmatprep.subr.bf16.mxu0 0
        %4165 = vmatpush1.bf16.msra.mxu0 %v4118
        %4166 = vmatprep.subr.bf16.mxu0 0
        %4167 = vmatpush2.bf16.msra.mxu0 0
        %4168 = vmatprep.subr.bf16.mxu0 0
        %4169 = vmatpush2.bf16.msra.mxu0 0
        %4170 = vmatprep.subr.bf16.mxu0 0
        %4171 = vmatpush2.bf16.msra.mxu0 0
        %4172 = vmatprep.subr.bf16.mxu0 0
        %4173 = vmatpush2.bf16.msra.mxu0 0
        %4174 = vmatprep.subr.bf16.mxu0 0
        %4175 = vmatpush2.bf16.msra.mxu0 0
        %4176 = vmatprep.subr.bf16.mxu0 0
        %4177 = vmatpush2.bf16.msra.mxu0 0
        %4178 = vmatprep.subr.bf16.mxu0 0
        %4179 = vmatpush2.bf16.msra.mxu0 0
        %4180 = vmatprep.subr.bf16.mxu0 0
        %4181 = vmatpush2.bf16.msra.mxu0 0
        %4182 = vmatprep.mubr.bf16.mxu0 0
        %4183 = vmatmul.mubr.bf16.gmra.mxu0 %v4127
        %v4184 = vpop.f32.mrf.mxu0
        %v4185 = vadd.f32 0.0, %v4184
        %v4186 = vpop.f32.mrf.mxu0
        %v4187 = vpop.f32.mrf.mxu0
        %v4188 = vadd.f32 0.0, %v4187
        %v4189 = vpop.f32.mrf.mxu0
        %4190 = vmatprep.mubr.bf16.mxu0 0
        %4191 = vmatmul.mubr.bf16.gmra.mxu0 %v4130
        %v4192 = vpop.f32.mrf.mxu0
        %v4193 = vadd.f32 0.0, %v4192
        %v4194 = vpop.f32.mrf.mxu0
        %v4195 = vpop.f32.mrf.mxu0
        %v4196 = vadd.f32 0.0, %v4195
        %v4197 = vpop.f32.mrf.mxu0
        %4198 = vmatprep.mubr.bf16.mxu0 0
        %4199 = vmatmul.mubr.bf16.gmra.mxu0 %v4133
        %v4200 = vpop.f32.mrf.mxu0
        %v4201 = vadd.f32 0.0, %v4200
        %v4202 = vpop.f32.mrf.mxu0
        %v4203 = vpop.f32.mrf.mxu0
        %v4204 = vadd.f32 0.0, %v4203
        %v4205 = vpop.f32.mrf.mxu0
        %4206 = vmatprep.mubr.bf16.mxu0 0
        %4207 = vmatmul.mubr.bf16.gmra.mxu0 %v4136
        %v4208 = vpop.f32.mrf.mxu0
        %v4209 = vadd.f32 0.0, %v4208
        %v4210 = vpop.f32.mrf.mxu0
        %v4211 = vpop.f32.mrf.mxu0
        %v4212 = vadd.f32 0.0, %v4211
        %v4213 = vpop.f32.mrf.mxu0
        %4214 = vmatprep.mubr.bf16.mxu0 0
        %4215 = vmatmul.mubr.bf16.gmra.mxu0 %v4139
        %v4216 = vpop.f32.mrf.mxu0
        %v4217 = vadd.f32 0.0, %v4216
        %v4218 = vpop.f32.mrf.mxu0
        %v4219 = vpop.f32.mrf.mxu0
        %v4220 = vadd.f32 0.0, %v4219
        %v4221 = vpop.f32.mrf.mxu0
        %4222 = vmatprep.mubr.bf16.mxu0 0
        %4223 = vmatmul.mubr.bf16.gmra.mxu0 %v4142
        %v4224 = vpop.f32.mrf.mxu0
        %v4225 = vadd.f32 0.0, %v4224
        %v4226 = vpop.f32.mrf.mxu0
        %v4227 = vpop.f32.mrf.mxu0
        %v4228 = vadd.f32 0.0, %v4227
        %v4229 = vpop.f32.mrf.mxu0
        %4230 = vmatprep.mubr.bf16.mxu0 0
        %4231 = vmatmul.mubr.bf16.gmra.mxu0 %v4145
        %v4232 = vpop.f32.mrf.mxu0
        %v4233 = vadd.f32 0.0, %v4232
        %v4234 = vpop.f32.mrf.mxu0
        %v4235 = vpop.f32.mrf.mxu0
        %v4236 = vadd.f32 0.0, %v4235
        %v4237 = vpop.f32.mrf.mxu0
        %4238 = vmatprep.mubr.bf16.mxu0 0
        %4239 = vmatmul.mubr.bf16.gmra.mxu0 %v4148
        %v4240 = vpop.f32.mrf.mxu0
        %v4241 = vadd.f32 0.0, %v4240
        %v4242 = vpop.f32.mrf.mxu0
        %v4243 = vpop.f32.mrf.mxu0
        %v4244 = vadd.f32 0.0, %v4243
        %v4245 = vpop.f32.mrf.mxu0
        %4246 = vdwg.mxu0
        %v4247 = vadd.f32 %v3860, %v4185
        %v4248 = vadd.f32 %v3861, %v4188
        %v4249 = vadd.f32 %v3862, %v4193
        %v4250 = vadd.f32 %v3863, %v4196
        %v4251 = vadd.f32 %v3864, %v4201
        %v4252 = vadd.f32 %v3865, %v4204
        %v4253 = vadd.f32 %v3866, %v4209
        %v4254 = vadd.f32 %v3867, %v4212
        %v4255 = vadd.f32 %v3868, %v4217
        %v4256 = vadd.f32 %v3869, %v4220
        %v4257 = vadd.f32 %v3870, %v4225
        %v4258 = vadd.f32 %v3871, %v4228
        %v4259 = vadd.f32 %v3872, %v4233
        %v4260 = vadd.f32 %v3873, %v4236
        %v4261 = vadd.f32 %v3874, %v4241
        %v4262 = vadd.f32 %v3875, %v4244
        %v4263 = vld [vmem:[%s0 + $0x280] sm:$0xf]
        %v4264 = vld [vmem:[%s0 + $0x284] sm:$0xf]
        %v4265 = vld [vmem:[%s0 + $0x288] sm:$0xf]
        %v4266 = vld [vmem:[%s0 + $0x28c] sm:$0xf]
        %v4267 = vld [vmem:[%s0 + $0x290] sm:$0xf]
        %v4268 = vld [vmem:[%s0 + $0x294] sm:$0xf]
        %v4269 = vld [vmem:[%s0 + $0x298] sm:$0xf]
        %v4270 = vld [vmem:[%s0 + $0x29c] sm:$0xf]
        %v4271 = vld [vmem:[%s0 + $0x2a0] sm:$0xf]
        %v4272 = vld [vmem:[%s0 + $0x2a4] sm:$0xf]
        %v4273 = vld [vmem:[%s0 + $0x2a8] sm:$0xf]
        %v4274 = vld [vmem:[%s0 + $0x2ac] sm:$0xf]
        %v4275 = vld [vmem:[%s0 + $0x2b0] sm:$0xf]
        %v4276 = vld [vmem:[%s0 + $0x2b4] sm:$0xf]
        %v4277 = vld [vmem:[%s0 + $0x2b8] sm:$0xf]
        %v4278 = vld [vmem:[%s0 + $0x2bc] sm:$0xf]
        %v4295 = vunpack.c.l.b16 %v4263
        %v4296 = vunpack.c.l.b16 %v4264
        %v4297 = vunpack.c.l.b16 %v4265
        %v4298 = vunpack.c.l.b16 %v4266
        %v4299 = vunpack.c.l.b16 %v4267
        %v4300 = vunpack.c.l.b16 %v4268
        %v4301 = vunpack.c.l.b16 %v4269
        %v4302 = vunpack.c.l.b16 %v4270
        %v4303 = vunpack.c.l.b16 %v4271
        %v4304 = vunpack.c.l.b16 %v4272
        %v4305 = vunpack.c.l.b16 %v4273
        %v4306 = vunpack.c.l.b16 %v4274
        %v4307 = vunpack.c.l.b16 %v4275
        %v4308 = vunpack.c.l.b16 %v4276
        %v4309 = vunpack.c.l.b16 %v4277
        %v4310 = vunpack.c.l.b16 %v4278
        %v4311 = vpack.c.b16 %v4296, %v4295
        %v4312 = vpack.c.b16 %v4298, %v4297
        %v4313 = vpack.c.b16 %v4300, %v4299
        %v4314 = vpack.c.b16 %v4302, %v4301
        %v4315 = vpack.c.b16 %v4304, %v4303
        %v4316 = vpack.c.b16 %v4306, %v4305
        %v4317 = vpack.c.b16 %v4308, %v4307
        %v4318 = vpack.c.b16 %v4310, %v4309
        %v4320 = vsel %vm474, %v4311, 0
        %v4323 = vsel %vm474, %v4312, 0
        %v4326 = vsel %vm474, %v4313, 0
        %v4329 = vsel %vm474, %v4314, 0
        %v4332 = vsel %vm474, %v4315, 0
        %v4335 = vsel %vm474, %v4316, 0
        %v4338 = vsel %vm474, %v4317, 0
        %v4341 = vsel %vm474, %v4318, 0
        %4343 = vmatprep.subr.bf16.mxu0 0
        %4344 = vmatpush1.bf16.msra.mxu0 0
        %4345 = vmatprep.subr.bf16.mxu0 0
        %4346 = vmatpush1.bf16.msra.mxu0 0
        %4347 = vmatprep.subr.bf16.mxu0 0
        %4348 = vmatpush1.bf16.msra.mxu0 0
        %4349 = vmatprep.subr.bf16.mxu0 0
        %4350 = vmatpush1.bf16.msra.mxu0 0
        %4351 = vmatprep.subr.bf16.mxu0 0
        %4352 = vmatpush1.bf16.msra.mxu0 0
        %4353 = vmatprep.subr.bf16.mxu0 0
        %4354 = vmatpush1.bf16.msra.mxu0 0
        %4355 = vmatprep.subr.bf16.mxu0 0
        %4356 = vmatpush1.bf16.msra.mxu0 %v503
        %4357 = vmatprep.subr.bf16.mxu0 0
        %4358 = vmatpush1.bf16.msra.mxu0 %v471
        %4359 = vmatprep.subr.bf16.mxu0 0
        %4360 = vmatpush2.bf16.msra.mxu0 0
        %4361 = vmatprep.subr.bf16.mxu0 0
        %4362 = vmatpush2.bf16.msra.mxu0 0
        %4363 = vmatprep.subr.bf16.mxu0 0
        %4364 = vmatpush2.bf16.msra.mxu0 0
        %4365 = vmatprep.subr.bf16.mxu0 0
        %4366 = vmatpush2.bf16.msra.mxu0 0
        %4367 = vmatprep.subr.bf16.mxu0 0
        %4368 = vmatpush2.bf16.msra.mxu0 0
        %4369 = vmatprep.subr.bf16.mxu0 0
        %4370 = vmatpush2.bf16.msra.mxu0 0
        %4371 = vmatprep.subr.bf16.mxu0 0
        %4372 = vmatpush2.bf16.msra.mxu0 0
        %4373 = vmatprep.subr.bf16.mxu0 0
        %4374 = vmatpush2.bf16.msra.mxu0 0
        %4375 = vmatprep.mubr.bf16.mxu0 0
        %4376 = vmatmul.mubr.bf16.gmra.mxu0 %v4320
        %v4377 = vpop.f32.mrf.mxu0
        %v4378 = vadd.f32 0.0, %v4377
        %v4379 = vpop.f32.mrf.mxu0
        %v4380 = vpop.f32.mrf.mxu0
        %v4381 = vadd.f32 0.0, %v4380
        %v4382 = vpop.f32.mrf.mxu0
        %4383 = vmatprep.mubr.bf16.mxu0 0
        %4384 = vmatmul.mubr.bf16.gmra.mxu0 %v4323
        %v4385 = vpop.f32.mrf.mxu0
        %v4386 = vadd.f32 0.0, %v4385
        %v4387 = vpop.f32.mrf.mxu0
        %v4388 = vpop.f32.mrf.mxu0
        %v4389 = vadd.f32 0.0, %v4388
        %v4390 = vpop.f32.mrf.mxu0
        %4391 = vmatprep.mubr.bf16.mxu0 0
        %4392 = vmatmul.mubr.bf16.gmra.mxu0 %v4326
        %v4393 = vpop.f32.mrf.mxu0
        %v4394 = vadd.f32 0.0, %v4393
        %v4395 = vpop.f32.mrf.mxu0
        %v4396 = vpop.f32.mrf.mxu0
        %v4397 = vadd.f32 0.0, %v4396
        %v4398 = vpop.f32.mrf.mxu0
        %4399 = vmatprep.mubr.bf16.mxu0 0
        %4400 = vmatmul.mubr.bf16.gmra.mxu0 %v4329
        %v4401 = vpop.f32.mrf.mxu0
        %v4402 = vadd.f32 0.0, %v4401
        %v4403 = vpop.f32.mrf.mxu0
        %v4404 = vpop.f32.mrf.mxu0
        %v4405 = vadd.f32 0.0, %v4404
        %v4406 = vpop.f32.mrf.mxu0
        %4407 = vmatprep.mubr.bf16.mxu0 0
        %4408 = vmatmul.mubr.bf16.gmra.mxu0 %v4332
        %v4409 = vpop.f32.mrf.mxu0
        %v4410 = vadd.f32 0.0, %v4409
        %v4411 = vpop.f32.mrf.mxu0
        %v4412 = vpop.f32.mrf.mxu0
        %v4413 = vadd.f32 0.0, %v4412
        %v4414 = vpop.f32.mrf.mxu0
        %4415 = vmatprep.mubr.bf16.mxu0 0
        %4416 = vmatmul.mubr.bf16.gmra.mxu0 %v4335
        %v4417 = vpop.f32.mrf.mxu0
        %v4418 = vadd.f32 0.0, %v4417
        %v4419 = vpop.f32.mrf.mxu0
        %v4420 = vpop.f32.mrf.mxu0
        %v4421 = vadd.f32 0.0, %v4420
        %v4422 = vpop.f32.mrf.mxu0
        %4423 = vmatprep.mubr.bf16.mxu0 0
        %4424 = vmatmul.mubr.bf16.gmra.mxu0 %v4338
        %v4425 = vpop.f32.mrf.mxu0
        %v4426 = vadd.f32 0.0, %v4425
        %v4427 = vpop.f32.mrf.mxu0
        %v4428 = vpop.f32.mrf.mxu0
        %v4429 = vadd.f32 0.0, %v4428
        %v4430 = vpop.f32.mrf.mxu0
        %4431 = vmatprep.mubr.bf16.mxu0 0
        %4432 = vmatmul.mubr.bf16.gmra.mxu0 %v4341
        %v4433 = vpop.f32.mrf.mxu0
        %v4434 = vadd.f32 0.0, %v4433
        %v4435 = vpop.f32.mrf.mxu0
        %v4436 = vpop.f32.mrf.mxu0
        %v4437 = vadd.f32 0.0, %v4436
        %v4438 = vpop.f32.mrf.mxu0
        %4439 = vdwg.mxu0
        %v4440 = vmul.f32 %v4378, 0.2
        %v4441 = vmul.f32 %v4381, 0.2
        %v4442 = vmul.f32 %v4386, 0.2
        %v4443 = vmul.f32 %v4389, 0.2
        %v4444 = vmul.f32 %v4394, 0.2
        %v4445 = vmul.f32 %v4397, 0.2
        %v4446 = vmul.f32 %v4402, 0.2
        %v4447 = vmul.f32 %v4405, 0.2
        %v4448 = vmul.f32 %v4410, 0.2
        %v4449 = vmul.f32 %v4413, 0.2
        %v4450 = vmul.f32 %v4418, 0.2
        %v4451 = vmul.f32 %v4421, 0.2
        %v4452 = vmul.f32 %v4426, 0.2
        %v4453 = vmul.f32 %v4429, 0.2
        %v4454 = vmul.f32 %v4434, 0.2
        %v4455 = vmul.f32 %v4437, 0.2
        %v4456 = vmax.f32 %v4378, %v4440
        %v4457 = vmax.f32 %v4381, %v4441
        %v4458 = vmax.f32 %v4386, %v4442
        %v4459 = vmax.f32 %v4389, %v4443
        %v4460 = vmax.f32 %v4394, %v4444
        %v4461 = vmax.f32 %v4397, %v4445
        %v4462 = vmax.f32 %v4402, %v4446
        %v4463 = vmax.f32 %v4405, %v4447
        %v4464 = vmax.f32 %v4410, %v4448
        %v4465 = vmax.f32 %v4413, %v4449
        %v4466 = vmax.f32 %v4418, %v4450
        %v4467 = vmax.f32 %v4421, %v4451
        %v4468 = vmax.f32 %v4426, %v4452
        %v4469 = vmax.f32 %v4429, %v4453
        %v4470 = vmax.f32 %v4434, %v4454
        %v4471 = vmax.f32 %v4437, %v4455
        %v4472 = vpack.c.bf16 %v4457, %v4456
        %v4473 = vpack.c.bf16 %v4459, %v4458
        %v4474 = vpack.c.bf16 %v4461, %v4460
        %v4475 = vpack.c.bf16 %v4463, %v4462
        %v4476 = vpack.c.bf16 %v4465, %v4464
        %v4477 = vpack.c.bf16 %v4467, %v4466
        %v4478 = vpack.c.bf16 %v4469, %v4468
        %v4479 = vpack.c.bf16 %v4471, %v4470
        %s4480 = scalar_lea.vmem %s2, 320
        %v4481 = vld [vmem:[%s4480] sm:$0xf]
        %v4482 = vld [vmem:[%s4480 + $0x4] sm:$0xf]
        %v4483 = vld [vmem:[%s4480 + $0x8] sm:$0xf]
        %v4484 = vld [vmem:[%s4480 + $0xc] sm:$0xf]
        %v4485 = vld [vmem:[%s4480 + $0x10] sm:$0xf]
        %v4486 = vld [vmem:[%s4480 + $0x14] sm:$0xf]
        %v4487 = vld [vmem:[%s4480 + $0x18] sm:$0xf]
        %v4488 = vld [vmem:[%s4480 + $0x1c] sm:$0xf]
        %v4497 = vunpack.c.l.b16 %v4481
        %v4498 = vunpack.c.l.b16 %v4482
        %v4499 = vunpack.c.l.b16 %v4483
        %v4500 = vunpack.c.l.b16 %v4484
        %v4501 = vunpack.c.l.b16 %v4485
        %v4502 = vunpack.c.l.b16 %v4486
        %v4503 = vunpack.c.l.b16 %v4487
        %v4504 = vunpack.c.l.b16 %v4488
        %v4505 = vpack.c.b16 %v4498, %v4497
        %v4506 = vpack.c.b16 %v4500, %v4499
        %v4507 = vpack.c.b16 %v4502, %v4501
        %v4508 = vpack.c.b16 %v4504, %v4503
        %v4514 = vsel %vm900, %v4472, 0
        %v4517 = vsel %vm900, %v4473, 0
        %v4520 = vsel %vm900, %v4474, 0
        %v4523 = vsel %vm900, %v4475, 0
        %v4526 = vsel %vm900, %v4476, 0
        %v4529 = vsel %vm900, %v4477, 0
        %v4532 = vsel %vm900, %v4478, 0
        %v4535 = vsel %vm900, %v4479, 0
        %4537 = vmatprep.subr.bf16.mxu0 0
        %4538 = vmatpush1.bf16.msra.mxu0 0
        %4539 = vmatprep.subr.bf16.mxu0 0
        %4540 = vmatpush1.bf16.msra.mxu0 0
        %4541 = vmatprep.subr.bf16.mxu0 0
        %4542 = vmatpush1.bf16.msra.mxu0 0
        %4543 = vmatprep.subr.bf16.mxu0 0
        %4544 = vmatpush1.bf16.msra.mxu0 0
        %4545 = vmatprep.subr.bf16.mxu0 0
        %4546 = vmatpush1.bf16.msra.mxu0 %v4508
        %4547 = vmatprep.subr.bf16.mxu0 0
        %4548 = vmatpush1.bf16.msra.mxu0 %v4507
        %4549 = vmatprep.subr.bf16.mxu0 0
        %4550 = vmatpush1.bf16.msra.mxu0 %v4506
        %4551 = vmatprep.subr.bf16.mxu0 0
        %4552 = vmatpush1.bf16.msra.mxu0 %v4505
        %4553 = vmatprep.subr.bf16.mxu0 0
        %4554 = vmatpush2.bf16.msra.mxu0 0
        %4555 = vmatprep.subr.bf16.mxu0 0
        %4556 = vmatpush2.bf16.msra.mxu0 0
        %4557 = vmatprep.subr.bf16.mxu0 0
        %4558 = vmatpush2.bf16.msra.mxu0 0
        %4559 = vmatprep.subr.bf16.mxu0 0
        %4560 = vmatpush2.bf16.msra.mxu0 0
        %4561 = vmatprep.subr.bf16.mxu0 0
        %4562 = vmatpush2.bf16.msra.mxu0 0
        %4563 = vmatprep.subr.bf16.mxu0 0
        %4564 = vmatpush2.bf16.msra.mxu0 0
        %4565 = vmatprep.subr.bf16.mxu0 0
        %4566 = vmatpush2.bf16.msra.mxu0 0
        %4567 = vmatprep.subr.bf16.mxu0 0
        %4568 = vmatpush2.bf16.msra.mxu0 0
        %4569 = vmatprep.mubr.bf16.mxu0 0
        %4570 = vmatmul.mubr.bf16.gmra.mxu0 %v4514
        %v4571 = vpop.f32.mrf.mxu0
        %v4572 = vadd.f32 0.0, %v4571
        %v4573 = vpop.f32.mrf.mxu0
        %v4574 = vpop.f32.mrf.mxu0
        %v4575 = vadd.f32 0.0, %v4574
        %v4576 = vpop.f32.mrf.mxu0
        %4577 = vmatprep.mubr.bf16.mxu0 0
        %4578 = vmatmul.mubr.bf16.gmra.mxu0 %v4517
        %v4579 = vpop.f32.mrf.mxu0
        %v4580 = vadd.f32 0.0, %v4579
        %v4581 = vpop.f32.mrf.mxu0
        %v4582 = vpop.f32.mrf.mxu0
        %v4583 = vadd.f32 0.0, %v4582
        %v4584 = vpop.f32.mrf.mxu0
        %4585 = vmatprep.mubr.bf16.mxu0 0
        %4586 = vmatmul.mubr.bf16.gmra.mxu0 %v4520
        %v4587 = vpop.f32.mrf.mxu0
        %v4588 = vadd.f32 0.0, %v4587
        %v4589 = vpop.f32.mrf.mxu0
        %v4590 = vpop.f32.mrf.mxu0
        %v4591 = vadd.f32 0.0, %v4590
        %v4592 = vpop.f32.mrf.mxu0
        %4593 = vmatprep.mubr.bf16.mxu0 0
        %4594 = vmatmul.mubr.bf16.gmra.mxu0 %v4523
        %v4595 = vpop.f32.mrf.mxu0
        %v4596 = vadd.f32 0.0, %v4595
        %v4597 = vpop.f32.mrf.mxu0
        %v4598 = vpop.f32.mrf.mxu0
        %v4599 = vadd.f32 0.0, %v4598
        %v4600 = vpop.f32.mrf.mxu0
        %4601 = vmatprep.mubr.bf16.mxu0 0
        %4602 = vmatmul.mubr.bf16.gmra.mxu0 %v4526
        %v4603 = vpop.f32.mrf.mxu0
        %v4604 = vadd.f32 0.0, %v4603
        %v4605 = vpop.f32.mrf.mxu0
        %v4606 = vpop.f32.mrf.mxu0
        %v4607 = vadd.f32 0.0, %v4606
        %v4608 = vpop.f32.mrf.mxu0
        %4609 = vmatprep.mubr.bf16.mxu0 0
        %4610 = vmatmul.mubr.bf16.gmra.mxu0 %v4529
        %v4611 = vpop.f32.mrf.mxu0
        %v4612 = vadd.f32 0.0, %v4611
        %v4613 = vpop.f32.mrf.mxu0
        %v4614 = vpop.f32.mrf.mxu0
        %v4615 = vadd.f32 0.0, %v4614
        %v4616 = vpop.f32.mrf.mxu0
        %4617 = vmatprep.mubr.bf16.mxu0 0
        %4618 = vmatmul.mubr.bf16.gmra.mxu0 %v4532
        %v4619 = vpop.f32.mrf.mxu0
        %v4620 = vadd.f32 0.0, %v4619
        %v4621 = vpop.f32.mrf.mxu0
        %v4622 = vpop.f32.mrf.mxu0
        %v4623 = vadd.f32 0.0, %v4622
        %v4624 = vpop.f32.mrf.mxu0
        %4625 = vmatprep.mubr.bf16.mxu0 0
        %4626 = vmatmul.mubr.bf16.gmra.mxu0 %v4535
        %v4627 = vpop.f32.mrf.mxu0
        %v4628 = vadd.f32 0.0, %v4627
        %v4629 = vpop.f32.mrf.mxu0
        %v4630 = vpop.f32.mrf.mxu0
        %v4631 = vadd.f32 0.0, %v4630
        %v4632 = vpop.f32.mrf.mxu0
        %4633 = vdwg.mxu0
        %v4634 = vadd.f32 %v4247, %v4572
        %v4635 = vadd.f32 %v4248, %v4575
        %v4636 = vadd.f32 %v4249, %v4580
        %v4637 = vadd.f32 %v4250, %v4583
        %v4638 = vadd.f32 %v4251, %v4588
        %v4639 = vadd.f32 %v4252, %v4591
        %v4640 = vadd.f32 %v4253, %v4596
        %v4641 = vadd.f32 %v4254, %v4599
        %v4642 = vadd.f32 %v4255, %v4604
        %v4643 = vadd.f32 %v4256, %v4607
        %v4644 = vadd.f32 %v4257, %v4612
        %v4645 = vadd.f32 %v4258, %v4615
        %v4646 = vadd.f32 %v4259, %v4620
        %v4647 = vadd.f32 %v4260, %v4623
        %v4648 = vadd.f32 %v4261, %v4628
        %v4649 = vadd.f32 %v4262, %v4631
        %v4650 = vld [vmem:[%s0 + $0x2c0] sm:$0xf]
        %v4651 = vld [vmem:[%s0 + $0x2c4] sm:$0xf]
        %v4652 = vld [vmem:[%s0 + $0x2c8] sm:$0xf]
        %v4653 = vld [vmem:[%s0 + $0x2cc] sm:$0xf]
        %v4654 = vld [vmem:[%s0 + $0x2d0] sm:$0xf]
        %v4655 = vld [vmem:[%s0 + $0x2d4] sm:$0xf]
        %v4656 = vld [vmem:[%s0 + $0x2d8] sm:$0xf]
        %v4657 = vld [vmem:[%s0 + $0x2dc] sm:$0xf]
        %v4658 = vld [vmem:[%s0 + $0x2e0] sm:$0xf]
        %v4659 = vld [vmem:[%s0 + $0x2e4] sm:$0xf]
        %v4660 = vld [vmem:[%s0 + $0x2e8] sm:$0xf]
        %v4661 = vld [vmem:[%s0 + $0x2ec] sm:$0xf]
        %v4662 = vld [vmem:[%s0 + $0x2f0] sm:$0xf]
        %v4663 = vld [vmem:[%s0 + $0x2f4] sm:$0xf]
        %v4664 = vld [vmem:[%s0 + $0x2f8] sm:$0xf]
        %v4665 = vld [vmem:[%s0 + $0x2fc] sm:$0xf]
        %v4682 = vunpack.c.l.b16 %v4650
        %v4683 = vunpack.c.l.b16 %v4651
        %v4684 = vunpack.c.l.b16 %v4652
        %v4685 = vunpack.c.l.b16 %v4653
        %v4686 = vunpack.c.l.b16 %v4654
        %v4687 = vunpack.c.l.b16 %v4655
        %v4688 = vunpack.c.l.b16 %v4656
        %v4689 = vunpack.c.l.b16 %v4657
        %v4690 = vunpack.c.l.b16 %v4658
        %v4691 = vunpack.c.l.b16 %v4659
        %v4692 = vunpack.c.l.b16 %v4660
        %v4693 = vunpack.c.l.b16 %v4661
        %v4694 = vunpack.c.l.b16 %v4662
        %v4695 = vunpack.c.l.b16 %v4663
        %v4696 = vunpack.c.l.b16 %v4664
        %v4697 = vunpack.c.l.b16 %v4665
        %v4698 = vpack.c.b16 %v4683, %v4682
        %v4699 = vpack.c.b16 %v4685, %v4684
        %v4700 = vpack.c.b16 %v4687, %v4686
        %v4701 = vpack.c.b16 %v4689, %v4688
        %v4702 = vpack.c.b16 %v4691, %v4690
        %v4703 = vpack.c.b16 %v4693, %v4692
        %v4704 = vpack.c.b16 %v4695, %v4694
        %v4705 = vpack.c.b16 %v4697, %v4696
        %v4707 = vsel %vm474, %v4698, 0
        %v4710 = vsel %vm474, %v4699, 0
        %v4713 = vsel %vm474, %v4700, 0
        %v4716 = vsel %vm474, %v4701, 0
        %v4719 = vsel %vm474, %v4702, 0
        %v4722 = vsel %vm474, %v4703, 0
        %v4725 = vsel %vm474, %v4704, 0
        %v4728 = vsel %vm474, %v4705, 0
        %4730 = vmatprep.subr.bf16.mxu0 0
        %4731 = vmatpush1.bf16.msra.mxu0 0
        %4732 = vmatprep.subr.bf16.mxu0 0
        %4733 = vmatpush1.bf16.msra.mxu0 0
        %4734 = vmatprep.subr.bf16.mxu0 0
        %4735 = vmatpush1.bf16.msra.mxu0 0
        %4736 = vmatprep.subr.bf16.mxu0 0
        %4737 = vmatpush1.bf16.msra.mxu0 0
        %4738 = vmatprep.subr.bf16.mxu0 0
        %4739 = vmatpush1.bf16.msra.mxu0 0
        %4740 = vmatprep.subr.bf16.mxu0 0
        %4741 = vmatpush1.bf16.msra.mxu0 0
        %4742 = vmatprep.subr.bf16.mxu0 0
        %4743 = vmatpush1.bf16.msra.mxu0 %v503
        %4744 = vmatprep.subr.bf16.mxu0 0
        %4745 = vmatpush1.bf16.msra.mxu0 %v471
        %4746 = vmatprep.subr.bf16.mxu0 0
        %4747 = vmatpush2.bf16.msra.mxu0 0
        %4748 = vmatprep.subr.bf16.mxu0 0
        %4749 = vmatpush2.bf16.msra.mxu0 0
        %4750 = vmatprep.subr.bf16.mxu0 0
        %4751 = vmatpush2.bf16.msra.mxu0 0
        %4752 = vmatprep.subr.bf16.mxu0 0
        %4753 = vmatpush2.bf16.msra.mxu0 0
        %4754 = vmatprep.subr.bf16.mxu0 0
        %4755 = vmatpush2.bf16.msra.mxu0 0
        %4756 = vmatprep.subr.bf16.mxu0 0
        %4757 = vmatpush2.bf16.msra.mxu0 0
        %4758 = vmatprep.subr.bf16.mxu0 0
        %4759 = vmatpush2.bf16.msra.mxu0 0
        %4760 = vmatprep.subr.bf16.mxu0 0
        %4761 = vmatpush2.bf16.msra.mxu0 0
        %4762 = vmatprep.mubr.bf16.mxu0 0
        %4763 = vmatmul.mubr.bf16.gmra.mxu0 %v4707
        %v4764 = vpop.f32.mrf.mxu0
        %v4765 = vadd.f32 0.0, %v4764
        %v4766 = vpop.f32.mrf.mxu0
        %v4767 = vpop.f32.mrf.mxu0
        %v4768 = vadd.f32 0.0, %v4767
        %v4769 = vpop.f32.mrf.mxu0
        %4770 = vmatprep.mubr.bf16.mxu0 0
        %4771 = vmatmul.mubr.bf16.gmra.mxu0 %v4710
        %v4772 = vpop.f32.mrf.mxu0
        %v4773 = vadd.f32 0.0, %v4772
        %v4774 = vpop.f32.mrf.mxu0
        %v4775 = vpop.f32.mrf.mxu0
        %v4776 = vadd.f32 0.0, %v4775
        %v4777 = vpop.f32.mrf.mxu0
        %4778 = vmatprep.mubr.bf16.mxu0 0
        %4779 = vmatmul.mubr.bf16.gmra.mxu0 %v4713
        %v4780 = vpop.f32.mrf.mxu0
        %v4781 = vadd.f32 0.0, %v4780
        %v4782 = vpop.f32.mrf.mxu0
        %v4783 = vpop.f32.mrf.mxu0
        %v4784 = vadd.f32 0.0, %v4783
        %v4785 = vpop.f32.mrf.mxu0
        %4786 = vmatprep.mubr.bf16.mxu0 0
        %4787 = vmatmul.mubr.bf16.gmra.mxu0 %v4716
        %v4788 = vpop.f32.mrf.mxu0
        %v4789 = vadd.f32 0.0, %v4788
        %v4790 = vpop.f32.mrf.mxu0
        %v4791 = vpop.f32.mrf.mxu0
        %v4792 = vadd.f32 0.0, %v4791
        %v4793 = vpop.f32.mrf.mxu0
        %4794 = vmatprep.mubr.bf16.mxu0 0
        %4795 = vmatmul.mubr.bf16.gmra.mxu0 %v4719
        %v4796 = vpop.f32.mrf.mxu0
        %v4797 = vadd.f32 0.0, %v4796
        %v4798 = vpop.f32.mrf.mxu0
        %v4799 = vpop.f32.mrf.mxu0
        %v4800 = vadd.f32 0.0, %v4799
        %v4801 = vpop.f32.mrf.mxu0
        %4802 = vmatprep.mubr.bf16.mxu0 0
        %4803 = vmatmul.mubr.bf16.gmra.mxu0 %v4722
        %v4804 = vpop.f32.mrf.mxu0
        %v4805 = vadd.f32 0.0, %v4804
        %v4806 = vpop.f32.mrf.mxu0
        %v4807 = vpop.f32.mrf.mxu0
        %v4808 = vadd.f32 0.0, %v4807
        %v4809 = vpop.f32.mrf.mxu0
        %4810 = vmatprep.mubr.bf16.mxu0 0
        %4811 = vmatmul.mubr.bf16.gmra.mxu0 %v4725
        %v4812 = vpop.f32.mrf.mxu0
        %v4813 = vadd.f32 0.0, %v4812
        %v4814 = vpop.f32.mrf.mxu0
        %v4815 = vpop.f32.mrf.mxu0
        %v4816 = vadd.f32 0.0, %v4815
        %v4817 = vpop.f32.mrf.mxu0
        %4818 = vmatprep.mubr.bf16.mxu0 0
        %4819 = vmatmul.mubr.bf16.gmra.mxu0 %v4728
        %v4820 = vpop.f32.mrf.mxu0
        %v4821 = vadd.f32 0.0, %v4820
        %v4822 = vpop.f32.mrf.mxu0
        %v4823 = vpop.f32.mrf.mxu0
        %v4824 = vadd.f32 0.0, %v4823
        %v4825 = vpop.f32.mrf.mxu0
        %4826 = vdwg.mxu0
        %v4827 = vmul.f32 %v4765, 0.2
        %v4828 = vmul.f32 %v4768, 0.2
        %v4829 = vmul.f32 %v4773, 0.2
        %v4830 = vmul.f32 %v4776, 0.2
        %v4831 = vmul.f32 %v4781, 0.2
        %v4832 = vmul.f32 %v4784, 0.2
        %v4833 = vmul.f32 %v4789, 0.2
        %v4834 = vmul.f32 %v4792, 0.2
        %v4835 = vmul.f32 %v4797, 0.2
        %v4836 = vmul.f32 %v4800, 0.2
        %v4837 = vmul.f32 %v4805, 0.2
        %v4838 = vmul.f32 %v4808, 0.2
        %v4839 = vmul.f32 %v4813, 0.2
        %v4840 = vmul.f32 %v4816, 0.2
        %v4841 = vmul.f32 %v4821, 0.2
        %v4842 = vmul.f32 %v4824, 0.2
        %v4843 = vmax.f32 %v4765, %v4827
        %v4844 = vmax.f32 %v4768, %v4828
        %v4845 = vmax.f32 %v4773, %v4829
        %v4846 = vmax.f32 %v4776, %v4830
        %v4847 = vmax.f32 %v4781, %v4831
        %v4848 = vmax.f32 %v4784, %v4832
        %v4849 = vmax.f32 %v4789, %v4833
        %v4850 = vmax.f32 %v4792, %v4834
        %v4851 = vmax.f32 %v4797, %v4835
        %v4852 = vmax.f32 %v4800, %v4836
        %v4853 = vmax.f32 %v4805, %v4837
        %v4854 = vmax.f32 %v4808, %v4838
        %v4855 = vmax.f32 %v4813, %v4839
        %v4856 = vmax.f32 %v4816, %v4840
        %v4857 = vmax.f32 %v4821, %v4841
        %v4858 = vmax.f32 %v4824, %v4842
        %v4859 = vpack.c.bf16 %v4844, %v4843
        %v4860 = vpack.c.bf16 %v4846, %v4845
        %v4861 = vpack.c.bf16 %v4848, %v4847
        %v4862 = vpack.c.bf16 %v4850, %v4849
        %v4863 = vpack.c.bf16 %v4852, %v4851
        %v4864 = vpack.c.bf16 %v4854, %v4853
        %v4865 = vpack.c.bf16 %v4856, %v4855
        %v4866 = vpack.c.bf16 %v4858, %v4857
        %s4867 = scalar_lea.vmem %s2, 352
        %v4868 = vld [vmem:[%s4867] sm:$0xf]
        %v4869 = vld [vmem:[%s4867 + $0x4] sm:$0xf]
        %v4870 = vld [vmem:[%s4867 + $0x8] sm:$0xf]
        %v4871 = vld [vmem:[%s4867 + $0xc] sm:$0xf]
        %v4872 = vld [vmem:[%s4867 + $0x10] sm:$0xf]
        %v4873 = vld [vmem:[%s4867 + $0x14] sm:$0xf]
        %v4874 = vld [vmem:[%s4867 + $0x18] sm:$0xf]
        %v4875 = vld [vmem:[%s4867 + $0x1c] sm:$0xf]
        %v4884 = vunpack.c.l.b16 %v4868
        %v4885 = vunpack.c.l.b16 %v4869
        %v4886 = vunpack.c.l.b16 %v4870
        %v4887 = vunpack.c.l.b16 %v4871
        %v4888 = vunpack.c.l.b16 %v4872
        %v4889 = vunpack.c.l.b16 %v4873
        %v4890 = vunpack.c.l.b16 %v4874
        %v4891 = vunpack.c.l.b16 %v4875
        %v4892 = vpack.c.b16 %v4885, %v4884
        %v4893 = vpack.c.b16 %v4887, %v4886
        %v4894 = vpack.c.b16 %v4889, %v4888
        %v4895 = vpack.c.b16 %v4891, %v4890
        %v4901 = vsel %vm900, %v4859, 0
        %v4904 = vsel %vm900, %v4860, 0
        %v4907 = vsel %vm900, %v4861, 0
        %v4910 = vsel %vm900, %v4862, 0
        %v4913 = vsel %vm900, %v4863, 0
        %v4916 = vsel %vm900, %v4864, 0
        %v4919 = vsel %vm900, %v4865, 0
        %v4922 = vsel %vm900, %v4866, 0
        %4924 = vmatprep.subr.bf16.mxu0 0
        %4925 = vmatpush1.bf16.msra.mxu0 0
        %4926 = vmatprep.subr.bf16.mxu0 0
        %4927 = vmatpush1.bf16.msra.mxu0 0
        %4928 = vmatprep.subr.bf16.mxu0 0
        %4929 = vmatpush1.bf16.msra.mxu0 0
        %4930 = vmatprep.subr.bf16.mxu0 0
        %4931 = vmatpush1.bf16.msra.mxu0 0
        %4932 = vmatprep.subr.bf16.mxu0 0
        %4933 = vmatpush1.bf16.msra.mxu0 %v4895
        %4934 = vmatprep.subr.bf16.mxu0 0
        %4935 = vmatpush1.bf16.msra.mxu0 %v4894
        %4936 = vmatprep.subr.bf16.mxu0 0
        %4937 = vmatpush1.bf16.msra.mxu0 %v4893
        %4938 = vmatprep.subr.bf16.mxu0 0
        %4939 = vmatpush1.bf16.msra.mxu0 %v4892
        %4940 = vmatprep.subr.bf16.mxu0 0
        %4941 = vmatpush2.bf16.msra.mxu0 0
        %4942 = vmatprep.subr.bf16.mxu0 0
        %4943 = vmatpush2.bf16.msra.mxu0 0
        %4944 = vmatprep.subr.bf16.mxu0 0
        %4945 = vmatpush2.bf16.msra.mxu0 0
        %4946 = vmatprep.subr.bf16.mxu0 0
        %4947 = vmatpush2.bf16.msra.mxu0 0
        %4948 = vmatprep.subr.bf16.mxu0 0
        %4949 = vmatpush2.bf16.msra.mxu0 0
        %4950 = vmatprep.subr.bf16.mxu0 0
        %4951 = vmatpush2.bf16.msra.mxu0 0
        %4952 = vmatprep.subr.bf16.mxu0 0
        %4953 = vmatpush2.bf16.msra.mxu0 0
        %4954 = vmatprep.subr.bf16.mxu0 0
        %4955 = vmatpush2.bf16.msra.mxu0 0
        %4956 = vmatprep.mubr.bf16.mxu0 0
        %4957 = vmatmul.mubr.bf16.gmra.mxu0 %v4901
        %v4958 = vpop.f32.mrf.mxu0
        %v4959 = vadd.f32 0.0, %v4958
        %v4960 = vpop.f32.mrf.mxu0
        %v4961 = vpop.f32.mrf.mxu0
        %v4962 = vadd.f32 0.0, %v4961
        %v4963 = vpop.f32.mrf.mxu0
        %4964 = vmatprep.mubr.bf16.mxu0 0
        %4965 = vmatmul.mubr.bf16.gmra.mxu0 %v4904
        %v4966 = vpop.f32.mrf.mxu0
        %v4967 = vadd.f32 0.0, %v4966
        %v4968 = vpop.f32.mrf.mxu0
        %v4969 = vpop.f32.mrf.mxu0
        %v4970 = vadd.f32 0.0, %v4969
        %v4971 = vpop.f32.mrf.mxu0
        %4972 = vmatprep.mubr.bf16.mxu0 0
        %4973 = vmatmul.mubr.bf16.gmra.mxu0 %v4907
        %v4974 = vpop.f32.mrf.mxu0
        %v4975 = vadd.f32 0.0, %v4974
        %v4976 = vpop.f32.mrf.mxu0
        %v4977 = vpop.f32.mrf.mxu0
        %v4978 = vadd.f32 0.0, %v4977
        %v4979 = vpop.f32.mrf.mxu0
        %4980 = vmatprep.mubr.bf16.mxu0 0
        %4981 = vmatmul.mubr.bf16.gmra.mxu0 %v4910
        %v4982 = vpop.f32.mrf.mxu0
        %v4983 = vadd.f32 0.0, %v4982
        %v4984 = vpop.f32.mrf.mxu0
        %v4985 = vpop.f32.mrf.mxu0
        %v4986 = vadd.f32 0.0, %v4985
        %v4987 = vpop.f32.mrf.mxu0
        %4988 = vmatprep.mubr.bf16.mxu0 0
        %4989 = vmatmul.mubr.bf16.gmra.mxu0 %v4913
        %v4990 = vpop.f32.mrf.mxu0
        %v4991 = vadd.f32 0.0, %v4990
        %v4992 = vpop.f32.mrf.mxu0
        %v4993 = vpop.f32.mrf.mxu0
        %v4994 = vadd.f32 0.0, %v4993
        %v4995 = vpop.f32.mrf.mxu0
        %4996 = vmatprep.mubr.bf16.mxu0 0
        %4997 = vmatmul.mubr.bf16.gmra.mxu0 %v4916
        %v4998 = vpop.f32.mrf.mxu0
        %v4999 = vadd.f32 0.0, %v4998
        %v5000 = vpop.f32.mrf.mxu0
        %v5001 = vpop.f32.mrf.mxu0
        %v5002 = vadd.f32 0.0, %v5001
        %v5003 = vpop.f32.mrf.mxu0
        %5004 = vmatprep.mubr.bf16.mxu0 0
        %5005 = vmatmul.mubr.bf16.gmra.mxu0 %v4919
        %v5006 = vpop.f32.mrf.mxu0
        %v5007 = vadd.f32 0.0, %v5006
        %v5008 = vpop.f32.mrf.mxu0
        %v5009 = vpop.f32.mrf.mxu0
        %v5010 = vadd.f32 0.0, %v5009
        %v5011 = vpop.f32.mrf.mxu0
        %5012 = vmatprep.mubr.bf16.mxu0 0
        %5013 = vmatmul.mubr.bf16.gmra.mxu0 %v4922
        %v5014 = vpop.f32.mrf.mxu0
        %v5015 = vadd.f32 0.0, %v5014
        %v5016 = vpop.f32.mrf.mxu0
        %v5017 = vpop.f32.mrf.mxu0
        %v5018 = vadd.f32 0.0, %v5017
        %v5019 = vpop.f32.mrf.mxu0
        %5020 = vdwg.mxu0
        %v5021 = vadd.f32 %v4634, %v4959
        %v5022 = vadd.f32 %v4635, %v4962
        %v5023 = vadd.f32 %v4636, %v4967
        %v5024 = vadd.f32 %v4637, %v4970
        %v5025 = vadd.f32 %v4638, %v4975
        %v5026 = vadd.f32 %v4639, %v4978
        %v5027 = vadd.f32 %v4640, %v4983
        %v5028 = vadd.f32 %v4641, %v4986
        %v5029 = vadd.f32 %v4642, %v4991
        %v5030 = vadd.f32 %v4643, %v4994
        %v5031 = vadd.f32 %v4644, %v4999
        %v5032 = vadd.f32 %v4645, %v5002
        %v5033 = vadd.f32 %v4646, %v5007
        %v5034 = vadd.f32 %v4647, %v5010
        %v5035 = vadd.f32 %v4648, %v5015
        %v5036 = vadd.f32 %v4649, %v5018
        %v5037 = vld [vmem:[%s0 + $0x300] sm:$0xf]
        %v5038 = vld [vmem:[%s0 + $0x304] sm:$0xf]
        %v5039 = vld [vmem:[%s0 + $0x308] sm:$0xf]
        %v5040 = vld [vmem:[%s0 + $0x30c] sm:$0xf]
        %v5041 = vld [vmem:[%s0 + $0x310] sm:$0xf]
        %v5042 = vld [vmem:[%s0 + $0x314] sm:$0xf]
        %v5043 = vld [vmem:[%s0 + $0x318] sm:$0xf]
        %v5044 = vld [vmem:[%s0 + $0x31c] sm:$0xf]
        %v5045 = vld [vmem:[%s0 + $0x320] sm:$0xf]
        %v5046 = vld [vmem:[%s0 + $0x324] sm:$0xf]
        %v5047 = vld [vmem:[%s0 + $0x328] sm:$0xf]
        %v5048 = vld [vmem:[%s0 + $0x32c] sm:$0xf]
        %v5049 = vld [vmem:[%s0 + $0x330] sm:$0xf]
        %v5050 = vld [vmem:[%s0 + $0x334] sm:$0xf]
        %v5051 = vld [vmem:[%s0 + $0x338] sm:$0xf]
        %v5052 = vld [vmem:[%s0 + $0x33c] sm:$0xf]
        %v5069 = vunpack.c.l.b16 %v5037
        %v5070 = vunpack.c.l.b16 %v5038
        %v5071 = vunpack.c.l.b16 %v5039
        %v5072 = vunpack.c.l.b16 %v5040
        %v5073 = vunpack.c.l.b16 %v5041
        %v5074 = vunpack.c.l.b16 %v5042
        %v5075 = vunpack.c.l.b16 %v5043
        %v5076 = vunpack.c.l.b16 %v5044
        %v5077 = vunpack.c.l.b16 %v5045
        %v5078 = vunpack.c.l.b16 %v5046
        %v5079 = vunpack.c.l.b16 %v5047
        %v5080 = vunpack.c.l.b16 %v5048
        %v5081 = vunpack.c.l.b16 %v5049
        %v5082 = vunpack.c.l.b16 %v5050
        %v5083 = vunpack.c.l.b16 %v5051
        %v5084 = vunpack.c.l.b16 %v5052
        %v5085 = vpack.c.b16 %v5070, %v5069
        %v5086 = vpack.c.b16 %v5072, %v5071
        %v5087 = vpack.c.b16 %v5074, %v5073
        %v5088 = vpack.c.b16 %v5076, %v5075
        %v5089 = vpack.c.b16 %v5078, %v5077
        %v5090 = vpack.c.b16 %v5080, %v5079
        %v5091 = vpack.c.b16 %v5082, %v5081
        %v5092 = vpack.c.b16 %v5084, %v5083
        %v5094 = vsel %vm474, %v5085, 0
        %v5097 = vsel %vm474, %v5086, 0
        %v5100 = vsel %vm474, %v5087, 0
        %v5103 = vsel %vm474, %v5088, 0
        %v5106 = vsel %vm474, %v5089, 0
        %v5109 = vsel %vm474, %v5090, 0
        %v5112 = vsel %vm474, %v5091, 0
        %v5115 = vsel %vm474, %v5092, 0
        %5117 = vmatprep.subr.bf16.mxu0 0
        %5118 = vmatpush1.bf16.msra.mxu0 0
        %5119 = vmatprep.subr.bf16.mxu0 0
        %5120 = vmatpush1.bf16.msra.mxu0 0
        %5121 = vmatprep.subr.bf16.mxu0 0
        %5122 = vmatpush1.bf16.msra.mxu0 0
        %5123 = vmatprep.subr.bf16.mxu0 0
        %5124 = vmatpush1.bf16.msra.mxu0 0
        %5125 = vmatprep.subr.bf16.mxu0 0
        %5126 = vmatpush1.bf16.msra.mxu0 0
        %5127 = vmatprep.subr.bf16.mxu0 0
        %5128 = vmatpush1.bf16.msra.mxu0 0
        %5129 = vmatprep.subr.bf16.mxu0 0
        %5130 = vmatpush1.bf16.msra.mxu0 %v503
        %5131 = vmatprep.subr.bf16.mxu0 0
        %5132 = vmatpush1.bf16.msra.mxu0 %v471
        %5133 = vmatprep.subr.bf16.mxu0 0
        %5134 = vmatpush2.bf16.msra.mxu0 0
        %5135 = vmatprep.subr.bf16.mxu0 0
        %5136 = vmatpush2.bf16.msra.mxu0 0
        %5137 = vmatprep.subr.bf16.mxu0 0
        %5138 = vmatpush2.bf16.msra.mxu0 0
        %5139 = vmatprep.subr.bf16.mxu0 0
        %5140 = vmatpush2.bf16.msra.mxu0 0
        %5141 = vmatprep.subr.bf16.mxu0 0
        %5142 = vmatpush2.bf16.msra.mxu0 0
        %5143 = vmatprep.subr.bf16.mxu0 0
        %5144 = vmatpush2.bf16.msra.mxu0 0
        %5145 = vmatprep.subr.bf16.mxu0 0
        %5146 = vmatpush2.bf16.msra.mxu0 0
        %5147 = vmatprep.subr.bf16.mxu0 0
        %5148 = vmatpush2.bf16.msra.mxu0 0
        %5149 = vmatprep.mubr.bf16.mxu0 0
        %5150 = vmatmul.mubr.bf16.gmra.mxu0 %v5094
        %v5151 = vpop.f32.mrf.mxu0
        %v5152 = vadd.f32 0.0, %v5151
        %v5153 = vpop.f32.mrf.mxu0
        %v5154 = vpop.f32.mrf.mxu0
        %v5155 = vadd.f32 0.0, %v5154
        %v5156 = vpop.f32.mrf.mxu0
        %5157 = vmatprep.mubr.bf16.mxu0 0
        %5158 = vmatmul.mubr.bf16.gmra.mxu0 %v5097
        %v5159 = vpop.f32.mrf.mxu0
        %v5160 = vadd.f32 0.0, %v5159
        %v5161 = vpop.f32.mrf.mxu0
        %v5162 = vpop.f32.mrf.mxu0
        %v5163 = vadd.f32 0.0, %v5162
        %v5164 = vpop.f32.mrf.mxu0
        %5165 = vmatprep.mubr.bf16.mxu0 0
        %5166 = vmatmul.mubr.bf16.gmra.mxu0 %v5100
        %v5167 = vpop.f32.mrf.mxu0
        %v5168 = vadd.f32 0.0, %v5167
        %v5169 = vpop.f32.mrf.mxu0
        %v5170 = vpop.f32.mrf.mxu0
        %v5171 = vadd.f32 0.0, %v5170
        %v5172 = vpop.f32.mrf.mxu0
        %5173 = vmatprep.mubr.bf16.mxu0 0
        %5174 = vmatmul.mubr.bf16.gmra.mxu0 %v5103
        %v5175 = vpop.f32.mrf.mxu0
        %v5176 = vadd.f32 0.0, %v5175
        %v5177 = vpop.f32.mrf.mxu0
        %v5178 = vpop.f32.mrf.mxu0
        %v5179 = vadd.f32 0.0, %v5178
        %v5180 = vpop.f32.mrf.mxu0
        %5181 = vmatprep.mubr.bf16.mxu0 0
        %5182 = vmatmul.mubr.bf16.gmra.mxu0 %v5106
        %v5183 = vpop.f32.mrf.mxu0
        %v5184 = vadd.f32 0.0, %v5183
        %v5185 = vpop.f32.mrf.mxu0
        %v5186 = vpop.f32.mrf.mxu0
        %v5187 = vadd.f32 0.0, %v5186
        %v5188 = vpop.f32.mrf.mxu0
        %5189 = vmatprep.mubr.bf16.mxu0 0
        %5190 = vmatmul.mubr.bf16.gmra.mxu0 %v5109
        %v5191 = vpop.f32.mrf.mxu0
        %v5192 = vadd.f32 0.0, %v5191
        %v5193 = vpop.f32.mrf.mxu0
        %v5194 = vpop.f32.mrf.mxu0
        %v5195 = vadd.f32 0.0, %v5194
        %v5196 = vpop.f32.mrf.mxu0
        %5197 = vmatprep.mubr.bf16.mxu0 0
        %5198 = vmatmul.mubr.bf16.gmra.mxu0 %v5112
        %v5199 = vpop.f32.mrf.mxu0
        %v5200 = vadd.f32 0.0, %v5199
        %v5201 = vpop.f32.mrf.mxu0
        %v5202 = vpop.f32.mrf.mxu0
        %v5203 = vadd.f32 0.0, %v5202
        %v5204 = vpop.f32.mrf.mxu0
        %5205 = vmatprep.mubr.bf16.mxu0 0
        %5206 = vmatmul.mubr.bf16.gmra.mxu0 %v5115
        %v5207 = vpop.f32.mrf.mxu0
        %v5208 = vadd.f32 0.0, %v5207
        %v5209 = vpop.f32.mrf.mxu0
        %v5210 = vpop.f32.mrf.mxu0
        %v5211 = vadd.f32 0.0, %v5210
        %v5212 = vpop.f32.mrf.mxu0
        %5213 = vdwg.mxu0
        %v5214 = vmul.f32 %v5152, 0.2
        %v5215 = vmul.f32 %v5155, 0.2
        %v5216 = vmul.f32 %v5160, 0.2
        %v5217 = vmul.f32 %v5163, 0.2
        %v5218 = vmul.f32 %v5168, 0.2
        %v5219 = vmul.f32 %v5171, 0.2
        %v5220 = vmul.f32 %v5176, 0.2
        %v5221 = vmul.f32 %v5179, 0.2
        %v5222 = vmul.f32 %v5184, 0.2
        %v5223 = vmul.f32 %v5187, 0.2
        %v5224 = vmul.f32 %v5192, 0.2
        %v5225 = vmul.f32 %v5195, 0.2
        %v5226 = vmul.f32 %v5200, 0.2
        %v5227 = vmul.f32 %v5203, 0.2
        %v5228 = vmul.f32 %v5208, 0.2
        %v5229 = vmul.f32 %v5211, 0.2
        %v5230 = vmax.f32 %v5152, %v5214
        %v5231 = vmax.f32 %v5155, %v5215
        %v5232 = vmax.f32 %v5160, %v5216
        %v5233 = vmax.f32 %v5163, %v5217
        %v5234 = vmax.f32 %v5168, %v5218
        %v5235 = vmax.f32 %v5171, %v5219
        %v5236 = vmax.f32 %v5176, %v5220
        %v5237 = vmax.f32 %v5179, %v5221
        %v5238 = vmax.f32 %v5184, %v5222
        %v5239 = vmax.f32 %v5187, %v5223
        %v5240 = vmax.f32 %v5192, %v5224
        %v5241 = vmax.f32 %v5195, %v5225
        %v5242 = vmax.f32 %v5200, %v5226
        %v5243 = vmax.f32 %v5203, %v5227
        %v5244 = vmax.f32 %v5208, %v5228
        %v5245 = vmax.f32 %v5211, %v5229
        %v5246 = vpack.c.bf16 %v5231, %v5230
        %v5247 = vpack.c.bf16 %v5233, %v5232
        %v5248 = vpack.c.bf16 %v5235, %v5234
        %v5249 = vpack.c.bf16 %v5237, %v5236
        %v5250 = vpack.c.bf16 %v5239, %v5238
        %v5251 = vpack.c.bf16 %v5241, %v5240
        %v5252 = vpack.c.bf16 %v5243, %v5242
        %v5253 = vpack.c.bf16 %v5245, %v5244
        %s5254 = scalar_lea.vmem %s2, 384
        %v5255 = vld [vmem:[%s5254] sm:$0xf]
        %v5256 = vld [vmem:[%s5254 + $0x4] sm:$0xf]
        %v5257 = vld [vmem:[%s5254 + $0x8] sm:$0xf]
        %v5258 = vld [vmem:[%s5254 + $0xc] sm:$0xf]
        %v5259 = vld [vmem:[%s5254 + $0x10] sm:$0xf]
        %v5260 = vld [vmem:[%s5254 + $0x14] sm:$0xf]
        %v5261 = vld [vmem:[%s5254 + $0x18] sm:$0xf]
        %v5262 = vld [vmem:[%s5254 + $0x1c] sm:$0xf]
        %v5271 = vunpack.c.l.b16 %v5255
        %v5272 = vunpack.c.l.b16 %v5256
        %v5273 = vunpack.c.l.b16 %v5257
        %v5274 = vunpack.c.l.b16 %v5258
        %v5275 = vunpack.c.l.b16 %v5259
        %v5276 = vunpack.c.l.b16 %v5260
        %v5277 = vunpack.c.l.b16 %v5261
        %v5278 = vunpack.c.l.b16 %v5262
        %v5279 = vpack.c.b16 %v5272, %v5271
        %v5280 = vpack.c.b16 %v5274, %v5273
        %v5281 = vpack.c.b16 %v5276, %v5275
        %v5282 = vpack.c.b16 %v5278, %v5277
        %v5288 = vsel %vm900, %v5246, 0
        %v5291 = vsel %vm900, %v5247, 0
        %v5294 = vsel %vm900, %v5248, 0
        %v5297 = vsel %vm900, %v5249, 0
        %v5300 = vsel %vm900, %v5250, 0
        %v5303 = vsel %vm900, %v5251, 0
        %v5306 = vsel %vm900, %v5252, 0
        %v5309 = vsel %vm900, %v5253, 0
        %5311 = vmatprep.subr.bf16.mxu0 0
        %5312 = vmatpush1.bf16.msra.mxu0 0
        %5313 = vmatprep.subr.bf16.mxu0 0
        %5314 = vmatpush1.bf16.msra.mxu0 0
        %5315 = vmatprep.subr.bf16.mxu0 0
        %5316 = vmatpush1.bf16.msra.mxu0 0
        %5317 = vmatprep.subr.bf16.mxu0 0
        %5318 = vmatpush1.bf16.msra.mxu0 0
        %5319 = vmatprep.subr.bf16.mxu0 0
        %5320 = vmatpush1.bf16.msra.mxu0 %v5282
        %5321 = vmatprep.subr.bf16.mxu0 0
        %5322 = vmatpush1.bf16.msra.mxu0 %v5281
        %5323 = vmatprep.subr.bf16.mxu0 0
        %5324 = vmatpush1.bf16.msra.mxu0 %v5280
        %5325 = vmatprep.subr.bf16.mxu0 0
        %5326 = vmatpush1.bf16.msra.mxu0 %v5279
        %5327 = vmatprep.subr.bf16.mxu0 0
        %5328 = vmatpush2.bf16.msra.mxu0 0
        %5329 = vmatprep.subr.bf16.mxu0 0
        %5330 = vmatpush2.bf16.msra.mxu0 0
        %5331 = vmatprep.subr.bf16.mxu0 0
        %5332 = vmatpush2.bf16.msra.mxu0 0
        %5333 = vmatprep.subr.bf16.mxu0 0
        %5334 = vmatpush2.bf16.msra.mxu0 0
        %5335 = vmatprep.subr.bf16.mxu0 0
        %5336 = vmatpush2.bf16.msra.mxu0 0
        %5337 = vmatprep.subr.bf16.mxu0 0
        %5338 = vmatpush2.bf16.msra.mxu0 0
        %5339 = vmatprep.subr.bf16.mxu0 0
        %5340 = vmatpush2.bf16.msra.mxu0 0
        %5341 = vmatprep.subr.bf16.mxu0 0
        %5342 = vmatpush2.bf16.msra.mxu0 0
        %5343 = vmatprep.mubr.bf16.mxu0 0
        %5344 = vmatmul.mubr.bf16.gmra.mxu0 %v5288
        %v5345 = vpop.f32.mrf.mxu0
        %v5346 = vadd.f32 0.0, %v5345
        %v5347 = vpop.f32.mrf.mxu0
        %v5348 = vpop.f32.mrf.mxu0
        %v5349 = vadd.f32 0.0, %v5348
        %v5350 = vpop.f32.mrf.mxu0
        %5351 = vmatprep.mubr.bf16.mxu0 0
        %5352 = vmatmul.mubr.bf16.gmra.mxu0 %v5291
        %v5353 = vpop.f32.mrf.mxu0
        %v5354 = vadd.f32 0.0, %v5353
        %v5355 = vpop.f32.mrf.mxu0
        %v5356 = vpop.f32.mrf.mxu0
        %v5357 = vadd.f32 0.0, %v5356
        %v5358 = vpop.f32.mrf.mxu0
        %5359 = vmatprep.mubr.bf16.mxu0 0
        %5360 = vmatmul.mubr.bf16.gmra.mxu0 %v5294
        %v5361 = vpop.f32.mrf.mxu0
        %v5362 = vadd.f32 0.0, %v5361
        %v5363 = vpop.f32.mrf.mxu0
        %v5364 = vpop.f32.mrf.mxu0
        %v5365 = vadd.f32 0.0, %v5364
        %v5366 = vpop.f32.mrf.mxu0
        %5367 = vmatprep.mubr.bf16.mxu0 0
        %5368 = vmatmul.mubr.bf16.gmra.mxu0 %v5297
        %v5369 = vpop.f32.mrf.mxu0
        %v5370 = vadd.f32 0.0, %v5369
        %v5371 = vpop.f32.mrf.mxu0
        %v5372 = vpop.f32.mrf.mxu0
        %v5373 = vadd.f32 0.0, %v5372
        %v5374 = vpop.f32.mrf.mxu0
        %5375 = vmatprep.mubr.bf16.mxu0 0
        %5376 = vmatmul.mubr.bf16.gmra.mxu0 %v5300
        %v5377 = vpop.f32.mrf.mxu0
        %v5378 = vadd.f32 0.0, %v5377
        %v5379 = vpop.f32.mrf.mxu0
        %v5380 = vpop.f32.mrf.mxu0
        %v5381 = vadd.f32 0.0, %v5380
        %v5382 = vpop.f32.mrf.mxu0
        %5383 = vmatprep.mubr.bf16.mxu0 0
        %5384 = vmatmul.mubr.bf16.gmra.mxu0 %v5303
        %v5385 = vpop.f32.mrf.mxu0
        %v5386 = vadd.f32 0.0, %v5385
        %v5387 = vpop.f32.mrf.mxu0
        %v5388 = vpop.f32.mrf.mxu0
        %v5389 = vadd.f32 0.0, %v5388
        %v5390 = vpop.f32.mrf.mxu0
        %5391 = vmatprep.mubr.bf16.mxu0 0
        %5392 = vmatmul.mubr.bf16.gmra.mxu0 %v5306
        %v5393 = vpop.f32.mrf.mxu0
        %v5394 = vadd.f32 0.0, %v5393
        %v5395 = vpop.f32.mrf.mxu0
        %v5396 = vpop.f32.mrf.mxu0
        %v5397 = vadd.f32 0.0, %v5396
        %v5398 = vpop.f32.mrf.mxu0
        %5399 = vmatprep.mubr.bf16.mxu0 0
        %5400 = vmatmul.mubr.bf16.gmra.mxu0 %v5309
        %v5401 = vpop.f32.mrf.mxu0
        %v5402 = vadd.f32 0.0, %v5401
        %v5403 = vpop.f32.mrf.mxu0
        %v5404 = vpop.f32.mrf.mxu0
        %v5405 = vadd.f32 0.0, %v5404
        %v5406 = vpop.f32.mrf.mxu0
        %5407 = vdwg.mxu0
        %v5408 = vadd.f32 %v5021, %v5346
        %v5409 = vadd.f32 %v5022, %v5349
        %v5410 = vadd.f32 %v5023, %v5354
        %v5411 = vadd.f32 %v5024, %v5357
        %v5412 = vadd.f32 %v5025, %v5362
        %v5413 = vadd.f32 %v5026, %v5365
        %v5414 = vadd.f32 %v5027, %v5370
        %v5415 = vadd.f32 %v5028, %v5373
        %v5416 = vadd.f32 %v5029, %v5378
        %v5417 = vadd.f32 %v5030, %v5381
        %v5418 = vadd.f32 %v5031, %v5386
        %v5419 = vadd.f32 %v5032, %v5389
        %v5420 = vadd.f32 %v5033, %v5394
        %v5421 = vadd.f32 %v5034, %v5397
        %v5422 = vadd.f32 %v5035, %v5402
        %v5423 = vadd.f32 %v5036, %v5405
        %v5424 = vld [vmem:[%s0 + $0x340] sm:$0xf]
        %v5425 = vld [vmem:[%s0 + $0x344] sm:$0xf]
        %v5426 = vld [vmem:[%s0 + $0x348] sm:$0xf]
        %v5427 = vld [vmem:[%s0 + $0x34c] sm:$0xf]
        %v5428 = vld [vmem:[%s0 + $0x350] sm:$0xf]
        %v5429 = vld [vmem:[%s0 + $0x354] sm:$0xf]
        %v5430 = vld [vmem:[%s0 + $0x358] sm:$0xf]
        %v5431 = vld [vmem:[%s0 + $0x35c] sm:$0xf]
        %v5432 = vld [vmem:[%s0 + $0x360] sm:$0xf]
        %v5433 = vld [vmem:[%s0 + $0x364] sm:$0xf]
        %v5434 = vld [vmem:[%s0 + $0x368] sm:$0xf]
        %v5435 = vld [vmem:[%s0 + $0x36c] sm:$0xf]
        %v5436 = vld [vmem:[%s0 + $0x370] sm:$0xf]
        %v5437 = vld [vmem:[%s0 + $0x374] sm:$0xf]
        %v5438 = vld [vmem:[%s0 + $0x378] sm:$0xf]
        %v5439 = vld [vmem:[%s0 + $0x37c] sm:$0xf]
        %v5456 = vunpack.c.l.b16 %v5424
        %v5457 = vunpack.c.l.b16 %v5425
        %v5458 = vunpack.c.l.b16 %v5426
        %v5459 = vunpack.c.l.b16 %v5427
        %v5460 = vunpack.c.l.b16 %v5428
        %v5461 = vunpack.c.l.b16 %v5429
        %v5462 = vunpack.c.l.b16 %v5430
        %v5463 = vunpack.c.l.b16 %v5431
        %v5464 = vunpack.c.l.b16 %v5432
        %v5465 = vunpack.c.l.b16 %v5433
        %v5466 = vunpack.c.l.b16 %v5434
        %v5467 = vunpack.c.l.b16 %v5435
        %v5468 = vunpack.c.l.b16 %v5436
        %v5469 = vunpack.c.l.b16 %v5437
        %v5470 = vunpack.c.l.b16 %v5438
        %v5471 = vunpack.c.l.b16 %v5439
        %v5472 = vpack.c.b16 %v5457, %v5456
        %v5473 = vpack.c.b16 %v5459, %v5458
        %v5474 = vpack.c.b16 %v5461, %v5460
        %v5475 = vpack.c.b16 %v5463, %v5462
        %v5476 = vpack.c.b16 %v5465, %v5464
        %v5477 = vpack.c.b16 %v5467, %v5466
        %v5478 = vpack.c.b16 %v5469, %v5468
        %v5479 = vpack.c.b16 %v5471, %v5470
        %v5481 = vsel %vm474, %v5472, 0
        %v5484 = vsel %vm474, %v5473, 0
        %v5487 = vsel %vm474, %v5474, 0
        %v5490 = vsel %vm474, %v5475, 0
        %v5493 = vsel %vm474, %v5476, 0
        %v5496 = vsel %vm474, %v5477, 0
        %v5499 = vsel %vm474, %v5478, 0
        %v5502 = vsel %vm474, %v5479, 0
        %5504 = vmatprep.subr.bf16.mxu0 0
        %5505 = vmatpush1.bf16.msra.mxu0 0
        %5506 = vmatprep.subr.bf16.mxu0 0
        %5507 = vmatpush1.bf16.msra.mxu0 0
        %5508 = vmatprep.subr.bf16.mxu0 0
        %5509 = vmatpush1.bf16.msra.mxu0 0
        %5510 = vmatprep.subr.bf16.mxu0 0
        %5511 = vmatpush1.bf16.msra.mxu0 0
        %5512 = vmatprep.subr.bf16.mxu0 0
        %5513 = vmatpush1.bf16.msra.mxu0 0
        %5514 = vmatprep.subr.bf16.mxu0 0
        %5515 = vmatpush1.bf16.msra.mxu0 0
        %5516 = vmatprep.subr.bf16.mxu0 0
        %5517 = vmatpush1.bf16.msra.mxu0 %v503
        %5518 = vmatprep.subr.bf16.mxu0 0
        %5519 = vmatpush1.bf16.msra.mxu0 %v471
        %5520 = vmatprep.subr.bf16.mxu0 0
        %5521 = vmatpush2.bf16.msra.mxu0 0
        %5522 = vmatprep.subr.bf16.mxu0 0
        %5523 = vmatpush2.bf16.msra.mxu0 0
        %5524 = vmatprep.subr.bf16.mxu0 0
        %5525 = vmatpush2.bf16.msra.mxu0 0
        %5526 = vmatprep.subr.bf16.mxu0 0
        %5527 = vmatpush2.bf16.msra.mxu0 0
        %5528 = vmatprep.subr.bf16.mxu0 0
        %5529 = vmatpush2.bf16.msra.mxu0 0
        %5530 = vmatprep.subr.bf16.mxu0 0
        %5531 = vmatpush2.bf16.msra.mxu0 0
        %5532 = vmatprep.subr.bf16.mxu0 0
        %5533 = vmatpush2.bf16.msra.mxu0 0
        %5534 = vmatprep.subr.bf16.mxu0 0
        %5535 = vmatpush2.bf16.msra.mxu0 0
        %5536 = vmatprep.mubr.bf16.mxu0 0
        %5537 = vmatmul.mubr.bf16.gmra.mxu0 %v5481
        %v5538 = vpop.f32.mrf.mxu0
        %v5539 = vadd.f32 0.0, %v5538
        %v5540 = vpop.f32.mrf.mxu0
        %v5541 = vpop.f32.mrf.mxu0
        %v5542 = vadd.f32 0.0, %v5541
        %v5543 = vpop.f32.mrf.mxu0
        %5544 = vmatprep.mubr.bf16.mxu0 0
        %5545 = vmatmul.mubr.bf16.gmra.mxu0 %v5484
        %v5546 = vpop.f32.mrf.mxu0
        %v5547 = vadd.f32 0.0, %v5546
        %v5548 = vpop.f32.mrf.mxu0
        %v5549 = vpop.f32.mrf.mxu0
        %v5550 = vadd.f32 0.0, %v5549
        %v5551 = vpop.f32.mrf.mxu0
        %5552 = vmatprep.mubr.bf16.mxu0 0
        %5553 = vmatmul.mubr.bf16.gmra.mxu0 %v5487
        %v5554 = vpop.f32.mrf.mxu0
        %v5555 = vadd.f32 0.0, %v5554
        %v5556 = vpop.f32.mrf.mxu0
        %v5557 = vpop.f32.mrf.mxu0
        %v5558 = vadd.f32 0.0, %v5557
        %v5559 = vpop.f32.mrf.mxu0
        %5560 = vmatprep.mubr.bf16.mxu0 0
        %5561 = vmatmul.mubr.bf16.gmra.mxu0 %v5490
        %v5562 = vpop.f32.mrf.mxu0
        %v5563 = vadd.f32 0.0, %v5562
        %v5564 = vpop.f32.mrf.mxu0
        %v5565 = vpop.f32.mrf.mxu0
        %v5566 = vadd.f32 0.0, %v5565
        %v5567 = vpop.f32.mrf.mxu0
        %5568 = vmatprep.mubr.bf16.mxu0 0
        %5569 = vmatmul.mubr.bf16.gmra.mxu0 %v5493
        %v5570 = vpop.f32.mrf.mxu0
        %v5571 = vadd.f32 0.0, %v5570
        %v5572 = vpop.f32.mrf.mxu0
        %v5573 = vpop.f32.mrf.mxu0
        %v5574 = vadd.f32 0.0, %v5573
        %v5575 = vpop.f32.mrf.mxu0
        %5576 = vmatprep.mubr.bf16.mxu0 0
        %5577 = vmatmul.mubr.bf16.gmra.mxu0 %v5496
        %v5578 = vpop.f32.mrf.mxu0
        %v5579 = vadd.f32 0.0, %v5578
        %v5580 = vpop.f32.mrf.mxu0
        %v5581 = vpop.f32.mrf.mxu0
        %v5582 = vadd.f32 0.0, %v5581
        %v5583 = vpop.f32.mrf.mxu0
        %5584 = vmatprep.mubr.bf16.mxu0 0
        %5585 = vmatmul.mubr.bf16.gmra.mxu0 %v5499
        %v5586 = vpop.f32.mrf.mxu0
        %v5587 = vadd.f32 0.0, %v5586
        %v5588 = vpop.f32.mrf.mxu0
        %v5589 = vpop.f32.mrf.mxu0
        %v5590 = vadd.f32 0.0, %v5589
        %v5591 = vpop.f32.mrf.mxu0
        %5592 = vmatprep.mubr.bf16.mxu0 0
        %5593 = vmatmul.mubr.bf16.gmra.mxu0 %v5502
        %v5594 = vpop.f32.mrf.mxu0
        %v5595 = vadd.f32 0.0, %v5594
        %v5596 = vpop.f32.mrf.mxu0
        %v5597 = vpop.f32.mrf.mxu0
        %v5598 = vadd.f32 0.0, %v5597
        %v5599 = vpop.f32.mrf.mxu0
        %5600 = vdwg.mxu0
        %v5601 = vmul.f32 %v5539, 0.2
        %v5602 = vmul.f32 %v5542, 0.2
        %v5603 = vmul.f32 %v5547, 0.2
        %v5604 = vmul.f32 %v5550, 0.2
        %v5605 = vmul.f32 %v5555, 0.2
        %v5606 = vmul.f32 %v5558, 0.2
        %v5607 = vmul.f32 %v5563, 0.2
        %v5608 = vmul.f32 %v5566, 0.2
        %v5609 = vmul.f32 %v5571, 0.2
        %v5610 = vmul.f32 %v5574, 0.2
        %v5611 = vmul.f32 %v5579, 0.2
        %v5612 = vmul.f32 %v5582, 0.2
        %v5613 = vmul.f32 %v5587, 0.2
        %v5614 = vmul.f32 %v5590, 0.2
        %v5615 = vmul.f32 %v5595, 0.2
        %v5616 = vmul.f32 %v5598, 0.2
        %v5617 = vmax.f32 %v5539, %v5601
        %v5618 = vmax.f32 %v5542, %v5602
        %v5619 = vmax.f32 %v5547, %v5603
        %v5620 = vmax.f32 %v5550, %v5604
        %v5621 = vmax.f32 %v5555, %v5605
        %v5622 = vmax.f32 %v5558, %v5606
        %v5623 = vmax.f32 %v5563, %v5607
        %v5624 = vmax.f32 %v5566, %v5608
        %v5625 = vmax.f32 %v5571, %v5609
        %v5626 = vmax.f32 %v5574, %v5610
        %v5627 = vmax.f32 %v5579, %v5611
        %v5628 = vmax.f32 %v5582, %v5612
        %v5629 = vmax.f32 %v5587, %v5613
        %v5630 = vmax.f32 %v5590, %v5614
        %v5631 = vmax.f32 %v5595, %v5615
        %v5632 = vmax.f32 %v5598, %v5616
        %v5633 = vpack.c.bf16 %v5618, %v5617
        %v5634 = vpack.c.bf16 %v5620, %v5619
        %v5635 = vpack.c.bf16 %v5622, %v5621
        %v5636 = vpack.c.bf16 %v5624, %v5623
        %v5637 = vpack.c.bf16 %v5626, %v5625
        %v5638 = vpack.c.bf16 %v5628, %v5627
        %v5639 = vpack.c.bf16 %v5630, %v5629
        %v5640 = vpack.c.bf16 %v5632, %v5631
        %s5641 = scalar_lea.vmem %s2, 416
        %v5642 = vld [vmem:[%s5641] sm:$0xf]
        %v5643 = vld [vmem:[%s5641 + $0x4] sm:$0xf]
        %v5644 = vld [vmem:[%s5641 + $0x8] sm:$0xf]
        %v5645 = vld [vmem:[%s5641 + $0xc] sm:$0xf]
        %v5646 = vld [vmem:[%s5641 + $0x10] sm:$0xf]
        %v5647 = vld [vmem:[%s5641 + $0x14] sm:$0xf]
        %v5648 = vld [vmem:[%s5641 + $0x18] sm:$0xf]
        %v5649 = vld [vmem:[%s5641 + $0x1c] sm:$0xf]
        %v5658 = vunpack.c.l.b16 %v5642
        %v5659 = vunpack.c.l.b16 %v5643
        %v5660 = vunpack.c.l.b16 %v5644
        %v5661 = vunpack.c.l.b16 %v5645
        %v5662 = vunpack.c.l.b16 %v5646
        %v5663 = vunpack.c.l.b16 %v5647
        %v5664 = vunpack.c.l.b16 %v5648
        %v5665 = vunpack.c.l.b16 %v5649
        %v5666 = vpack.c.b16 %v5659, %v5658
        %v5667 = vpack.c.b16 %v5661, %v5660
        %v5668 = vpack.c.b16 %v5663, %v5662
        %v5669 = vpack.c.b16 %v5665, %v5664
        %v5675 = vsel %vm900, %v5633, 0
        %v5678 = vsel %vm900, %v5634, 0
        %v5681 = vsel %vm900, %v5635, 0
        %v5684 = vsel %vm900, %v5636, 0
        %v5687 = vsel %vm900, %v5637, 0
        %v5690 = vsel %vm900, %v5638, 0
        %v5693 = vsel %vm900, %v5639, 0
        %v5696 = vsel %vm900, %v5640, 0
        %5698 = vmatprep.subr.bf16.mxu0 0
        %5699 = vmatpush1.bf16.msra.mxu0 0
        %5700 = vmatprep.subr.bf16.mxu0 0
        %5701 = vmatpush1.bf16.msra.mxu0 0
        %5702 = vmatprep.subr.bf16.mxu0 0
        %5703 = vmatpush1.bf16.msra.mxu0 0
        %5704 = vmatprep.subr.bf16.mxu0 0
        %5705 = vmatpush1.bf16.msra.mxu0 0
        %5706 = vmatprep.subr.bf16.mxu0 0
        %5707 = vmatpush1.bf16.msra.mxu0 %v5669
        %5708 = vmatprep.subr.bf16.mxu0 0
        %5709 = vmatpush1.bf16.msra.mxu0 %v5668
        %5710 = vmatprep.subr.bf16.mxu0 0
        %5711 = vmatpush1.bf16.msra.mxu0 %v5667
        %5712 = vmatprep.subr.bf16.mxu0 0
        %5713 = vmatpush1.bf16.msra.mxu0 %v5666
        %5714 = vmatprep.subr.bf16.mxu0 0
        %5715 = vmatpush2.bf16.msra.mxu0 0
        %5716 = vmatprep.subr.bf16.mxu0 0
        %5717 = vmatpush2.bf16.msra.mxu0 0
        %5718 = vmatprep.subr.bf16.mxu0 0
        %5719 = vmatpush2.bf16.msra.mxu0 0
        %5720 = vmatprep.subr.bf16.mxu0 0
        %5721 = vmatpush2.bf16.msra.mxu0 0
        %5722 = vmatprep.subr.bf16.mxu0 0
        %5723 = vmatpush2.bf16.msra.mxu0 0
        %5724 = vmatprep.subr.bf16.mxu0 0
        %5725 = vmatpush2.bf16.msra.mxu0 0
        %5726 = vmatprep.subr.bf16.mxu0 0
        %5727 = vmatpush2.bf16.msra.mxu0 0
        %5728 = vmatprep.subr.bf16.mxu0 0
        %5729 = vmatpush2.bf16.msra.mxu0 0
        %5730 = vmatprep.mubr.bf16.mxu0 0
        %5731 = vmatmul.mubr.bf16.gmra.mxu0 %v5675
        %v5732 = vpop.f32.mrf.mxu0
        %v5733 = vadd.f32 0.0, %v5732
        %v5734 = vpop.f32.mrf.mxu0
        %v5735 = vpop.f32.mrf.mxu0
        %v5736 = vadd.f32 0.0, %v5735
        %v5737 = vpop.f32.mrf.mxu0
        %5738 = vmatprep.mubr.bf16.mxu0 0
        %5739 = vmatmul.mubr.bf16.gmra.mxu0 %v5678
        %v5740 = vpop.f32.mrf.mxu0
        %v5741 = vadd.f32 0.0, %v5740
        %v5742 = vpop.f32.mrf.mxu0
        %v5743 = vpop.f32.mrf.mxu0
        %v5744 = vadd.f32 0.0, %v5743
        %v5745 = vpop.f32.mrf.mxu0
        %5746 = vmatprep.mubr.bf16.mxu0 0
        %5747 = vmatmul.mubr.bf16.gmra.mxu0 %v5681
        %v5748 = vpop.f32.mrf.mxu0
        %v5749 = vadd.f32 0.0, %v5748
        %v5750 = vpop.f32.mrf.mxu0
        %v5751 = vpop.f32.mrf.mxu0
        %v5752 = vadd.f32 0.0, %v5751
        %v5753 = vpop.f32.mrf.mxu0
        %5754 = vmatprep.mubr.bf16.mxu0 0
        %5755 = vmatmul.mubr.bf16.gmra.mxu0 %v5684
        %v5756 = vpop.f32.mrf.mxu0
        %v5757 = vadd.f32 0.0, %v5756
        %v5758 = vpop.f32.mrf.mxu0
        %v5759 = vpop.f32.mrf.mxu0
        %v5760 = vadd.f32 0.0, %v5759
        %v5761 = vpop.f32.mrf.mxu0
        %5762 = vmatprep.mubr.bf16.mxu0 0
        %5763 = vmatmul.mubr.bf16.gmra.mxu0 %v5687
        %v5764 = vpop.f32.mrf.mxu0
        %v5765 = vadd.f32 0.0, %v5764
        %v5766 = vpop.f32.mrf.mxu0
        %v5767 = vpop.f32.mrf.mxu0
        %v5768 = vadd.f32 0.0, %v5767
        %v5769 = vpop.f32.mrf.mxu0
        %5770 = vmatprep.mubr.bf16.mxu0 0
        %5771 = vmatmul.mubr.bf16.gmra.mxu0 %v5690
        %v5772 = vpop.f32.mrf.mxu0
        %v5773 = vadd.f32 0.0, %v5772
        %v5774 = vpop.f32.mrf.mxu0
        %v5775 = vpop.f32.mrf.mxu0
        %v5776 = vadd.f32 0.0, %v5775
        %v5777 = vpop.f32.mrf.mxu0
        %5778 = vmatprep.mubr.bf16.mxu0 0
        %5779 = vmatmul.mubr.bf16.gmra.mxu0 %v5693
        %v5780 = vpop.f32.mrf.mxu0
        %v5781 = vadd.f32 0.0, %v5780
        %v5782 = vpop.f32.mrf.mxu0
        %v5783 = vpop.f32.mrf.mxu0
        %v5784 = vadd.f32 0.0, %v5783
        %v5785 = vpop.f32.mrf.mxu0
        %5786 = vmatprep.mubr.bf16.mxu0 0
        %5787 = vmatmul.mubr.bf16.gmra.mxu0 %v5696
        %v5788 = vpop.f32.mrf.mxu0
        %v5789 = vadd.f32 0.0, %v5788
        %v5790 = vpop.f32.mrf.mxu0
        %v5791 = vpop.f32.mrf.mxu0
        %v5792 = vadd.f32 0.0, %v5791
        %v5793 = vpop.f32.mrf.mxu0
        %5794 = vdwg.mxu0
        %v5795 = vadd.f32 %v5408, %v5733
        %v5796 = vadd.f32 %v5409, %v5736
        %v5797 = vadd.f32 %v5410, %v5741
        %v5798 = vadd.f32 %v5411, %v5744
        %v5799 = vadd.f32 %v5412, %v5749
        %v5800 = vadd.f32 %v5413, %v5752
        %v5801 = vadd.f32 %v5414, %v5757
        %v5802 = vadd.f32 %v5415, %v5760
        %v5803 = vadd.f32 %v5416, %v5765
        %v5804 = vadd.f32 %v5417, %v5768
        %v5805 = vadd.f32 %v5418, %v5773
        %v5806 = vadd.f32 %v5419, %v5776
        %v5807 = vadd.f32 %v5420, %v5781
        %v5808 = vadd.f32 %v5421, %v5784
        %v5809 = vadd.f32 %v5422, %v5789
        %v5810 = vadd.f32 %v5423, %v5792
        %v5811 = vld [vmem:[%s0 + $0x380] sm:$0xf]
        %v5812 = vld [vmem:[%s0 + $0x384] sm:$0xf]
        %v5813 = vld [vmem:[%s0 + $0x388] sm:$0xf]
        %v5814 = vld [vmem:[%s0 + $0x38c] sm:$0xf]
        %v5815 = vld [vmem:[%s0 + $0x390] sm:$0xf]
        %v5816 = vld [vmem:[%s0 + $0x394] sm:$0xf]
        %v5817 = vld [vmem:[%s0 + $0x398] sm:$0xf]
        %v5818 = vld [vmem:[%s0 + $0x39c] sm:$0xf]
        %v5819 = vld [vmem:[%s0 + $0x3a0] sm:$0xf]
        %v5820 = vld [vmem:[%s0 + $0x3a4] sm:$0xf]
        %v5821 = vld [vmem:[%s0 + $0x3a8] sm:$0xf]
        %v5822 = vld [vmem:[%s0 + $0x3ac] sm:$0xf]
        %v5823 = vld [vmem:[%s0 + $0x3b0] sm:$0xf]
        %v5824 = vld [vmem:[%s0 + $0x3b4] sm:$0xf]
        %v5825 = vld [vmem:[%s0 + $0x3b8] sm:$0xf]
        %v5826 = vld [vmem:[%s0 + $0x3bc] sm:$0xf]
        %v5843 = vunpack.c.l.b16 %v5811
        %v5844 = vunpack.c.l.b16 %v5812
        %v5845 = vunpack.c.l.b16 %v5813
        %v5846 = vunpack.c.l.b16 %v5814
        %v5847 = vunpack.c.l.b16 %v5815
        %v5848 = vunpack.c.l.b16 %v5816
        %v5849 = vunpack.c.l.b16 %v5817
        %v5850 = vunpack.c.l.b16 %v5818
        %v5851 = vunpack.c.l.b16 %v5819
        %v5852 = vunpack.c.l.b16 %v5820
        %v5853 = vunpack.c.l.b16 %v5821
        %v5854 = vunpack.c.l.b16 %v5822
        %v5855 = vunpack.c.l.b16 %v5823
        %v5856 = vunpack.c.l.b16 %v5824
        %v5857 = vunpack.c.l.b16 %v5825
        %v5858 = vunpack.c.l.b16 %v5826
        %v5859 = vpack.c.b16 %v5844, %v5843
        %v5860 = vpack.c.b16 %v5846, %v5845
        %v5861 = vpack.c.b16 %v5848, %v5847
        %v5862 = vpack.c.b16 %v5850, %v5849
        %v5863 = vpack.c.b16 %v5852, %v5851
        %v5864 = vpack.c.b16 %v5854, %v5853
        %v5865 = vpack.c.b16 %v5856, %v5855
        %v5866 = vpack.c.b16 %v5858, %v5857
        %v5868 = vsel %vm474, %v5859, 0
        %v5871 = vsel %vm474, %v5860, 0
        %v5874 = vsel %vm474, %v5861, 0
        %v5877 = vsel %vm474, %v5862, 0
        %v5880 = vsel %vm474, %v5863, 0
        %v5883 = vsel %vm474, %v5864, 0
        %v5886 = vsel %vm474, %v5865, 0
        %v5889 = vsel %vm474, %v5866, 0
        %5891 = vmatprep.subr.bf16.mxu0 0
        %5892 = vmatpush1.bf16.msra.mxu0 0
        %5893 = vmatprep.subr.bf16.mxu0 0
        %5894 = vmatpush1.bf16.msra.mxu0 0
        %5895 = vmatprep.subr.bf16.mxu0 0
        %5896 = vmatpush1.bf16.msra.mxu0 0
        %5897 = vmatprep.subr.bf16.mxu0 0
        %5898 = vmatpush1.bf16.msra.mxu0 0
        %5899 = vmatprep.subr.bf16.mxu0 0
        %5900 = vmatpush1.bf16.msra.mxu0 0
        %5901 = vmatprep.subr.bf16.mxu0 0
        %5902 = vmatpush1.bf16.msra.mxu0 0
        %5903 = vmatprep.subr.bf16.mxu0 0
        %5904 = vmatpush1.bf16.msra.mxu0 %v503
        %5905 = vmatprep.subr.bf16.mxu0 0
        %5906 = vmatpush1.bf16.msra.mxu0 %v471
        %5907 = vmatprep.subr.bf16.mxu0 0
        %5908 = vmatpush2.bf16.msra.mxu0 0
        %5909 = vmatprep.subr.bf16.mxu0 0
        %5910 = vmatpush2.bf16.msra.mxu0 0
        %5911 = vmatprep.subr.bf16.mxu0 0
        %5912 = vmatpush2.bf16.msra.mxu0 0
        %5913 = vmatprep.subr.bf16.mxu0 0
        %5914 = vmatpush2.bf16.msra.mxu0 0
        %5915 = vmatprep.subr.bf16.mxu0 0
        %5916 = vmatpush2.bf16.msra.mxu0 0
        %5917 = vmatprep.subr.bf16.mxu0 0
        %5918 = vmatpush2.bf16.msra.mxu0 0
        %5919 = vmatprep.subr.bf16.mxu0 0
        %5920 = vmatpush2.bf16.msra.mxu0 0
        %5921 = vmatprep.subr.bf16.mxu0 0
        %5922 = vmatpush2.bf16.msra.mxu0 0
        %5923 = vmatprep.mubr.bf16.mxu0 0
        %5924 = vmatmul.mubr.bf16.gmra.mxu0 %v5868
        %v5925 = vpop.f32.mrf.mxu0
        %v5926 = vadd.f32 0.0, %v5925
        %v5927 = vpop.f32.mrf.mxu0
        %v5928 = vpop.f32.mrf.mxu0
        %v5929 = vadd.f32 0.0, %v5928
        %v5930 = vpop.f32.mrf.mxu0
        %5931 = vmatprep.mubr.bf16.mxu0 0
        %5932 = vmatmul.mubr.bf16.gmra.mxu0 %v5871
        %v5933 = vpop.f32.mrf.mxu0
        %v5934 = vadd.f32 0.0, %v5933
        %v5935 = vpop.f32.mrf.mxu0
        %v5936 = vpop.f32.mrf.mxu0
        %v5937 = vadd.f32 0.0, %v5936
        %v5938 = vpop.f32.mrf.mxu0
        %5939 = vmatprep.mubr.bf16.mxu0 0
        %5940 = vmatmul.mubr.bf16.gmra.mxu0 %v5874
        %v5941 = vpop.f32.mrf.mxu0
        %v5942 = vadd.f32 0.0, %v5941
        %v5943 = vpop.f32.mrf.mxu0
        %v5944 = vpop.f32.mrf.mxu0
        %v5945 = vadd.f32 0.0, %v5944
        %v5946 = vpop.f32.mrf.mxu0
        %5947 = vmatprep.mubr.bf16.mxu0 0
        %5948 = vmatmul.mubr.bf16.gmra.mxu0 %v5877
        %v5949 = vpop.f32.mrf.mxu0
        %v5950 = vadd.f32 0.0, %v5949
        %v5951 = vpop.f32.mrf.mxu0
        %v5952 = vpop.f32.mrf.mxu0
        %v5953 = vadd.f32 0.0, %v5952
        %v5954 = vpop.f32.mrf.mxu0
        %5955 = vmatprep.mubr.bf16.mxu0 0
        %5956 = vmatmul.mubr.bf16.gmra.mxu0 %v5880
        %v5957 = vpop.f32.mrf.mxu0
        %v5958 = vadd.f32 0.0, %v5957
        %v5959 = vpop.f32.mrf.mxu0
        %v5960 = vpop.f32.mrf.mxu0
        %v5961 = vadd.f32 0.0, %v5960
        %v5962 = vpop.f32.mrf.mxu0
        %5963 = vmatprep.mubr.bf16.mxu0 0
        %5964 = vmatmul.mubr.bf16.gmra.mxu0 %v5883
        %v5965 = vpop.f32.mrf.mxu0
        %v5966 = vadd.f32 0.0, %v5965
        %v5967 = vpop.f32.mrf.mxu0
        %v5968 = vpop.f32.mrf.mxu0
        %v5969 = vadd.f32 0.0, %v5968
        %v5970 = vpop.f32.mrf.mxu0
        %5971 = vmatprep.mubr.bf16.mxu0 0
        %5972 = vmatmul.mubr.bf16.gmra.mxu0 %v5886
        %v5973 = vpop.f32.mrf.mxu0
        %v5974 = vadd.f32 0.0, %v5973
        %v5975 = vpop.f32.mrf.mxu0
        %v5976 = vpop.f32.mrf.mxu0
        %v5977 = vadd.f32 0.0, %v5976
        %v5978 = vpop.f32.mrf.mxu0
        %5979 = vmatprep.mubr.bf16.mxu0 0
        %5980 = vmatmul.mubr.bf16.gmra.mxu0 %v5889
        %v5981 = vpop.f32.mrf.mxu0
        %v5982 = vadd.f32 0.0, %v5981
        %v5983 = vpop.f32.mrf.mxu0
        %v5984 = vpop.f32.mrf.mxu0
        %v5985 = vadd.f32 0.0, %v5984
        %v5986 = vpop.f32.mrf.mxu0
        %5987 = vdwg.mxu0
        %v5988 = vmul.f32 %v5926, 0.2
        %v5989 = vmul.f32 %v5929, 0.2
        %v5990 = vmul.f32 %v5934, 0.2
        %v5991 = vmul.f32 %v5937, 0.2
        %v5992 = vmul.f32 %v5942, 0.2
        %v5993 = vmul.f32 %v5945, 0.2
        %v5994 = vmul.f32 %v5950, 0.2
        %v5995 = vmul.f32 %v5953, 0.2
        %v5996 = vmul.f32 %v5958, 0.2
        %v5997 = vmul.f32 %v5961, 0.2
        %v5998 = vmul.f32 %v5966, 0.2
        %v5999 = vmul.f32 %v5969, 0.2
        %v6000 = vmul.f32 %v5974, 0.2
        %v6001 = vmul.f32 %v5977, 0.2
        %v6002 = vmul.f32 %v5982, 0.2
        %v6003 = vmul.f32 %v5985, 0.2
        %v6004 = vmax.f32 %v5926, %v5988
        %v6005 = vmax.f32 %v5929, %v5989
        %v6006 = vmax.f32 %v5934, %v5990
        %v6007 = vmax.f32 %v5937, %v5991
        %v6008 = vmax.f32 %v5942, %v5992
        %v6009 = vmax.f32 %v5945, %v5993
        %v6010 = vmax.f32 %v5950, %v5994
        %v6011 = vmax.f32 %v5953, %v5995
        %v6012 = vmax.f32 %v5958, %v5996
        %v6013 = vmax.f32 %v5961, %v5997
        %v6014 = vmax.f32 %v5966, %v5998
        %v6015 = vmax.f32 %v5969, %v5999
        %v6016 = vmax.f32 %v5974, %v6000
        %v6017 = vmax.f32 %v5977, %v6001
        %v6018 = vmax.f32 %v5982, %v6002
        %v6019 = vmax.f32 %v5985, %v6003
        %v6020 = vpack.c.bf16 %v6005, %v6004
        %v6021 = vpack.c.bf16 %v6007, %v6006
        %v6022 = vpack.c.bf16 %v6009, %v6008
        %v6023 = vpack.c.bf16 %v6011, %v6010
        %v6024 = vpack.c.bf16 %v6013, %v6012
        %v6025 = vpack.c.bf16 %v6015, %v6014
        %v6026 = vpack.c.bf16 %v6017, %v6016
        %v6027 = vpack.c.bf16 %v6019, %v6018
        %s6028 = scalar_lea.vmem %s2, 448
        %v6029 = vld [vmem:[%s6028] sm:$0xf]
        %v6030 = vld [vmem:[%s6028 + $0x4] sm:$0xf]
        %v6031 = vld [vmem:[%s6028 + $0x8] sm:$0xf]
        %v6032 = vld [vmem:[%s6028 + $0xc] sm:$0xf]
        %v6033 = vld [vmem:[%s6028 + $0x10] sm:$0xf]
        %v6034 = vld [vmem:[%s6028 + $0x14] sm:$0xf]
        %v6035 = vld [vmem:[%s6028 + $0x18] sm:$0xf]
        %v6036 = vld [vmem:[%s6028 + $0x1c] sm:$0xf]
        %v6045 = vunpack.c.l.b16 %v6029
        %v6046 = vunpack.c.l.b16 %v6030
        %v6047 = vunpack.c.l.b16 %v6031
        %v6048 = vunpack.c.l.b16 %v6032
        %v6049 = vunpack.c.l.b16 %v6033
        %v6050 = vunpack.c.l.b16 %v6034
        %v6051 = vunpack.c.l.b16 %v6035
        %v6052 = vunpack.c.l.b16 %v6036
        %v6053 = vpack.c.b16 %v6046, %v6045
        %v6054 = vpack.c.b16 %v6048, %v6047
        %v6055 = vpack.c.b16 %v6050, %v6049
        %v6056 = vpack.c.b16 %v6052, %v6051
        %v6062 = vsel %vm900, %v6020, 0
        %v6065 = vsel %vm900, %v6021, 0
        %v6068 = vsel %vm900, %v6022, 0
        %v6071 = vsel %vm900, %v6023, 0
        %v6074 = vsel %vm900, %v6024, 0
        %v6077 = vsel %vm900, %v6025, 0
        %v6080 = vsel %vm900, %v6026, 0
        %v6083 = vsel %vm900, %v6027, 0
        %6085 = vmatprep.subr.bf16.mxu0 0
        %6086 = vmatpush1.bf16.msra.mxu0 0
        %6087 = vmatprep.subr.bf16.mxu0 0
        %6088 = vmatpush1.bf16.msra.mxu0 0
        %6089 = vmatprep.subr.bf16.mxu0 0
        %6090 = vmatpush1.bf16.msra.mxu0 0
        %6091 = vmatprep.subr.bf16.mxu0 0
        %6092 = vmatpush1.bf16.msra.mxu0 0
        %6093 = vmatprep.subr.bf16.mxu0 0
        %6094 = vmatpush1.bf16.msra.mxu0 %v6056
        %6095 = vmatprep.subr.bf16.mxu0 0
        %6096 = vmatpush1.bf16.msra.mxu0 %v6055
        %6097 = vmatprep.subr.bf16.mxu0 0
        %6098 = vmatpush1.bf16.msra.mxu0 %v6054
        %6099 = vmatprep.subr.bf16.mxu0 0
        %6100 = vmatpush1.bf16.msra.mxu0 %v6053
        %6101 = vmatprep.subr.bf16.mxu0 0
        %6102 = vmatpush2.bf16.msra.mxu0 0
        %6103 = vmatprep.subr.bf16.mxu0 0
        %6104 = vmatpush2.bf16.msra.mxu0 0
        %6105 = vmatprep.subr.bf16.mxu0 0
        %6106 = vmatpush2.bf16.msra.mxu0 0
        %6107 = vmatprep.subr.bf16.mxu0 0
        %6108 = vmatpush2.bf16.msra.mxu0 0
        %6109 = vmatprep.subr.bf16.mxu0 0
        %6110 = vmatpush2.bf16.msra.mxu0 0
        %6111 = vmatprep.subr.bf16.mxu0 0
        %6112 = vmatpush2.bf16.msra.mxu0 0
        %6113 = vmatprep.subr.bf16.mxu0 0
        %6114 = vmatpush2.bf16.msra.mxu0 0
        %6115 = vmatprep.subr.bf16.mxu0 0
        %6116 = vmatpush2.bf16.msra.mxu0 0
        %6117 = vmatprep.mubr.bf16.mxu0 0
        %6118 = vmatmul.mubr.bf16.gmra.mxu0 %v6062
        %v6119 = vpop.f32.mrf.mxu0
        %v6120 = vadd.f32 0.0, %v6119
        %v6121 = vpop.f32.mrf.mxu0
        %v6122 = vpop.f32.mrf.mxu0
        %v6123 = vadd.f32 0.0, %v6122
        %v6124 = vpop.f32.mrf.mxu0
        %6125 = vmatprep.mubr.bf16.mxu0 0
        %6126 = vmatmul.mubr.bf16.gmra.mxu0 %v6065
        %v6127 = vpop.f32.mrf.mxu0
        %v6128 = vadd.f32 0.0, %v6127
        %v6129 = vpop.f32.mrf.mxu0
        %v6130 = vpop.f32.mrf.mxu0
        %v6131 = vadd.f32 0.0, %v6130
        %v6132 = vpop.f32.mrf.mxu0
        %6133 = vmatprep.mubr.bf16.mxu0 0
        %6134 = vmatmul.mubr.bf16.gmra.mxu0 %v6068
        %v6135 = vpop.f32.mrf.mxu0
        %v6136 = vadd.f32 0.0, %v6135
        %v6137 = vpop.f32.mrf.mxu0
        %v6138 = vpop.f32.mrf.mxu0
        %v6139 = vadd.f32 0.0, %v6138
        %v6140 = vpop.f32.mrf.mxu0
        %6141 = vmatprep.mubr.bf16.mxu0 0
        %6142 = vmatmul.mubr.bf16.gmra.mxu0 %v6071
        %v6143 = vpop.f32.mrf.mxu0
        %v6144 = vadd.f32 0.0, %v6143
        %v6145 = vpop.f32.mrf.mxu0
        %v6146 = vpop.f32.mrf.mxu0
        %v6147 = vadd.f32 0.0, %v6146
        %v6148 = vpop.f32.mrf.mxu0
        %6149 = vmatprep.mubr.bf16.mxu0 0
        %6150 = vmatmul.mubr.bf16.gmra.mxu0 %v6074
        %v6151 = vpop.f32.mrf.mxu0
        %v6152 = vadd.f32 0.0, %v6151
        %v6153 = vpop.f32.mrf.mxu0
        %v6154 = vpop.f32.mrf.mxu0
        %v6155 = vadd.f32 0.0, %v6154
        %v6156 = vpop.f32.mrf.mxu0
        %6157 = vmatprep.mubr.bf16.mxu0 0
        %6158 = vmatmul.mubr.bf16.gmra.mxu0 %v6077
        %v6159 = vpop.f32.mrf.mxu0
        %v6160 = vadd.f32 0.0, %v6159
        %v6161 = vpop.f32.mrf.mxu0
        %v6162 = vpop.f32.mrf.mxu0
        %v6163 = vadd.f32 0.0, %v6162
        %v6164 = vpop.f32.mrf.mxu0
        %6165 = vmatprep.mubr.bf16.mxu0 0
        %6166 = vmatmul.mubr.bf16.gmra.mxu0 %v6080
        %v6167 = vpop.f32.mrf.mxu0
        %v6168 = vadd.f32 0.0, %v6167
        %v6169 = vpop.f32.mrf.mxu0
        %v6170 = vpop.f32.mrf.mxu0
        %v6171 = vadd.f32 0.0, %v6170
        %v6172 = vpop.f32.mrf.mxu0
        %6173 = vmatprep.mubr.bf16.mxu0 0
        %6174 = vmatmul.mubr.bf16.gmra.mxu0 %v6083
        %v6175 = vpop.f32.mrf.mxu0
        %v6176 = vadd.f32 0.0, %v6175
        %v6177 = vpop.f32.mrf.mxu0
        %v6178 = vpop.f32.mrf.mxu0
        %v6179 = vadd.f32 0.0, %v6178
        %v6180 = vpop.f32.mrf.mxu0
        %6181 = vdwg.mxu0
        %v6182 = vadd.f32 %v5795, %v6120
        %v6183 = vadd.f32 %v5796, %v6123
        %v6184 = vadd.f32 %v5797, %v6128
        %v6185 = vadd.f32 %v5798, %v6131
        %v6186 = vadd.f32 %v5799, %v6136
        %v6187 = vadd.f32 %v5800, %v6139
        %v6188 = vadd.f32 %v5801, %v6144
        %v6189 = vadd.f32 %v5802, %v6147
        %v6190 = vadd.f32 %v5803, %v6152
        %v6191 = vadd.f32 %v5804, %v6155
        %v6192 = vadd.f32 %v5805, %v6160
        %v6193 = vadd.f32 %v5806, %v6163
        %v6194 = vadd.f32 %v5807, %v6168
        %v6195 = vadd.f32 %v5808, %v6171
        %v6196 = vadd.f32 %v5809, %v6176
        %v6197 = vadd.f32 %v5810, %v6179
        %v6198 = vld [vmem:[%s0 + $0x3c0] sm:$0xf]
        %v6199 = vld [vmem:[%s0 + $0x3c4] sm:$0xf]
        %v6200 = vld [vmem:[%s0 + $0x3c8] sm:$0xf]
        %v6201 = vld [vmem:[%s0 + $0x3cc] sm:$0xf]
        %v6202 = vld [vmem:[%s0 + $0x3d0] sm:$0xf]
        %v6203 = vld [vmem:[%s0 + $0x3d4] sm:$0xf]
        %v6204 = vld [vmem:[%s0 + $0x3d8] sm:$0xf]
        %v6205 = vld [vmem:[%s0 + $0x3dc] sm:$0xf]
        %v6206 = vld [vmem:[%s0 + $0x3e0] sm:$0xf]
        %v6207 = vld [vmem:[%s0 + $0x3e4] sm:$0xf]
        %v6208 = vld [vmem:[%s0 + $0x3e8] sm:$0xf]
        %v6209 = vld [vmem:[%s0 + $0x3ec] sm:$0xf]
        %v6210 = vld [vmem:[%s0 + $0x3f0] sm:$0xf]
        %v6211 = vld [vmem:[%s0 + $0x3f4] sm:$0xf]
        %v6212 = vld [vmem:[%s0 + $0x3f8] sm:$0xf]
        %v6213 = vld [vmem:[%s0 + $0x3fc] sm:$0xf]
        %v6230 = vunpack.c.l.b16 %v6198
        %v6231 = vunpack.c.l.b16 %v6199
        %v6232 = vunpack.c.l.b16 %v6200
        %v6233 = vunpack.c.l.b16 %v6201
        %v6234 = vunpack.c.l.b16 %v6202
        %v6235 = vunpack.c.l.b16 %v6203
        %v6236 = vunpack.c.l.b16 %v6204
        %v6237 = vunpack.c.l.b16 %v6205
        %v6238 = vunpack.c.l.b16 %v6206
        %v6239 = vunpack.c.l.b16 %v6207
        %v6240 = vunpack.c.l.b16 %v6208
        %v6241 = vunpack.c.l.b16 %v6209
        %v6242 = vunpack.c.l.b16 %v6210
        %v6243 = vunpack.c.l.b16 %v6211
        %v6244 = vunpack.c.l.b16 %v6212
        %v6245 = vunpack.c.l.b16 %v6213
        %v6246 = vpack.c.b16 %v6231, %v6230
        %v6247 = vpack.c.b16 %v6233, %v6232
        %v6248 = vpack.c.b16 %v6235, %v6234
        %v6249 = vpack.c.b16 %v6237, %v6236
        %v6250 = vpack.c.b16 %v6239, %v6238
        %v6251 = vpack.c.b16 %v6241, %v6240
        %v6252 = vpack.c.b16 %v6243, %v6242
        %v6253 = vpack.c.b16 %v6245, %v6244
        %v6255 = vsel %vm474, %v6246, 0
        %v6258 = vsel %vm474, %v6247, 0
        %v6261 = vsel %vm474, %v6248, 0
        %v6264 = vsel %vm474, %v6249, 0
        %v6267 = vsel %vm474, %v6250, 0
        %v6270 = vsel %vm474, %v6251, 0
        %v6273 = vsel %vm474, %v6252, 0
        %v6276 = vsel %vm474, %v6253, 0
        %6278 = vmatprep.subr.bf16.mxu0 0
        %6279 = vmatpush1.bf16.msra.mxu0 0
        %6280 = vmatprep.subr.bf16.mxu0 0
        %6281 = vmatpush1.bf16.msra.mxu0 0
        %6282 = vmatprep.subr.bf16.mxu0 0
        %6283 = vmatpush1.bf16.msra.mxu0 0
        %6284 = vmatprep.subr.bf16.mxu0 0
        %6285 = vmatpush1.bf16.msra.mxu0 0
        %6286 = vmatprep.subr.bf16.mxu0 0
        %6287 = vmatpush1.bf16.msra.mxu0 0
        %6288 = vmatprep.subr.bf16.mxu0 0
        %6289 = vmatpush1.bf16.msra.mxu0 0
        %6290 = vmatprep.subr.bf16.mxu0 0
        %6291 = vmatpush1.bf16.msra.mxu0 %v503
        %6292 = vmatprep.subr.bf16.mxu0 0
        %6293 = vmatpush1.bf16.msra.mxu0 %v471
        %6294 = vmatprep.subr.bf16.mxu0 0
        %6295 = vmatpush2.bf16.msra.mxu0 0
        %6296 = vmatprep.subr.bf16.mxu0 0
        %6297 = vmatpush2.bf16.msra.mxu0 0
        %6298 = vmatprep.subr.bf16.mxu0 0
        %6299 = vmatpush2.bf16.msra.mxu0 0
        %6300 = vmatprep.subr.bf16.mxu0 0
        %6301 = vmatpush2.bf16.msra.mxu0 0
        %6302 = vmatprep.subr.bf16.mxu0 0
        %6303 = vmatpush2.bf16.msra.mxu0 0
        %6304 = vmatprep.subr.bf16.mxu0 0
        %6305 = vmatpush2.bf16.msra.mxu0 0
        %6306 = vmatprep.subr.bf16.mxu0 0
        %6307 = vmatpush2.bf16.msra.mxu0 0
        %6308 = vmatprep.subr.bf16.mxu0 0
        %6309 = vmatpush2.bf16.msra.mxu0 0
        %6310 = vmatprep.mubr.bf16.mxu0 0
        %6311 = vmatmul.mubr.bf16.gmra.mxu0 %v6255
        %v6312 = vpop.f32.mrf.mxu0
        %v6313 = vadd.f32 0.0, %v6312
        %v6314 = vpop.f32.mrf.mxu0
        %v6315 = vpop.f32.mrf.mxu0
        %v6316 = vadd.f32 0.0, %v6315
        %v6317 = vpop.f32.mrf.mxu0
        %6318 = vmatprep.mubr.bf16.mxu0 0
        %6319 = vmatmul.mubr.bf16.gmra.mxu0 %v6258
        %v6320 = vpop.f32.mrf.mxu0
        %v6321 = vadd.f32 0.0, %v6320
        %v6322 = vpop.f32.mrf.mxu0
        %v6323 = vpop.f32.mrf.mxu0
        %v6324 = vadd.f32 0.0, %v6323
        %v6325 = vpop.f32.mrf.mxu0
        %6326 = vmatprep.mubr.bf16.mxu0 0
        %6327 = vmatmul.mubr.bf16.gmra.mxu0 %v6261
        %v6328 = vpop.f32.mrf.mxu0
        %v6329 = vadd.f32 0.0, %v6328
        %v6330 = vpop.f32.mrf.mxu0
        %v6331 = vpop.f32.mrf.mxu0
        %v6332 = vadd.f32 0.0, %v6331
        %v6333 = vpop.f32.mrf.mxu0
        %6334 = vmatprep.mubr.bf16.mxu0 0
        %6335 = vmatmul.mubr.bf16.gmra.mxu0 %v6264
        %v6336 = vpop.f32.mrf.mxu0
        %v6337 = vadd.f32 0.0, %v6336
        %v6338 = vpop.f32.mrf.mxu0
        %v6339 = vpop.f32.mrf.mxu0
        %v6340 = vadd.f32 0.0, %v6339
        %v6341 = vpop.f32.mrf.mxu0
        %6342 = vmatprep.mubr.bf16.mxu0 0
        %6343 = vmatmul.mubr.bf16.gmra.mxu0 %v6267
        %v6344 = vpop.f32.mrf.mxu0
        %v6345 = vadd.f32 0.0, %v6344
        %v6346 = vpop.f32.mrf.mxu0
        %v6347 = vpop.f32.mrf.mxu0
        %v6348 = vadd.f32 0.0, %v6347
        %v6349 = vpop.f32.mrf.mxu0
        %6350 = vmatprep.mubr.bf16.mxu0 0
        %6351 = vmatmul.mubr.bf16.gmra.mxu0 %v6270
        %v6352 = vpop.f32.mrf.mxu0
        %v6353 = vadd.f32 0.0, %v6352
        %v6354 = vpop.f32.mrf.mxu0
        %v6355 = vpop.f32.mrf.mxu0
        %v6356 = vadd.f32 0.0, %v6355
        %v6357 = vpop.f32.mrf.mxu0
        %6358 = vmatprep.mubr.bf16.mxu0 0
        %6359 = vmatmul.mubr.bf16.gmra.mxu0 %v6273
        %v6360 = vpop.f32.mrf.mxu0
        %v6361 = vadd.f32 0.0, %v6360
        %v6362 = vpop.f32.mrf.mxu0
        %v6363 = vpop.f32.mrf.mxu0
        %v6364 = vadd.f32 0.0, %v6363
        %v6365 = vpop.f32.mrf.mxu0
        %6366 = vmatprep.mubr.bf16.mxu0 0
        %6367 = vmatmul.mubr.bf16.gmra.mxu0 %v6276
        %v6368 = vpop.f32.mrf.mxu0
        %v6369 = vadd.f32 0.0, %v6368
        %v6370 = vpop.f32.mrf.mxu0
        %v6371 = vpop.f32.mrf.mxu0
        %v6372 = vadd.f32 0.0, %v6371
        %v6373 = vpop.f32.mrf.mxu0
        %6374 = vdwg.mxu0
        %v6375 = vmul.f32 %v6313, 0.2
        %v6376 = vmul.f32 %v6316, 0.2
        %v6377 = vmul.f32 %v6321, 0.2
        %v6378 = vmul.f32 %v6324, 0.2
        %v6379 = vmul.f32 %v6329, 0.2
        %v6380 = vmul.f32 %v6332, 0.2
        %v6381 = vmul.f32 %v6337, 0.2
        %v6382 = vmul.f32 %v6340, 0.2
        %v6383 = vmul.f32 %v6345, 0.2
        %v6384 = vmul.f32 %v6348, 0.2
        %v6385 = vmul.f32 %v6353, 0.2
        %v6386 = vmul.f32 %v6356, 0.2
        %v6387 = vmul.f32 %v6361, 0.2
        %v6388 = vmul.f32 %v6364, 0.2
        %v6389 = vmul.f32 %v6369, 0.2
        %v6390 = vmul.f32 %v6372, 0.2
        %v6391 = vmax.f32 %v6313, %v6375
        %v6392 = vmax.f32 %v6316, %v6376
        %v6393 = vmax.f32 %v6321, %v6377
        %v6394 = vmax.f32 %v6324, %v6378
        %v6395 = vmax.f32 %v6329, %v6379
        %v6396 = vmax.f32 %v6332, %v6380
        %v6397 = vmax.f32 %v6337, %v6381
        %v6398 = vmax.f32 %v6340, %v6382
        %v6399 = vmax.f32 %v6345, %v6383
        %v6400 = vmax.f32 %v6348, %v6384
        %v6401 = vmax.f32 %v6353, %v6385
        %v6402 = vmax.f32 %v6356, %v6386
        %v6403 = vmax.f32 %v6361, %v6387
        %v6404 = vmax.f32 %v6364, %v6388
        %v6405 = vmax.f32 %v6369, %v6389
        %v6406 = vmax.f32 %v6372, %v6390
        %v6407 = vpack.c.bf16 %v6392, %v6391
        %v6408 = vpack.c.bf16 %v6394, %v6393
        %v6409 = vpack.c.bf16 %v6396, %v6395
        %v6410 = vpack.c.bf16 %v6398, %v6397
        %v6411 = vpack.c.bf16 %v6400, %v6399
        %v6412 = vpack.c.bf16 %v6402, %v6401
        %v6413 = vpack.c.bf16 %v6404, %v6403
        %v6414 = vpack.c.bf16 %v6406, %v6405
        %s6415 = scalar_lea.vmem %s2, 480
        %v6416 = vld [vmem:[%s6415] sm:$0xf]
        %v6417 = vld [vmem:[%s6415 + $0x4] sm:$0xf]
        %v6418 = vld [vmem:[%s6415 + $0x8] sm:$0xf]
        %v6419 = vld [vmem:[%s6415 + $0xc] sm:$0xf]
        %v6420 = vld [vmem:[%s6415 + $0x10] sm:$0xf]
        %v6421 = vld [vmem:[%s6415 + $0x14] sm:$0xf]
        %v6422 = vld [vmem:[%s6415 + $0x18] sm:$0xf]
        %v6423 = vld [vmem:[%s6415 + $0x1c] sm:$0xf]
        %v6432 = vunpack.c.l.b16 %v6416
        %v6433 = vunpack.c.l.b16 %v6417
        %v6434 = vunpack.c.l.b16 %v6418
        %v6435 = vunpack.c.l.b16 %v6419
        %v6436 = vunpack.c.l.b16 %v6420
        %v6437 = vunpack.c.l.b16 %v6421
        %v6438 = vunpack.c.l.b16 %v6422
        %v6439 = vunpack.c.l.b16 %v6423
        %v6440 = vpack.c.b16 %v6433, %v6432
        %v6441 = vpack.c.b16 %v6435, %v6434
        %v6442 = vpack.c.b16 %v6437, %v6436
        %v6443 = vpack.c.b16 %v6439, %v6438
        %v6449 = vsel %vm900, %v6407, 0
        %v6452 = vsel %vm900, %v6408, 0
        %v6455 = vsel %vm900, %v6409, 0
        %v6458 = vsel %vm900, %v6410, 0
        %v6461 = vsel %vm900, %v6411, 0
        %v6464 = vsel %vm900, %v6412, 0
        %v6467 = vsel %vm900, %v6413, 0
        %v6470 = vsel %vm900, %v6414, 0
        %6472 = vmatprep.subr.bf16.mxu0 0
        %6473 = vmatpush1.bf16.msra.mxu0 0
        %6474 = vmatprep.subr.bf16.mxu0 0
        %6475 = vmatpush1.bf16.msra.mxu0 0
        %6476 = vmatprep.subr.bf16.mxu0 0
        %6477 = vmatpush1.bf16.msra.mxu0 0
        %6478 = vmatprep.subr.bf16.mxu0 0
        %6479 = vmatpush1.bf16.msra.mxu0 0
        %6480 = vmatprep.subr.bf16.mxu0 0
        %6481 = vmatpush1.bf16.msra.mxu0 %v6443
        %6482 = vmatprep.subr.bf16.mxu0 0
        %6483 = vmatpush1.bf16.msra.mxu0 %v6442
        %6484 = vmatprep.subr.bf16.mxu0 0
        %6485 = vmatpush1.bf16.msra.mxu0 %v6441
        %6486 = vmatprep.subr.bf16.mxu0 0
        %6487 = vmatpush1.bf16.msra.mxu0 %v6440
        %6488 = vmatprep.subr.bf16.mxu0 0
        %6489 = vmatpush2.bf16.msra.mxu0 0
        %6490 = vmatprep.subr.bf16.mxu0 0
        %6491 = vmatpush2.bf16.msra.mxu0 0
        %6492 = vmatprep.subr.bf16.mxu0 0
        %6493 = vmatpush2.bf16.msra.mxu0 0
        %6494 = vmatprep.subr.bf16.mxu0 0
        %6495 = vmatpush2.bf16.msra.mxu0 0
        %6496 = vmatprep.subr.bf16.mxu0 0
        %6497 = vmatpush2.bf16.msra.mxu0 0
        %6498 = vmatprep.subr.bf16.mxu0 0
        %6499 = vmatpush2.bf16.msra.mxu0 0
        %6500 = vmatprep.subr.bf16.mxu0 0
        %6501 = vmatpush2.bf16.msra.mxu0 0
        %6502 = vmatprep.subr.bf16.mxu0 0
        %6503 = vmatpush2.bf16.msra.mxu0 0
        %6504 = vmatprep.mubr.bf16.mxu0 0
        %6505 = vmatmul.mubr.bf16.gmra.mxu0 %v6449
        %v6506 = vpop.f32.mrf.mxu0
        %v6507 = vadd.f32 0.0, %v6506
        %v6508 = vpop.f32.mrf.mxu0
        %v6509 = vpop.f32.mrf.mxu0
        %v6510 = vadd.f32 0.0, %v6509
        %v6511 = vpop.f32.mrf.mxu0
        %6512 = vmatprep.mubr.bf16.mxu0 0
        %6513 = vmatmul.mubr.bf16.gmra.mxu0 %v6452
        %v6514 = vpop.f32.mrf.mxu0
        %v6515 = vadd.f32 0.0, %v6514
        %v6516 = vpop.f32.mrf.mxu0
        %v6517 = vpop.f32.mrf.mxu0
        %v6518 = vadd.f32 0.0, %v6517
        %v6519 = vpop.f32.mrf.mxu0
        %6520 = vmatprep.mubr.bf16.mxu0 0
        %6521 = vmatmul.mubr.bf16.gmra.mxu0 %v6455
        %v6522 = vpop.f32.mrf.mxu0
        %v6523 = vadd.f32 0.0, %v6522
        %v6524 = vpop.f32.mrf.mxu0
        %v6525 = vpop.f32.mrf.mxu0
        %v6526 = vadd.f32 0.0, %v6525
        %v6527 = vpop.f32.mrf.mxu0
        %6528 = vmatprep.mubr.bf16.mxu0 0
        %6529 = vmatmul.mubr.bf16.gmra.mxu0 %v6458
        %v6530 = vpop.f32.mrf.mxu0
        %v6531 = vadd.f32 0.0, %v6530
        %v6532 = vpop.f32.mrf.mxu0
        %v6533 = vpop.f32.mrf.mxu0
        %v6534 = vadd.f32 0.0, %v6533
        %v6535 = vpop.f32.mrf.mxu0
        %6536 = vmatprep.mubr.bf16.mxu0 0
        %6537 = vmatmul.mubr.bf16.gmra.mxu0 %v6461
        %v6538 = vpop.f32.mrf.mxu0
        %v6539 = vadd.f32 0.0, %v6538
        %v6540 = vpop.f32.mrf.mxu0
        %v6541 = vpop.f32.mrf.mxu0
        %v6542 = vadd.f32 0.0, %v6541
        %v6543 = vpop.f32.mrf.mxu0
        %6544 = vmatprep.mubr.bf16.mxu0 0
        %6545 = vmatmul.mubr.bf16.gmra.mxu0 %v6464
        %v6546 = vpop.f32.mrf.mxu0
        %v6547 = vadd.f32 0.0, %v6546
        %v6548 = vpop.f32.mrf.mxu0
        %v6549 = vpop.f32.mrf.mxu0
        %v6550 = vadd.f32 0.0, %v6549
        %v6551 = vpop.f32.mrf.mxu0
        %6552 = vmatprep.mubr.bf16.mxu0 0
        %6553 = vmatmul.mubr.bf16.gmra.mxu0 %v6467
        %v6554 = vpop.f32.mrf.mxu0
        %v6555 = vadd.f32 0.0, %v6554
        %v6556 = vpop.f32.mrf.mxu0
        %v6557 = vpop.f32.mrf.mxu0
        %v6558 = vadd.f32 0.0, %v6557
        %v6559 = vpop.f32.mrf.mxu0
        %6560 = vmatprep.mubr.bf16.mxu0 0
        %6561 = vmatmul.mubr.bf16.gmra.mxu0 %v6470
        %v6562 = vpop.f32.mrf.mxu0
        %v6563 = vadd.f32 0.0, %v6562
        %v6564 = vpop.f32.mrf.mxu0
        %v6565 = vpop.f32.mrf.mxu0
        %v6566 = vadd.f32 0.0, %v6565
        %v6567 = vpop.f32.mrf.mxu0
        %6568 = vdwg.mxu0
        %v6569 = vadd.f32 %v6182, %v6507
        %v6570 = vadd.f32 %v6183, %v6510
        %v6571 = vadd.f32 %v6184, %v6515
        %v6572 = vadd.f32 %v6185, %v6518
        %v6573 = vadd.f32 %v6186, %v6523
        %v6574 = vadd.f32 %v6187, %v6526
        %v6575 = vadd.f32 %v6188, %v6531
        %v6576 = vadd.f32 %v6189, %v6534
        %v6577 = vadd.f32 %v6190, %v6539
        %v6578 = vadd.f32 %v6191, %v6542
        %v6579 = vadd.f32 %v6192, %v6547
        %v6580 = vadd.f32 %v6193, %v6550
        %v6581 = vadd.f32 %v6194, %v6555
        %v6582 = vadd.f32 %v6195, %v6558
        %v6583 = vadd.f32 %v6196, %v6563
        %v6584 = vadd.f32 %v6197, %v6566
        %v6585 = vld [vmem:[%s3] sm:$0x1]
        %v6587 = vlaneseq
        %v6588 = vshrl.u32 %v6587, 7
        %v6589 = vsub.s32 0, %v6588
        %v6590 = vrot.slane %v6585, %v6589
        %v6592 = vadd.f32 %v6569, %v6590
        %v6593 = vadd.f32 %v6570, %v6590
        %v6594 = vadd.f32 %v6571, %v6590
        %v6595 = vadd.f32 %v6572, %v6590
        %v6596 = vadd.f32 %v6573, %v6590
        %v6597 = vadd.f32 %v6574, %v6590
        %v6598 = vadd.f32 %v6575, %v6590
        %v6599 = vadd.f32 %v6576, %v6590
        %v6600 = vadd.f32 %v6577, %v6590
        %v6601 = vadd.f32 %v6578, %v6590
        %v6602 = vadd.f32 %v6579, %v6590
        %v6603 = vadd.f32 %v6580, %v6590
        %v6604 = vadd.f32 %v6581, %v6590
        %v6605 = vadd.f32 %v6582, %v6590
        %v6606 = vadd.f32 %v6583, %v6590
        %v6607 = vadd.f32 %v6584, %v6590
        %v6608 = vadd.f32 %v6592, %v6593
        %v6609 = vadd.f32 %v6608, %v6594
        %v6610 = vadd.f32 %v6609, %v6595
        %v6611 = vadd.f32 %v6610, %v6596
        %v6612 = vadd.f32 %v6611, %v6597
        %v6613 = vadd.f32 %v6612, %v6598
        %v6614 = vadd.f32 %v6613, %v6599
        %v6615 = vadd.f32 %v6614, %v6600
        %v6616 = vadd.f32 %v6615, %v6601
        %v6617 = vadd.f32 %v6616, %v6602
        %v6618 = vadd.f32 %v6617, %v6603
        %v6619 = vadd.f32 %v6618, %v6604
        %v6620 = vadd.f32 %v6619, %v6605
        %v6621 = vadd.f32 %v6620, %v6606
        %v6622 = vadd.f32 %v6621, %v6607
        %v6623 = vrot.slane %v6622, 4
        %v6624 = vadd.f32 %v6622, %v6623
        %v6625 = vrot.slane %v6624, 2
        %v6626 = vadd.f32 %v6624, %v6625
        %v6627 = vrot.slane %v6626, 1
        %v6628 = vadd.f32 %v6626, %v6627
        %v6629 = vmul.f32 %v6628, 0.0078125
        %v6630 = vmul.f32 %v6592, %v6592
        %v6631 = vmul.f32 %v6593, %v6593
        %v6632 = vmul.f32 %v6594, %v6594
        %v6633 = vmul.f32 %v6595, %v6595
        %v6634 = vmul.f32 %v6596, %v6596
        %v6635 = vmul.f32 %v6597, %v6597
        %v6636 = vmul.f32 %v6598, %v6598
        %v6637 = vmul.f32 %v6599, %v6599
        %v6638 = vmul.f32 %v6600, %v6600
        %v6639 = vmul.f32 %v6601, %v6601
        %v6640 = vmul.f32 %v6602, %v6602
        %v6641 = vmul.f32 %v6603, %v6603
        %v6642 = vmul.f32 %v6604, %v6604
        %v6643 = vmul.f32 %v6605, %v6605
        %v6644 = vmul.f32 %v6606, %v6606
        %v6645 = vmul.f32 %v6607, %v6607
        %v6646 = vadd.f32 %v6630, %v6631
        %v6647 = vadd.f32 %v6646, %v6632
        %v6648 = vadd.f32 %v6647, %v6633
        %v6649 = vadd.f32 %v6648, %v6634
        %v6650 = vadd.f32 %v6649, %v6635
        %v6651 = vadd.f32 %v6650, %v6636
        %v6652 = vadd.f32 %v6651, %v6637
        %v6653 = vadd.f32 %v6652, %v6638
        %v6654 = vadd.f32 %v6653, %v6639
        %v6655 = vadd.f32 %v6654, %v6640
        %v6656 = vadd.f32 %v6655, %v6641
        %v6657 = vadd.f32 %v6656, %v6642
        %v6658 = vadd.f32 %v6657, %v6643
        %v6659 = vadd.f32 %v6658, %v6644
        %v6660 = vadd.f32 %v6659, %v6645
        %v6661 = vrot.slane %v6660, 4
        %v6662 = vadd.f32 %v6660, %v6661
        %v6663 = vrot.slane %v6662, 2
        %v6664 = vadd.f32 %v6662, %v6663
        %v6665 = vrot.slane %v6664, 1
        %v6666 = vadd.f32 %v6664, %v6665
        %v6667 = vmul.f32 %v6666, 0.0078125
        %v6668 = vmul.f32 %v6629, %v6629
        %v6669 = vsub.f32 %v6667, %v6668
        %v6670 = vmax.f32 %v6669, 0.0
        %v6671 = vsub.f32 %v6592, %v6629
        %v6672 = vsub.f32 %v6593, %v6629
        %v6673 = vsub.f32 %v6594, %v6629
        %v6674 = vsub.f32 %v6595, %v6629
        %v6675 = vsub.f32 %v6596, %v6629
        %v6676 = vsub.f32 %v6597, %v6629
        %v6677 = vsub.f32 %v6598, %v6629
        %v6678 = vsub.f32 %v6599, %v6629
        %v6679 = vsub.f32 %v6600, %v6629
        %v6680 = vsub.f32 %v6601, %v6629
        %v6681 = vsub.f32 %v6602, %v6629
        %v6682 = vsub.f32 %v6603, %v6629
        %v6683 = vsub.f32 %v6604, %v6629
        %v6684 = vsub.f32 %v6605, %v6629
        %v6685 = vsub.f32 %v6606, %v6629
        %v6686 = vsub.f32 %v6607, %v6629
        %v6687 = vadd.f32 %v6670, 1e-05
        %v6688 = vrsqrt.pop %v6687
        %v6689 = vmul.f32 %v6671, %v6688
        %v6690 = vmul.f32 %v6672, %v6688
        %v6691 = vmul.f32 %v6673, %v6688
        %v6692 = vmul.f32 %v6674, %v6688
        %v6693 = vmul.f32 %v6675, %v6688
        %v6694 = vmul.f32 %v6676, %v6688
        %v6695 = vmul.f32 %v6677, %v6688
        %v6696 = vmul.f32 %v6678, %v6688
        %v6697 = vmul.f32 %v6679, %v6688
        %v6698 = vmul.f32 %v6680, %v6688
        %v6699 = vmul.f32 %v6681, %v6688
        %v6700 = vmul.f32 %v6682, %v6688
        %v6701 = vmul.f32 %v6683, %v6688
        %v6702 = vmul.f32 %v6684, %v6688
        %v6703 = vmul.f32 %v6685, %v6688
        %v6704 = vmul.f32 %v6686, %v6688
        %v6705 = vld [vmem:[%s4] sm:$0x1]
        %v6707 = vlaneseq
        %v6708 = vshrl.u32 %v6707, 7
        %v6709 = vsub.s32 0, %v6708
        %v6710 = vrot.slane %v6705, %v6709
        %v6712 = vmul.f32 %v6689, %v6710
        %v6713 = vmul.f32 %v6690, %v6710
        %v6714 = vmul.f32 %v6691, %v6710
        %v6715 = vmul.f32 %v6692, %v6710
        %v6716 = vmul.f32 %v6693, %v6710
        %v6717 = vmul.f32 %v6694, %v6710
        %v6718 = vmul.f32 %v6695, %v6710
        %v6719 = vmul.f32 %v6696, %v6710
        %v6720 = vmul.f32 %v6697, %v6710
        %v6721 = vmul.f32 %v6698, %v6710
        %v6722 = vmul.f32 %v6699, %v6710
        %v6723 = vmul.f32 %v6700, %v6710
        %v6724 = vmul.f32 %v6701, %v6710
        %v6725 = vmul.f32 %v6702, %v6710
        %v6726 = vmul.f32 %v6703, %v6710
        %v6727 = vmul.f32 %v6704, %v6710
        %v6728 = vld [vmem:[%s5] sm:$0x1]
        %v6730 = vlaneseq
        %v6731 = vshrl.u32 %v6730, 7
        %v6732 = vsub.s32 0, %v6731
        %v6733 = vrot.slane %v6728, %v6732
        %v6735 = vadd.f32 %v6712, %v6733
        %v6736 = vadd.f32 %v6713, %v6733
        %v6737 = vadd.f32 %v6714, %v6733
        %v6738 = vadd.f32 %v6715, %v6733
        %v6739 = vadd.f32 %v6716, %v6733
        %v6740 = vadd.f32 %v6717, %v6733
        %v6741 = vadd.f32 %v6718, %v6733
        %v6742 = vadd.f32 %v6719, %v6733
        %v6743 = vadd.f32 %v6720, %v6733
        %v6744 = vadd.f32 %v6721, %v6733
        %v6745 = vadd.f32 %v6722, %v6733
        %v6746 = vadd.f32 %v6723, %v6733
        %v6747 = vadd.f32 %v6724, %v6733
        %v6748 = vadd.f32 %v6725, %v6733
        %v6749 = vadd.f32 %v6726, %v6733
        %v6750 = vadd.f32 %v6727, %v6733
        %v6751 = vmul.f32 %v6735, 0.2
        %v6752 = vmul.f32 %v6736, 0.2
        %v6753 = vmul.f32 %v6737, 0.2
        %v6754 = vmul.f32 %v6738, 0.2
        %v6755 = vmul.f32 %v6739, 0.2
        %v6756 = vmul.f32 %v6740, 0.2
        %v6757 = vmul.f32 %v6741, 0.2
        %v6758 = vmul.f32 %v6742, 0.2
        %v6759 = vmul.f32 %v6743, 0.2
        %v6760 = vmul.f32 %v6744, 0.2
        %v6761 = vmul.f32 %v6745, 0.2
        %v6762 = vmul.f32 %v6746, 0.2
        %v6763 = vmul.f32 %v6747, 0.2
        %v6764 = vmul.f32 %v6748, 0.2
        %v6765 = vmul.f32 %v6749, 0.2
        %v6766 = vmul.f32 %v6750, 0.2
        %v6767 = vmax.f32 %v6735, %v6751
        %v6768 = vmax.f32 %v6736, %v6752
        %v6769 = vmax.f32 %v6737, %v6753
        %v6770 = vmax.f32 %v6738, %v6754
        %v6771 = vmax.f32 %v6739, %v6755
        %v6772 = vmax.f32 %v6740, %v6756
        %v6773 = vmax.f32 %v6741, %v6757
        %v6774 = vmax.f32 %v6742, %v6758
        %v6775 = vmax.f32 %v6743, %v6759
        %v6776 = vmax.f32 %v6744, %v6760
        %v6777 = vmax.f32 %v6745, %v6761
        %v6778 = vmax.f32 %v6746, %v6762
        %v6779 = vmax.f32 %v6747, %v6763
        %v6780 = vmax.f32 %v6748, %v6764
        %v6781 = vmax.f32 %v6749, %v6765
        %v6782 = vmax.f32 %v6750, %v6766
        %v6783 = vpack.c.bf16 %v6768, %v6767
        %v6784 = vpack.c.bf16 %v6770, %v6769
        %v6785 = vpack.c.bf16 %v6772, %v6771
        %v6786 = vpack.c.bf16 %v6774, %v6773
        %v6787 = vpack.c.bf16 %v6776, %v6775
        %v6788 = vpack.c.bf16 %v6778, %v6777
        %v6789 = vpack.c.bf16 %v6780, %v6779
        %v6790 = vpack.c.bf16 %v6782, %v6781
        %v6799 = vunpack.c.l.b16 %v6783
        %v6800 = vunpack.c.h.b16 %v6783
        %v6801 = vunpack.c.l.b16 %v6784
        %v6802 = vunpack.c.h.b16 %v6784
        %v6803 = vunpack.c.l.b16 %v6785
        %v6804 = vunpack.c.h.b16 %v6785
        %v6805 = vunpack.c.l.b16 %v6786
        %v6806 = vunpack.c.h.b16 %v6786
        %v6807 = vunpack.c.l.b16 %v6787
        %v6808 = vunpack.c.h.b16 %v6787
        %v6809 = vunpack.c.l.b16 %v6788
        %v6810 = vunpack.c.h.b16 %v6788
        %v6811 = vunpack.c.l.b16 %v6789
        %v6812 = vunpack.c.h.b16 %v6789
        %v6813 = vunpack.c.l.b16 %v6790
        %v6814 = vunpack.c.h.b16 %v6790
        %v6815 = vpack.c.b16 %v6799, %v6799
        %v6816 = vpack.c.b16 %v6800, %v6800
        %v6817 = vpack.c.b16 %v6801, %v6801
        %v6818 = vpack.c.b16 %v6802, %v6802
        %v6819 = vpack.c.b16 %v6803, %v6803
        %v6820 = vpack.c.b16 %v6804, %v6804
        %v6821 = vpack.c.b16 %v6805, %v6805
        %v6822 = vpack.c.b16 %v6806, %v6806
        %v6823 = vpack.c.b16 %v6807, %v6807
        %v6824 = vpack.c.b16 %v6808, %v6808
        %v6825 = vpack.c.b16 %v6809, %v6809
        %v6826 = vpack.c.b16 %v6810, %v6810
        %v6827 = vpack.c.b16 %v6811, %v6811
        %v6828 = vpack.c.b16 %v6812, %v6812
        %v6829 = vpack.c.b16 %v6813, %v6813
        %v6830 = vpack.c.b16 %v6814, %v6814
        %6847 = vst [vmem:[#allocation2] sm:$0xf] %v6815
        %6848 = vst [vmem:[#allocation2 + $0x4] sm:$0xf] %v6816
        %6849 = vst [vmem:[#allocation2 + $0x8] sm:$0xf] %v6817
        %6850 = vst [vmem:[#allocation2 + $0xc] sm:$0xf] %v6818
        %6851 = vst [vmem:[#allocation2 + $0x10] sm:$0xf] %v6819
        %6852 = vst [vmem:[#allocation2 + $0x14] sm:$0xf] %v6820
        %6853 = vst [vmem:[#allocation2 + $0x18] sm:$0xf] %v6821
        %6854 = vst [vmem:[#allocation2 + $0x1c] sm:$0xf] %v6822
        %6855 = vst [vmem:[#allocation2 + $0x20] sm:$0xf] %v6823
        %6856 = vst [vmem:[#allocation2 + $0x24] sm:$0xf] %v6824
        %6857 = vst [vmem:[#allocation2 + $0x28] sm:$0xf] %v6825
        %6858 = vst [vmem:[#allocation2 + $0x2c] sm:$0xf] %v6826
        %6859 = vst [vmem:[#allocation2 + $0x30] sm:$0xf] %v6827
        %6860 = vst [vmem:[#allocation2 + $0x34] sm:$0xf] %v6828
        %6861 = vst [vmem:[#allocation2 + $0x38] sm:$0xf] %v6829
        %6862 = vst [vmem:[#allocation2 + $0x3c] sm:$0xf] %v6830
        %6863 = vst [vmem:[#allocation3] sm:$0xff] 0.0
        %6864 = vst [vmem:[#allocation3 + $0x8] sm:$0xff] 0.0
        %6865 = vst [vmem:[#allocation3 + $0x10] sm:$0xff] 0.0
        %6866 = vst [vmem:[#allocation3 + $0x18] sm:$0xff] 0.0
        %6867 = vst [vmem:[#allocation3 + $0x20] sm:$0xff] 0.0
        %6868 = vst [vmem:[#allocation3 + $0x28] sm:$0xff] 0.0
        %6869 = vst [vmem:[#allocation3 + $0x30] sm:$0xff] 0.0
        %6870 = vst [vmem:[#allocation3 + $0x38] sm:$0xff] 0.0
      $region72: #{discriminator_forward.1} parent=67 // pred_fallthru
        _
      %s6871 = smul.u32 %s25, 16
      %s6872 = sshra.s32 %s6871, 3
      %s6873 = sand.u32 %s6871, 7
      %s6874 = smul.addr %s6872, 4
      %s6875 = scalar_lea.vmem [#allocation2], %s6874
      %v6876 = vld [vmem:[%s6875] sm:$0xf]
      %s6877 = sadd.s32 %s6871, 8
      %s6878 = sshra.s32 %s6877, 3
      %s6879 = sand.u32 %s6877, 7
      %s6880 = smul.addr %s6878, 4
      %s6881 = scalar_lea.vmem [#allocation2], %s6880
      %v6882 = vld [vmem:[%s6881] sm:$0xf]
      %v6883 = vld [vmem:[#allocation3] sm:$0xff]
      %v6884 = vld [vmem:[#allocation3 + $0x8] sm:$0xff]
      %v6885 = vld [vmem:[#allocation3 + $0x10] sm:$0xff]
      %v6886 = vld [vmem:[#allocation3 + $0x18] sm:$0xff]
      %v6887 = vld [vmem:[#allocation3 + $0x20] sm:$0xff]
      %v6888 = vld [vmem:[#allocation3 + $0x28] sm:$0xff]
      %v6889 = vld [vmem:[#allocation3 + $0x30] sm:$0xff]
      %v6890 = vld [vmem:[#allocation3 + $0x38] sm:$0xff]
      %v6891 = vld [vmem:[%s400] sm:$0xff]
      %v6892 = vld [vmem:[%s400 + $0x8] sm:$0xff]
      %v6893 = vld [vmem:[%s400 + $0x10] sm:$0xff]
      %v6894 = vld [vmem:[%s400 + $0x18] sm:$0xff]
      %v6895 = vld [vmem:[%s400 + $0x20] sm:$0xff]
      %v6896 = vld [vmem:[%s400 + $0x28] sm:$0xff]
      %v6897 = vld [vmem:[%s400 + $0x30] sm:$0xff]
      %v6898 = vld [vmem:[%s400 + $0x38] sm:$0xff]
      %v6899 = vld [vmem:[%s400 + $0x40] sm:$0xff]
      %v6900 = vld [vmem:[%s400 + $0x48] sm:$0xff]
      %v6901 = vld [vmem:[%s400 + $0x50] sm:$0xff]
      %v6902 = vld [vmem:[%s400 + $0x58] sm:$0xff]
      %v6903 = vld [vmem:[%s400 + $0x60] sm:$0xff]
      %v6904 = vld [vmem:[%s400 + $0x68] sm:$0xff]
      %v6905 = vld [vmem:[%s400 + $0x70] sm:$0xff]
      %v6906 = vld [vmem:[%s400 + $0x78] sm:$0xff]
      %v6907 = vld [vmem:[%s400 + $0x80] sm:$0xff]
      %v6908 = vld [vmem:[%s400 + $0x88] sm:$0xff]
      %v6909 = vld [vmem:[%s400 + $0x90] sm:$0xff]
      %v6910 = vld [vmem:[%s400 + $0x98] sm:$0xff]
      %v6911 = vld [vmem:[%s400 + $0xa0] sm:$0xff]
      %v6912 = vld [vmem:[%s400 + $0xa8] sm:$0xff]
      %v6913 = vld [vmem:[%s400 + $0xb0] sm:$0xff]
      %v6914 = vld [vmem:[%s400 + $0xb8] sm:$0xff]
      %v6915 = vld [vmem:[%s400 + $0xc0] sm:$0xff]
      %v6916 = vld [vmem:[%s400 + $0xc8] sm:$0xff]
      %v6917 = vld [vmem:[%s400 + $0xd0] sm:$0xff]
      %v6918 = vld [vmem:[%s400 + $0xd8] sm:$0xff]
      %v6919 = vld [vmem:[%s400 + $0xe0] sm:$0xff]
      %v6920 = vld [vmem:[%s400 + $0xe8] sm:$0xff]
      %v6921 = vld [vmem:[%s400 + $0xf0] sm:$0xff]
      %v6922 = vld [vmem:[%s400 + $0xf8] sm:$0xff]
      %v6923 = vld [vmem:[%s400 + $0x100] sm:$0xff]
      %v6924 = vld [vmem:[%s400 + $0x108] sm:$0xff]
      %v6925 = vld [vmem:[%s400 + $0x110] sm:$0xff]
      %v6926 = vld [vmem:[%s400 + $0x118] sm:$0xff]
      %v6927 = vld [vmem:[%s400 + $0x120] sm:$0xff]
      %v6928 = vld [vmem:[%s400 + $0x128] sm:$0xff]
      %v6929 = vld [vmem:[%s400 + $0x130] sm:$0xff]
      %v6930 = vld [vmem:[%s400 + $0x138] sm:$0xff]
      %v6931 = vld [vmem:[%s400 + $0x140] sm:$0xff]
      %v6932 = vld [vmem:[%s400 + $0x148] sm:$0xff]
      %v6933 = vld [vmem:[%s400 + $0x150] sm:$0xff]
      %v6934 = vld [vmem:[%s400 + $0x158] sm:$0xff]
      %v6935 = vld [vmem:[%s400 + $0x160] sm:$0xff]
      %v6936 = vld [vmem:[%s400 + $0x168] sm:$0xff]
      %v6937 = vld [vmem:[%s400 + $0x170] sm:$0xff]
      %v6938 = vld [vmem:[%s400 + $0x178] sm:$0xff]
      %v6939 = vld [vmem:[%s400 + $0x180] sm:$0xff]
      %v6940 = vld [vmem:[%s400 + $0x188] sm:$0xff]
      %v6941 = vld [vmem:[%s400 + $0x190] sm:$0xff]
      %v6942 = vld [vmem:[%s400 + $0x198] sm:$0xff]
      %v6943 = vld [vmem:[%s400 + $0x1a0] sm:$0xff]
      %v6944 = vld [vmem:[%s400 + $0x1a8] sm:$0xff]
      %v6945 = vld [vmem:[%s400 + $0x1b0] sm:$0xff]
      %v6946 = vld [vmem:[%s400 + $0x1b8] sm:$0xff]
      %v6947 = vld [vmem:[%s400 + $0x1c0] sm:$0xff]
      %v6948 = vld [vmem:[%s400 + $0x1c8] sm:$0xff]
      %v6949 = vld [vmem:[%s400 + $0x1d0] sm:$0xff]
      %v6950 = vld [vmem:[%s400 + $0x1d8] sm:$0xff]
      %v6951 = vld [vmem:[%s400 + $0x1e0] sm:$0xff]
      %v6952 = vld [vmem:[%s400 + $0x1e8] sm:$0xff]
      %v6953 = vld [vmem:[%s400 + $0x1f0] sm:$0xff]
      %v6954 = vld [vmem:[%s400 + $0x1f8] sm:$0xff]
      %v6955 = vld [vmem:[%s400 + $0x200] sm:$0xff]
      %v6956 = vld [vmem:[%s400 + $0x208] sm:$0xff]
      %v6957 = vld [vmem:[%s400 + $0x210] sm:$0xff]
      %v6958 = vld [vmem:[%s400 + $0x218] sm:$0xff]
      %v6959 = vld [vmem:[%s400 + $0x220] sm:$0xff]
      %v6960 = vld [vmem:[%s400 + $0x228] sm:$0xff]
      %v6961 = vld [vmem:[%s400 + $0x230] sm:$0xff]
      %v6962 = vld [vmem:[%s400 + $0x238] sm:$0xff]
      %v6963 = vld [vmem:[%s400 + $0x240] sm:$0xff]
      %v6964 = vld [vmem:[%s400 + $0x248] sm:$0xff]
      %v6965 = vld [vmem:[%s400 + $0x250] sm:$0xff]
      %v6966 = vld [vmem:[%s400 + $0x258] sm:$0xff]
      %v6967 = vld [vmem:[%s400 + $0x260] sm:$0xff]
      %v6968 = vld [vmem:[%s400 + $0x268] sm:$0xff]
      %v6969 = vld [vmem:[%s400 + $0x270] sm:$0xff]
      %v6970 = vld [vmem:[%s400 + $0x278] sm:$0xff]
      %v6971 = vld [vmem:[%s400 + $0x280] sm:$0xff]
      %v6972 = vld [vmem:[%s400 + $0x288] sm:$0xff]
      %v6973 = vld [vmem:[%s400 + $0x290] sm:$0xff]
      %v6974 = vld [vmem:[%s400 + $0x298] sm:$0xff]
      %v6975 = vld [vmem:[%s400 + $0x2a0] sm:$0xff]
      %v6976 = vld [vmem:[%s400 + $0x2a8] sm:$0xff]
      %v6977 = vld [vmem:[%s400 + $0x2b0] sm:$0xff]
      %v6978 = vld [vmem:[%s400 + $0x2b8] sm:$0xff]
      %v6979 = vld [vmem:[%s400 + $0x2c0] sm:$0xff]
      %v6980 = vld [vmem:[%s400 + $0x2c8] sm:$0xff]
      %v6981 = vld [vmem:[%s400 + $0x2d0] sm:$0xff]
      %v6982 = vld [vmem:[%s400 + $0x2d8] sm:$0xff]
      %v6983 = vld [vmem:[%s400 + $0x2e0] sm:$0xff]
      %v6984 = vld [vmem:[%s400 + $0x2e8] sm:$0xff]
      %v6985 = vld [vmem:[%s400 + $0x2f0] sm:$0xff]
      %v6986 = vld [vmem:[%s400 + $0x2f8] sm:$0xff]
      %v6987 = vld [vmem:[%s400 + $0x300] sm:$0xff]
      %v6988 = vld [vmem:[%s400 + $0x308] sm:$0xff]
      %v6989 = vld [vmem:[%s400 + $0x310] sm:$0xff]
      %v6990 = vld [vmem:[%s400 + $0x318] sm:$0xff]
      %v6991 = vld [vmem:[%s400 + $0x320] sm:$0xff]
      %v6992 = vld [vmem:[%s400 + $0x328] sm:$0xff]
      %v6993 = vld [vmem:[%s400 + $0x330] sm:$0xff]
      %v6994 = vld [vmem:[%s400 + $0x338] sm:$0xff]
      %v6995 = vld [vmem:[%s400 + $0x340] sm:$0xff]
      %v6996 = vld [vmem:[%s400 + $0x348] sm:$0xff]
      %v6997 = vld [vmem:[%s400 + $0x350] sm:$0xff]
      %v6998 = vld [vmem:[%s400 + $0x358] sm:$0xff]
      %v6999 = vld [vmem:[%s400 + $0x360] sm:$0xff]
      %v7000 = vld [vmem:[%s400 + $0x368] sm:$0xff]
      %v7001 = vld [vmem:[%s400 + $0x370] sm:$0xff]
      %v7002 = vld [vmem:[%s400 + $0x378] sm:$0xff]
      %v7003 = vld [vmem:[%s400 + $0x380] sm:$0xff]
      %v7004 = vld [vmem:[%s400 + $0x388] sm:$0xff]
      %v7005 = vld [vmem:[%s400 + $0x390] sm:$0xff]
      %v7006 = vld [vmem:[%s400 + $0x398] sm:$0xff]
      %v7007 = vld [vmem:[%s400 + $0x3a0] sm:$0xff]
      %v7008 = vld [vmem:[%s400 + $0x3a8] sm:$0xff]
      %v7009 = vld [vmem:[%s400 + $0x3b0] sm:$0xff]
      %v7010 = vld [vmem:[%s400 + $0x3b8] sm:$0xff]
      %v7011 = vld [vmem:[%s400 + $0x3c0] sm:$0xff]
      %v7012 = vld [vmem:[%s400 + $0x3c8] sm:$0xff]
      %v7013 = vld [vmem:[%s400 + $0x3d0] sm:$0xff]
      %v7014 = vld [vmem:[%s400 + $0x3d8] sm:$0xff]
      %v7015 = vld [vmem:[%s400 + $0x3e0] sm:$0xff]
      %v7016 = vld [vmem:[%s400 + $0x3e8] sm:$0xff]
      %v7017 = vld [vmem:[%s400 + $0x3f0] sm:$0xff]
      %v7018 = vld [vmem:[%s400 + $0x3f8] sm:$0xff]
      %v7147 = vunpack.c.l.b16 %v6891
      %v7148 = vunpack.c.h.b16 %v6891
      %v7149 = vunpack.c.l.b16 %v6892
      %v7150 = vunpack.c.h.b16 %v6892
      %v7151 = vunpack.c.l.b16 %v6893
      %v7152 = vunpack.c.h.b16 %v6893
      %v7153 = vunpack.c.l.b16 %v6894
      %v7154 = vunpack.c.h.b16 %v6894
      %v7155 = vunpack.c.l.b16 %v6895
      %v7156 = vunpack.c.h.b16 %v6895
      %v7157 = vunpack.c.l.b16 %v6896
      %v7158 = vunpack.c.h.b16 %v6896
      %v7159 = vunpack.c.l.b16 %v6897
      %v7160 = vunpack.c.h.b16 %v6897
      %v7161 = vunpack.c.l.b16 %v6898
      %v7162 = vunpack.c.h.b16 %v6898
      %v7163 = vunpack.c.l.b16 %v6899
      %v7164 = vunpack.c.h.b16 %v6899
      %v7165 = vunpack.c.l.b16 %v6900
      %v7166 = vunpack.c.h.b16 %v6900
      %v7167 = vunpack.c.l.b16 %v6901
      %v7168 = vunpack.c.h.b16 %v6901
      %v7169 = vunpack.c.l.b16 %v6902
      %v7170 = vunpack.c.h.b16 %v6902
      %v7171 = vunpack.c.l.b16 %v6903
      %v7172 = vunpack.c.h.b16 %v6903
      %v7173 = vunpack.c.l.b16 %v6904
      %v7174 = vunpack.c.h.b16 %v6904
      %v7175 = vunpack.c.l.b16 %v6905
      %v7176 = vunpack.c.h.b16 %v6905
      %v7177 = vunpack.c.l.b16 %v6906
      %v7178 = vunpack.c.h.b16 %v6906
      %v7179 = vunpack.c.l.b16 %v6907
      %v7180 = vunpack.c.h.b16 %v6907
      %v7181 = vunpack.c.l.b16 %v6908
      %v7182 = vunpack.c.h.b16 %v6908
      %v7183 = vunpack.c.l.b16 %v6909
      %v7184 = vunpack.c.h.b16 %v6909
      %v7185 = vunpack.c.l.b16 %v6910
      %v7186 = vunpack.c.h.b16 %v6910
      %v7187 = vunpack.c.l.b16 %v6911
      %v7188 = vunpack.c.h.b16 %v6911
      %v7189 = vunpack.c.l.b16 %v6912
      %v7190 = vunpack.c.h.b16 %v6912
      %v7191 = vunpack.c.l.b16 %v6913
      %v7192 = vunpack.c.h.b16 %v6913
      %v7193 = vunpack.c.l.b16 %v6914
      %v7194 = vunpack.c.h.b16 %v6914
      %v7195 = vunpack.c.l.b16 %v6915
      %v7196 = vunpack.c.h.b16 %v6915
      %v7197 = vunpack.c.l.b16 %v6916
      %v7198 = vunpack.c.h.b16 %v6916
      %v7199 = vunpack.c.l.b16 %v6917
      %v7200 = vunpack.c.h.b16 %v6917
      %v7201 = vunpack.c.l.b16 %v6918
      %v7202 = vunpack.c.h.b16 %v6918
      %v7203 = vunpack.c.l.b16 %v6919
      %v7204 = vunpack.c.h.b16 %v6919
      %v7205 = vunpack.c.l.b16 %v6920
      %v7206 = vunpack.c.h.b16 %v6920
      %v7207 = vunpack.c.l.b16 %v6921
      %v7208 = vunpack.c.h.b16 %v6921
      %v7209 = vunpack.c.l.b16 %v6922
      %v7210 = vunpack.c.h.b16 %v6922
      %v7211 = vunpack.c.l.b16 %v6923
      %v7212 = vunpack.c.h.b16 %v6923
      %v7213 = vunpack.c.l.b16 %v6924
      %v7214 = vunpack.c.h.b16 %v6924
      %v7215 = vunpack.c.l.b16 %v6925
      %v7216 = vunpack.c.h.b16 %v6925
      %v7217 = vunpack.c.l.b16 %v6926
      %v7218 = vunpack.c.h.b16 %v6926
      %v7219 = vunpack.c.l.b16 %v6927
      %v7220 = vunpack.c.h.b16 %v6927
      %v7221 = vunpack.c.l.b16 %v6928
      %v7222 = vunpack.c.h.b16 %v6928
      %v7223 = vunpack.c.l.b16 %v6929
      %v7224 = vunpack.c.h.b16 %v6929
      %v7225 = vunpack.c.l.b16 %v6930
      %v7226 = vunpack.c.h.b16 %v6930
      %v7227 = vunpack.c.l.b16 %v6931
      %v7228 = vunpack.c.h.b16 %v6931
      %v7229 = vunpack.c.l.b16 %v6932
      %v7230 = vunpack.c.h.b16 %v6932
      %v7231 = vunpack.c.l.b16 %v6933
      %v7232 = vunpack.c.h.b16 %v6933
      %v7233 = vunpack.c.l.b16 %v6934
      %v7234 = vunpack.c.h.b16 %v6934
      %v7235 = vunpack.c.l.b16 %v6935
      %v7236 = vunpack.c.h.b16 %v6935
      %v7237 = vunpack.c.l.b16 %v6936
      %v7238 = vunpack.c.h.b16 %v6936
      %v7239 = vunpack.c.l.b16 %v6937
      %v7240 = vunpack.c.h.b16 %v6937
      %v7241 = vunpack.c.l.b16 %v6938
      %v7242 = vunpack.c.h.b16 %v6938
      %v7243 = vunpack.c.l.b16 %v6939
      %v7244 = vunpack.c.h.b16 %v6939
      %v7245 = vunpack.c.l.b16 %v6940
      %v7246 = vunpack.c.h.b16 %v6940
      %v7247 = vunpack.c.l.b16 %v6941
      %v7248 = vunpack.c.h.b16 %v6941
      %v7249 = vunpack.c.l.b16 %v6942
      %v7250 = vunpack.c.h.b16 %v6942
      %v7251 = vunpack.c.l.b16 %v6943
      %v7252 = vunpack.c.h.b16 %v6943
      %v7253 = vunpack.c.l.b16 %v6944
      %v7254 = vunpack.c.h.b16 %v6944
      %v7255 = vunpack.c.l.b16 %v6945
      %v7256 = vunpack.c.h.b16 %v6945
      %v7257 = vunpack.c.l.b16 %v6946
      %v7258 = vunpack.c.h.b16 %v6946
      %v7259 = vunpack.c.l.b16 %v6947
      %v7260 = vunpack.c.h.b16 %v6947
      %v7261 = vunpack.c.l.b16 %v6948
      %v7262 = vunpack.c.h.b16 %v6948
      %v7263 = vunpack.c.l.b16 %v6949
      %v7264 = vunpack.c.h.b16 %v6949
      %v7265 = vunpack.c.l.b16 %v6950
      %v7266 = vunpack.c.h.b16 %v6950
      %v7267 = vunpack.c.l.b16 %v6951
      %v7268 = vunpack.c.h.b16 %v6951
      %v7269 = vunpack.c.l.b16 %v6952
      %v7270 = vunpack.c.h.b16 %v6952
      %v7271 = vunpack.c.l.b16 %v6953
      %v7272 = vunpack.c.h.b16 %v6953
      %v7273 = vunpack.c.l.b16 %v6954
      %v7274 = vunpack.c.h.b16 %v6954
      %v7275 = vunpack.c.l.b16 %v6955
      %v7276 = vunpack.c.h.b16 %v6955
      %v7277 = vunpack.c.l.b16 %v6956
      %v7278 = vunpack.c.h.b16 %v6956
      %v7279 = vunpack.c.l.b16 %v6957
      %v7280 = vunpack.c.h.b16 %v6957
      %v7281 = vunpack.c.l.b16 %v6958
      %v7282 = vunpack.c.h.b16 %v6958
      %v7283 = vunpack.c.l.b16 %v6959
      %v7284 = vunpack.c.h.b16 %v6959
      %v7285 = vunpack.c.l.b16 %v6960
      %v7286 = vunpack.c.h.b16 %v6960
      %v7287 = vunpack.c.l.b16 %v6961
      %v7288 = vunpack.c.h.b16 %v6961
      %v7289 = vunpack.c.l.b16 %v6962
      %v7290 = vunpack.c.h.b16 %v6962
      %v7291 = vunpack.c.l.b16 %v6963
      %v7292 = vunpack.c.h.b16 %v6963
      %v7293 = vunpack.c.l.b16 %v6964
      %v7294 = vunpack.c.h.b16 %v6964
      %v7295 = vunpack.c.l.b16 %v6965
      %v7296 = vunpack.c.h.b16 %v6965
      %v7297 = vunpack.c.l.b16 %v6966
      %v7298 = vunpack.c.h.b16 %v6966
      %v7299 = vunpack.c.l.b16 %v6967
      %v7300 = vunpack.c.h.b16 %v6967
      %v7301 = vunpack.c.l.b16 %v6968
      %v7302 = vunpack.c.h.b16 %v6968
      %v7303 = vunpack.c.l.b16 %v6969
      %v7304 = vunpack.c.h.b16 %v6969
      %v7305 = vunpack.c.l.b16 %v6970
      %v7306 = vunpack.c.h.b16 %v6970
      %v7307 = vunpack.c.l.b16 %v6971
      %v7308 = vunpack.c.h.b16 %v6971
      %v7309 = vunpack.c.l.b16 %v6972
      %v7310 = vunpack.c.h.b16 %v6972
      %v7311 = vunpack.c.l.b16 %v6973
      %v7312 = vunpack.c.h.b16 %v6973
      %v7313 = vunpack.c.l.b16 %v6974
      %v7314 = vunpack.c.h.b16 %v6974
      %v7315 = vunpack.c.l.b16 %v6975
      %v7316 = vunpack.c.h.b16 %v6975
      %v7317 = vunpack.c.l.b16 %v6976
      %v7318 = vunpack.c.h.b16 %v6976
      %v7319 = vunpack.c.l.b16 %v6977
      %v7320 = vunpack.c.h.b16 %v6977
      %v7321 = vunpack.c.l.b16 %v6978
      %v7322 = vunpack.c.h.b16 %v6978
      %v7323 = vunpack.c.l.b16 %v6979
      %v7324 = vunpack.c.h.b16 %v6979
      %v7325 = vunpack.c.l.b16 %v6980
      %v7326 = vunpack.c.h.b16 %v6980
      %v7327 = vunpack.c.l.b16 %v6981
      %v7328 = vunpack.c.h.b16 %v6981
      %v7329 = vunpack.c.l.b16 %v6982
      %v7330 = vunpack.c.h.b16 %v6982
      %v7331 = vunpack.c.l.b16 %v6983
      %v7332 = vunpack.c.h.b16 %v6983
      %v7333 = vunpack.c.l.b16 %v6984
      %v7334 = vunpack.c.h.b16 %v6984
      %v7335 = vunpack.c.l.b16 %v6985
      %v7336 = vunpack.c.h.b16 %v6985
      %v7337 = vunpack.c.l.b16 %v6986
      %v7338 = vunpack.c.h.b16 %v6986
      %v7339 = vunpack.c.l.b16 %v6987
      %v7340 = vunpack.c.h.b16 %v6987
      %v7341 = vunpack.c.l.b16 %v6988
      %v7342 = vunpack.c.h.b16 %v6988
      %v7343 = vunpack.c.l.b16 %v6989
      %v7344 = vunpack.c.h.b16 %v6989
      %v7345 = vunpack.c.l.b16 %v6990
      %v7346 = vunpack.c.h.b16 %v6990
      %v7347 = vunpack.c.l.b16 %v6991
      %v7348 = vunpack.c.h.b16 %v6991
      %v7349 = vunpack.c.l.b16 %v6992
      %v7350 = vunpack.c.h.b16 %v6992
      %v7351 = vunpack.c.l.b16 %v6993
      %v7352 = vunpack.c.h.b16 %v6993
      %v7353 = vunpack.c.l.b16 %v6994
      %v7354 = vunpack.c.h.b16 %v6994
      %v7355 = vunpack.c.l.b16 %v6995
      %v7356 = vunpack.c.h.b16 %v6995
      %v7357 = vunpack.c.l.b16 %v6996
      %v7358 = vunpack.c.h.b16 %v6996
      %v7359 = vunpack.c.l.b16 %v6997
      %v7360 = vunpack.c.h.b16 %v6997
      %v7361 = vunpack.c.l.b16 %v6998
      %v7362 = vunpack.c.h.b16 %v6998
      %v7363 = vunpack.c.l.b16 %v6999
      %v7364 = vunpack.c.h.b16 %v6999
      %v7365 = vunpack.c.l.b16 %v7000
      %v7366 = vunpack.c.h.b16 %v7000
      %v7367 = vunpack.c.l.b16 %v7001
      %v7368 = vunpack.c.h.b16 %v7001
      %v7369 = vunpack.c.l.b16 %v7002
      %v7370 = vunpack.c.h.b16 %v7002
      %v7371 = vunpack.c.l.b16 %v7003
      %v7372 = vunpack.c.h.b16 %v7003
      %v7373 = vunpack.c.l.b16 %v7004
      %v7374 = vunpack.c.h.b16 %v7004
      %v7375 = vunpack.c.l.b16 %v7005
      %v7376 = vunpack.c.h.b16 %v7005
      %v7377 = vunpack.c.l.b16 %v7006
      %v7378 = vunpack.c.h.b16 %v7006
      %v7379 = vunpack.c.l.b16 %v7007
      %v7380 = vunpack.c.h.b16 %v7007
      %v7381 = vunpack.c.l.b16 %v7008
      %v7382 = vunpack.c.h.b16 %v7008
      %v7383 = vunpack.c.l.b16 %v7009
      %v7384 = vunpack.c.h.b16 %v7009
      %v7385 = vunpack.c.l.b16 %v7010
      %v7386 = vunpack.c.h.b16 %v7010
      %v7387 = vunpack.c.l.b16 %v7011
      %v7388 = vunpack.c.h.b16 %v7011
      %v7389 = vunpack.c.l.b16 %v7012
      %v7390 = vunpack.c.h.b16 %v7012
      %v7391 = vunpack.c.l.b16 %v7013
      %v7392 = vunpack.c.h.b16 %v7013
      %v7393 = vunpack.c.l.b16 %v7014
      %v7394 = vunpack.c.h.b16 %v7014
      %v7395 = vunpack.c.l.b16 %v7015
      %v7396 = vunpack.c.h.b16 %v7015
      %v7397 = vunpack.c.l.b16 %v7016
      %v7398 = vunpack.c.h.b16 %v7016
      %v7399 = vunpack.c.l.b16 %v7017
      %v7400 = vunpack.c.h.b16 %v7017
      %v7401 = vunpack.c.l.b16 %v7018
      %v7402 = vunpack.c.h.b16 %v7018
      %v7403 = vpack.c.b16 %v7155, %v7147
      %v7404 = vpack.c.b16 %v7156, %v7148
      %v7405 = vpack.c.b16 %v7157, %v7149
      %v7406 = vpack.c.b16 %v7158, %v7150
      %v7407 = vpack.c.b16 %v7159, %v7151
      %v7408 = vpack.c.b16 %v7160, %v7152
      %v7409 = vpack.c.b16 %v7161, %v7153
      %v7410 = vpack.c.b16 %v7162, %v7154
      %v7411 = vpack.c.b16 %v7171, %v7163
      %v7412 = vpack.c.b16 %v7172, %v7164
      %v7413 = vpack.c.b16 %v7173, %v7165
      %v7414 = vpack.c.b16 %v7174, %v7166
      %v7415 = vpack.c.b16 %v7175, %v7167
      %v7416 = vpack.c.b16 %v7176, %v7168
      %v7417 = vpack.c.b16 %v7177, %v7169
      %v7418 = vpack.c.b16 %v7178, %v7170
      %v7419 = vpack.c.b16 %v7187, %v7179
      %v7420 = vpack.c.b16 %v7188, %v7180
      %v7421 = vpack.c.b16 %v7189, %v7181
      %v7422 = vpack.c.b16 %v7190, %v7182
      %v7423 = vpack.c.b16 %v7191, %v7183
      %v7424 = vpack.c.b16 %v7192, %v7184
      %v7425 = vpack.c.b16 %v7193, %v7185
      %v7426 = vpack.c.b16 %v7194, %v7186
      %v7427 = vpack.c.b16 %v7203, %v7195
      %v7428 = vpack.c.b16 %v7204, %v7196
      %v7429 = vpack.c.b16 %v7205, %v7197
      %v7430 = vpack.c.b16 %v7206, %v7198
      %v7431 = vpack.c.b16 %v7207, %v7199
      %v7432 = vpack.c.b16 %v7208, %v7200
      %v7433 = vpack.c.b16 %v7209, %v7201
      %v7434 = vpack.c.b16 %v7210, %v7202
      %v7435 = vpack.c.b16 %v7219, %v7211
      %v7436 = vpack.c.b16 %v7220, %v7212
      %v7437 = vpack.c.b16 %v7221, %v7213
      %v7438 = vpack.c.b16 %v7222, %v7214
      %v7439 = vpack.c.b16 %v7223, %v7215
      %v7440 = vpack.c.b16 %v7224, %v7216
      %v7441 = vpack.c.b16 %v7225, %v7217
      %v7442 = vpack.c.b16 %v7226, %v7218
      %v7443 = vpack.c.b16 %v7235, %v7227
      %v7444 = vpack.c.b16 %v7236, %v7228
      %v7445 = vpack.c.b16 %v7237, %v7229
      %v7446 = vpack.c.b16 %v7238, %v7230
      %v7447 = vpack.c.b16 %v7239, %v7231
      %v7448 = vpack.c.b16 %v7240, %v7232
      %v7449 = vpack.c.b16 %v7241, %v7233
      %v7450 = vpack.c.b16 %v7242, %v7234
      %v7451 = vpack.c.b16 %v7251, %v7243
      %v7452 = vpack.c.b16 %v7252, %v7244
      %v7453 = vpack.c.b16 %v7253, %v7245
      %v7454 = vpack.c.b16 %v7254, %v7246
      %v7455 = vpack.c.b16 %v7255, %v7247
      %v7456 = vpack.c.b16 %v7256, %v7248
      %v7457 = vpack.c.b16 %v7257, %v7249
      %v7458 = vpack.c.b16 %v7258, %v7250
      %v7459 = vpack.c.b16 %v7267, %v7259
      %v7460 = vpack.c.b16 %v7268, %v7260
      %v7461 = vpack.c.b16 %v7269, %v7261
      %v7462 = vpack.c.b16 %v7270, %v7262
      %v7463 = vpack.c.b16 %v7271, %v7263
      %v7464 = vpack.c.b16 %v7272, %v7264
      %v7465 = vpack.c.b16 %v7273, %v7265
      %v7466 = vpack.c.b16 %v7274, %v7266
      %v7467 = vpack.c.b16 %v7283, %v7275
      %v7468 = vpack.c.b16 %v7284, %v7276
      %v7469 = vpack.c.b16 %v7285, %v7277
      %v7470 = vpack.c.b16 %v7286, %v7278
      %v7471 = vpack.c.b16 %v7287, %v7279
      %v7472 = vpack.c.b16 %v7288, %v7280
      %v7473 = vpack.c.b16 %v7289, %v7281
      %v7474 = vpack.c.b16 %v7290, %v7282
      %v7475 = vpack.c.b16 %v7299, %v7291
      %v7476 = vpack.c.b16 %v7300, %v7292
      %v7477 = vpack.c.b16 %v7301, %v7293
      %v7478 = vpack.c.b16 %v7302, %v7294
      %v7479 = vpack.c.b16 %v7303, %v7295
      %v7480 = vpack.c.b16 %v7304, %v7296
      %v7481 = vpack.c.b16 %v7305, %v7297
      %v7482 = vpack.c.b16 %v7306, %v7298
      %v7483 = vpack.c.b16 %v7315, %v7307
      %v7484 = vpack.c.b16 %v7316, %v7308
      %v7485 = vpack.c.b16 %v7317, %v7309
      %v7486 = vpack.c.b16 %v7318, %v7310
      %v7487 = vpack.c.b16 %v7319, %v7311
      %v7488 = vpack.c.b16 %v7320, %v7312
      %v7489 = vpack.c.b16 %v7321, %v7313
      %v7490 = vpack.c.b16 %v7322, %v7314
      %v7491 = vpack.c.b16 %v7331, %v7323
      %v7492 = vpack.c.b16 %v7332, %v7324
      %v7493 = vpack.c.b16 %v7333, %v7325
      %v7494 = vpack.c.b16 %v7334, %v7326
      %v7495 = vpack.c.b16 %v7335, %v7327
      %v7496 = vpack.c.b16 %v7336, %v7328
      %v7497 = vpack.c.b16 %v7337, %v7329
      %v7498 = vpack.c.b16 %v7338, %v7330
      %v7499 = vpack.c.b16 %v7347, %v7339
      %v7500 = vpack.c.b16 %v7348, %v7340
      %v7501 = vpack.c.b16 %v7349, %v7341
      %v7502 = vpack.c.b16 %v7350, %v7342
      %v7503 = vpack.c.b16 %v7351, %v7343
      %v7504 = vpack.c.b16 %v7352, %v7344
      %v7505 = vpack.c.b16 %v7353, %v7345
      %v7506 = vpack.c.b16 %v7354, %v7346
      %v7507 = vpack.c.b16 %v7363, %v7355
      %v7508 = vpack.c.b16 %v7364, %v7356
      %v7509 = vpack.c.b16 %v7365, %v7357
      %v7510 = vpack.c.b16 %v7366, %v7358
      %v7511 = vpack.c.b16 %v7367, %v7359
      %v7512 = vpack.c.b16 %v7368, %v7360
      %v7513 = vpack.c.b16 %v7369, %v7361
      %v7514 = vpack.c.b16 %v7370, %v7362
      %v7515 = vpack.c.b16 %v7379, %v7371
      %v7516 = vpack.c.b16 %v7380, %v7372
      %v7517 = vpack.c.b16 %v7381, %v7373
      %v7518 = vpack.c.b16 %v7382, %v7374
      %v7519 = vpack.c.b16 %v7383, %v7375
      %v7520 = vpack.c.b16 %v7384, %v7376
      %v7521 = vpack.c.b16 %v7385, %v7377
      %v7522 = vpack.c.b16 %v7386, %v7378
      %v7523 = vpack.c.b16 %v7395, %v7387
      %v7524 = vpack.c.b16 %v7396, %v7388
      %v7525 = vpack.c.b16 %v7397, %v7389
      %v7526 = vpack.c.b16 %v7398, %v7390
      %v7527 = vpack.c.b16 %v7399, %v7391
      %v7528 = vpack.c.b16 %v7400, %v7392
      %v7529 = vpack.c.b16 %v7401, %v7393
      %v7530 = vpack.c.b16 %v7402, %v7394
      %7659 = vmatprep.subr.bf16.mxu0 %v7460
      %7660 = vmatpush1.bf16.msra.mxu0 %v7459
      %7661 = vmatprep.subr.bf16.mxu0 %v7452
      %7662 = vmatpush1.bf16.msra.mxu0 %v7451
      %7663 = vmatprep.subr.bf16.mxu0 %v7444
      %7664 = vmatpush1.bf16.msra.mxu0 %v7443
      %7665 = vmatprep.subr.bf16.mxu0 %v7436
      %7666 = vmatpush1.bf16.msra.mxu0 %v7435
      %7667 = vmatprep.subr.bf16.mxu0 %v7428
      %7668 = vmatpush1.bf16.msra.mxu0 %v7427
      %7669 = vmatprep.subr.bf16.mxu0 %v7420
      %7670 = vmatpush1.bf16.msra.mxu0 %v7419
      %7671 = vmatprep.subr.bf16.mxu0 %v7412
      %7672 = vmatpush1.bf16.msra.mxu0 %v7411
      %7673 = vmatprep.subr.bf16.mxu0 %v7404
      %7674 = vmatpush1.bf16.msra.mxu0 %v7403
      %7675 = vmatprep.subr.bf16.mxu0 %v7524
      %7676 = vmatpush2.bf16.msra.mxu0 %v7523
      %7677 = vmatprep.subr.bf16.mxu0 %v7516
      %7678 = vmatpush2.bf16.msra.mxu0 %v7515
      %7679 = vmatprep.subr.bf16.mxu0 %v7508
      %7680 = vmatpush2.bf16.msra.mxu0 %v7507
      %7681 = vmatprep.subr.bf16.mxu0 %v7500
      %7682 = vmatpush2.bf16.msra.mxu0 %v7499
      %7683 = vmatprep.subr.bf16.mxu0 %v7492
      %7684 = vmatpush2.bf16.msra.mxu0 %v7491
      %7685 = vmatprep.subr.bf16.mxu0 %v7484
      %7686 = vmatpush2.bf16.msra.mxu0 %v7483
      %7687 = vmatprep.subr.bf16.mxu0 %v7476
      %7688 = vmatpush2.bf16.msra.mxu0 %v7475
      %7689 = vmatprep.subr.bf16.mxu0 %v7468
      %7690 = vmatpush2.bf16.msra.mxu0 %v7467
      %7691 = vmatprep.mubr.bf16.mxu0 %v6882
      %7692 = vmatmul.mubr.bf16.gmra.mxu0 %v6876
      %v7693 = vpop.f32.mrf.mxu0
      %v7694 = vadd.f32 0.0, %v7693
      %v7695 = vpop.f32.mrf.mxu0
      %v7696 = vadd.f32 0.0, %v7695
      %v7697 = vpop.f32.mrf.mxu0
      %v7698 = vpop.f32.mrf.mxu0
      %7699 = vdwg.mxu0
      %7700 = vmatprep.subr.bf16.mxu0 %v7462
      %7701 = vmatpush1.bf16.msra.mxu0 %v7461
      %7702 = vmatprep.subr.bf16.mxu0 %v7454
      %7703 = vmatpush1.bf16.msra.mxu0 %v7453
      %7704 = vmatprep.subr.bf16.mxu0 %v7446
      %7705 = vmatpush1.bf16.msra.mxu0 %v7445
      %7706 = vmatprep.subr.bf16.mxu0 %v7438
      %7707 = vmatpush1.bf16.msra.mxu0 %v7437
      %7708 = vmatprep.subr.bf16.mxu0 %v7430
      %7709 = vmatpush1.bf16.msra.mxu0 %v7429
      %7710 = vmatprep.subr.bf16.mxu0 %v7422
      %7711 = vmatpush1.bf16.msra.mxu0 %v7421
      %7712 = vmatprep.subr.bf16.mxu0 %v7414
      %7713 = vmatpush1.bf16.msra.mxu0 %v7413
      %7714 = vmatprep.subr.bf16.mxu0 %v7406
      %7715 = vmatpush1.bf16.msra.mxu0 %v7405
      %7716 = vmatprep.subr.bf16.mxu0 %v7526
      %7717 = vmatpush2.bf16.msra.mxu0 %v7525
      %7718 = vmatprep.subr.bf16.mxu0 %v7518
      %7719 = vmatpush2.bf16.msra.mxu0 %v7517
      %7720 = vmatprep.subr.bf16.mxu0 %v7510
      %7721 = vmatpush2.bf16.msra.mxu0 %v7509
      %7722 = vmatprep.subr.bf16.mxu0 %v7502
      %7723 = vmatpush2.bf16.msra.mxu0 %v7501
      %7724 = vmatprep.subr.bf16.mxu0 %v7494
      %7725 = vmatpush2.bf16.msra.mxu0 %v7493
      %7726 = vmatprep.subr.bf16.mxu0 %v7486
      %7727 = vmatpush2.bf16.msra.mxu0 %v7485
      %7728 = vmatprep.subr.bf16.mxu0 %v7478
      %7729 = vmatpush2.bf16.msra.mxu0 %v7477
      %7730 = vmatprep.subr.bf16.mxu0 %v7470
      %7731 = vmatpush2.bf16.msra.mxu0 %v7469
      %7732 = vmatprep.mubr.bf16.mxu0 %v6882
      %7733 = vmatmul.mubr.bf16.gmra.mxu0 %v6876
      %v7734 = vpop.f32.mrf.mxu0
      %v7735 = vadd.f32 0.0, %v7734
      %v7736 = vpop.f32.mrf.mxu0
      %v7737 = vadd.f32 0.0, %v7736
      %v7738 = vpop.f32.mrf.mxu0
      %v7739 = vpop.f32.mrf.mxu0
      %7740 = vdwg.mxu0
      %7741 = vmatprep.subr.bf16.mxu0 %v7464
      %7742 = vmatpush1.bf16.msra.mxu0 %v7463
      %7743 = vmatprep.subr.bf16.mxu0 %v7456
      %7744 = vmatpush1.bf16.msra.mxu0 %v7455
      %7745 = vmatprep.subr.bf16.mxu0 %v7448
      %7746 = vmatpush1.bf16.msra.mxu0 %v7447
      %7747 = vmatprep.subr.bf16.mxu0 %v7440
      %7748 = vmatpush1.bf16.msra.mxu0 %v7439
      %7749 = vmatprep.subr.bf16.mxu0 %v7432
      %7750 = vmatpush1.bf16.msra.mxu0 %v7431
      %7751 = vmatprep.subr.bf16.mxu0 %v7424
      %7752 = vmatpush1.bf16.msra.mxu0 %v7423
      %7753 = vmatprep.subr.bf16.mxu0 %v7416
      %7754 = vmatpush1.bf16.msra.mxu0 %v7415
      %7755 = vmatprep.subr.bf16.mxu0 %v7408
      %7756 = vmatpush1.bf16.msra.mxu0 %v7407
      %7757 = vmatprep.subr.bf16.mxu0 %v7528
      %7758 = vmatpush2.bf16.msra.mxu0 %v7527
      %7759 = vmatprep.subr.bf16.mxu0 %v7520
      %7760 = vmatpush2.bf16.msra.mxu0 %v7519
      %7761 = vmatprep.subr.bf16.mxu0 %v7512
      %7762 = vmatpush2.bf16.msra.mxu0 %v7511
      %7763 = vmatprep.subr.bf16.mxu0 %v7504
      %7764 = vmatpush2.bf16.msra.mxu0 %v7503
      %7765 = vmatprep.subr.bf16.mxu0 %v7496
      %7766 = vmatpush2.bf16.msra.mxu0 %v7495
      %7767 = vmatprep.subr.bf16.mxu0 %v7488
      %7768 = vmatpush2.bf16.msra.mxu0 %v7487
      %7769 = vmatprep.subr.bf16.mxu0 %v7480
      %7770 = vmatpush2.bf16.msra.mxu0 %v7479
      %7771 = vmatprep.subr.bf16.mxu0 %v7472
      %7772 = vmatpush2.bf16.msra.mxu0 %v7471
      %7773 = vmatprep.mubr.bf16.mxu0 %v6882
      %7774 = vmatmul.mubr.bf16.gmra.mxu0 %v6876
      %v7775 = vpop.f32.mrf.mxu0
      %v7776 = vadd.f32 0.0, %v7775
      %v7777 = vpop.f32.mrf.mxu0
      %v7778 = vadd.f32 0.0, %v7777
      %v7779 = vpop.f32.mrf.mxu0
      %v7780 = vpop.f32.mrf.mxu0
      %7781 = vdwg.mxu0
      %7782 = vmatprep.subr.bf16.mxu0 %v7466
      %7783 = vmatpush1.bf16.msra.mxu0 %v7465
      %7784 = vmatprep.subr.bf16.mxu0 %v7458
      %7785 = vmatpush1.bf16.msra.mxu0 %v7457
      %7786 = vmatprep.subr.bf16.mxu0 %v7450
      %7787 = vmatpush1.bf16.msra.mxu0 %v7449
      %7788 = vmatprep.subr.bf16.mxu0 %v7442
      %7789 = vmatpush1.bf16.msra.mxu0 %v7441
      %7790 = vmatprep.subr.bf16.mxu0 %v7434
      %7791 = vmatpush1.bf16.msra.mxu0 %v7433
      %7792 = vmatprep.subr.bf16.mxu0 %v7426
      %7793 = vmatpush1.bf16.msra.mxu0 %v7425
      %7794 = vmatprep.subr.bf16.mxu0 %v7418
      %7795 = vmatpush1.bf16.msra.mxu0 %v7417
      %7796 = vmatprep.subr.bf16.mxu0 %v7410
      %7797 = vmatpush1.bf16.msra.mxu0 %v7409
      %7798 = vmatprep.subr.bf16.mxu0 %v7530
      %7799 = vmatpush2.bf16.msra.mxu0 %v7529
      %7800 = vmatprep.subr.bf16.mxu0 %v7522
      %7801 = vmatpush2.bf16.msra.mxu0 %v7521
      %7802 = vmatprep.subr.bf16.mxu0 %v7514
      %7803 = vmatpush2.bf16.msra.mxu0 %v7513
      %7804 = vmatprep.subr.bf16.mxu0 %v7506
      %7805 = vmatpush2.bf16.msra.mxu0 %v7505
      %7806 = vmatprep.subr.bf16.mxu0 %v7498
      %7807 = vmatpush2.bf16.msra.mxu0 %v7497
      %7808 = vmatprep.subr.bf16.mxu0 %v7490
      %7809 = vmatpush2.bf16.msra.mxu0 %v7489
      %7810 = vmatprep.subr.bf16.mxu0 %v7482
      %7811 = vmatpush2.bf16.msra.mxu0 %v7481
      %7812 = vmatprep.subr.bf16.mxu0 %v7474
      %7813 = vmatpush2.bf16.msra.mxu0 %v7473
      %7814 = vmatprep.mubr.bf16.mxu0 %v6882
      %7815 = vmatmul.mubr.bf16.gmra.mxu0 %v6876
      %v7816 = vpop.f32.mrf.mxu0
      %v7817 = vadd.f32 0.0, %v7816
      %v7818 = vpop.f32.mrf.mxu0
      %v7819 = vadd.f32 0.0, %v7818
      %v7820 = vpop.f32.mrf.mxu0
      %v7821 = vpop.f32.mrf.mxu0
      %7822 = vdwg.mxu0
      %v7823 = vadd.f32 %v6883, %v7694
      %v7824 = vadd.f32 %v6884, %v7696
      %v7825 = vadd.f32 %v6885, %v7735
      %v7826 = vadd.f32 %v6886, %v7737
      %v7827 = vadd.f32 %v6887, %v7776
      %v7828 = vadd.f32 %v6888, %v7778
      %v7829 = vadd.f32 %v6889, %v7817
      %v7830 = vadd.f32 %v6890, %v7819
      %7831 = vst [vmem:[#allocation3] sm:$0xff] %v7823
      %7832 = vst [vmem:[#allocation3 + $0x8] sm:$0xff] %v7824
      %7833 = vst [vmem:[#allocation3 + $0x10] sm:$0xff] %v7825
      %7834 = vst [vmem:[#allocation3 + $0x18] sm:$0xff] %v7826
      %7835 = vst [vmem:[#allocation3 + $0x20] sm:$0xff] %v7827
      %7836 = vst [vmem:[#allocation3 + $0x28] sm:$0xff] %v7828
      %7837 = vst [vmem:[#allocation3 + $0x30] sm:$0xff] %v7829
      %7838 = vst [vmem:[#allocation3 + $0x38] sm:$0xff] %v7830
      %p7839 = scmp.eq.s32.totalorder %s25, 7
      // Predicated region
      $region73: #{discriminator_forward.1} parent=67 // pred_check
        %p7840 = pneg %p7839
      $region74: #{discriminator_forward.1} parent=67 // pred_check_branch
        %7842 = sbr.rel (%p7840) target = $region76
      $region75: #{discriminator_forward.1} parent=67 // pred_region
        %v7843 = vld [vmem:[#allocation3] sm:$0xff]
        %v7844 = vld [vmem:[#allocation3 + $0x8] sm:$0xff]
        %v7845 = vld [vmem:[#allocation3 + $0x10] sm:$0xff]
        %v7846 = vld [vmem:[#allocation3 + $0x18] sm:$0xff]
        %v7847 = vld [vmem:[#allocation3 + $0x20] sm:$0xff]
        %v7848 = vld [vmem:[#allocation3 + $0x28] sm:$0xff]
        %v7849 = vld [vmem:[#allocation3 + $0x30] sm:$0xff]
        %v7850 = vld [vmem:[#allocation3 + $0x38] sm:$0xff]
        %v7851 = vld [vmem:[%s7] sm:$0xff]
        %v7853 = vlaneseq
        %v7854 = vshrl.u32 %v7853, 7
        %v7855 = vsub.s32 0, %v7854
        %v7856 = vrot.slane %v7851, %v7855
        %v7857 = vlaneseq
        %v7858 = vshrl.u32 %v7857, 7
        %v7859 = vsub.s32 1, %v7858
        %v7860 = vrot.slane %v7851, %v7859
        %v7861 = vlaneseq
        %v7862 = vshrl.u32 %v7861, 7
        %v7863 = vsub.s32 2, %v7862
        %v7864 = vrot.slane %v7851, %v7863
        %v7865 = vlaneseq
        %v7866 = vshrl.u32 %v7865, 7
        %v7867 = vsub.s32 3, %v7866
        %v7868 = vrot.slane %v7851, %v7867
        %v7869 = vlaneseq
        %v7870 = vshrl.u32 %v7869, 7
        %v7871 = vsub.s32 4, %v7870
        %v7872 = vrot.slane %v7851, %v7871
        %v7873 = vlaneseq
        %v7874 = vshrl.u32 %v7873, 7
        %v7875 = vsub.s32 5, %v7874
        %v7876 = vrot.slane %v7851, %v7875
        %v7877 = vlaneseq
        %v7878 = vshrl.u32 %v7877, 7
        %v7879 = vsub.s32 6, %v7878
        %v7880 = vrot.slane %v7851, %v7879
        %v7881 = vlaneseq
        %v7882 = vshrl.u32 %v7881, 7
        %v7883 = vsub.s32 7, %v7882
        %v7884 = vrot.slane %v7851, %v7883
        %v7893 = vadd.f32 %v7843, %v7856
        %v7894 = vadd.f32 %v7844, %v7860
        %v7895 = vadd.f32 %v7845, %v7864
        %v7896 = vadd.f32 %v7846, %v7868
        %v7897 = vadd.f32 %v7847, %v7872
        %v7898 = vadd.f32 %v7848, %v7876
        %v7899 = vadd.f32 %v7849, %v7880
        %v7900 = vadd.f32 %v7850, %v7884
        %v7901 = vrot.slane %v7893, 4
        %v7902 = vadd.f32 %v7893, %v7901
        %v7903 = vrot.slane %v7902, 2
        %v7904 = vadd.f32 %v7902, %v7903
        %v7905 = vrot.slane %v7904, 1
        %v7906 = vadd.f32 %v7904, %v7905
        %v7907 = vrot.slane %v7894, 4
        %v7908 = vadd.f32 %v7894, %v7907
        %v7909 = vrot.slane %v7908, 2
        %v7910 = vadd.f32 %v7908, %v7909
        %v7911 = vrot.slane %v7910, 1
        %v7912 = vadd.f32 %v7910, %v7911
        %v7913 = vrot.slane %v7895, 4
        %v7914 = vadd.f32 %v7895, %v7913
        %v7915 = vrot.slane %v7914, 2
        %v7916 = vadd.f32 %v7914, %v7915
        %v7917 = vrot.slane %v7916, 1
        %v7918 = vadd.f32 %v7916, %v7917
        %v7919 = vrot.slane %v7896, 4
        %v7920 = vadd.f32 %v7896, %v7919
        %v7921 = vrot.slane %v7920, 2
        %v7922 = vadd.f32 %v7920, %v7921
        %v7923 = vrot.slane %v7922, 1
        %v7924 = vadd.f32 %v7922, %v7923
        %v7925 = vrot.slane %v7897, 4
        %v7926 = vadd.f32 %v7897, %v7925
        %v7927 = vrot.slane %v7926, 2
        %v7928 = vadd.f32 %v7926, %v7927
        %v7929 = vrot.slane %v7928, 1
        %v7930 = vadd.f32 %v7928, %v7929
        %v7931 = vrot.slane %v7898, 4
        %v7932 = vadd.f32 %v7898, %v7931
        %v7933 = vrot.slane %v7932, 2
        %v7934 = vadd.f32 %v7932, %v7933
        %v7935 = vrot.slane %v7934, 1
        %v7936 = vadd.f32 %v7934, %v7935
        %v7937 = vrot.slane %v7899, 4
        %v7938 = vadd.f32 %v7899, %v7937
        %v7939 = vrot.slane %v7938, 2
        %v7940 = vadd.f32 %v7938, %v7939
        %v7941 = vrot.slane %v7940, 1
        %v7942 = vadd.f32 %v7940, %v7941
        %v7943 = vrot.slane %v7900, 4
        %v7944 = vadd.f32 %v7900, %v7943
        %v7945 = vrot.slane %v7944, 2
        %v7946 = vadd.f32 %v7944, %v7945
        %v7947 = vrot.slane %v7946, 1
        %v7948 = vadd.f32 %v7946, %v7947
        %v7949 = vmul.f32 %v7906, 0.125
        %v7950 = vmul.f32 %v7912, 0.125
        %v7951 = vmul.f32 %v7918, 0.125
        %v7952 = vmul.f32 %v7924, 0.125
        %v7953 = vmul.f32 %v7930, 0.125
        %v7954 = vmul.f32 %v7936, 0.125
        %v7955 = vmul.f32 %v7942, 0.125
        %v7956 = vmul.f32 %v7948, 0.125
        %v7957 = vmul.f32 %v7893, %v7893
        %v7958 = vmul.f32 %v7894, %v7894
        %v7959 = vmul.f32 %v7895, %v7895
        %v7960 = vmul.f32 %v7896, %v7896
        %v7961 = vmul.f32 %v7897, %v7897
        %v7962 = vmul.f32 %v7898, %v7898
        %v7963 = vmul.f32 %v7899, %v7899
        %v7964 = vmul.f32 %v7900, %v7900
        %v7965 = vrot.slane %v7957, 4
        %v7966 = vadd.f32 %v7957, %v7965
        %v7967 = vrot.slane %v7966, 2
        %v7968 = vadd.f32 %v7966, %v7967
        %v7969 = vrot.slane %v7968, 1
        %v7970 = vadd.f32 %v7968, %v7969
        %v7971 = vrot.slane %v7958, 4
        %v7972 = vadd.f32 %v7958, %v7971
        %v7973 = vrot.slane %v7972, 2
        %v7974 = vadd.f32 %v7972, %v7973
        %v7975 = vrot.slane %v7974, 1
        %v7976 = vadd.f32 %v7974, %v7975
        %v7977 = vrot.slane %v7959, 4
        %v7978 = vadd.f32 %v7959, %v7977
        %v7979 = vrot.slane %v7978, 2
        %v7980 = vadd.f32 %v7978, %v7979
        %v7981 = vrot.slane %v7980, 1
        %v7982 = vadd.f32 %v7980, %v7981
        %v7983 = vrot.slane %v7960, 4
        %v7984 = vadd.f32 %v7960, %v7983
        %v7985 = vrot.slane %v7984, 2
        %v7986 = vadd.f32 %v7984, %v7985
        %v7987 = vrot.slane %v7986, 1
        %v7988 = vadd.f32 %v7986, %v7987
        %v7989 = vrot.slane %v7961, 4
        %v7990 = vadd.f32 %v7961, %v7989
        %v7991 = vrot.slane %v7990, 2
        %v7992 = vadd.f32 %v7990, %v7991
        %v7993 = vrot.slane %v7992, 1
        %v7994 = vadd.f32 %v7992, %v7993
        %v7995 = vrot.slane %v7962, 4
        %v7996 = vadd.f32 %v7962, %v7995
        %v7997 = vrot.slane %v7996, 2
        %v7998 = vadd.f32 %v7996, %v7997
        %v7999 = vrot.slane %v7998, 1
        %v8000 = vadd.f32 %v7998, %v7999
        %v8001 = vrot.slane %v7963, 4
        %v8002 = vadd.f32 %v7963, %v8001
        %v8003 = vrot.slane %v8002, 2
        %v8004 = vadd.f32 %v8002, %v8003
        %v8005 = vrot.slane %v8004, 1
        %v8006 = vadd.f32 %v8004, %v8005
        %v8007 = vrot.slane %v7964, 4
        %v8008 = vadd.f32 %v7964, %v8007
        %v8009 = vrot.slane %v8008, 2
        %v8010 = vadd.f32 %v8008, %v8009
        %v8011 = vrot.slane %v8010, 1
        %v8012 = vadd.f32 %v8010, %v8011
        %v8013 = vmul.f32 %v7970, 0.125
        %v8014 = vmul.f32 %v7976, 0.125
        %v8015 = vmul.f32 %v7982, 0.125
        %v8016 = vmul.f32 %v7988, 0.125
        %v8017 = vmul.f32 %v7994, 0.125
        %v8018 = vmul.f32 %v8000, 0.125
        %v8019 = vmul.f32 %v8006, 0.125
        %v8020 = vmul.f32 %v8012, 0.125
        %v8021 = vmul.f32 %v7949, %v7949
        %v8022 = vmul.f32 %v7950, %v7950
        %v8023 = vmul.f32 %v7951, %v7951
        %v8024 = vmul.f32 %v7952, %v7952
        %v8025 = vmul.f32 %v7953, %v7953
        %v8026 = vmul.f32 %v7954, %v7954
        %v8027 = vmul.f32 %v7955, %v7955
        %v8028 = vmul.f32 %v7956, %v7956
        %v8029 = vsub.f32 %v8013, %v8021
        %v8030 = vsub.f32 %v8014, %v8022
        %v8031 = vsub.f32 %v8015, %v8023
        %v8032 = vsub.f32 %v8016, %v8024
        %v8033 = vsub.f32 %v8017, %v8025
        %v8034 = vsub.f32 %v8018, %v8026
        %v8035 = vsub.f32 %v8019, %v8027
        %v8036 = vsub.f32 %v8020, %v8028
        %v8037 = vmax.f32 %v8029, 0.0
        %v8038 = vmax.f32 %v8030, 0.0
        %v8039 = vmax.f32 %v8031, 0.0
        %v8040 = vmax.f32 %v8032, 0.0
        %v8041 = vmax.f32 %v8033, 0.0
        %v8042 = vmax.f32 %v8034, 0.0
        %v8043 = vmax.f32 %v8035, 0.0
        %v8044 = vmax.f32 %v8036, 0.0
        %v8045 = vsub.f32 %v7893, %v7949
        %v8046 = vsub.f32 %v7894, %v7950
        %v8047 = vsub.f32 %v7895, %v7951
        %v8048 = vsub.f32 %v7896, %v7952
        %v8049 = vsub.f32 %v7897, %v7953
        %v8050 = vsub.f32 %v7898, %v7954
        %v8051 = vsub.f32 %v7899, %v7955
        %v8052 = vsub.f32 %v7900, %v7956
        %v8053 = vadd.f32 %v8037, 1e-05
        %v8054 = vadd.f32 %v8038, 1e-05
        %v8055 = vadd.f32 %v8039, 1e-05
        %v8056 = vadd.f32 %v8040, 1e-05
        %v8057 = vadd.f32 %v8041, 1e-05
        %v8058 = vadd.f32 %v8042, 1e-05
        %v8059 = vadd.f32 %v8043, 1e-05
        %v8060 = vadd.f32 %v8044, 1e-05
        %v8061 = vrsqrt.pop %v8053
        %v8062 = vrsqrt.pop %v8054
        %v8063 = vrsqrt.pop %v8055
        %v8064 = vrsqrt.pop %v8056
        %v8065 = vrsqrt.pop %v8057
        %v8066 = vrsqrt.pop %v8058
        %v8067 = vrsqrt.pop %v8059
        %v8068 = vrsqrt.pop %v8060
        %v8069 = vmul.f32 %v8045, %v8061
        %v8070 = vmul.f32 %v8046, %v8062
        %v8071 = vmul.f32 %v8047, %v8063
        %v8072 = vmul.f32 %v8048, %v8064
        %v8073 = vmul.f32 %v8049, %v8065
        %v8074 = vmul.f32 %v8050, %v8066
        %v8075 = vmul.f32 %v8051, %v8067
        %v8076 = vmul.f32 %v8052, %v8068
        %v8077 = vld [vmem:[%s8] sm:$0xff]
        %v8079 = vlaneseq
        %v8080 = vshrl.u32 %v8079, 7
        %v8081 = vsub.s32 0, %v8080
        %v8082 = vrot.slane %v8077, %v8081
        %v8083 = vlaneseq
        %v8084 = vshrl.u32 %v8083, 7
        %v8085 = vsub.s32 1, %v8084
        %v8086 = vrot.slane %v8077, %v8085
        %v8087 = vlaneseq
        %v8088 = vshrl.u32 %v8087, 7
        %v8089 = vsub.s32 2, %v8088
        %v8090 = vrot.slane %v8077, %v8089
        %v8091 = vlaneseq
        %v8092 = vshrl.u32 %v8091, 7
        %v8093 = vsub.s32 3, %v8092
        %v8094 = vrot.slane %v8077, %v8093
        %v8095 = vlaneseq
        %v8096 = vshrl.u32 %v8095, 7
        %v8097 = vsub.s32 4, %v8096
        %v8098 = vrot.slane %v8077, %v8097
        %v8099 = vlaneseq
        %v8100 = vshrl.u32 %v8099, 7
        %v8101 = vsub.s32 5, %v8100
        %v8102 = vrot.slane %v8077, %v8101
        %v8103 = vlaneseq
        %v8104 = vshrl.u32 %v8103, 7
        %v8105 = vsub.s32 6, %v8104
        %v8106 = vrot.slane %v8077, %v8105
        %v8107 = vlaneseq
        %v8108 = vshrl.u32 %v8107, 7
        %v8109 = vsub.s32 7, %v8108
        %v8110 = vrot.slane %v8077, %v8109
        %v8119 = vmul.f32 %v8069, %v8082
        %v8120 = vmul.f32 %v8070, %v8086
        %v8121 = vmul.f32 %v8071, %v8090
        %v8122 = vmul.f32 %v8072, %v8094
        %v8123 = vmul.f32 %v8073, %v8098
        %v8124 = vmul.f32 %v8074, %v8102
        %v8125 = vmul.f32 %v8075, %v8106
        %v8126 = vmul.f32 %v8076, %v8110
        %v8127 = vld [vmem:[%s9] sm:$0xff]
        %v8129 = vlaneseq
        %v8130 = vshrl.u32 %v8129, 7
        %v8131 = vsub.s32 0, %v8130
        %v8132 = vrot.slane %v8127, %v8131
        %v8133 = vlaneseq
        %v8134 = vshrl.u32 %v8133, 7
        %v8135 = vsub.s32 1, %v8134
        %v8136 = vrot.slane %v8127, %v8135
        %v8137 = vlaneseq
        %v8138 = vshrl.u32 %v8137, 7
        %v8139 = vsub.s32 2, %v8138
        %v8140 = vrot.slane %v8127, %v8139
        %v8141 = vlaneseq
        %v8142 = vshrl.u32 %v8141, 7
        %v8143 = vsub.s32 3, %v8142
        %v8144 = vrot.slane %v8127, %v8143
        %v8145 = vlaneseq
        %v8146 = vshrl.u32 %v8145, 7
        %v8147 = vsub.s32 4, %v8146
        %v8148 = vrot.slane %v8127, %v8147
        %v8149 = vlaneseq
        %v8150 = vshrl.u32 %v8149, 7
        %v8151 = vsub.s32 5, %v8150
        %v8152 = vrot.slane %v8127, %v8151
        %v8153 = vlaneseq
        %v8154 = vshrl.u32 %v8153, 7
        %v8155 = vsub.s32 6, %v8154
        %v8156 = vrot.slane %v8127, %v8155
        %v8157 = vlaneseq
        %v8158 = vshrl.u32 %v8157, 7
        %v8159 = vsub.s32 7, %v8158
        %v8160 = vrot.slane %v8127, %v8159
        %v8169 = vadd.f32 %v8119, %v8132
        %v8170 = vadd.f32 %v8120, %v8136
        %v8171 = vadd.f32 %v8121, %v8140
        %v8172 = vadd.f32 %v8122, %v8144
        %v8173 = vadd.f32 %v8123, %v8148
        %v8174 = vadd.f32 %v8124, %v8152
        %v8175 = vadd.f32 %v8125, %v8156
        %v8176 = vadd.f32 %v8126, %v8160
        %v8177 = vmul.f32 %v8169, 0.2
        %v8178 = vmul.f32 %v8170, 0.2
        %v8179 = vmul.f32 %v8171, 0.2
        %v8180 = vmul.f32 %v8172, 0.2
        %v8181 = vmul.f32 %v8173, 0.2
        %v8182 = vmul.f32 %v8174, 0.2
        %v8183 = vmul.f32 %v8175, 0.2
        %v8184 = vmul.f32 %v8176, 0.2
        %v8185 = vmax.f32 %v8169, %v8177
        %v8186 = vmax.f32 %v8170, %v8178
        %v8187 = vmax.f32 %v8171, %v8179
        %v8188 = vmax.f32 %v8172, %v8180
        %v8189 = vmax.f32 %v8173, %v8181
        %v8190 = vmax.f32 %v8174, %v8182
        %v8191 = vmax.f32 %v8175, %v8183
        %v8192 = vmax.f32 %v8176, %v8184
        %v8193 = vld [vmem:[%s10] sm:$0xff]
        %v8195 = vlaneseq
        %v8196 = vshrl.u32 %v8195, 7
        %v8197 = vsub.s32 0, %v8196
        %v8198 = vrot.slane %v8193, %v8197
        %v8199 = vlaneseq
        %v8200 = vshrl.u32 %v8199, 7
        %v8201 = vsub.s32 1, %v8200
        %v8202 = vrot.slane %v8193, %v8201
        %v8203 = vlaneseq
        %v8204 = vshrl.u32 %v8203, 7
        %v8205 = vsub.s32 2, %v8204
        %v8206 = vrot.slane %v8193, %v8205
        %v8207 = vlaneseq
        %v8208 = vshrl.u32 %v8207, 7
        %v8209 = vsub.s32 3, %v8208
        %v8210 = vrot.slane %v8193, %v8209
        %v8211 = vlaneseq
        %v8212 = vshrl.u32 %v8211, 7
        %v8213 = vsub.s32 4, %v8212
        %v8214 = vrot.slane %v8193, %v8213
        %v8215 = vlaneseq
        %v8216 = vshrl.u32 %v8215, 7
        %v8217 = vsub.s32 5, %v8216
        %v8218 = vrot.slane %v8193, %v8217
        %v8219 = vlaneseq
        %v8220 = vshrl.u32 %v8219, 7
        %v8221 = vsub.s32 6, %v8220
        %v8222 = vrot.slane %v8193, %v8221
        %v8223 = vlaneseq
        %v8224 = vshrl.u32 %v8223, 7
        %v8225 = vsub.s32 7, %v8224
        %v8226 = vrot.slane %v8193, %v8225
        %v8235 = vmul.f32 %v8185, %v8198
        %v8236 = vmul.f32 %v8186, %v8202
        %v8237 = vmul.f32 %v8187, %v8206
        %v8238 = vmul.f32 %v8188, %v8210
        %v8239 = vmul.f32 %v8189, %v8214
        %v8240 = vmul.f32 %v8190, %v8218
        %v8241 = vmul.f32 %v8191, %v8222
        %v8242 = vmul.f32 %v8192, %v8226
        %v8243 = vadd.f32 %v8235, %v8236
        %v8244 = vadd.f32 %v8243, %v8237
        %v8245 = vadd.f32 %v8244, %v8238
        %v8246 = vadd.f32 %v8245, %v8239
        %v8247 = vadd.f32 %v8246, %v8240
        %v8248 = vadd.f32 %v8247, %v8241
        %v8249 = vadd.f32 %v8248, %v8242
        %8250 = vadd.xlane.f32.xlu0 %v8249
        %v8251 = vpop.xlane.xlu0 %8250
        %v8252 = vld [vmem:[#allocation4] sm:$0x1]
        %v8254 = vlaneseq
        %v8255 = vshrl.u32 %v8254, 7
        %v8256 = vsub.s32 0, %v8255
        %v8257 = vrot.slane %v8252, %v8256
        %v8259 = vadd.f32 %v8251, %v8257
        %v8260 = vxor.u32 %v8259, 2147483648
        %v8261 = vmul.f32 %v8260, 1.442695
        %v8262 = vpow.pop %v8261
        %v8263 = vadd.f32 %v8262, 1.0
        %v8264 = vrcp.pop %v8263
        %v8265 = vmul.f32 1.0, %v8264
        %vm8266 = vcmask 7168
        %8267 = vst.msk [vmem:[%s12] sm:$0xff] %vm8266, %v8265
      $region76: #{discriminator_forward.1} parent=67 // pred_fallthru
        _
      // Predicated region
      $region77: #{discriminator_forward.1} parent=67 // pred_check
        %p8268 = pneg %p295
      $region78: #{discriminator_forward.1} parent=67 // pred_check_branch
        %8270 = sbr.rel (%p8268) target = $region80
      $region79: #{discriminator_forward.1} parent=67 // pred_region
        _
      $region80: #{discriminator_forward.1} parent=67 // pred_fallthru
        _
      // Predicated region
      $region81: #{discriminator_forward.1} parent=67 // pred_check
        %p8271 = pneg %p295
      $region82: #{discriminator_forward.1} parent=67 // pred_check_branch
        %8273 = sbr.rel (%p8271) target = $region84
      $region83: #{discriminator_forward.1} parent=67 // pred_region
        _
      $region84: #{discriminator_forward.1} parent=67 // pred_fallthru
        _
    $region68: #{discriminator_forward.1} parent=5 // pred_fallthru
      _
    %p8274 = scmp.le.s32.totalorder 2, %s20
    // Predicated region
    $region85: #{discriminator_forward.1} parent=5 // pred_check
      %p8275 = pneg %p8274
    $region86: #{discriminator_forward.1} parent=5 // pred_check_branch
      %8277 = sbr.rel (%p8275) target = $region88
    $region87: #{discriminator_forward.1} parent=5 // pred_region
      %s8278 = ssub.s32 %s20, 2
    $region88: #{discriminator_forward.1} parent=5 // pred_fallthru
      _
  $region6: #{discriminator_forward.1} parent=0 // loop_footer
    %s24 = sadd.s32 1, %s20
  $region7: #{discriminator_forward.1} parent=0 // loop_footer_branch
    %19 = sbr.rel target = $region3
  $region8: #{discriminator_forward.1} parent=0 // loop_exit
    _

</llo_original>
